<compile_context>
chip_gen: v5e
topology: v5e:2x2
jax: 0.10.0
libtpu: 0.0.40
codegen_flags: <defaults>
</compile_context>

<pallas_src>
import functools

import jax
import jax.numpy as jnp
from jax.experimental import pallas as pl
from jax.experimental.pallas import tpu as pltpu

EPS = 1e-5  # PyTorch InstanceNorm3d default eps


# ----------------------------- kernel helpers ------------------------------ #

def _reflect_pad_dh_into(xp_ref, v):
    """Write v (D,H,W,C) into xp_ref (D+2,H+2,W,C) with ReflectionPad(1) on the
    D and H axes only.  Every store is a whole-(W,C)-plane aligned copy; the W
    reflection is realized at read time in _conv3x3x3 (no misaligned vst)."""
    D, H, W, C = v.shape
    # interior
    xp_ref[1:D + 1, 1:H + 1, :, :] = v
    # depth faces: padded plane 0 <- v[1], padded plane D+1 <- v[D-2]
    xp_ref[0:1, 1:H + 1, :, :] = v[1:2]
    xp_ref[D + 1:D + 2, 1:H + 1, :, :] = v[D - 2:D - 1]
    # height faces over the already-padded full depth range
    xp_ref[:, 0:1, :, :] = xp_ref[:, 2:3, :, :]
    xp_ref[:, H + 1:H + 2, :, :] = xp_ref[:, H - 1:H, :, :]


def _w_tap(xh, kw, W):
    """Reflection-correct W tap (kw in {0,1,2}) of an unpadded-W slab, done on
    the read side (vld/VPU/XLU slots) instead of via misaligned pad stores."""
    if kw == 0:   # padded col w   -> original col w-1; col -1 reflects to col 1
        return jnp.concatenate([xh[:, :, 1:2, :], xh[:, :, 0:W - 1, :]], axis=2)
    if kw == 1:   # padded col w+1 -> original col w
        return xh
    # kw == 2      padded col w+2 -> original col w+1; col W reflects to col W-2
    return jnp.concatenate([xh[:, :, 1:W, :], xh[:, :, W - 2:W - 1, :]], axis=2)


def _conv3x3x3(xp, w_ref, D, H, W, C):
    """3x3x3 conv of the D/H-reflection-padded xp (D+2,H+2,W,C).

    Only the (kh,kw) taps are folded into the lane axis (K = 9*C), built once
    over the padded depth range; the kd taps are a 3-step accumulation loop
    slicing the kd-major packed weight.  Returns a (D*H*W, C) f32 accumulator
    (no conv bias: cancelled exactly by the affine=False InstanceNorm)."""
    taps = []
    for kh in range(3):
        xh = xp[:, kh:kh + H, :, :]                       # (D+2, H, W, C)
        for kw in range(3):
            taps.append(_w_tap(xh, kw, W))
    a9 = jnp.concatenate(taps, axis=3)                    # (D+2,H,W,9C), (kh,kw,ci)

    acc = None
    for kd in range(3):
        patch = a9[kd:kd + D].reshape(D * H * W, 9 * C)   # leading-dims reshape
        part = jnp.dot(patch, w_ref[kd * 9 * C:(kd + 1) * 9 * C, :],
                       preferred_element_type=jnp.float32)
        acc = part if acc is None else acc + part
    return acc


def _instance_norm(acc, inv_m):
    """InstanceNorm3d (affine=False, biased variance) on a (rows, C) f32
    accumulator: one fused cross-sublane reduction for E[x] and E[x^2]."""
    C = acc.shape[1]
    s = jnp.sum(jnp.concatenate([acc, acc * acc], axis=1), axis=0, keepdims=True)
    mean = s[:, :C] * inv_m
    var = s[:, C:] * inv_m - mean * mean
    return (acc - mean) * jax.lax.rsqrt(var + EPS)


# ------------------------------ kernel body -------------------------------- #

def _residual_block_kernel(x_ref, w1_ref, w2_ref, o_ref, xp_ref):
    # x_ref/o_ref: (D,H,W,C) one batch sample (f32); w*_ref: (27*C, C) in the
    # MXU dtype; xp_ref: (D+2,H+2,W,C) VMEM scratch in the MXU dtype, fully
    # rewritten by each stage.
    D, H, W, C = x_ref.shape
    cdt = xp_ref.dtype
    inv_m = 1.0 / float(D * H * W)

    # stage 1: reflect-pad -> conv3x3x3 (kd-loop im2col) -> instance-norm -> ReLU
    _reflect_pad_dh_into(xp_ref, x_ref[...].astype(cdt))
    acc1 = _conv3x3x3(xp_ref[...], w1_ref, D, H, W, C)      # (DHW, C) f32
    h = jnp.maximum(_instance_norm(acc1, inv_m), 0.0)

    # stage 2: reflect-pad -> conv3x3x3 -> instance-norm
    _reflect_pad_dh_into(xp_ref, h.astype(cdt).reshape(D, H, W, C))
    acc2 = _conv3x3x3(xp_ref[...], w2_ref, D, H, W, C)
    z = _instance_norm(acc2, inv_m)

    # residual add: re-read x from its VMEM-resident block (bounds x's live
    # range across the two conv+IN stages at zero extra HBM cost).
    o_ref[...] = x_ref[...] + z.reshape(D, H, W, C)

    # TODO(synk): v7x / large volumes: halo'd D-slab tiling with two-pass
    #   InstanceNorm stats (slab conv pass accumulating per-channel sum/sumsq,
    #   then a normalize+epilogue pass) to bound VMEM to O(slab) per stage.
    # TODO(synk): at toy C (<128) a lane-dense (D, H*W*C) in/out presentation
    #   would replace masked 4-lane loads/stores; it needs a lane-relayout
    #   reshape in-kernel and is a no-op at production C (multiple of 128).


# ----------------------------- pallas_call glue ----------------------------- #

def _vmem_limit_bytes(D, H, W, C, cdt):
    f32 = 4
    cds = jnp.dtype(cdt).itemsize
    vol = D * H * W * C
    io = 2 * 2 * vol * f32                       # x + out blocks, double-buffered
    wts = 2 * 2 * 27 * C * C * cds               # wk1 + wk2, double-buffered
    xp = (D + 2) * (H + 2) * W * C * cds         # pad scratch
    a9 = (D + 2) * H * W * 9 * C * cds           # (kh,kw)-folded im2col slab
    tmp = 4 * vol * f32                          # conv acc / h / z / epilogue temps
    est = int(1.5 * (io + wts + xp + a9 + tmp)) + (1 << 20)
    return max(16 << 20, min(est, 64 << 20))     # stay under v7x physical VMEM


def _residual_block_ndhwc(x, wk1, wk2, mxu_dtype):
    """x: (N,D,H,W,C) f32; wk1/wk2: (27*C, C) already in the MXU dtype."""
    N, D, H, W, C = x.shape
    return pl.pallas_call(
        _residual_block_kernel,
        out_shape=jax.ShapeDtypeStruct((N, D, H, W, C), jnp.float32),
        grid=(N,),   # v7x: keep N even per chip so both TensorCores stay fed
        in_specs=[
            pl.BlockSpec((None, D, H, W, C), lambda n: (n, 0, 0, 0, 0)),
            # grid-invariant weight blocks.
            # TODO(synk): single-buffer them (pipeline_mode=pl.Buffered(1)) to
            #   reclaim ~1.8 MiB of VMEM at C=128 on v7x.
            pl.BlockSpec((27 * C, C), lambda n: (0, 0)),
            pl.BlockSpec((27 * C, C), lambda n: (0, 0)),
        ],
        out_specs=pl.BlockSpec((None, D, H, W, C), lambda n: (n, 0, 0, 0, 0)),
        scratch_shapes=[pltpu.VMEM((D + 2, H + 2, W, C), mxu_dtype)],
        compiler_params=pltpu.CompilerParams(
            dimension_semantics=("parallel",),
            vmem_limit_bytes=_vmem_limit_bytes(D, H, W, C, mxu_dtype)),
    )(x, wk1, wk2)


def pack_conv_weight(w_oidhw, mxu_dtype=jnp.bfloat16):
    """(C_out,C_in,3,3,3) -> (27*C_in, C_out), rows ordered (kd,kh,kw,ci).
    Do this once, outside the per-step jit, so weights stay packed/resident."""
    c_out, c_in = w_oidhw.shape[0], w_oidhw.shape[1]
    return (jnp.transpose(w_oidhw, (2, 3, 4, 1, 0))
            .reshape(27 * c_in, c_out).astype(mxu_dtype))


@functools.partial(jax.jit, static_argnames=("mxu_dtype",))
def residual_block_ndhwc(x_ndhwc, wk1, wk2, mxu_dtype=jnp.bfloat16):
    """Production entry point: NDHWC activations end-to-end, packed weights."""
    return _residual_block_ndhwc(x_ndhwc.astype(jnp.float32), wk1, wk2, mxu_dtype)


@functools.partial(jax.jit, static_argnames=("mxu_dtype",))
def residual_block_forward(x_ncdhw, w1, b1, w2, b2, mxu_dtype=jnp.bfloat16):
    """PyTorch-parity wrapper: NCDHW activations, OIDHW conv weights.

    The boundary transposes here exist only for parity testing; real models
    should call residual_block_ndhwc and stay NDHWC end-to-end.  b1/b2 are
    accepted for parameter parity but unused: a per-channel conv bias is
    cancelled exactly by the affine=False InstanceNorm3d that follows it."""
    del b1, b2
    x = jnp.transpose(x_ncdhw, (0, 2, 3, 4, 1)).astype(jnp.float32)   # NDHWC
    wk1 = pack_conv_weight(w1, mxu_dtype)
    wk2 = pack_conv_weight(w2, mxu_dtype)
    out = _residual_block_ndhwc(x, wk1, wk2, mxu_dtype)
    return jnp.transpose(out, (0, 4, 1, 2, 3))                        # NCDHW


# ----------------------------- pure-JAX reference --------------------------- #

def _ref_forward(x, w1, b1, w2, b2):
    def conv(a, w, b):
        ap = jnp.pad(a, ((0, 0), (0, 0), (1, 1), (1, 1), (1, 1)), mode="reflect")
        out = jax.lax.conv_general_dilated(
            ap, w, window_strides=(1, 1, 1), padding="VALID",
            dimension_numbers=("NCDHW", "OIDHW", "NCDHW"),
            precision=jax.lax.Precision.HIGHEST)
        return out + b.reshape(1, -1, 1, 1, 1)

    def inorm(a):
        mean = jnp.mean(a, axis=(2, 3, 4), keepdims=True)
        var = jnp.mean((a - mean) ** 2, axis=(2, 3, 4), keepdims=True)
        return (a - mean) * jax.lax.rsqrt(var + EPS)

    h = jax.nn.relu(inorm(conv(x, w1, b1)))
    return x + inorm(conv(h, w2, b2))


# --------------------------------- main ------------------------------------ #

if __name__ == "__main__":
    N, C, D, H, W = 2, 4, 8, 8, 8
    key = jax.random.PRNGKey(0)
    kx, kw1, kb1, kw2, kb2 = jax.random.split(key, 5)

    x = jax.random.normal(kx, (N, C, D, H, W), dtype=jnp.float32)

    fan_in = C * 3 * 3 * 3
    bound = 1.0 / (fan_in ** 0.5)
    w1 = jax.random.uniform(kw1, (C, C, 3, 3, 3), jnp.float32, -bound, bound)
    b1 = jax.random.uniform(kb1, (C,), jnp.float32, -bound, bound)
    w2 = jax.random.uniform(kw2, (C, C, 3, 3, 3), jnp.float32, -bound, bound)
    b2 = jax.random.uniform(kb2, (C,), jnp.float32, -bound, bound)

    ref = jax.block_until_ready(_ref_forward(x, w1, b1, w2, b2))

    # Exact-semantics check: f32 MXU inputs (also validates the bias drop and
    # the read-side W-reflection / kd-loop im2col restructuring).
    out_f32 = jax.block_until_ready(
        residual_block_forward(x, w1, b1, w2, b2, mxu_dtype=jnp.float32))
    assert out_f32.shape == (N, C, D, H, W), out_f32.shape
    err_f32 = float(jnp.max(jnp.abs(out_f32 - ref)))
    assert err_f32 < 1e-3, f"f32-mode max abs error {err_f32}"

    # Default fast path: bf16 pad scratch + im2col + MXU inputs, f32 accumulate.
    out_bf16 = jax.block_until_ready(
        residual_block_forward(x, w1, b1, w2, b2, mxu_dtype=jnp.bfloat16))
    assert out_bf16.shape == (N, C, D, H, W), out_bf16.shape
    err_bf16 = float(jnp.max(jnp.abs(out_bf16 - ref)))
    assert err_bf16 < 5e-2, f"bf16-mode max abs error {err_bf16}"

    print("KERNEL_OK")
</pallas_src>

<mosaic_0001>
module attributes {stable_mosaic.version = 11 : i64} {
  func.func @_residual_block_kernel(%arg0: i32, %arg1: memref<1x8x8x8x4xf32, #tpu.memory_space<vmem>>, %arg2: memref<108x4xf32, #tpu.memory_space<vmem>>, %arg3: memref<108x4xf32, #tpu.memory_space<vmem>>, %arg4: memref<1x8x8x8x4xf32, #tpu.memory_space<vmem>>, %arg5: memref<10x10x8x4xf32, #tpu.memory_space<vmem>>) attributes {dimension_semantics = [#tpu.dimension_semantics<parallel>], iteration_bounds = array<i64: 2>, scalar_prefetch = 0 : i64, scratch_operands = 1 : i64, tpu.core_type = #tpu.core_type<tc>, window_params = [{transform_indices = @transform_0, window_bounds = array<i64: 1, 8, 8, 8, 4>}, {pipeline_mode = #tpu.pipeline_mode<synchronous>, transform_indices = @transform_1, window_bounds = array<i64: 108, 4>}, {pipeline_mode = #tpu.pipeline_mode<synchronous>, transform_indices = @transform_2, window_bounds = array<i64: 108, 4>}, {transform_indices = @transform_3, window_bounds = array<i64: 1, 8, 8, 8, 4>}]} {
    %c0 = arith.constant 0 : index
    %c0_0 = arith.constant 0 : index
    %c0_1 = arith.constant 0 : index
    %c0_2 = arith.constant 0 : index
    %c0_3 = arith.constant 0 : index
    %0 = vector.load %arg1[%c0, %c0_0, %c0_1, %c0_2, %c0_3] : memref<1x8x8x8x4xf32, #tpu.memory_space<vmem>>, vector<1x8x8x8x4xf32>
    %1 = vector.shape_cast %0 : vector<1x8x8x8x4xf32> to vector<8x8x8x4xf32>
    %c1 = arith.constant 1 : index
    %c1_4 = arith.constant 1 : index
    %c0_5 = arith.constant 0 : index
    %c0_6 = arith.constant 0 : index
    %2 = vector.load %arg5[%c1, %c1_4, %c0_5, %c0_6] : memref<10x10x8x4xf32, #tpu.memory_space<vmem>>, vector<8x8x8x4xf32>
    tpu.vector_store %arg5[%c1, %c1_4, %c0_5, %c0_6], %1 {strides = array<i32>} : memref<10x10x8x4xf32, #tpu.memory_space<vmem>>, vector<8x8x8x4xf32>,
    %3 = vector.extract_strided_slice %1 {offsets = [1, 0, 0, 0], sizes = [1, 8, 8, 4], strides = [1, 1, 1, 1]} : vector<8x8x8x4xf32> to vector<1x8x8x4xf32>
    %c0_7 = arith.constant 0 : index
    %c1_8 = arith.constant 1 : index
    %c0_9 = arith.constant 0 : index
    %c0_10 = arith.constant 0 : index
    %4 = vector.load %arg5[%c0_7, %c1_8, %c0_9, %c0_10] : memref<10x10x8x4xf32, #tpu.memory_space<vmem>>, vector<1x8x8x4xf32>
    tpu.vector_store %arg5[%c0_7, %c1_8, %c0_9, %c0_10], %3 {strides = array<i32>} : memref<10x10x8x4xf32, #tpu.memory_space<vmem>>, vector<1x8x8x4xf32>,
    %5 = vector.extract_strided_slice %1 {offsets = [6, 0, 0, 0], sizes = [1, 8, 8, 4], strides = [1, 1, 1, 1]} : vector<8x8x8x4xf32> to vector<1x8x8x4xf32>
    %c9 = arith.constant 9 : index
    %c1_11 = arith.constant 1 : index
    %c0_12 = arith.constant 0 : index
    %c0_13 = arith.constant 0 : index
    %6 = vector.load %arg5[%c9, %c1_11, %c0_12, %c0_13] : memref<10x10x8x4xf32, #tpu.memory_space<vmem>>, vector<1x8x8x4xf32>
    tpu.vector_store %arg5[%c9, %c1_11, %c0_12, %c0_13], %5 {strides = array<i32>} : memref<10x10x8x4xf32, #tpu.memory_space<vmem>>, vector<1x8x8x4xf32>,
    %c0_14 = arith.constant 0 : index
    %c2 = arith.constant 2 : index
    %c0_15 = arith.constant 0 : index
    %c0_16 = arith.constant 0 : index
    %7 = vector.load %arg5[%c0_14, %c2, %c0_15, %c0_16] : memref<10x10x8x4xf32, #tpu.memory_space<vmem>>, vector<10x1x8x4xf32>
    %c0_17 = arith.constant 0 : index
    %c0_18 = arith.constant 0 : index
    %c0_19 = arith.constant 0 : index
    %c0_20 = arith.constant 0 : index
    %8 = vector.load %arg5[%c0_17, %c0_18, %c0_19, %c0_20] : memref<10x10x8x4xf32, #tpu.memory_space<vmem>>, vector<10x1x8x4xf32>
    tpu.vector_store %arg5[%c0_17, %c0_18, %c0_19, %c0_20], %7 {strides = array<i32>} : memref<10x10x8x4xf32, #tpu.memory_space<vmem>>, vector<10x1x8x4xf32>,
    %c0_21 = arith.constant 0 : index
    %c7 = arith.constant 7 : index
    %c0_22 = arith.constant 0 : index
    %c0_23 = arith.constant 0 : index
    %9 = vector.load %arg5[%c0_21, %c7, %c0_22, %c0_23] : memref<10x10x8x4xf32, #tpu.memory_space<vmem>>, vector<10x1x8x4xf32>
    %c0_24 = arith.constant 0 : index
    %c9_25 = arith.constant 9 : index
    %c0_26 = arith.constant 0 : index
    %c0_27 = arith.constant 0 : index
    %10 = vector.load %arg5[%c0_24, %c9_25, %c0_26, %c0_27] : memref<10x10x8x4xf32, #tpu.memory_space<vmem>>, vector<10x1x8x4xf32>
    tpu.vector_store %arg5[%c0_24, %c9_25, %c0_26, %c0_27], %9 {strides = array<i32>} : memref<10x10x8x4xf32, #tpu.memory_space<vmem>>, vector<10x1x8x4xf32>,
    %c0_28 = arith.constant 0 : index
    %c0_29 = arith.constant 0 : index
    %c0_30 = arith.constant 0 : index
    %c0_31 = arith.constant 0 : index
    %11 = vector.load %arg5[%c0_28, %c0_29, %c0_30, %c0_31] : memref<10x10x8x4xf32, #tpu.memory_space<vmem>>, vector<10x10x8x4xf32>
    %12 = vector.extract_strided_slice %11 {offsets = [0, 0, 0, 0], sizes = [10, 8, 8, 4], strides = [1, 1, 1, 1]} : vector<10x10x8x4xf32> to vector<10x8x8x4xf32>
    %13 = vector.extract_strided_slice %12 {offsets = [0, 0, 1, 0], sizes = [10, 8, 1, 4], strides = [1, 1, 1, 1]} : vector<10x8x8x4xf32> to vector<10x8x1x4xf32>
    %14 = vector.extract_strided_slice %12 {offsets = [0, 0, 0, 0], sizes = [10, 8, 7, 4], strides = [1, 1, 1, 1]} : vector<10x8x8x4xf32> to vector<10x8x7x4xf32>
    %15 = tpu.concatenate %13, %14 in 2 : vector<10x8x1x4xf32>, vector<10x8x7x4xf32> -> vector<10x8x8x4xf32>
    %16 = vector.extract_strided_slice %12 {offsets = [0, 0, 1, 0], sizes = [10, 8, 7, 4], strides = [1, 1, 1, 1]} : vector<10x8x8x4xf32> to vector<10x8x7x4xf32>
    %17 = vector.extract_strided_slice %12 {offsets = [0, 0, 6, 0], sizes = [10, 8, 1, 4], strides = [1, 1, 1, 1]} : vector<10x8x8x4xf32> to vector<10x8x1x4xf32>
    %18 = tpu.concatenate %16, %17 in 2 : vector<10x8x7x4xf32>, vector<10x8x1x4xf32> -> vector<10x8x8x4xf32>
    %19 = vector.extract_strided_slice %11 {offsets = [0, 1, 0, 0], sizes = [10, 8, 8, 4], strides = [1, 1, 1, 1]} : vector<10x10x8x4xf32> to vector<10x8x8x4xf32>
    %20 = vector.extract_strided_slice %19 {offsets = [0, 0, 1, 0], sizes = [10, 8, 1, 4], strides = [1, 1, 1, 1]} : vector<10x8x8x4xf32> to vector<10x8x1x4xf32>
    %21 = vector.extract_strided_slice %19 {offsets = [0, 0, 0, 0], sizes = [10, 8, 7, 4], strides = [1, 1, 1, 1]} : vector<10x8x8x4xf32> to vector<10x8x7x4xf32>
    %22 = tpu.concatenate %20, %21 in 2 : vector<10x8x1x4xf32>, vector<10x8x7x4xf32> -> vector<10x8x8x4xf32>
    %23 = vector.extract_strided_slice %19 {offsets = [0, 0, 1, 0], sizes = [10, 8, 7, 4], strides = [1, 1, 1, 1]} : vector<10x8x8x4xf32> to vector<10x8x7x4xf32>
    %24 = vector.extract_strided_slice %19 {offsets = [0, 0, 6, 0], sizes = [10, 8, 1, 4], strides = [1, 1, 1, 1]} : vector<10x8x8x4xf32> to vector<10x8x1x4xf32>
    %25 = tpu.concatenate %23, %24 in 2 : vector<10x8x7x4xf32>, vector<10x8x1x4xf32> -> vector<10x8x8x4xf32>
    %26 = vector.extract_strided_slice %11 {offsets = [0, 2, 0, 0], sizes = [10, 8, 8, 4], strides = [1, 1, 1, 1]} : vector<10x10x8x4xf32> to vector<10x8x8x4xf32>
    %27 = vector.extract_strided_slice %26 {offsets = [0, 0, 1, 0], sizes = [10, 8, 1, 4], strides = [1, 1, 1, 1]} : vector<10x8x8x4xf32> to vector<10x8x1x4xf32>
    %28 = vector.extract_strided_slice %26 {offsets = [0, 0, 0, 0], sizes = [10, 8, 7, 4], strides = [1, 1, 1, 1]} : vector<10x8x8x4xf32> to vector<10x8x7x4xf32>
    %29 = tpu.concatenate %27, %28 in 2 : vector<10x8x1x4xf32>, vector<10x8x7x4xf32> -> vector<10x8x8x4xf32>
    %30 = vector.extract_strided_slice %26 {offsets = [0, 0, 1, 0], sizes = [10, 8, 7, 4], strides = [1, 1, 1, 1]} : vector<10x8x8x4xf32> to vector<10x8x7x4xf32>
    %31 = vector.extract_strided_slice %26 {offsets = [0, 0, 6, 0], sizes = [10, 8, 1, 4], strides = [1, 1, 1, 1]} : vector<10x8x8x4xf32> to vector<10x8x1x4xf32>
    %32 = tpu.concatenate %30, %31 in 2 : vector<10x8x7x4xf32>, vector<10x8x1x4xf32> -> vector<10x8x8x4xf32>
    %33 = tpu.concatenate %15, %12, %18, %22, %19, %25, %29, %26, %32 in 3 : vector<10x8x8x4xf32>, vector<10x8x8x4xf32>, vector<10x8x8x4xf32>, vector<10x8x8x4xf32>, vector<10x8x8x4xf32>, vector<10x8x8x4xf32>, vector<10x8x8x4xf32>, vector<10x8x8x4xf32>, vector<10x8x8x4xf32> -> vector<10x8x8x36xf32>
    %34 = vector.extract_strided_slice %33 {offsets = [0, 0, 0, 0], sizes = [8, 8, 8, 36], strides = [1, 1, 1, 1]} : vector<10x8x8x36xf32> to vector<8x8x8x36xf32>
    %35 = vector.shape_cast %34 : vector<8x8x8x36xf32> to vector<512x36xf32>
    %c0_32 = arith.constant 0 : index
    %c0_33 = arith.constant 0 : index
    %36 = vector.load %arg2[%c0_32, %c0_33] : memref<108x4xf32, #tpu.memory_space<vmem>>, vector<36x4xf32>
    %cst = arith.constant dense<0.000000e+00> : vector<512x4xf32>
    %37 = tpu.matmul %35, %36, %cst {dimension_numbers = #tpu.dot_dimension_numbers<[1], [0], [0], [1], [0, 0, 1, 1], [], []>} : vector<512x36xf32>, vector<36x4xf32>, vector<512x4xf32> -> vector<512x4xf32>
    %38 = vector.extract_strided_slice %33 {offsets = [1, 0, 0, 0], sizes = [8, 8, 8, 36], strides = [1, 1, 1, 1]} : vector<10x8x8x36xf32> to vector<8x8x8x36xf32>
    %39 = vector.shape_cast %38 : vector<8x8x8x36xf32> to vector<512x36xf32>
    %c36 = arith.constant 36 : index
    %c0_34 = arith.constant 0 : index
    %40 = vector.load %arg2[%c36, %c0_34] : memref<108x4xf32, #tpu.memory_space<vmem>>, vector<36x4xf32>
    %cst_35 = arith.constant dense<0.000000e+00> : vector<512x4xf32>
    %41 = tpu.matmul %39, %40, %cst_35 {dimension_numbers = #tpu.dot_dimension_numbers<[1], [0], [0], [1], [0, 0, 1, 1], [], []>} : vector<512x36xf32>, vector<36x4xf32>, vector<512x4xf32> -> vector<512x4xf32>
    %42 = arith.addf %37, %41 : vector<512x4xf32>
    %43 = vector.extract_strided_slice %33 {offsets = [2, 0, 0, 0], sizes = [8, 8, 8, 36], strides = [1, 1, 1, 1]} : vector<10x8x8x36xf32> to vector<8x8x8x36xf32>
    %44 = vector.shape_cast %43 : vector<8x8x8x36xf32> to vector<512x36xf32>
    %c72 = arith.constant 72 : index
    %c0_36 = arith.constant 0 : index
    %45 = vector.load %arg2[%c72, %c0_36] : memref<108x4xf32, #tpu.memory_space<vmem>>, vector<36x4xf32>
    %cst_37 = arith.constant dense<0.000000e+00> : vector<512x4xf32>
    %46 = tpu.matmul %44, %45, %cst_37 {dimension_numbers = #tpu.dot_dimension_numbers<[1], [0], [0], [1], [0, 0, 1, 1], [], []>} : vector<512x36xf32>, vector<36x4xf32>, vector<512x4xf32> -> vector<512x4xf32>
    %47 = arith.addf %42, %46 : vector<512x4xf32>
    %48 = arith.mulf %47, %47 : vector<512x4xf32>
    %49 = tpu.concatenate %47, %48 in 1 : vector<512x4xf32>, vector<512x4xf32> -> vector<512x8xf32>
    %cst_38 = arith.constant dense<0.000000e+00> : vector<8xf32>
    %50 = vector.multi_reduction <add>, %49, %cst_38 [0] : vector<512x8xf32> to vector<8xf32>
    %51 = vector.shape_cast %50 : vector<8xf32> to vector<1x8xf32>
    %52 = vector.extract_strided_slice %51 {offsets = [0, 0], sizes = [1, 4], strides = [1, 1]} : vector<1x8xf32> to vector<1x4xf32>
    %cst_39 = arith.constant 0.001953125 : f32
    %53 = vector.broadcast %cst_39 : f32 to vector<1x4xf32>
    %54 = arith.mulf %52, %53 : vector<1x4xf32>
    %55 = vector.extract_strided_slice %51 {offsets = [0, 4], sizes = [1, 4], strides = [1, 1]} : vector<1x8xf32> to vector<1x4xf32>
    %cst_40 = arith.constant 0.001953125 : f32
    %56 = vector.broadcast %cst_40 : f32 to vector<1x4xf32>
    %57 = arith.mulf %55, %56 : vector<1x4xf32>
    %58 = arith.mulf %54, %54 : vector<1x4xf32>
    %59 = arith.subf %57, %58 : vector<1x4xf32>
    %60 = vector.broadcast %54 : vector<1x4xf32> to vector<512x4xf32>
    %61 = arith.subf %47, %60 : vector<512x4xf32>
    %cst_41 = arith.constant 9.99999974E-6 : f32
    %62 = vector.broadcast %cst_41 : f32 to vector<1x4xf32>
    %63 = arith.addf %59, %62 : vector<1x4xf32>
    %64 = math.rsqrt %63 : vector<1x4xf32>
    %65 = vector.broadcast %64 : vector<1x4xf32> to vector<512x4xf32>
    %66 = arith.mulf %61, %65 : vector<512x4xf32>
    %cst_42 = arith.constant 0.000000e+00 : f32
    %67 = vector.broadcast %cst_42 : f32 to vector<512x4xf32>
    %68 = arith.maximumf %66, %67 : vector<512x4xf32>
    %69 = vector.shape_cast %68 : vector<512x4xf32> to vector<8x8x8x4xf32>
    %c1_43 = arith.constant 1 : index
    %c1_44 = arith.constant 1 : index
    %c0_45 = arith.constant 0 : index
    %c0_46 = arith.constant 0 : index
    %70 = vector.load %arg5[%c1_43, %c1_44, %c0_45, %c0_46] : memref<10x10x8x4xf32, #tpu.memory_space<vmem>>, vector<8x8x8x4xf32>
    tpu.vector_store %arg5[%c1_43, %c1_44, %c0_45, %c0_46], %69 {strides = array<i32>} : memref<10x10x8x4xf32, #tpu.memory_space<vmem>>, vector<8x8x8x4xf32>,
    %71 = vector.extract_strided_slice %69 {offsets = [1, 0, 0, 0], sizes = [1, 8, 8, 4], strides = [1, 1, 1, 1]} : vector<8x8x8x4xf32> to vector<1x8x8x4xf32>
    %c0_47 = arith.constant 0 : index
    %c1_48 = arith.constant 1 : index
    %c0_49 = arith.constant 0 : index
    %c0_50 = arith.constant 0 : index
    %72 = vector.load %arg5[%c0_47, %c1_48, %c0_49, %c0_50] : memref<10x10x8x4xf32, #tpu.memory_space<vmem>>, vector<1x8x8x4xf32>
    tpu.vector_store %arg5[%c0_47, %c1_48, %c0_49, %c0_50], %71 {strides = array<i32>} : memref<10x10x8x4xf32, #tpu.memory_space<vmem>>, vector<1x8x8x4xf32>,
    %73 = vector.extract_strided_slice %69 {offsets = [6, 0, 0, 0], sizes = [1, 8, 8, 4], strides = [1, 1, 1, 1]} : vector<8x8x8x4xf32> to vector<1x8x8x4xf32>
    %c9_51 = arith.constant 9 : index
    %c1_52 = arith.constant 1 : index
    %c0_53 = arith.constant 0 : index
    %c0_54 = arith.constant 0 : index
    %74 = vector.load %arg5[%c9_51, %c1_52, %c0_53, %c0_54] : memref<10x10x8x4xf32, #tpu.memory_space<vmem>>, vector<1x8x8x4xf32>
    tpu.vector_store %arg5[%c9_51, %c1_52, %c0_53, %c0_54], %73 {strides = array<i32>} : memref<10x10x8x4xf32, #tpu.memory_space<vmem>>, vector<1x8x8x4xf32>,
    %c0_55 = arith.constant 0 : index
    %c2_56 = arith.constant 2 : index
    %c0_57 = arith.constant 0 : index
    %c0_58 = arith.constant 0 : index
    %75 = vector.load %arg5[%c0_55, %c2_56, %c0_57, %c0_58] : memref<10x10x8x4xf32, #tpu.memory_space<vmem>>, vector<10x1x8x4xf32>
    %c0_59 = arith.constant 0 : index
    %c0_60 = arith.constant 0 : index
    %c0_61 = arith.constant 0 : index
    %c0_62 = arith.constant 0 : index
    %76 = vector.load %arg5[%c0_59, %c0_60, %c0_61, %c0_62] : memref<10x10x8x4xf32, #tpu.memory_space<vmem>>, vector<10x1x8x4xf32>
    tpu.vector_store %arg5[%c0_59, %c0_60, %c0_61, %c0_62], %75 {strides = array<i32>} : memref<10x10x8x4xf32, #tpu.memory_space<vmem>>, vector<10x1x8x4xf32>,
    %c0_63 = arith.constant 0 : index
    %c7_64 = arith.constant 7 : index
    %c0_65 = arith.constant 0 : index
    %c0_66 = arith.constant 0 : index
    %77 = vector.load %arg5[%c0_63, %c7_64, %c0_65, %c0_66] : memref<10x10x8x4xf32, #tpu.memory_space<vmem>>, vector<10x1x8x4xf32>
    %c0_67 = arith.constant 0 : index
    %c9_68 = arith.constant 9 : index
    %c0_69 = arith.constant 0 : index
    %c0_70 = arith.constant 0 : index
    %78 = vector.load %arg5[%c0_67, %c9_68, %c0_69, %c0_70] : memref<10x10x8x4xf32, #tpu.memory_space<vmem>>, vector<10x1x8x4xf32>
    tpu.vector_store %arg5[%c0_67, %c9_68, %c0_69, %c0_70], %77 {strides = array<i32>} : memref<10x10x8x4xf32, #tpu.memory_space<vmem>>, vector<10x1x8x4xf32>,
    %c0_71 = arith.constant 0 : index
    %c0_72 = arith.constant 0 : index
    %c0_73 = arith.constant 0 : index
    %c0_74 = arith.constant 0 : index
    %79 = vector.load %arg5[%c0_71, %c0_72, %c0_73, %c0_74] : memref<10x10x8x4xf32, #tpu.memory_space<vmem>>, vector<10x10x8x4xf32>
    %80 = vector.extract_strided_slice %79 {offsets = [0, 0, 0, 0], sizes = [10, 8, 8, 4], strides = [1, 1, 1, 1]} : vector<10x10x8x4xf32> to vector<10x8x8x4xf32>
    %81 = vector.extract_strided_slice %80 {offsets = [0, 0, 1, 0], sizes = [10, 8, 1, 4], strides = [1, 1, 1, 1]} : vector<10x8x8x4xf32> to vector<10x8x1x4xf32>
    %82 = vector.extract_strided_slice %80 {offsets = [0, 0, 0, 0], sizes = [10, 8, 7, 4], strides = [1, 1, 1, 1]} : vector<10x8x8x4xf32> to vector<10x8x7x4xf32>
    %83 = tpu.concatenate %81, %82 in 2 : vector<10x8x1x4xf32>, vector<10x8x7x4xf32> -> vector<10x8x8x4xf32>
    %84 = vector.extract_strided_slice %80 {offsets = [0, 0, 1, 0], sizes = [10, 8, 7, 4], strides = [1, 1, 1, 1]} : vector<10x8x8x4xf32> to vector<10x8x7x4xf32>
    %85 = vector.extract_strided_slice %80 {offsets = [0, 0, 6, 0], sizes = [10, 8, 1, 4], strides = [1, 1, 1, 1]} : vector<10x8x8x4xf32> to vector<10x8x1x4xf32>
    %86 = tpu.concatenate %84, %85 in 2 : vector<10x8x7x4xf32>, vector<10x8x1x4xf32> -> vector<10x8x8x4xf32>
    %87 = vector.extract_strided_slice %79 {offsets = [0, 1, 0, 0], sizes = [10, 8, 8, 4], strides = [1, 1, 1, 1]} : vector<10x10x8x4xf32> to vector<10x8x8x4xf32>
    %88 = vector.extract_strided_slice %87 {offsets = [0, 0, 1, 0], sizes = [10, 8, 1, 4], strides = [1, 1, 1, 1]} : vector<10x8x8x4xf32> to vector<10x8x1x4xf32>
    %89 = vector.extract_strided_slice %87 {offsets = [0, 0, 0, 0], sizes = [10, 8, 7, 4], strides = [1, 1, 1, 1]} : vector<10x8x8x4xf32> to vector<10x8x7x4xf32>
    %90 = tpu.concatenate %88, %89 in 2 : vector<10x8x1x4xf32>, vector<10x8x7x4xf32> -> vector<10x8x8x4xf32>
    %91 = vector.extract_strided_slice %87 {offsets = [0, 0, 1, 0], sizes = [10, 8, 7, 4], strides = [1, 1, 1, 1]} : vector<10x8x8x4xf32> to vector<10x8x7x4xf32>
    %92 = vector.extract_strided_slice %87 {offsets = [0, 0, 6, 0], sizes = [10, 8, 1, 4], strides = [1, 1, 1, 1]} : vector<10x8x8x4xf32> to vector<10x8x1x4xf32>
    %93 = tpu.concatenate %91, %92 in 2 : vector<10x8x7x4xf32>, vector<10x8x1x4xf32> -> vector<10x8x8x4xf32>
    %94 = vector.extract_strided_slice %79 {offsets = [0, 2, 0, 0], sizes = [10, 8, 8, 4], strides = [1, 1, 1, 1]} : vector<10x10x8x4xf32> to vector<10x8x8x4xf32>
    %95 = vector.extract_strided_slice %94 {offsets = [0, 0, 1, 0], sizes = [10, 8, 1, 4], strides = [1, 1, 1, 1]} : vector<10x8x8x4xf32> to vector<10x8x1x4xf32>
    %96 = vector.extract_strided_slice %94 {offsets = [0, 0, 0, 0], sizes = [10, 8, 7, 4], strides = [1, 1, 1, 1]} : vector<10x8x8x4xf32> to vector<10x8x7x4xf32>
    %97 = tpu.concatenate %95, %96 in 2 : vector<10x8x1x4xf32>, vector<10x8x7x4xf32> -> vector<10x8x8x4xf32>
    %98 = vector.extract_strided_slice %94 {offsets = [0, 0, 1, 0], sizes = [10, 8, 7, 4], strides = [1, 1, 1, 1]} : vector<10x8x8x4xf32> to vector<10x8x7x4xf32>
    %99 = vector.extract_strided_slice %94 {offsets = [0, 0, 6, 0], sizes = [10, 8, 1, 4], strides = [1, 1, 1, 1]} : vector<10x8x8x4xf32> to vector<10x8x1x4xf32>
    %100 = tpu.concatenate %98, %99 in 2 : vector<10x8x7x4xf32>, vector<10x8x1x4xf32> -> vector<10x8x8x4xf32>
    %101 = tpu.concatenate %83, %80, %86, %90, %87, %93, %97, %94, %100 in 3 : vector<10x8x8x4xf32>, vector<10x8x8x4xf32>, vector<10x8x8x4xf32>, vector<10x8x8x4xf32>, vector<10x8x8x4xf32>, vector<10x8x8x4xf32>, vector<10x8x8x4xf32>, vector<10x8x8x4xf32>, vector<10x8x8x4xf32> -> vector<10x8x8x36xf32>
    %102 = vector.extract_strided_slice %101 {offsets = [0, 0, 0, 0], sizes = [8, 8, 8, 36], strides = [1, 1, 1, 1]} : vector<10x8x8x36xf32> to vector<8x8x8x36xf32>
    %103 = vector.shape_cast %102 : vector<8x8x8x36xf32> to vector<512x36xf32>
    %c0_75 = arith.constant 0 : index
    %c0_76 = arith.constant 0 : index
    %104 = vector.load %arg3[%c0_75, %c0_76] : memref<108x4xf32, #tpu.memory_space<vmem>>, vector<36x4xf32>
    %cst_77 = arith.constant dense<0.000000e+00> : vector<512x4xf32>
    %105 = tpu.matmul %103, %104, %cst_77 {dimension_numbers = #tpu.dot_dimension_numbers<[1], [0], [0], [1], [0, 0, 1, 1], [], []>} : vector<512x36xf32>, vector<36x4xf32>, vector<512x4xf32> -> vector<512x4xf32>
    %106 = vector.extract_strided_slice %101 {offsets = [1, 0, 0, 0], sizes = [8, 8, 8, 36], strides = [1, 1, 1, 1]} : vector<10x8x8x36xf32> to vector<8x8x8x36xf32>
    %107 = vector.shape_cast %106 : vector<8x8x8x36xf32> to vector<512x36xf32>
    %c36_78 = arith.constant 36 : index
    %c0_79 = arith.constant 0 : index
    %108 = vector.load %arg3[%c36_78, %c0_79] : memref<108x4xf32, #tpu.memory_space<vmem>>, vector<36x4xf32>
    %cst_80 = arith.constant dense<0.000000e+00> : vector<512x4xf32>
    %109 = tpu.matmul %107, %108, %cst_80 {dimension_numbers = #tpu.dot_dimension_numbers<[1], [0], [0], [1], [0, 0, 1, 1], [], []>} : vector<512x36xf32>, vector<36x4xf32>, vector<512x4xf32> -> vector<512x4xf32>
    %110 = arith.addf %105, %109 : vector<512x4xf32>
    %111 = vector.extract_strided_slice %101 {offsets = [2, 0, 0, 0], sizes = [8, 8, 8, 36], strides = [1, 1, 1, 1]} : vector<10x8x8x36xf32> to vector<8x8x8x36xf32>
    %112 = vector.shape_cast %111 : vector<8x8x8x36xf32> to vector<512x36xf32>
    %c72_81 = arith.constant 72 : index
    %c0_82 = arith.constant 0 : index
    %113 = vector.load %arg3[%c72_81, %c0_82] : memref<108x4xf32, #tpu.memory_space<vmem>>, vector<36x4xf32>
    %cst_83 = arith.constant dense<0.000000e+00> : vector<512x4xf32>
    %114 = tpu.matmul %112, %113, %cst_83 {dimension_numbers = #tpu.dot_dimension_numbers<[1], [0], [0], [1], [0, 0, 1, 1], [], []>} : vector<512x36xf32>, vector<36x4xf32>, vector<512x4xf32> -> vector<512x4xf32>
    %115 = arith.addf %110, %114 : vector<512x4xf32>
    %116 = arith.mulf %115, %115 : vector<512x4xf32>
    %117 = tpu.concatenate %115, %116 in 1 : vector<512x4xf32>, vector<512x4xf32> -> vector<512x8xf32>
    %cst_84 = arith.constant dense<0.000000e+00> : vector<8xf32>
    %118 = vector.multi_reduction <add>, %117, %cst_84 [0] : vector<512x8xf32> to vector<8xf32>
    %119 = vector.shape_cast %118 : vector<8xf32> to vector<1x8xf32>
    %120 = vector.extract_strided_slice %119 {offsets = [0, 0], sizes = [1, 4], strides = [1, 1]} : vector<1x8xf32> to vector<1x4xf32>
    %cst_85 = arith.constant 0.001953125 : f32
    %121 = vector.broadcast %cst_85 : f32 to vector<1x4xf32>
    %122 = arith.mulf %120, %121 : vector<1x4xf32>
    %123 = vector.extract_strided_slice %119 {offsets = [0, 4], sizes = [1, 4], strides = [1, 1]} : vector<1x8xf32> to vector<1x4xf32>
    %cst_86 = arith.constant 0.001953125 : f32
    %124 = vector.broadcast %cst_86 : f32 to vector<1x4xf32>
    %125 = arith.mulf %123, %124 : vector<1x4xf32>
    %126 = arith.mulf %122, %122 : vector<1x4xf32>
    %127 = arith.subf %125, %126 : vector<1x4xf32>
    %128 = vector.broadcast %122 : vector<1x4xf32> to vector<512x4xf32>
    %129 = arith.subf %115, %128 : vector<512x4xf32>
    %cst_87 = arith.constant 9.99999974E-6 : f32
    %130 = vector.broadcast %cst_87 : f32 to vector<1x4xf32>
    %131 = arith.addf %127, %130 : vector<1x4xf32>
    %132 = math.rsqrt %131 : vector<1x4xf32>
    %133 = vector.broadcast %132 : vector<1x4xf32> to vector<512x4xf32>
    %134 = arith.mulf %129, %133 : vector<512x4xf32>
    %c0_88 = arith.constant 0 : index
    %c0_89 = arith.constant 0 : index
    %c0_90 = arith.constant 0 : index
    %c0_91 = arith.constant 0 : index
    %c0_92 = arith.constant 0 : index
    %135 = vector.load %arg1[%c0_88, %c0_89, %c0_90, %c0_91, %c0_92] : memref<1x8x8x8x4xf32, #tpu.memory_space<vmem>>, vector<1x8x8x8x4xf32>
    %136 = vector.shape_cast %135 : vector<1x8x8x8x4xf32> to vector<8x8x8x4xf32>
    %137 = vector.shape_cast %134 : vector<512x4xf32> to vector<8x8x8x4xf32>
    %138 = arith.addf %136, %137 : vector<8x8x8x4xf32>
    %c0_93 = arith.constant 0 : index
    %c0_94 = arith.constant 0 : index
    %c0_95 = arith.constant 0 : index
    %c0_96 = arith.constant 0 : index
    %c0_97 = arith.constant 0 : index
    %139 = vector.load %arg4[%c0_93, %c0_94, %c0_95, %c0_96, %c0_97] : memref<1x8x8x8x4xf32, #tpu.memory_space<vmem>>, vector<1x8x8x8x4xf32>
    %140 = vector.shape_cast %139 : vector<1x8x8x8x4xf32> to vector<8x8x8x4xf32>
    %141 = vector.shape_cast %138 : vector<8x8x8x4xf32> to vector<1x8x8x8x4xf32>
    tpu.vector_store %arg4[%c0_93, %c0_94, %c0_95, %c0_96, %c0_97], %141 {strides = array<i32>} : memref<1x8x8x8x4xf32, #tpu.memory_space<vmem>>, vector<1x8x8x8x4xf32>,
    return
  }
  func.func @transform_0(%arg0: i32) -> (i32, i32, i32, i32, i32) {
    %c0_i32 = arith.constant 0 : i32
    %c0_i32_0 = arith.constant 0 : i32
    %c0_i32_1 = arith.constant 0 : i32
    %c0_i32_2 = arith.constant 0 : i32
    %c0_i32_3 = arith.constant 0 : i32
    return %arg0, %c0_i32, %c0_i32_0, %c0_i32_1, %c0_i32_2 : i32, i32, i32, i32, i32
  }
  func.func @transform_1(%arg0: i32) -> (i32, i32) {
    %c0_i32 = arith.constant 0 : i32
    %c0_i32_0 = arith.constant 0 : i32
    %c0_i32_1 = arith.constant 0 : i32
    return %c0_i32, %c0_i32_0 : i32, i32
  }
  func.func @transform_2(%arg0: i32) -> (i32, i32) {
    %c0_i32 = arith.constant 0 : i32
    %c0_i32_0 = arith.constant 0 : i32
    %c0_i32_1 = arith.constant 0 : i32
    return %c0_i32, %c0_i32_0 : i32, i32
  }
  func.func @transform_3(%arg0: i32) -> (i32, i32, i32, i32, i32) {
    %c0_i32 = arith.constant 0 : i32
    %c0_i32_0 = arith.constant 0 : i32
    %c0_i32_1 = arith.constant 0 : i32
    %c0_i32_2 = arith.constant 0 : i32
    %c0_i32_3 = arith.constant 0 : i32
    return %arg0, %c0_i32, %c0_i32_0, %c0_i32_1, %c0_i32_2 : i32, i32, i32, i32, i32
  }
}

</mosaic_0001>

<llo_original>
// kernel: residual_block_forward.1
$region0: #{residual_block_forward.1}
  #allocation0 [shape = 'u32[]', space=smem, size = 0x4, offset = 0x4, fixed_abs, tag = 'smem constant byte address 0x4 - core index']
  #allocation1 [shape = 'u32[72,128]{1,0:T(1,128)}', space=vmem, size = 0x9000, scoped, tag = 'internal scratch']
  #allocation2 [shape = 'f32[10,10,8,4]{3,2,1,0:T(8,128)}', space=vmem, size = 0x64000, scoped, tag = 'scratch operand']
  %s0 = inlined_call_operand.vmem [shape: f32[2,8,8,8,4], index: 0, kind: input, shape index: {}]
  %s1 = inlined_call_operand.vmem [shape: f32[108,4], index: 1, kind: input, shape index: {}]
  %s2 = inlined_call_operand.vmem [shape: f32[108,4], index: 2, kind: input, shape index: {}]
  %s3 = inlined_call_operand.vmem [shape: f32[2,8,8,8,4], index: 3, kind: output, shape index: {}]
  %s4 = sld [smem:[#allocation0]]
  $region45: #{residual_block_forward.1} parent=0
    _
  %s6 = ssub.s32 1, %s4
  %s7 = scalar_select 0, %s6, %s4
  loop: start=0, step=1, limit=4
  $region2: #{residual_block_forward.1} parent=0 // loop_pre_header
    _
  $region3: #{residual_block_forward.1} parent=0 // loop_header
    %s9 = sphi 0, %s13
    %p10 = scmp.ge.s32.totalorder %s9, 4
    %s19 = sphi 0, %s21
    %s22 = sphi 0, %s19
    %s23 = sphi 0, %s22
    %s39 = sphi 0, %s23
    %s43 = sphi 0, %s43
    %s45 = sphi 0, %s43
    %s46 = sphi 0, %s45
    %s60 = sphi 0, %s46
    %s64 = sphi 0, %s64
    %s66 = sphi 0, %s64
    %s67 = sphi 0, %s66
    %s81 = sphi 0, %s67
    %s87 = sphi 0, %s89
    %s90 = sphi 0, %s87
    %s91 = sphi 0, %s90
    %s107 = sphi 0, %s91
  $region4: #{residual_block_forward.1} parent=0 // loop_header_branch
    %12 = sbr.rel (%p10) target = $region8
  $region5: #{residual_block_forward.1} parent=0 // loop_body
    %s14 = ssub.s32 %s9, 1
    %s15 = ssub.s32 %s9, 2
    %s16 = sadd.s32 %s9, 1
    %s17 = ssub.s32 %s9, %s16
    %p18 = scmp.eq.s32.totalorder %s17, 0
    %s20 = sadd.s32 %s19, 1
    %s21 = scalar_select %p18, %s19, %s20
    %p24 = pneg %p18
    %p25 = scmp.eq.s32.totalorder %s9, 1
    %p26 = por %p24, %p25
    %p27 = scmp.ne.s32.totalorder %s19, %s22
    %p28 = scmp.eq.s32.totalorder %s9, 0
    %p29 = por %p27, %p28
    %p30 = scmp.ne.s32.totalorder %s19, %s22
    %p31 = scmp.eq.s32.totalorder %s14, 1
    %p32 = por %p30, %p31
    %p33 = scmp.ne.s32.totalorder %s22, %s23
    %p34 = scmp.eq.s32.totalorder %s14, 0
    %p35 = por %p33, %p34
    %p36 = scmp.ne.s32.totalorder %s22, %s23
    %p37 = scmp.eq.s32.totalorder %s15, 1
    %p38 = por %p36, %p37
    %p40 = scmp.ne.s32.totalorder %s23, %s39
    %p41 = scmp.eq.s32.totalorder %s15, 0
    %p42 = por %p40, %p41
    %s44 = sadd.s32 %s43, 1
    %p47 = scmp.eq.s32.totalorder %s9, 1
    %p48 = scmp.ne.s32.totalorder %s43, %s45
    %p49 = scmp.eq.s32.totalorder %s9, 0
    %p50 = por %p48, %p49
    %p51 = scmp.ne.s32.totalorder %s43, %s45
    %p52 = scmp.eq.s32.totalorder %s14, 1
    %p53 = por %p51, %p52
    %p54 = scmp.ne.s32.totalorder %s45, %s46
    %p55 = scmp.eq.s32.totalorder %s14, 0
    %p56 = por %p54, %p55
    %p57 = scmp.ne.s32.totalorder %s45, %s46
    %p58 = scmp.eq.s32.totalorder %s15, 1
    %p59 = por %p57, %p58
    %p61 = scmp.ne.s32.totalorder %s46, %s60
    %p62 = scmp.eq.s32.totalorder %s15, 0
    %p63 = por %p61, %p62
    %s65 = sadd.s32 %s64, 1
    %p68 = scmp.eq.s32.totalorder %s9, 1
    %p69 = scmp.ne.s32.totalorder %s64, %s66
    %p70 = scmp.eq.s32.totalorder %s9, 0
    %p71 = por %p69, %p70
    %p72 = scmp.ne.s32.totalorder %s64, %s66
    %p73 = scmp.eq.s32.totalorder %s14, 1
    %p74 = por %p72, %p73
    %p75 = scmp.ne.s32.totalorder %s66, %s67
    %p76 = scmp.eq.s32.totalorder %s14, 0
    %p77 = por %p75, %p76
    %p78 = scmp.ne.s32.totalorder %s66, %s67
    %p79 = scmp.eq.s32.totalorder %s15, 1
    %p80 = por %p78, %p79
    %p82 = scmp.ne.s32.totalorder %s67, %s81
    %p83 = scmp.eq.s32.totalorder %s15, 0
    %p84 = por %p82, %p83
    %s85 = ssub.s32 %s9, %s16
    %p86 = scmp.eq.s32.totalorder %s85, 0
    %s88 = sadd.s32 %s87, 1
    %s89 = scalar_select %p86, %s87, %s88
    %p92 = pneg %p86
    %p93 = scmp.eq.s32.totalorder %s9, 1
    %p94 = por %p92, %p93
    %p95 = scmp.ne.s32.totalorder %s87, %s90
    %p96 = scmp.eq.s32.totalorder %s9, 0
    %p97 = por %p95, %p96
    %p98 = scmp.ne.s32.totalorder %s87, %s90
    %p99 = scmp.eq.s32.totalorder %s14, 1
    %p100 = por %p98, %p99
    %p101 = scmp.ne.s32.totalorder %s90, %s91
    %p102 = scmp.eq.s32.totalorder %s14, 0
    %p103 = por %p101, %p102
    %p104 = scmp.ne.s32.totalorder %s90, %s91
    %p105 = scmp.eq.s32.totalorder %s15, 1
    %p106 = por %p104, %p105
    %p108 = scmp.ne.s32.totalorder %s91, %s107
    %p109 = scmp.eq.s32.totalorder %s15, 0
    %p110 = por %p108, %p109
    %p111 = scmp.le.s32.totalorder 1, %s9
    %p112 = scmp.lt.s32.totalorder %s9, 3
    %p113 = pnand %p111, %p112
    %p114 = pneg %p113
    // Predicated region
    $region9: #{residual_block_forward.1} parent=5 // pred_check
      _
    $region10: #{residual_block_forward.1} parent=5 // pred_check_branch
      %116 = sbr.rel (%p113) target = $region12
    $region11: #{residual_block_forward.1} parent=5 // pred_region
      %s117 = ssub.s32 %s9, 1
      // Predicated region
      $region13: #{residual_block_forward.1} parent=11 // pred_check
        %p118 = pneg %p56
      $region14: #{residual_block_forward.1} parent=11 // pred_check_branch
        %120 = sbr.rel (%p118) target = $region16
      $region15: #{residual_block_forward.1} parent=11 // pred_region
        _
      $region16: #{residual_block_forward.1} parent=11 // pred_fallthru
        _
      // Predicated region
      $region17: #{residual_block_forward.1} parent=11 // pred_check
        %p121 = pneg %p77
      $region18: #{residual_block_forward.1} parent=11 // pred_check_branch
        %123 = sbr.rel (%p121) target = $region20
      $region19: #{residual_block_forward.1} parent=11 // pred_region
        _
      $region20: #{residual_block_forward.1} parent=11 // pred_fallthru
        _
    $region12: #{residual_block_forward.1} parent=5 // pred_fallthru
      _
    %p124 = scmp.lt.s32.totalorder %s9, 2
    // Predicated region
    $region21: #{residual_block_forward.1} parent=5 // pred_check
      %p125 = pneg %p124
    $region22: #{residual_block_forward.1} parent=5 // pred_check_branch
      %127 = sbr.rel (%p125) target = $region24
    $region23: #{residual_block_forward.1} parent=5 // pred_region
      // Predicated region
      $region25: #{residual_block_forward.1} parent=23 // pred_check
        %p128 = pneg %p29
      $region26: #{residual_block_forward.1} parent=23 // pred_check_branch
        %130 = sbr.rel (%p128) target = $region28
      $region27: #{residual_block_forward.1} parent=23 // pred_region
        %p131 = scmp.lt.s32.totalorder %s9, 1
        %s132 = scalar_select %p131, %s9, 1
        %s133 = smul.addr %s132, 64
        %s134 = smul.addr %s133, 8
        %s135 = scalar_lea.vmem %s0, %s134
      $region28: #{residual_block_forward.1} parent=23 // pred_fallthru
        _
    $region24: #{residual_block_forward.1} parent=5 // pred_fallthru
      _
    %p136 = scmp.le.s32.totalorder 1, %s9
    %p137 = scmp.lt.s32.totalorder %s9, 3
    %p138 = pnand %p136, %p137
    %p139 = pneg %p138
    // Predicated region
    $region29: #{residual_block_forward.1} parent=5 // pred_check
      _
    $region30: #{residual_block_forward.1} parent=5 // pred_check_branch
      %141 = sbr.rel (%p138) target = $region32
    $region31: #{residual_block_forward.1} parent=5 // pred_region
      %s142 = ssub.s32 %s9, 1
      %p143 = scmp.lt.s32.totalorder %s14, 1
      %s144 = scalar_select %p143, %s14, 1
      %s145 = smul.addr %s144, 64
      %s146 = smul.addr %s145, 8
      %s147 = scalar_lea.vmem %s0, %s146
      %p148 = pneg %p35
      %p149 = pneg %p32
      %p150 = pneg %p56
      %p151 = pneg %p53
      %p152 = pneg %p77
      %p153 = pneg %p74
      %p154 = pneg %p103
      %p155 = pneg %p100
      %p156 = scmp.lt.s32.totalorder %s14, 1
      %s157 = scalar_select %p156, %s14, 1
      %s158 = smul.addr %s157, 64
      %s159 = smul.addr %s158, 8
      %s160 = scalar_lea.vmem %s3, %s159
      %p161 = scmp.lt.s32.totalorder %s14, 1
      %s162 = scalar_select %p161, %s14, 1
      %s163 = smul.addr %s162, 64
      %s164 = smul.addr %s163, 8
      %s165 = scalar_lea.vmem %s0, %s164
      %p166 = scmp.lt.s32.totalorder %s14, 1
      %s167 = scalar_select %p166, %s14, 1
      %s168 = smul.addr %s167, 64
      %s169 = smul.addr %s168, 8
      %s170 = scalar_lea.vmem %s3, %s169
      %v171 = vld [vmem:[%s165] sm:$0xff]
      %v172 = vld [vmem:[%s165 + $0x8] sm:$0xff]
      %v173 = vld [vmem:[%s165 + $0x10] sm:$0xff]
      %v174 = vld [vmem:[%s165 + $0x18] sm:$0xff]
      %v175 = vld [vmem:[%s165 + $0x20] sm:$0xff]
      %v176 = vld [vmem:[%s165 + $0x28] sm:$0xff]
      %v177 = vld [vmem:[%s165 + $0x30] sm:$0xff]
      %v178 = vld [vmem:[%s165 + $0x38] sm:$0xff]
      %v179 = vld [vmem:[%s165 + $0x40] sm:$0xff]
      %v180 = vld [vmem:[%s165 + $0x48] sm:$0xff]
      %v181 = vld [vmem:[%s165 + $0x50] sm:$0xff]
      %v182 = vld [vmem:[%s165 + $0x58] sm:$0xff]
      %v183 = vld [vmem:[%s165 + $0x60] sm:$0xff]
      %v184 = vld [vmem:[%s165 + $0x68] sm:$0xff]
      %v185 = vld [vmem:[%s165 + $0x70] sm:$0xff]
      %v186 = vld [vmem:[%s165 + $0x78] sm:$0xff]
      %v187 = vld [vmem:[%s165 + $0x80] sm:$0xff]
      %v188 = vld [vmem:[%s165 + $0x88] sm:$0xff]
      %v189 = vld [vmem:[%s165 + $0x90] sm:$0xff]
      %v190 = vld [vmem:[%s165 + $0x98] sm:$0xff]
      %v191 = vld [vmem:[%s165 + $0xa0] sm:$0xff]
      %v192 = vld [vmem:[%s165 + $0xa8] sm:$0xff]
      %v193 = vld [vmem:[%s165 + $0xb0] sm:$0xff]
      %v194 = vld [vmem:[%s165 + $0xb8] sm:$0xff]
      %v195 = vld [vmem:[%s165 + $0xc0] sm:$0xff]
      %v196 = vld [vmem:[%s165 + $0xc8] sm:$0xff]
      %v197 = vld [vmem:[%s165 + $0xd0] sm:$0xff]
      %v198 = vld [vmem:[%s165 + $0xd8] sm:$0xff]
      %v199 = vld [vmem:[%s165 + $0xe0] sm:$0xff]
      %v200 = vld [vmem:[%s165 + $0xe8] sm:$0xff]
      %v201 = vld [vmem:[%s165 + $0xf0] sm:$0xff]
      %v202 = vld [vmem:[%s165 + $0xf8] sm:$0xff]
      %v203 = vld [vmem:[%s165 + $0x100] sm:$0xff]
      %v204 = vld [vmem:[%s165 + $0x108] sm:$0xff]
      %v205 = vld [vmem:[%s165 + $0x110] sm:$0xff]
      %v206 = vld [vmem:[%s165 + $0x118] sm:$0xff]
      %v207 = vld [vmem:[%s165 + $0x120] sm:$0xff]
      %v208 = vld [vmem:[%s165 + $0x128] sm:$0xff]
      %v209 = vld [vmem:[%s165 + $0x130] sm:$0xff]
      %v210 = vld [vmem:[%s165 + $0x138] sm:$0xff]
      %v211 = vld [vmem:[%s165 + $0x140] sm:$0xff]
      %v212 = vld [vmem:[%s165 + $0x148] sm:$0xff]
      %v213 = vld [vmem:[%s165 + $0x150] sm:$0xff]
      %v214 = vld [vmem:[%s165 + $0x158] sm:$0xff]
      %v215 = vld [vmem:[%s165 + $0x160] sm:$0xff]
      %v216 = vld [vmem:[%s165 + $0x168] sm:$0xff]
      %v217 = vld [vmem:[%s165 + $0x170] sm:$0xff]
      %v218 = vld [vmem:[%s165 + $0x178] sm:$0xff]
      %v219 = vld [vmem:[%s165 + $0x180] sm:$0xff]
      %v220 = vld [vmem:[%s165 + $0x188] sm:$0xff]
      %v221 = vld [vmem:[%s165 + $0x190] sm:$0xff]
      %v222 = vld [vmem:[%s165 + $0x198] sm:$0xff]
      %v223 = vld [vmem:[%s165 + $0x1a0] sm:$0xff]
      %v224 = vld [vmem:[%s165 + $0x1a8] sm:$0xff]
      %v225 = vld [vmem:[%s165 + $0x1b0] sm:$0xff]
      %v226 = vld [vmem:[%s165 + $0x1b8] sm:$0xff]
      %v227 = vld [vmem:[%s165 + $0x1c0] sm:$0xff]
      %v228 = vld [vmem:[%s165 + $0x1c8] sm:$0xff]
      %v229 = vld [vmem:[%s165 + $0x1d0] sm:$0xff]
      %v230 = vld [vmem:[%s165 + $0x1d8] sm:$0xff]
      %v231 = vld [vmem:[%s165 + $0x1e0] sm:$0xff]
      %v232 = vld [vmem:[%s165 + $0x1e8] sm:$0xff]
      %v233 = vld [vmem:[%s165 + $0x1f0] sm:$0xff]
      %v234 = vld [vmem:[%s165 + $0x1f8] sm:$0xff]
      %s235 = scalar_lea.vmem [#allocation2], 88
      %vm236 = vcmask 31744
      %237 = vst.msk [vmem:[%s235] sm:$0xff] %vm236, %v171
      %238 = vst.msk [vmem:[%s235 + $0x8] sm:$0xff] %vm236, %v172
      %239 = vst.msk [vmem:[%s235 + $0x10] sm:$0xff] %vm236, %v173
      %240 = vst.msk [vmem:[%s235 + $0x18] sm:$0xff] %vm236, %v174
      %241 = vst.msk [vmem:[%s235 + $0x20] sm:$0xff] %vm236, %v175
      %242 = vst.msk [vmem:[%s235 + $0x28] sm:$0xff] %vm236, %v176
      %243 = vst.msk [vmem:[%s235 + $0x30] sm:$0xff] %vm236, %v177
      %244 = vst.msk [vmem:[%s235 + $0x38] sm:$0xff] %vm236, %v178
      %245 = vst.msk [vmem:[%s235 + $0x50] sm:$0xff] %vm236, %v179
      %246 = vst.msk [vmem:[%s235 + $0x58] sm:$0xff] %vm236, %v180
      %247 = vst.msk [vmem:[%s235 + $0x60] sm:$0xff] %vm236, %v181
      %248 = vst.msk [vmem:[%s235 + $0x68] sm:$0xff] %vm236, %v182
      %249 = vst.msk [vmem:[%s235 + $0x70] sm:$0xff] %vm236, %v183
      %250 = vst.msk [vmem:[%s235 + $0x78] sm:$0xff] %vm236, %v184
      %251 = vst.msk [vmem:[%s235 + $0x80] sm:$0xff] %vm236, %v185
      %252 = vst.msk [vmem:[%s235 + $0x88] sm:$0xff] %vm236, %v186
      %253 = vst.msk [vmem:[%s235 + $0xa0] sm:$0xff] %vm236, %v187
      %254 = vst.msk [vmem:[%s235 + $0xa8] sm:$0xff] %vm236, %v188
      %255 = vst.msk [vmem:[%s235 + $0xb0] sm:$0xff] %vm236, %v189
      %256 = vst.msk [vmem:[%s235 + $0xb8] sm:$0xff] %vm236, %v190
      %257 = vst.msk [vmem:[%s235 + $0xc0] sm:$0xff] %vm236, %v191
      %258 = vst.msk [vmem:[%s235 + $0xc8] sm:$0xff] %vm236, %v192
      %259 = vst.msk [vmem:[%s235 + $0xd0] sm:$0xff] %vm236, %v193
      %260 = vst.msk [vmem:[%s235 + $0xd8] sm:$0xff] %vm236, %v194
      %261 = vst.msk [vmem:[%s235 + $0xf0] sm:$0xff] %vm236, %v195
      %262 = vst.msk [vmem:[%s235 + $0xf8] sm:$0xff] %vm236, %v196
      %263 = vst.msk [vmem:[%s235 + $0x100] sm:$0xff] %vm236, %v197
      %264 = vst.msk [vmem:[%s235 + $0x108] sm:$0xff] %vm236, %v198
      %265 = vst.msk [vmem:[%s235 + $0x110] sm:$0xff] %vm236, %v199
      %266 = vst.msk [vmem:[%s235 + $0x118] sm:$0xff] %vm236, %v200
      %267 = vst.msk [vmem:[%s235 + $0x120] sm:$0xff] %vm236, %v201
      %268 = vst.msk [vmem:[%s235 + $0x128] sm:$0xff] %vm236, %v202
      %269 = vst.msk [vmem:[%s235 + $0x140] sm:$0xff] %vm236, %v203
      %270 = vst.msk [vmem:[%s235 + $0x148] sm:$0xff] %vm236, %v204
      %271 = vst.msk [vmem:[%s235 + $0x150] sm:$0xff] %vm236, %v205
      %272 = vst.msk [vmem:[%s235 + $0x158] sm:$0xff] %vm236, %v206
      %273 = vst.msk [vmem:[%s235 + $0x160] sm:$0xff] %vm236, %v207
      %274 = vst.msk [vmem:[%s235 + $0x168] sm:$0xff] %vm236, %v208
      %275 = vst.msk [vmem:[%s235 + $0x170] sm:$0xff] %vm236, %v209
      %276 = vst.msk [vmem:[%s235 + $0x178] sm:$0xff] %vm236, %v210
      %277 = vst.msk [vmem:[%s235 + $0x190] sm:$0xff] %vm236, %v211
      %278 = vst.msk [vmem:[%s235 + $0x198] sm:$0xff] %vm236, %v212
      %279 = vst.msk [vmem:[%s235 + $0x1a0] sm:$0xff] %vm236, %v213
      %280 = vst.msk [vmem:[%s235 + $0x1a8] sm:$0xff] %vm236, %v214
      %281 = vst.msk [vmem:[%s235 + $0x1b0] sm:$0xff] %vm236, %v215
      %282 = vst.msk [vmem:[%s235 + $0x1b8] sm:$0xff] %vm236, %v216
      %283 = vst.msk [vmem:[%s235 + $0x1c0] sm:$0xff] %vm236, %v217
      %284 = vst.msk [vmem:[%s235 + $0x1c8] sm:$0xff] %vm236, %v218
      %285 = vst.msk [vmem:[%s235 + $0x1e0] sm:$0xff] %vm236, %v219
      %286 = vst.msk [vmem:[%s235 + $0x1e8] sm:$0xff] %vm236, %v220
      %287 = vst.msk [vmem:[%s235 + $0x1f0] sm:$0xff] %vm236, %v221
      %288 = vst.msk [vmem:[%s235 + $0x1f8] sm:$0xff] %vm236, %v222
      %289 = vst.msk [vmem:[%s235 + $0x200] sm:$0xff] %vm236, %v223
      %290 = vst.msk [vmem:[%s235 + $0x208] sm:$0xff] %vm236, %v224
      %291 = vst.msk [vmem:[%s235 + $0x210] sm:$0xff] %vm236, %v225
      %292 = vst.msk [vmem:[%s235 + $0x218] sm:$0xff] %vm236, %v226
      %293 = vst.msk [vmem:[%s235 + $0x230] sm:$0xff] %vm236, %v227
      %294 = vst.msk [vmem:[%s235 + $0x238] sm:$0xff] %vm236, %v228
      %295 = vst.msk [vmem:[%s235 + $0x240] sm:$0xff] %vm236, %v229
      %296 = vst.msk [vmem:[%s235 + $0x248] sm:$0xff] %vm236, %v230
      %297 = vst.msk [vmem:[%s235 + $0x250] sm:$0xff] %vm236, %v231
      %298 = vst.msk [vmem:[%s235 + $0x258] sm:$0xff] %vm236, %v232
      %299 = vst.msk [vmem:[%s235 + $0x260] sm:$0xff] %vm236, %v233
      %300 = vst.msk [vmem:[%s235 + $0x268] sm:$0xff] %vm236, %v234
      %s301 = scalar_lea.vmem [#allocation2], 8
      %302 = vst.msk [vmem:[%s301] sm:$0xff] %vm236, %v179
      %303 = vst.msk [vmem:[%s301 + $0x8] sm:$0xff] %vm236, %v180
      %304 = vst.msk [vmem:[%s301 + $0x10] sm:$0xff] %vm236, %v181
      %305 = vst.msk [vmem:[%s301 + $0x18] sm:$0xff] %vm236, %v182
      %306 = vst.msk [vmem:[%s301 + $0x20] sm:$0xff] %vm236, %v183
      %307 = vst.msk [vmem:[%s301 + $0x28] sm:$0xff] %vm236, %v184
      %308 = vst.msk [vmem:[%s301 + $0x30] sm:$0xff] %vm236, %v185
      %309 = vst.msk [vmem:[%s301 + $0x38] sm:$0xff] %vm236, %v186
      %s310 = scalar_lea.vmem [#allocation2], 728
      %311 = vst.msk [vmem:[%s310] sm:$0xff] %vm236, %v219
      %312 = vst.msk [vmem:[%s310 + $0x8] sm:$0xff] %vm236, %v220
      %313 = vst.msk [vmem:[%s310 + $0x10] sm:$0xff] %vm236, %v221
      %314 = vst.msk [vmem:[%s310 + $0x18] sm:$0xff] %vm236, %v222
      %315 = vst.msk [vmem:[%s310 + $0x20] sm:$0xff] %vm236, %v223
      %316 = vst.msk [vmem:[%s310 + $0x28] sm:$0xff] %vm236, %v224
      %317 = vst.msk [vmem:[%s310 + $0x30] sm:$0xff] %vm236, %v225
      %318 = vst.msk [vmem:[%s310 + $0x38] sm:$0xff] %vm236, %v226
      %s319 = scalar_lea.vmem [#allocation2], 16
      %v320 = vld [vmem:[%s319] sm:$0xff]
      %v321 = vld [vmem:[%s319 + $0x50] sm:$0xff]
      %v322 = vld [vmem:[%s319 + $0xa0] sm:$0xff]
      %v323 = vld [vmem:[%s319 + $0xf0] sm:$0xff]
      %v324 = vld [vmem:[%s319 + $0x140] sm:$0xff]
      %v325 = vld [vmem:[%s319 + $0x190] sm:$0xff]
      %v326 = vld [vmem:[%s319 + $0x1e0] sm:$0xff]
      %v327 = vld [vmem:[%s319 + $0x230] sm:$0xff]
      %v328 = vld [vmem:[%s319 + $0x280] sm:$0xff]
      %v329 = vld [vmem:[%s319 + $0x2d0] sm:$0xff]
      %330 = vst.msk [vmem:[#allocation2] sm:$0xff] %vm236, %v320
      %331 = vst.msk [vmem:[#allocation2 + $0x50] sm:$0xff] %vm236, %v321
      %332 = vst.msk [vmem:[#allocation2 + $0xa0] sm:$0xff] %vm236, %v322
      %333 = vst.msk [vmem:[#allocation2 + $0xf0] sm:$0xff] %vm236, %v323
      %334 = vst.msk [vmem:[#allocation2 + $0x140] sm:$0xff] %vm236, %v324
      %335 = vst.msk [vmem:[#allocation2 + $0x190] sm:$0xff] %vm236, %v325
      %336 = vst.msk [vmem:[#allocation2 + $0x1e0] sm:$0xff] %vm236, %v326
      %337 = vst.msk [vmem:[#allocation2 + $0x230] sm:$0xff] %vm236, %v327
      %338 = vst.msk [vmem:[#allocation2 + $0x280] sm:$0xff] %vm236, %v328
      %339 = vst.msk [vmem:[#allocation2 + $0x2d0] sm:$0xff] %vm236, %v329
      %s340 = scalar_lea.vmem [#allocation2], 56
      %v341 = vld [vmem:[%s340] sm:$0xff]
      %v342 = vld [vmem:[%s340 + $0x50] sm:$0xff]
      %v343 = vld [vmem:[%s340 + $0xa0] sm:$0xff]
      %v344 = vld [vmem:[%s340 + $0xf0] sm:$0xff]
      %v345 = vld [vmem:[%s340 + $0x140] sm:$0xff]
      %v346 = vld [vmem:[%s340 + $0x190] sm:$0xff]
      %v347 = vld [vmem:[%s340 + $0x1e0] sm:$0xff]
      %v348 = vld [vmem:[%s340 + $0x230] sm:$0xff]
      %v349 = vld [vmem:[%s340 + $0x280] sm:$0xff]
      %v350 = vld [vmem:[%s340 + $0x2d0] sm:$0xff]
      %s351 = scalar_lea.vmem [#allocation2], 72
      %352 = vst.msk [vmem:[%s351] sm:$0xff] %vm236, %v341
      %353 = vst.msk [vmem:[%s351 + $0x50] sm:$0xff] %vm236, %v342
      %354 = vst.msk [vmem:[%s351 + $0xa0] sm:$0xff] %vm236, %v343
      %355 = vst.msk [vmem:[%s351 + $0xf0] sm:$0xff] %vm236, %v344
      %356 = vst.msk [vmem:[%s351 + $0x140] sm:$0xff] %vm236, %v345
      %357 = vst.msk [vmem:[%s351 + $0x190] sm:$0xff] %vm236, %v346
      %358 = vst.msk [vmem:[%s351 + $0x1e0] sm:$0xff] %vm236, %v347
      %359 = vst.msk [vmem:[%s351 + $0x230] sm:$0xff] %vm236, %v348
      %360 = vst.msk [vmem:[%s351 + $0x280] sm:$0xff] %vm236, %v349
      %361 = vst.msk [vmem:[%s351 + $0x2d0] sm:$0xff] %vm236, %v350
      %v362 = vld [vmem:[#allocation2] sm:$0xff]
      %v363 = vld [vmem:[#allocation2 + $0x8] sm:$0xff]
      %v364 = vld [vmem:[#allocation2 + $0x10] sm:$0xff]
      %v365 = vld [vmem:[#allocation2 + $0x18] sm:$0xff]
      %v366 = vld [vmem:[#allocation2 + $0x20] sm:$0xff]
      %v367 = vld [vmem:[#allocation2 + $0x28] sm:$0xff]
      %v368 = vld [vmem:[#allocation2 + $0x30] sm:$0xff]
      %v369 = vld [vmem:[#allocation2 + $0x38] sm:$0xff]
      %v370 = vld [vmem:[#allocation2 + $0x40] sm:$0xff]
      %v371 = vld [vmem:[#allocation2 + $0x48] sm:$0xff]
      %v372 = vld [vmem:[#allocation2 + $0x50] sm:$0xff]
      %v373 = vld [vmem:[#allocation2 + $0x58] sm:$0xff]
      %v374 = vld [vmem:[#allocation2 + $0x60] sm:$0xff]
      %v375 = vld [vmem:[#allocation2 + $0x68] sm:$0xff]
      %v376 = vld [vmem:[#allocation2 + $0x70] sm:$0xff]
      %v377 = vld [vmem:[#allocation2 + $0x78] sm:$0xff]
      %v378 = vld [vmem:[#allocation2 + $0x80] sm:$0xff]
      %v379 = vld [vmem:[#allocation2 + $0x88] sm:$0xff]
      %v380 = vld [vmem:[#allocation2 + $0x90] sm:$0xff]
      %v381 = vld [vmem:[#allocation2 + $0x98] sm:$0xff]
      %v382 = vld [vmem:[#allocation2 + $0xa0] sm:$0xff]
      %v383 = vld [vmem:[#allocation2 + $0xa8] sm:$0xff]
      %v384 = vld [vmem:[#allocation2 + $0xb0] sm:$0xff]
      %v385 = vld [vmem:[#allocation2 + $0xb8] sm:$0xff]
      %v386 = vld [vmem:[#allocation2 + $0xc0] sm:$0xff]
      %v387 = vld [vmem:[#allocation2 + $0xc8] sm:$0xff]
      %v388 = vld [vmem:[#allocation2 + $0xd0] sm:$0xff]
      %v389 = vld [vmem:[#allocation2 + $0xd8] sm:$0xff]
      %v390 = vld [vmem:[#allocation2 + $0xe0] sm:$0xff]
      %v391 = vld [vmem:[#allocation2 + $0xe8] sm:$0xff]
      %v392 = vld [vmem:[#allocation2 + $0xf0] sm:$0xff]
      %v393 = vld [vmem:[#allocation2 + $0xf8] sm:$0xff]
      %v394 = vld [vmem:[#allocation2 + $0x100] sm:$0xff]
      %v395 = vld [vmem:[#allocation2 + $0x108] sm:$0xff]
      %v396 = vld [vmem:[#allocation2 + $0x110] sm:$0xff]
      %v397 = vld [vmem:[#allocation2 + $0x118] sm:$0xff]
      %v398 = vld [vmem:[#allocation2 + $0x120] sm:$0xff]
      %v399 = vld [vmem:[#allocation2 + $0x128] sm:$0xff]
      %v400 = vld [vmem:[#allocation2 + $0x130] sm:$0xff]
      %v401 = vld [vmem:[#allocation2 + $0x138] sm:$0xff]
      %v402 = vld [vmem:[#allocation2 + $0x140] sm:$0xff]
      %v403 = vld [vmem:[#allocation2 + $0x148] sm:$0xff]
      %v404 = vld [vmem:[#allocation2 + $0x150] sm:$0xff]
      %v405 = vld [vmem:[#allocation2 + $0x158] sm:$0xff]
      %v406 = vld [vmem:[#allocation2 + $0x160] sm:$0xff]
      %v407 = vld [vmem:[#allocation2 + $0x168] sm:$0xff]
      %v408 = vld [vmem:[#allocation2 + $0x170] sm:$0xff]
      %v409 = vld [vmem:[#allocation2 + $0x178] sm:$0xff]
      %v410 = vld [vmem:[#allocation2 + $0x180] sm:$0xff]
      %v411 = vld [vmem:[#allocation2 + $0x188] sm:$0xff]
      %v412 = vld [vmem:[#allocation2 + $0x190] sm:$0xff]
      %v413 = vld [vmem:[#allocation2 + $0x198] sm:$0xff]
      %v414 = vld [vmem:[#allocation2 + $0x1a0] sm:$0xff]
      %v415 = vld [vmem:[#allocation2 + $0x1a8] sm:$0xff]
      %v416 = vld [vmem:[#allocation2 + $0x1b0] sm:$0xff]
      %v417 = vld [vmem:[#allocation2 + $0x1b8] sm:$0xff]
      %v418 = vld [vmem:[#allocation2 + $0x1c0] sm:$0xff]
      %v419 = vld [vmem:[#allocation2 + $0x1c8] sm:$0xff]
      %v420 = vld [vmem:[#allocation2 + $0x1d0] sm:$0xff]
      %v421 = vld [vmem:[#allocation2 + $0x1d8] sm:$0xff]
      %v422 = vld [vmem:[#allocation2 + $0x1e0] sm:$0xff]
      %v423 = vld [vmem:[#allocation2 + $0x1e8] sm:$0xff]
      %v424 = vld [vmem:[#allocation2 + $0x1f0] sm:$0xff]
      %v425 = vld [vmem:[#allocation2 + $0x1f8] sm:$0xff]
      %v426 = vld [vmem:[#allocation2 + $0x200] sm:$0xff]
      %v427 = vld [vmem:[#allocation2 + $0x208] sm:$0xff]
      %v428 = vld [vmem:[#allocation2 + $0x210] sm:$0xff]
      %v429 = vld [vmem:[#allocation2 + $0x218] sm:$0xff]
      %v430 = vld [vmem:[#allocation2 + $0x220] sm:$0xff]
      %v431 = vld [vmem:[#allocation2 + $0x228] sm:$0xff]
      %v432 = vld [vmem:[#allocation2 + $0x230] sm:$0xff]
      %v433 = vld [vmem:[#allocation2 + $0x238] sm:$0xff]
      %v434 = vld [vmem:[#allocation2 + $0x240] sm:$0xff]
      %v435 = vld [vmem:[#allocation2 + $0x248] sm:$0xff]
      %v436 = vld [vmem:[#allocation2 + $0x250] sm:$0xff]
      %v437 = vld [vmem:[#allocation2 + $0x258] sm:$0xff]
      %v438 = vld [vmem:[#allocation2 + $0x260] sm:$0xff]
      %v439 = vld [vmem:[#allocation2 + $0x268] sm:$0xff]
      %v440 = vld [vmem:[#allocation2 + $0x270] sm:$0xff]
      %v441 = vld [vmem:[#allocation2 + $0x278] sm:$0xff]
      %v442 = vld [vmem:[#allocation2 + $0x280] sm:$0xff]
      %v443 = vld [vmem:[#allocation2 + $0x288] sm:$0xff]
      %v444 = vld [vmem:[#allocation2 + $0x290] sm:$0xff]
      %v445 = vld [vmem:[#allocation2 + $0x298] sm:$0xff]
      %v446 = vld [vmem:[#allocation2 + $0x2a0] sm:$0xff]
      %v447 = vld [vmem:[#allocation2 + $0x2a8] sm:$0xff]
      %v448 = vld [vmem:[#allocation2 + $0x2b0] sm:$0xff]
      %v449 = vld [vmem:[#allocation2 + $0x2b8] sm:$0xff]
      %v450 = vld [vmem:[#allocation2 + $0x2c0] sm:$0xff]
      %v451 = vld [vmem:[#allocation2 + $0x2c8] sm:$0xff]
      %v452 = vld [vmem:[#allocation2 + $0x2d0] sm:$0xff]
      %v453 = vld [vmem:[#allocation2 + $0x2d8] sm:$0xff]
      %v454 = vld [vmem:[#allocation2 + $0x2e0] sm:$0xff]
      %v455 = vld [vmem:[#allocation2 + $0x2e8] sm:$0xff]
      %v456 = vld [vmem:[#allocation2 + $0x2f0] sm:$0xff]
      %v457 = vld [vmem:[#allocation2 + $0x2f8] sm:$0xff]
      %v458 = vld [vmem:[#allocation2 + $0x300] sm:$0xff]
      %v459 = vld [vmem:[#allocation2 + $0x308] sm:$0xff]
      %v460 = vld [vmem:[#allocation2 + $0x310] sm:$0xff]
      %v461 = vld [vmem:[#allocation2 + $0x318] sm:$0xff]
      %v542 = vrot.slane %v362, 1
      %v543 = vrot.slane %v363, 1
      %v544 = vrot.slane %v364, 1
      %v545 = vrot.slane %v365, 1
      %v546 = vrot.slane %v366, 1
      %v547 = vrot.slane %v367, 1
      %v548 = vrot.slane %v368, 1
      %v549 = vrot.slane %v369, 1
      %v550 = vrot.slane %v372, 1
      %v551 = vrot.slane %v373, 1
      %v552 = vrot.slane %v374, 1
      %v553 = vrot.slane %v375, 1
      %v554 = vrot.slane %v376, 1
      %v555 = vrot.slane %v377, 1
      %v556 = vrot.slane %v378, 1
      %v557 = vrot.slane %v379, 1
      %v558 = vrot.slane %v382, 1
      %v559 = vrot.slane %v383, 1
      %v560 = vrot.slane %v384, 1
      %v561 = vrot.slane %v385, 1
      %v562 = vrot.slane %v386, 1
      %v563 = vrot.slane %v387, 1
      %v564 = vrot.slane %v388, 1
      %v565 = vrot.slane %v389, 1
      %v566 = vrot.slane %v392, 1
      %v567 = vrot.slane %v393, 1
      %v568 = vrot.slane %v394, 1
      %v569 = vrot.slane %v395, 1
      %v570 = vrot.slane %v396, 1
      %v571 = vrot.slane %v397, 1
      %v572 = vrot.slane %v398, 1
      %v573 = vrot.slane %v399, 1
      %v574 = vrot.slane %v402, 1
      %v575 = vrot.slane %v403, 1
      %v576 = vrot.slane %v404, 1
      %v577 = vrot.slane %v405, 1
      %v578 = vrot.slane %v406, 1
      %v579 = vrot.slane %v407, 1
      %v580 = vrot.slane %v408, 1
      %v581 = vrot.slane %v409, 1
      %v582 = vrot.slane %v412, 1
      %v583 = vrot.slane %v413, 1
      %v584 = vrot.slane %v414, 1
      %v585 = vrot.slane %v415, 1
      %v586 = vrot.slane %v416, 1
      %v587 = vrot.slane %v417, 1
      %v588 = vrot.slane %v418, 1
      %v589 = vrot.slane %v419, 1
      %v590 = vrot.slane %v422, 1
      %v591 = vrot.slane %v423, 1
      %v592 = vrot.slane %v424, 1
      %v593 = vrot.slane %v425, 1
      %v594 = vrot.slane %v426, 1
      %v595 = vrot.slane %v427, 1
      %v596 = vrot.slane %v428, 1
      %v597 = vrot.slane %v429, 1
      %v598 = vrot.slane %v432, 1
      %v599 = vrot.slane %v433, 1
      %v600 = vrot.slane %v434, 1
      %v601 = vrot.slane %v435, 1
      %v602 = vrot.slane %v436, 1
      %v603 = vrot.slane %v437, 1
      %v604 = vrot.slane %v438, 1
      %v605 = vrot.slane %v439, 1
      %v606 = vrot.slane %v442, 1
      %v607 = vrot.slane %v443, 1
      %v608 = vrot.slane %v444, 1
      %v609 = vrot.slane %v445, 1
      %v610 = vrot.slane %v446, 1
      %v611 = vrot.slane %v447, 1
      %v612 = vrot.slane %v448, 1
      %v613 = vrot.slane %v449, 1
      %v614 = vrot.slane %v452, 1
      %v615 = vrot.slane %v453, 1
      %v616 = vrot.slane %v454, 1
      %v617 = vrot.slane %v455, 1
      %v618 = vrot.slane %v456, 1
      %v619 = vrot.slane %v457, 1
      %v620 = vrot.slane %v458, 1
      %v621 = vrot.slane %v459, 1
      %v702 = vrot.slane %v362, 7
      %v703 = vrot.slane %v363, 7
      %v704 = vrot.slane %v364, 7
      %v705 = vrot.slane %v365, 7
      %v706 = vrot.slane %v366, 7
      %v707 = vrot.slane %v367, 7
      %v708 = vrot.slane %v368, 7
      %v709 = vrot.slane %v369, 7
      %v710 = vrot.slane %v372, 7
      %v711 = vrot.slane %v373, 7
      %v712 = vrot.slane %v374, 7
      %v713 = vrot.slane %v375, 7
      %v714 = vrot.slane %v376, 7
      %v715 = vrot.slane %v377, 7
      %v716 = vrot.slane %v378, 7
      %v717 = vrot.slane %v379, 7
      %v718 = vrot.slane %v382, 7
      %v719 = vrot.slane %v383, 7
      %v720 = vrot.slane %v384, 7
      %v721 = vrot.slane %v385, 7
      %v722 = vrot.slane %v386, 7
      %v723 = vrot.slane %v387, 7
      %v724 = vrot.slane %v388, 7
      %v725 = vrot.slane %v389, 7
      %v726 = vrot.slane %v392, 7
      %v727 = vrot.slane %v393, 7
      %v728 = vrot.slane %v394, 7
      %v729 = vrot.slane %v395, 7
      %v730 = vrot.slane %v396, 7
      %v731 = vrot.slane %v397, 7
      %v732 = vrot.slane %v398, 7
      %v733 = vrot.slane %v399, 7
      %v734 = vrot.slane %v402, 7
      %v735 = vrot.slane %v403, 7
      %v736 = vrot.slane %v404, 7
      %v737 = vrot.slane %v405, 7
      %v738 = vrot.slane %v406, 7
      %v739 = vrot.slane %v407, 7
      %v740 = vrot.slane %v408, 7
      %v741 = vrot.slane %v409, 7
      %v742 = vrot.slane %v412, 7
      %v743 = vrot.slane %v413, 7
      %v744 = vrot.slane %v414, 7
      %v745 = vrot.slane %v415, 7
      %v746 = vrot.slane %v416, 7
      %v747 = vrot.slane %v417, 7
      %v748 = vrot.slane %v418, 7
      %v749 = vrot.slane %v419, 7
      %v750 = vrot.slane %v422, 7
      %v751 = vrot.slane %v423, 7
      %v752 = vrot.slane %v424, 7
      %v753 = vrot.slane %v425, 7
      %v754 = vrot.slane %v426, 7
      %v755 = vrot.slane %v427, 7
      %v756 = vrot.slane %v428, 7
      %v757 = vrot.slane %v429, 7
      %v758 = vrot.slane %v432, 7
      %v759 = vrot.slane %v433, 7
      %v760 = vrot.slane %v434, 7
      %v761 = vrot.slane %v435, 7
      %v762 = vrot.slane %v436, 7
      %v763 = vrot.slane %v437, 7
      %v764 = vrot.slane %v438, 7
      %v765 = vrot.slane %v439, 7
      %v766 = vrot.slane %v442, 7
      %v767 = vrot.slane %v443, 7
      %v768 = vrot.slane %v444, 7
      %v769 = vrot.slane %v445, 7
      %v770 = vrot.slane %v446, 7
      %v771 = vrot.slane %v447, 7
      %v772 = vrot.slane %v448, 7
      %v773 = vrot.slane %v449, 7
      %v774 = vrot.slane %v452, 7
      %v775 = vrot.slane %v453, 7
      %v776 = vrot.slane %v454, 7
      %v777 = vrot.slane %v455, 7
      %v778 = vrot.slane %v456, 7
      %v779 = vrot.slane %v457, 7
      %v780 = vrot.slane %v458, 7
      %v781 = vrot.slane %v459, 7
      %vm862 = vcmask 1040384
      %v863 = vsel %vm862, %v542, %v702
      %v864 = vsel %vm862, %v543, %v703
      %v865 = vsel %vm862, %v544, %v704
      %v866 = vsel %vm862, %v545, %v705
      %v867 = vsel %vm862, %v546, %v706
      %v868 = vsel %vm862, %v547, %v707
      %v869 = vsel %vm862, %v548, %v708
      %v870 = vsel %vm862, %v549, %v709
      %v871 = vsel %vm862, %v550, %v710
      %v872 = vsel %vm862, %v551, %v711
      %v873 = vsel %vm862, %v552, %v712
      %v874 = vsel %vm862, %v553, %v713
      %v875 = vsel %vm862, %v554, %v714
      %v876 = vsel %vm862, %v555, %v715
      %v877 = vsel %vm862, %v556, %v716
      %v878 = vsel %vm862, %v557, %v717
      %v879 = vsel %vm862, %v558, %v718
      %v880 = vsel %vm862, %v559, %v719
      %v881 = vsel %vm862, %v560, %v720
      %v882 = vsel %vm862, %v561, %v721
      %v883 = vsel %vm862, %v562, %v722
      %v884 = vsel %vm862, %v563, %v723
      %v885 = vsel %vm862, %v564, %v724
      %v886 = vsel %vm862, %v565, %v725
      %v887 = vsel %vm862, %v566, %v726
      %v888 = vsel %vm862, %v567, %v727
      %v889 = vsel %vm862, %v568, %v728
      %v890 = vsel %vm862, %v569, %v729
      %v891 = vsel %vm862, %v570, %v730
      %v892 = vsel %vm862, %v571, %v731
      %v893 = vsel %vm862, %v572, %v732
      %v894 = vsel %vm862, %v573, %v733
      %v895 = vsel %vm862, %v574, %v734
      %v896 = vsel %vm862, %v575, %v735
      %v897 = vsel %vm862, %v576, %v736
      %v898 = vsel %vm862, %v577, %v737
      %v899 = vsel %vm862, %v578, %v738
      %v900 = vsel %vm862, %v579, %v739
      %v901 = vsel %vm862, %v580, %v740
      %v902 = vsel %vm862, %v581, %v741
      %v903 = vsel %vm862, %v582, %v742
      %v904 = vsel %vm862, %v583, %v743
      %v905 = vsel %vm862, %v584, %v744
      %v906 = vsel %vm862, %v585, %v745
      %v907 = vsel %vm862, %v586, %v746
      %v908 = vsel %vm862, %v587, %v747
      %v909 = vsel %vm862, %v588, %v748
      %v910 = vsel %vm862, %v589, %v749
      %v911 = vsel %vm862, %v590, %v750
      %v912 = vsel %vm862, %v591, %v751
      %v913 = vsel %vm862, %v592, %v752
      %v914 = vsel %vm862, %v593, %v753
      %v915 = vsel %vm862, %v594, %v754
      %v916 = vsel %vm862, %v595, %v755
      %v917 = vsel %vm862, %v596, %v756
      %v918 = vsel %vm862, %v597, %v757
      %v919 = vsel %vm862, %v598, %v758
      %v920 = vsel %vm862, %v599, %v759
      %v921 = vsel %vm862, %v600, %v760
      %v922 = vsel %vm862, %v601, %v761
      %v923 = vsel %vm862, %v602, %v762
      %v924 = vsel %vm862, %v603, %v763
      %v925 = vsel %vm862, %v604, %v764
      %v926 = vsel %vm862, %v605, %v765
      %v927 = vsel %vm862, %v606, %v766
      %v928 = vsel %vm862, %v607, %v767
      %v929 = vsel %vm862, %v608, %v768
      %v930 = vsel %vm862, %v609, %v769
      %v931 = vsel %vm862, %v610, %v770
      %v932 = vsel %vm862, %v611, %v771
      %v933 = vsel %vm862, %v612, %v772
      %v934 = vsel %vm862, %v613, %v773
      %v935 = vsel %vm862, %v614, %v774
      %v936 = vsel %vm862, %v615, %v775
      %v937 = vsel %vm862, %v616, %v776
      %v938 = vsel %vm862, %v617, %v777
      %v939 = vsel %vm862, %v618, %v778
      %v940 = vsel %vm862, %v619, %v779
      %v941 = vsel %vm862, %v620, %v780
      %v942 = vsel %vm862, %v621, %v781
      %vm943 = vcmask 1046528
      %v944 = vsel %vm943, %v542, %v702
      %v945 = vsel %vm943, %v543, %v703
      %v946 = vsel %vm943, %v544, %v704
      %v947 = vsel %vm943, %v545, %v705
      %v948 = vsel %vm943, %v546, %v706
      %v949 = vsel %vm943, %v547, %v707
      %v950 = vsel %vm943, %v548, %v708
      %v951 = vsel %vm943, %v549, %v709
      %v952 = vsel %vm943, %v550, %v710
      %v953 = vsel %vm943, %v551, %v711
      %v954 = vsel %vm943, %v552, %v712
      %v955 = vsel %vm943, %v553, %v713
      %v956 = vsel %vm943, %v554, %v714
      %v957 = vsel %vm943, %v555, %v715
      %v958 = vsel %vm943, %v556, %v716
      %v959 = vsel %vm943, %v557, %v717
      %v960 = vsel %vm943, %v558, %v718
      %v961 = vsel %vm943, %v559, %v719
      %v962 = vsel %vm943, %v560, %v720
      %v963 = vsel %vm943, %v561, %v721
      %v964 = vsel %vm943, %v562, %v722
      %v965 = vsel %vm943, %v563, %v723
      %v966 = vsel %vm943, %v564, %v724
      %v967 = vsel %vm943, %v565, %v725
      %v968 = vsel %vm943, %v566, %v726
      %v969 = vsel %vm943, %v567, %v727
      %v970 = vsel %vm943, %v568, %v728
      %v971 = vsel %vm943, %v569, %v729
      %v972 = vsel %vm943, %v570, %v730
      %v973 = vsel %vm943, %v571, %v731
      %v974 = vsel %vm943, %v572, %v732
      %v975 = vsel %vm943, %v573, %v733
      %v976 = vsel %vm943, %v574, %v734
      %v977 = vsel %vm943, %v575, %v735
      %v978 = vsel %vm943, %v576, %v736
      %v979 = vsel %vm943, %v577, %v737
      %v980 = vsel %vm943, %v578, %v738
      %v981 = vsel %vm943, %v579, %v739
      %v982 = vsel %vm943, %v580, %v740
      %v983 = vsel %vm943, %v581, %v741
      %v984 = vsel %vm943, %v582, %v742
      %v985 = vsel %vm943, %v583, %v743
      %v986 = vsel %vm943, %v584, %v744
      %v987 = vsel %vm943, %v585, %v745
      %v988 = vsel %vm943, %v586, %v746
      %v989 = vsel %vm943, %v587, %v747
      %v990 = vsel %vm943, %v588, %v748
      %v991 = vsel %vm943, %v589, %v749
      %v992 = vsel %vm943, %v590, %v750
      %v993 = vsel %vm943, %v591, %v751
      %v994 = vsel %vm943, %v592, %v752
      %v995 = vsel %vm943, %v593, %v753
      %v996 = vsel %vm943, %v594, %v754
      %v997 = vsel %vm943, %v595, %v755
      %v998 = vsel %vm943, %v596, %v756
      %v999 = vsel %vm943, %v597, %v757
      %v1000 = vsel %vm943, %v598, %v758
      %v1001 = vsel %vm943, %v599, %v759
      %v1002 = vsel %vm943, %v600, %v760
      %v1003 = vsel %vm943, %v601, %v761
      %v1004 = vsel %vm943, %v602, %v762
      %v1005 = vsel %vm943, %v603, %v763
      %v1006 = vsel %vm943, %v604, %v764
      %v1007 = vsel %vm943, %v605, %v765
      %v1008 = vsel %vm943, %v606, %v766
      %v1009 = vsel %vm943, %v607, %v767
      %v1010 = vsel %vm943, %v608, %v768
      %v1011 = vsel %vm943, %v609, %v769
      %v1012 = vsel %vm943, %v610, %v770
      %v1013 = vsel %vm943, %v611, %v771
      %v1014 = vsel %vm943, %v612, %v772
      %v1015 = vsel %vm943, %v613, %v773
      %v1016 = vsel %vm943, %v614, %v774
      %v1017 = vsel %vm943, %v615, %v775
      %v1018 = vsel %vm943, %v616, %v776
      %v1019 = vsel %vm943, %v617, %v777
      %v1020 = vsel %vm943, %v618, %v778
      %v1021 = vsel %vm943, %v619, %v779
      %v1022 = vsel %vm943, %v620, %v780
      %v1023 = vsel %vm943, %v621, %v781
      %v1034 = vrot.slane %v370, 1
      %v1035 = vrot.slane %v380, 1
      %v1036 = vrot.slane %v390, 1
      %v1037 = vrot.slane %v400, 1
      %v1038 = vrot.slane %v410, 1
      %v1039 = vrot.slane %v420, 1
      %v1040 = vrot.slane %v430, 1
      %v1041 = vrot.slane %v440, 1
      %v1042 = vrot.slane %v450, 1
      %v1043 = vrot.slane %v460, 1
      %v1054 = vrot.slane %v370, 7
      %v1055 = vrot.slane %v380, 7
      %v1056 = vrot.slane %v390, 7
      %v1057 = vrot.slane %v400, 7
      %v1058 = vrot.slane %v410, 7
      %v1059 = vrot.slane %v420, 7
      %v1060 = vrot.slane %v430, 7
      %v1061 = vrot.slane %v440, 7
      %v1062 = vrot.slane %v450, 7
      %v1063 = vrot.slane %v460, 7
      %v1074 = vsel %vm862, %v1034, %v1054
      %v1075 = vsel %vm862, %v1035, %v1055
      %v1076 = vsel %vm862, %v1036, %v1056
      %v1077 = vsel %vm862, %v1037, %v1057
      %v1078 = vsel %vm862, %v1038, %v1058
      %v1079 = vsel %vm862, %v1039, %v1059
      %v1080 = vsel %vm862, %v1040, %v1060
      %v1081 = vsel %vm862, %v1041, %v1061
      %v1082 = vsel %vm862, %v1042, %v1062
      %v1083 = vsel %vm862, %v1043, %v1063
      %v1084 = vsel %vm943, %v1034, %v1054
      %v1085 = vsel %vm943, %v1035, %v1055
      %v1086 = vsel %vm943, %v1036, %v1056
      %v1087 = vsel %vm943, %v1037, %v1057
      %v1088 = vsel %vm943, %v1038, %v1058
      %v1089 = vsel %vm943, %v1039, %v1059
      %v1090 = vsel %vm943, %v1040, %v1060
      %v1091 = vsel %vm943, %v1041, %v1061
      %v1092 = vsel %vm943, %v1042, %v1062
      %v1093 = vsel %vm943, %v1043, %v1063
      %v1104 = vrot.slane %v371, 1
      %v1105 = vrot.slane %v381, 1
      %v1106 = vrot.slane %v391, 1
      %v1107 = vrot.slane %v401, 1
      %v1108 = vrot.slane %v411, 1
      %v1109 = vrot.slane %v421, 1
      %v1110 = vrot.slane %v431, 1
      %v1111 = vrot.slane %v441, 1
      %v1112 = vrot.slane %v451, 1
      %v1113 = vrot.slane %v461, 1
      %v1124 = vrot.slane %v371, 7
      %v1125 = vrot.slane %v381, 7
      %v1126 = vrot.slane %v391, 7
      %v1127 = vrot.slane %v401, 7
      %v1128 = vrot.slane %v411, 7
      %v1129 = vrot.slane %v421, 7
      %v1130 = vrot.slane %v431, 7
      %v1131 = vrot.slane %v441, 7
      %v1132 = vrot.slane %v451, 7
      %v1133 = vrot.slane %v461, 7
      %v1144 = vsel %vm862, %v1104, %v1124
      %v1145 = vsel %vm862, %v1105, %v1125
      %v1146 = vsel %vm862, %v1106, %v1126
      %v1147 = vsel %vm862, %v1107, %v1127
      %v1148 = vsel %vm862, %v1108, %v1128
      %v1149 = vsel %vm862, %v1109, %v1129
      %v1150 = vsel %vm862, %v1110, %v1130
      %v1151 = vsel %vm862, %v1111, %v1131
      %v1152 = vsel %vm862, %v1112, %v1132
      %v1153 = vsel %vm862, %v1113, %v1133
      %v1154 = vsel %vm943, %v1104, %v1124
      %v1155 = vsel %vm943, %v1105, %v1125
      %v1156 = vsel %vm943, %v1106, %v1126
      %v1157 = vsel %vm943, %v1107, %v1127
      %v1158 = vsel %vm943, %v1108, %v1128
      %v1159 = vsel %vm943, %v1109, %v1129
      %v1160 = vsel %vm943, %v1110, %v1130
      %v1161 = vsel %vm943, %v1111, %v1131
      %v1162 = vsel %vm943, %v1112, %v1132
      %v1163 = vsel %vm943, %v1113, %v1133
      %1164 = vrot.lane.b32.xlu0 %v362, 4
      %v1165 = vpop.permute.xlu0 %1164
      %1166 = vrot.lane.b32.xlu0 %v363, 4
      %v1167 = vpop.permute.xlu0 %1166
      %1168 = vrot.lane.b32.xlu0 %v364, 4
      %v1169 = vpop.permute.xlu0 %1168
      %1170 = vrot.lane.b32.xlu0 %v365, 4
      %v1171 = vpop.permute.xlu0 %1170
      %1172 = vrot.lane.b32.xlu0 %v366, 4
      %v1173 = vpop.permute.xlu0 %1172
      %1174 = vrot.lane.b32.xlu0 %v367, 4
      %v1175 = vpop.permute.xlu0 %1174
      %1176 = vrot.lane.b32.xlu0 %v368, 4
      %v1177 = vpop.permute.xlu0 %1176
      %1178 = vrot.lane.b32.xlu0 %v369, 4
      %v1179 = vpop.permute.xlu0 %1178
      %1180 = vrot.lane.b32.xlu0 %v372, 4
      %v1181 = vpop.permute.xlu0 %1180
      %1182 = vrot.lane.b32.xlu0 %v373, 4
      %v1183 = vpop.permute.xlu0 %1182
      %1184 = vrot.lane.b32.xlu0 %v374, 4
      %v1185 = vpop.permute.xlu0 %1184
      %1186 = vrot.lane.b32.xlu0 %v375, 4
      %v1187 = vpop.permute.xlu0 %1186
      %1188 = vrot.lane.b32.xlu0 %v376, 4
      %v1189 = vpop.permute.xlu0 %1188
      %1190 = vrot.lane.b32.xlu0 %v377, 4
      %v1191 = vpop.permute.xlu0 %1190
      %1192 = vrot.lane.b32.xlu0 %v378, 4
      %v1193 = vpop.permute.xlu0 %1192
      %1194 = vrot.lane.b32.xlu0 %v379, 4
      %v1195 = vpop.permute.xlu0 %1194
      %1196 = vrot.lane.b32.xlu0 %v382, 4
      %v1197 = vpop.permute.xlu0 %1196
      %1198 = vrot.lane.b32.xlu0 %v383, 4
      %v1199 = vpop.permute.xlu0 %1198
      %1200 = vrot.lane.b32.xlu0 %v384, 4
      %v1201 = vpop.permute.xlu0 %1200
      %1202 = vrot.lane.b32.xlu0 %v385, 4
      %v1203 = vpop.permute.xlu0 %1202
      %1204 = vrot.lane.b32.xlu0 %v386, 4
      %v1205 = vpop.permute.xlu0 %1204
      %1206 = vrot.lane.b32.xlu0 %v387, 4
      %v1207 = vpop.permute.xlu0 %1206
      %1208 = vrot.lane.b32.xlu0 %v388, 4
      %v1209 = vpop.permute.xlu0 %1208
      %1210 = vrot.lane.b32.xlu0 %v389, 4
      %v1211 = vpop.permute.xlu0 %1210
      %1212 = vrot.lane.b32.xlu0 %v392, 4
      %v1213 = vpop.permute.xlu0 %1212
      %1214 = vrot.lane.b32.xlu0 %v393, 4
      %v1215 = vpop.permute.xlu0 %1214
      %1216 = vrot.lane.b32.xlu0 %v394, 4
      %v1217 = vpop.permute.xlu0 %1216
      %1218 = vrot.lane.b32.xlu0 %v395, 4
      %v1219 = vpop.permute.xlu0 %1218
      %1220 = vrot.lane.b32.xlu0 %v396, 4
      %v1221 = vpop.permute.xlu0 %1220
      %1222 = vrot.lane.b32.xlu0 %v397, 4
      %v1223 = vpop.permute.xlu0 %1222
      %1224 = vrot.lane.b32.xlu0 %v398, 4
      %v1225 = vpop.permute.xlu0 %1224
      %1226 = vrot.lane.b32.xlu0 %v399, 4
      %v1227 = vpop.permute.xlu0 %1226
      %1228 = vrot.lane.b32.xlu0 %v402, 4
      %v1229 = vpop.permute.xlu0 %1228
      %1230 = vrot.lane.b32.xlu0 %v403, 4
      %v1231 = vpop.permute.xlu0 %1230
      %1232 = vrot.lane.b32.xlu0 %v404, 4
      %v1233 = vpop.permute.xlu0 %1232
      %1234 = vrot.lane.b32.xlu0 %v405, 4
      %v1235 = vpop.permute.xlu0 %1234
      %1236 = vrot.lane.b32.xlu0 %v406, 4
      %v1237 = vpop.permute.xlu0 %1236
      %1238 = vrot.lane.b32.xlu0 %v407, 4
      %v1239 = vpop.permute.xlu0 %1238
      %1240 = vrot.lane.b32.xlu0 %v408, 4
      %v1241 = vpop.permute.xlu0 %1240
      %1242 = vrot.lane.b32.xlu0 %v409, 4
      %v1243 = vpop.permute.xlu0 %1242
      %1244 = vrot.lane.b32.xlu0 %v412, 4
      %v1245 = vpop.permute.xlu0 %1244
      %1246 = vrot.lane.b32.xlu0 %v413, 4
      %v1247 = vpop.permute.xlu0 %1246
      %1248 = vrot.lane.b32.xlu0 %v414, 4
      %v1249 = vpop.permute.xlu0 %1248
      %1250 = vrot.lane.b32.xlu0 %v415, 4
      %v1251 = vpop.permute.xlu0 %1250
      %1252 = vrot.lane.b32.xlu0 %v416, 4
      %v1253 = vpop.permute.xlu0 %1252
      %1254 = vrot.lane.b32.xlu0 %v417, 4
      %v1255 = vpop.permute.xlu0 %1254
      %1256 = vrot.lane.b32.xlu0 %v418, 4
      %v1257 = vpop.permute.xlu0 %1256
      %1258 = vrot.lane.b32.xlu0 %v419, 4
      %v1259 = vpop.permute.xlu0 %1258
      %1260 = vrot.lane.b32.xlu0 %v422, 4
      %v1261 = vpop.permute.xlu0 %1260
      %1262 = vrot.lane.b32.xlu0 %v423, 4
      %v1263 = vpop.permute.xlu0 %1262
      %1264 = vrot.lane.b32.xlu0 %v424, 4
      %v1265 = vpop.permute.xlu0 %1264
      %1266 = vrot.lane.b32.xlu0 %v425, 4
      %v1267 = vpop.permute.xlu0 %1266
      %1268 = vrot.lane.b32.xlu0 %v426, 4
      %v1269 = vpop.permute.xlu0 %1268
      %1270 = vrot.lane.b32.xlu0 %v427, 4
      %v1271 = vpop.permute.xlu0 %1270
      %1272 = vrot.lane.b32.xlu0 %v428, 4
      %v1273 = vpop.permute.xlu0 %1272
      %1274 = vrot.lane.b32.xlu0 %v429, 4
      %v1275 = vpop.permute.xlu0 %1274
      %1276 = vrot.lane.b32.xlu0 %v432, 4
      %v1277 = vpop.permute.xlu0 %1276
      %1278 = vrot.lane.b32.xlu0 %v433, 4
      %v1279 = vpop.permute.xlu0 %1278
      %1280 = vrot.lane.b32.xlu0 %v434, 4
      %v1281 = vpop.permute.xlu0 %1280
      %1282 = vrot.lane.b32.xlu0 %v435, 4
      %v1283 = vpop.permute.xlu0 %1282
      %1284 = vrot.lane.b32.xlu0 %v436, 4
      %v1285 = vpop.permute.xlu0 %1284
      %1286 = vrot.lane.b32.xlu0 %v437, 4
      %v1287 = vpop.permute.xlu0 %1286
      %1288 = vrot.lane.b32.xlu0 %v438, 4
      %v1289 = vpop.permute.xlu0 %1288
      %1290 = vrot.lane.b32.xlu0 %v439, 4
      %v1291 = vpop.permute.xlu0 %1290
      %1292 = vrot.lane.b32.xlu0 %v442, 4
      %v1293 = vpop.permute.xlu0 %1292
      %1294 = vrot.lane.b32.xlu0 %v443, 4
      %v1295 = vpop.permute.xlu0 %1294
      %1296 = vrot.lane.b32.xlu0 %v444, 4
      %v1297 = vpop.permute.xlu0 %1296
      %1298 = vrot.lane.b32.xlu0 %v445, 4
      %v1299 = vpop.permute.xlu0 %1298
      %1300 = vrot.lane.b32.xlu0 %v446, 4
      %v1301 = vpop.permute.xlu0 %1300
      %1302 = vrot.lane.b32.xlu0 %v447, 4
      %v1303 = vpop.permute.xlu0 %1302
      %1304 = vrot.lane.b32.xlu0 %v448, 4
      %v1305 = vpop.permute.xlu0 %1304
      %1306 = vrot.lane.b32.xlu0 %v449, 4
      %v1307 = vpop.permute.xlu0 %1306
      %1308 = vrot.lane.b32.xlu0 %v452, 4
      %v1309 = vpop.permute.xlu0 %1308
      %1310 = vrot.lane.b32.xlu0 %v453, 4
      %v1311 = vpop.permute.xlu0 %1310
      %1312 = vrot.lane.b32.xlu0 %v454, 4
      %v1313 = vpop.permute.xlu0 %1312
      %1314 = vrot.lane.b32.xlu0 %v455, 4
      %v1315 = vpop.permute.xlu0 %1314
      %1316 = vrot.lane.b32.xlu0 %v456, 4
      %v1317 = vpop.permute.xlu0 %1316
      %1318 = vrot.lane.b32.xlu0 %v457, 4
      %v1319 = vpop.permute.xlu0 %1318
      %1320 = vrot.lane.b32.xlu0 %v458, 4
      %v1321 = vpop.permute.xlu0 %1320
      %1322 = vrot.lane.b32.xlu0 %v459, 4
      %v1323 = vpop.permute.xlu0 %1322
      %1484 = vrot.lane.b32.xlu0 %v944, 8
      %v1485 = vpop.permute.xlu0 %1484
      %1486 = vrot.lane.b32.xlu0 %v945, 8
      %v1487 = vpop.permute.xlu0 %1486
      %1488 = vrot.lane.b32.xlu0 %v946, 8
      %v1489 = vpop.permute.xlu0 %1488
      %1490 = vrot.lane.b32.xlu0 %v947, 8
      %v1491 = vpop.permute.xlu0 %1490
      %1492 = vrot.lane.b32.xlu0 %v948, 8
      %v1493 = vpop.permute.xlu0 %1492
      %1494 = vrot.lane.b32.xlu0 %v949, 8
      %v1495 = vpop.permute.xlu0 %1494
      %1496 = vrot.lane.b32.xlu0 %v950, 8
      %v1497 = vpop.permute.xlu0 %1496
      %1498 = vrot.lane.b32.xlu0 %v951, 8
      %v1499 = vpop.permute.xlu0 %1498
      %1500 = vrot.lane.b32.xlu0 %v952, 8
      %v1501 = vpop.permute.xlu0 %1500
      %1502 = vrot.lane.b32.xlu0 %v953, 8
      %v1503 = vpop.permute.xlu0 %1502
      %1504 = vrot.lane.b32.xlu0 %v954, 8
      %v1505 = vpop.permute.xlu0 %1504
      %1506 = vrot.lane.b32.xlu0 %v955, 8
      %v1507 = vpop.permute.xlu0 %1506
      %1508 = vrot.lane.b32.xlu0 %v956, 8
      %v1509 = vpop.permute.xlu0 %1508
      %1510 = vrot.lane.b32.xlu0 %v957, 8
      %v1511 = vpop.permute.xlu0 %1510
      %1512 = vrot.lane.b32.xlu0 %v958, 8
      %v1513 = vpop.permute.xlu0 %1512
      %1514 = vrot.lane.b32.xlu0 %v959, 8
      %v1515 = vpop.permute.xlu0 %1514
      %1516 = vrot.lane.b32.xlu0 %v960, 8
      %v1517 = vpop.permute.xlu0 %1516
      %1518 = vrot.lane.b32.xlu0 %v961, 8
      %v1519 = vpop.permute.xlu0 %1518
      %1520 = vrot.lane.b32.xlu0 %v962, 8
      %v1521 = vpop.permute.xlu0 %1520
      %1522 = vrot.lane.b32.xlu0 %v963, 8
      %v1523 = vpop.permute.xlu0 %1522
      %1524 = vrot.lane.b32.xlu0 %v964, 8
      %v1525 = vpop.permute.xlu0 %1524
      %1526 = vrot.lane.b32.xlu0 %v965, 8
      %v1527 = vpop.permute.xlu0 %1526
      %1528 = vrot.lane.b32.xlu0 %v966, 8
      %v1529 = vpop.permute.xlu0 %1528
      %1530 = vrot.lane.b32.xlu0 %v967, 8
      %v1531 = vpop.permute.xlu0 %1530
      %1532 = vrot.lane.b32.xlu0 %v968, 8
      %v1533 = vpop.permute.xlu0 %1532
      %1534 = vrot.lane.b32.xlu0 %v969, 8
      %v1535 = vpop.permute.xlu0 %1534
      %1536 = vrot.lane.b32.xlu0 %v970, 8
      %v1537 = vpop.permute.xlu0 %1536
      %1538 = vrot.lane.b32.xlu0 %v971, 8
      %v1539 = vpop.permute.xlu0 %1538
      %1540 = vrot.lane.b32.xlu0 %v972, 8
      %v1541 = vpop.permute.xlu0 %1540
      %1542 = vrot.lane.b32.xlu0 %v973, 8
      %v1543 = vpop.permute.xlu0 %1542
      %1544 = vrot.lane.b32.xlu0 %v974, 8
      %v1545 = vpop.permute.xlu0 %1544
      %1546 = vrot.lane.b32.xlu0 %v975, 8
      %v1547 = vpop.permute.xlu0 %1546
      %1548 = vrot.lane.b32.xlu0 %v976, 8
      %v1549 = vpop.permute.xlu0 %1548
      %1550 = vrot.lane.b32.xlu0 %v977, 8
      %v1551 = vpop.permute.xlu0 %1550
      %1552 = vrot.lane.b32.xlu0 %v978, 8
      %v1553 = vpop.permute.xlu0 %1552
      %1554 = vrot.lane.b32.xlu0 %v979, 8
      %v1555 = vpop.permute.xlu0 %1554
      %1556 = vrot.lane.b32.xlu0 %v980, 8
      %v1557 = vpop.permute.xlu0 %1556
      %1558 = vrot.lane.b32.xlu0 %v981, 8
      %v1559 = vpop.permute.xlu0 %1558
      %1560 = vrot.lane.b32.xlu0 %v982, 8
      %v1561 = vpop.permute.xlu0 %1560
      %1562 = vrot.lane.b32.xlu0 %v983, 8
      %v1563 = vpop.permute.xlu0 %1562
      %1564 = vrot.lane.b32.xlu0 %v984, 8
      %v1565 = vpop.permute.xlu0 %1564
      %1566 = vrot.lane.b32.xlu0 %v985, 8
      %v1567 = vpop.permute.xlu0 %1566
      %1568 = vrot.lane.b32.xlu0 %v986, 8
      %v1569 = vpop.permute.xlu0 %1568
      %1570 = vrot.lane.b32.xlu0 %v987, 8
      %v1571 = vpop.permute.xlu0 %1570
      %1572 = vrot.lane.b32.xlu0 %v988, 8
      %v1573 = vpop.permute.xlu0 %1572
      %1574 = vrot.lane.b32.xlu0 %v989, 8
      %v1575 = vpop.permute.xlu0 %1574
      %1576 = vrot.lane.b32.xlu0 %v990, 8
      %v1577 = vpop.permute.xlu0 %1576
      %1578 = vrot.lane.b32.xlu0 %v991, 8
      %v1579 = vpop.permute.xlu0 %1578
      %1580 = vrot.lane.b32.xlu0 %v992, 8
      %v1581 = vpop.permute.xlu0 %1580
      %1582 = vrot.lane.b32.xlu0 %v993, 8
      %v1583 = vpop.permute.xlu0 %1582
      %1584 = vrot.lane.b32.xlu0 %v994, 8
      %v1585 = vpop.permute.xlu0 %1584
      %1586 = vrot.lane.b32.xlu0 %v995, 8
      %v1587 = vpop.permute.xlu0 %1586
      %1588 = vrot.lane.b32.xlu0 %v996, 8
      %v1589 = vpop.permute.xlu0 %1588
      %1590 = vrot.lane.b32.xlu0 %v997, 8
      %v1591 = vpop.permute.xlu0 %1590
      %1592 = vrot.lane.b32.xlu0 %v998, 8
      %v1593 = vpop.permute.xlu0 %1592
      %1594 = vrot.lane.b32.xlu0 %v999, 8
      %v1595 = vpop.permute.xlu0 %1594
      %1596 = vrot.lane.b32.xlu0 %v1000, 8
      %v1597 = vpop.permute.xlu0 %1596
      %1598 = vrot.lane.b32.xlu0 %v1001, 8
      %v1599 = vpop.permute.xlu0 %1598
      %1600 = vrot.lane.b32.xlu0 %v1002, 8
      %v1601 = vpop.permute.xlu0 %1600
      %1602 = vrot.lane.b32.xlu0 %v1003, 8
      %v1603 = vpop.permute.xlu0 %1602
      %1604 = vrot.lane.b32.xlu0 %v1004, 8
      %v1605 = vpop.permute.xlu0 %1604
      %1606 = vrot.lane.b32.xlu0 %v1005, 8
      %v1607 = vpop.permute.xlu0 %1606
      %1608 = vrot.lane.b32.xlu0 %v1006, 8
      %v1609 = vpop.permute.xlu0 %1608
      %1610 = vrot.lane.b32.xlu0 %v1007, 8
      %v1611 = vpop.permute.xlu0 %1610
      %1612 = vrot.lane.b32.xlu0 %v1008, 8
      %v1613 = vpop.permute.xlu0 %1612
      %1614 = vrot.lane.b32.xlu0 %v1009, 8
      %v1615 = vpop.permute.xlu0 %1614
      %1616 = vrot.lane.b32.xlu0 %v1010, 8
      %v1617 = vpop.permute.xlu0 %1616
      %1618 = vrot.lane.b32.xlu0 %v1011, 8
      %v1619 = vpop.permute.xlu0 %1618
      %1620 = vrot.lane.b32.xlu0 %v1012, 8
      %v1621 = vpop.permute.xlu0 %1620
      %1622 = vrot.lane.b32.xlu0 %v1013, 8
      %v1623 = vpop.permute.xlu0 %1622
      %1624 = vrot.lane.b32.xlu0 %v1014, 8
      %v1625 = vpop.permute.xlu0 %1624
      %1626 = vrot.lane.b32.xlu0 %v1015, 8
      %v1627 = vpop.permute.xlu0 %1626
      %1628 = vrot.lane.b32.xlu0 %v1016, 8
      %v1629 = vpop.permute.xlu0 %1628
      %1630 = vrot.lane.b32.xlu0 %v1017, 8
      %v1631 = vpop.permute.xlu0 %1630
      %1632 = vrot.lane.b32.xlu0 %v1018, 8
      %v1633 = vpop.permute.xlu0 %1632
      %1634 = vrot.lane.b32.xlu0 %v1019, 8
      %v1635 = vpop.permute.xlu0 %1634
      %1636 = vrot.lane.b32.xlu0 %v1020, 8
      %v1637 = vpop.permute.xlu0 %1636
      %1638 = vrot.lane.b32.xlu0 %v1021, 8
      %v1639 = vpop.permute.xlu0 %1638
      %1640 = vrot.lane.b32.xlu0 %v1022, 8
      %v1641 = vpop.permute.xlu0 %1640
      %1642 = vrot.lane.b32.xlu0 %v1023, 8
      %v1643 = vpop.permute.xlu0 %1642
      %1804 = vrot.lane.b32.xlu0 %v864, 12
      %v1805 = vpop.permute.xlu0 %1804
      %1806 = vrot.lane.b32.xlu0 %v865, 12
      %v1807 = vpop.permute.xlu0 %1806
      %1808 = vrot.lane.b32.xlu0 %v866, 12
      %v1809 = vpop.permute.xlu0 %1808
      %1810 = vrot.lane.b32.xlu0 %v867, 12
      %v1811 = vpop.permute.xlu0 %1810
      %1812 = vrot.lane.b32.xlu0 %v868, 12
      %v1813 = vpop.permute.xlu0 %1812
      %1814 = vrot.lane.b32.xlu0 %v869, 12
      %v1815 = vpop.permute.xlu0 %1814
      %1816 = vrot.lane.b32.xlu0 %v870, 12
      %v1817 = vpop.permute.xlu0 %1816
      %1818 = vrot.lane.b32.xlu0 %v1074, 12
      %v1819 = vpop.permute.xlu0 %1818
      %1820 = vrot.lane.b32.xlu0 %v872, 12
      %v1821 = vpop.permute.xlu0 %1820
      %1822 = vrot.lane.b32.xlu0 %v873, 12
      %v1823 = vpop.permute.xlu0 %1822
      %1824 = vrot.lane.b32.xlu0 %v874, 12
      %v1825 = vpop.permute.xlu0 %1824
      %1826 = vrot.lane.b32.xlu0 %v875, 12
      %v1827 = vpop.permute.xlu0 %1826
      %1828 = vrot.lane.b32.xlu0 %v876, 12
      %v1829 = vpop.permute.xlu0 %1828
      %1830 = vrot.lane.b32.xlu0 %v877, 12
      %v1831 = vpop.permute.xlu0 %1830
      %1832 = vrot.lane.b32.xlu0 %v878, 12
      %v1833 = vpop.permute.xlu0 %1832
      %1834 = vrot.lane.b32.xlu0 %v1075, 12
      %v1835 = vpop.permute.xlu0 %1834
      %1836 = vrot.lane.b32.xlu0 %v880, 12
      %v1837 = vpop.permute.xlu0 %1836
      %1838 = vrot.lane.b32.xlu0 %v881, 12
      %v1839 = vpop.permute.xlu0 %1838
      %1840 = vrot.lane.b32.xlu0 %v882, 12
      %v1841 = vpop.permute.xlu0 %1840
      %1842 = vrot.lane.b32.xlu0 %v883, 12
      %v1843 = vpop.permute.xlu0 %1842
      %1844 = vrot.lane.b32.xlu0 %v884, 12
      %v1845 = vpop.permute.xlu0 %1844
      %1846 = vrot.lane.b32.xlu0 %v885, 12
      %v1847 = vpop.permute.xlu0 %1846
      %1848 = vrot.lane.b32.xlu0 %v886, 12
      %v1849 = vpop.permute.xlu0 %1848
      %1850 = vrot.lane.b32.xlu0 %v1076, 12
      %v1851 = vpop.permute.xlu0 %1850
      %1852 = vrot.lane.b32.xlu0 %v888, 12
      %v1853 = vpop.permute.xlu0 %1852
      %1854 = vrot.lane.b32.xlu0 %v889, 12
      %v1855 = vpop.permute.xlu0 %1854
      %1856 = vrot.lane.b32.xlu0 %v890, 12
      %v1857 = vpop.permute.xlu0 %1856
      %1858 = vrot.lane.b32.xlu0 %v891, 12
      %v1859 = vpop.permute.xlu0 %1858
      %1860 = vrot.lane.b32.xlu0 %v892, 12
      %v1861 = vpop.permute.xlu0 %1860
      %1862 = vrot.lane.b32.xlu0 %v893, 12
      %v1863 = vpop.permute.xlu0 %1862
      %1864 = vrot.lane.b32.xlu0 %v894, 12
      %v1865 = vpop.permute.xlu0 %1864
      %1866 = vrot.lane.b32.xlu0 %v1077, 12
      %v1867 = vpop.permute.xlu0 %1866
      %1868 = vrot.lane.b32.xlu0 %v896, 12
      %v1869 = vpop.permute.xlu0 %1868
      %1870 = vrot.lane.b32.xlu0 %v897, 12
      %v1871 = vpop.permute.xlu0 %1870
      %1872 = vrot.lane.b32.xlu0 %v898, 12
      %v1873 = vpop.permute.xlu0 %1872
      %1874 = vrot.lane.b32.xlu0 %v899, 12
      %v1875 = vpop.permute.xlu0 %1874
      %1876 = vrot.lane.b32.xlu0 %v900, 12
      %v1877 = vpop.permute.xlu0 %1876
      %1878 = vrot.lane.b32.xlu0 %v901, 12
      %v1879 = vpop.permute.xlu0 %1878
      %1880 = vrot.lane.b32.xlu0 %v902, 12
      %v1881 = vpop.permute.xlu0 %1880
      %1882 = vrot.lane.b32.xlu0 %v1078, 12
      %v1883 = vpop.permute.xlu0 %1882
      %1884 = vrot.lane.b32.xlu0 %v904, 12
      %v1885 = vpop.permute.xlu0 %1884
      %1886 = vrot.lane.b32.xlu0 %v905, 12
      %v1887 = vpop.permute.xlu0 %1886
      %1888 = vrot.lane.b32.xlu0 %v906, 12
      %v1889 = vpop.permute.xlu0 %1888
      %1890 = vrot.lane.b32.xlu0 %v907, 12
      %v1891 = vpop.permute.xlu0 %1890
      %1892 = vrot.lane.b32.xlu0 %v908, 12
      %v1893 = vpop.permute.xlu0 %1892
      %1894 = vrot.lane.b32.xlu0 %v909, 12
      %v1895 = vpop.permute.xlu0 %1894
      %1896 = vrot.lane.b32.xlu0 %v910, 12
      %v1897 = vpop.permute.xlu0 %1896
      %1898 = vrot.lane.b32.xlu0 %v1079, 12
      %v1899 = vpop.permute.xlu0 %1898
      %1900 = vrot.lane.b32.xlu0 %v912, 12
      %v1901 = vpop.permute.xlu0 %1900
      %1902 = vrot.lane.b32.xlu0 %v913, 12
      %v1903 = vpop.permute.xlu0 %1902
      %1904 = vrot.lane.b32.xlu0 %v914, 12
      %v1905 = vpop.permute.xlu0 %1904
      %1906 = vrot.lane.b32.xlu0 %v915, 12
      %v1907 = vpop.permute.xlu0 %1906
      %1908 = vrot.lane.b32.xlu0 %v916, 12
      %v1909 = vpop.permute.xlu0 %1908
      %1910 = vrot.lane.b32.xlu0 %v917, 12
      %v1911 = vpop.permute.xlu0 %1910
      %1912 = vrot.lane.b32.xlu0 %v918, 12
      %v1913 = vpop.permute.xlu0 %1912
      %1914 = vrot.lane.b32.xlu0 %v1080, 12
      %v1915 = vpop.permute.xlu0 %1914
      %1916 = vrot.lane.b32.xlu0 %v920, 12
      %v1917 = vpop.permute.xlu0 %1916
      %1918 = vrot.lane.b32.xlu0 %v921, 12
      %v1919 = vpop.permute.xlu0 %1918
      %1920 = vrot.lane.b32.xlu0 %v922, 12
      %v1921 = vpop.permute.xlu0 %1920
      %1922 = vrot.lane.b32.xlu0 %v923, 12
      %v1923 = vpop.permute.xlu0 %1922
      %1924 = vrot.lane.b32.xlu0 %v924, 12
      %v1925 = vpop.permute.xlu0 %1924
      %1926 = vrot.lane.b32.xlu0 %v925, 12
      %v1927 = vpop.permute.xlu0 %1926
      %1928 = vrot.lane.b32.xlu0 %v926, 12
      %v1929 = vpop.permute.xlu0 %1928
      %1930 = vrot.lane.b32.xlu0 %v1081, 12
      %v1931 = vpop.permute.xlu0 %1930
      %1932 = vrot.lane.b32.xlu0 %v928, 12
      %v1933 = vpop.permute.xlu0 %1932
      %1934 = vrot.lane.b32.xlu0 %v929, 12
      %v1935 = vpop.permute.xlu0 %1934
      %1936 = vrot.lane.b32.xlu0 %v930, 12
      %v1937 = vpop.permute.xlu0 %1936
      %1938 = vrot.lane.b32.xlu0 %v931, 12
      %v1939 = vpop.permute.xlu0 %1938
      %1940 = vrot.lane.b32.xlu0 %v932, 12
      %v1941 = vpop.permute.xlu0 %1940
      %1942 = vrot.lane.b32.xlu0 %v933, 12
      %v1943 = vpop.permute.xlu0 %1942
      %1944 = vrot.lane.b32.xlu0 %v934, 12
      %v1945 = vpop.permute.xlu0 %1944
      %1946 = vrot.lane.b32.xlu0 %v1082, 12
      %v1947 = vpop.permute.xlu0 %1946
      %1948 = vrot.lane.b32.xlu0 %v936, 12
      %v1949 = vpop.permute.xlu0 %1948
      %1950 = vrot.lane.b32.xlu0 %v937, 12
      %v1951 = vpop.permute.xlu0 %1950
      %1952 = vrot.lane.b32.xlu0 %v938, 12
      %v1953 = vpop.permute.xlu0 %1952
      %1954 = vrot.lane.b32.xlu0 %v939, 12
      %v1955 = vpop.permute.xlu0 %1954
      %1956 = vrot.lane.b32.xlu0 %v940, 12
      %v1957 = vpop.permute.xlu0 %1956
      %1958 = vrot.lane.b32.xlu0 %v941, 12
      %v1959 = vpop.permute.xlu0 %1958
      %1960 = vrot.lane.b32.xlu0 %v942, 12
      %v1961 = vpop.permute.xlu0 %1960
      %1962 = vrot.lane.b32.xlu0 %v1083, 12
      %v1963 = vpop.permute.xlu0 %1962
      %2044 = vrot.lane.b32.xlu0 %v363, 16
      %v2045 = vpop.permute.xlu0 %2044
      %2046 = vrot.lane.b32.xlu0 %v364, 16
      %v2047 = vpop.permute.xlu0 %2046
      %2048 = vrot.lane.b32.xlu0 %v365, 16
      %v2049 = vpop.permute.xlu0 %2048
      %2050 = vrot.lane.b32.xlu0 %v366, 16
      %v2051 = vpop.permute.xlu0 %2050
      %2052 = vrot.lane.b32.xlu0 %v367, 16
      %v2053 = vpop.permute.xlu0 %2052
      %2054 = vrot.lane.b32.xlu0 %v368, 16
      %v2055 = vpop.permute.xlu0 %2054
      %2056 = vrot.lane.b32.xlu0 %v369, 16
      %v2057 = vpop.permute.xlu0 %2056
      %2058 = vrot.lane.b32.xlu0 %v370, 16
      %v2059 = vpop.permute.xlu0 %2058
      %2060 = vrot.lane.b32.xlu0 %v373, 16
      %v2061 = vpop.permute.xlu0 %2060
      %2062 = vrot.lane.b32.xlu0 %v374, 16
      %v2063 = vpop.permute.xlu0 %2062
      %2064 = vrot.lane.b32.xlu0 %v375, 16
      %v2065 = vpop.permute.xlu0 %2064
      %2066 = vrot.lane.b32.xlu0 %v376, 16
      %v2067 = vpop.permute.xlu0 %2066
      %2068 = vrot.lane.b32.xlu0 %v377, 16
      %v2069 = vpop.permute.xlu0 %2068
      %2070 = vrot.lane.b32.xlu0 %v378, 16
      %v2071 = vpop.permute.xlu0 %2070
      %2072 = vrot.lane.b32.xlu0 %v379, 16
      %v2073 = vpop.permute.xlu0 %2072
      %2074 = vrot.lane.b32.xlu0 %v380, 16
      %v2075 = vpop.permute.xlu0 %2074
      %2076 = vrot.lane.b32.xlu0 %v383, 16
      %v2077 = vpop.permute.xlu0 %2076
      %2078 = vrot.lane.b32.xlu0 %v384, 16
      %v2079 = vpop.permute.xlu0 %2078
      %2080 = vrot.lane.b32.xlu0 %v385, 16
      %v2081 = vpop.permute.xlu0 %2080
      %2082 = vrot.lane.b32.xlu0 %v386, 16
      %v2083 = vpop.permute.xlu0 %2082
      %2084 = vrot.lane.b32.xlu0 %v387, 16
      %v2085 = vpop.permute.xlu0 %2084
      %2086 = vrot.lane.b32.xlu0 %v388, 16
      %v2087 = vpop.permute.xlu0 %2086
      %2088 = vrot.lane.b32.xlu0 %v389, 16
      %v2089 = vpop.permute.xlu0 %2088
      %2090 = vrot.lane.b32.xlu0 %v390, 16
      %v2091 = vpop.permute.xlu0 %2090
      %2092 = vrot.lane.b32.xlu0 %v393, 16
      %v2093 = vpop.permute.xlu0 %2092
      %2094 = vrot.lane.b32.xlu0 %v394, 16
      %v2095 = vpop.permute.xlu0 %2094
      %2096 = vrot.lane.b32.xlu0 %v395, 16
      %v2097 = vpop.permute.xlu0 %2096
      %2098 = vrot.lane.b32.xlu0 %v396, 16
      %v2099 = vpop.permute.xlu0 %2098
      %2100 = vrot.lane.b32.xlu0 %v397, 16
      %v2101 = vpop.permute.xlu0 %2100
      %2102 = vrot.lane.b32.xlu0 %v398, 16
      %v2103 = vpop.permute.xlu0 %2102
      %2104 = vrot.lane.b32.xlu0 %v399, 16
      %v2105 = vpop.permute.xlu0 %2104
      %2106 = vrot.lane.b32.xlu0 %v400, 16
      %v2107 = vpop.permute.xlu0 %2106
      %2108 = vrot.lane.b32.xlu0 %v403, 16
      %v2109 = vpop.permute.xlu0 %2108
      %2110 = vrot.lane.b32.xlu0 %v404, 16
      %v2111 = vpop.permute.xlu0 %2110
      %2112 = vrot.lane.b32.xlu0 %v405, 16
      %v2113 = vpop.permute.xlu0 %2112
      %2114 = vrot.lane.b32.xlu0 %v406, 16
      %v2115 = vpop.permute.xlu0 %2114
      %2116 = vrot.lane.b32.xlu0 %v407, 16
      %v2117 = vpop.permute.xlu0 %2116
      %2118 = vrot.lane.b32.xlu0 %v408, 16
      %v2119 = vpop.permute.xlu0 %2118
      %2120 = vrot.lane.b32.xlu0 %v409, 16
      %v2121 = vpop.permute.xlu0 %2120
      %2122 = vrot.lane.b32.xlu0 %v410, 16
      %v2123 = vpop.permute.xlu0 %2122
      %2124 = vrot.lane.b32.xlu0 %v413, 16
      %v2125 = vpop.permute.xlu0 %2124
      %2126 = vrot.lane.b32.xlu0 %v414, 16
      %v2127 = vpop.permute.xlu0 %2126
      %2128 = vrot.lane.b32.xlu0 %v415, 16
      %v2129 = vpop.permute.xlu0 %2128
      %2130 = vrot.lane.b32.xlu0 %v416, 16
      %v2131 = vpop.permute.xlu0 %2130
      %2132 = vrot.lane.b32.xlu0 %v417, 16
      %v2133 = vpop.permute.xlu0 %2132
      %2134 = vrot.lane.b32.xlu0 %v418, 16
      %v2135 = vpop.permute.xlu0 %2134
      %2136 = vrot.lane.b32.xlu0 %v419, 16
      %v2137 = vpop.permute.xlu0 %2136
      %2138 = vrot.lane.b32.xlu0 %v420, 16
      %v2139 = vpop.permute.xlu0 %2138
      %2140 = vrot.lane.b32.xlu0 %v423, 16
      %v2141 = vpop.permute.xlu0 %2140
      %2142 = vrot.lane.b32.xlu0 %v424, 16
      %v2143 = vpop.permute.xlu0 %2142
      %2144 = vrot.lane.b32.xlu0 %v425, 16
      %v2145 = vpop.permute.xlu0 %2144
      %2146 = vrot.lane.b32.xlu0 %v426, 16
      %v2147 = vpop.permute.xlu0 %2146
      %2148 = vrot.lane.b32.xlu0 %v427, 16
      %v2149 = vpop.permute.xlu0 %2148
      %2150 = vrot.lane.b32.xlu0 %v428, 16
      %v2151 = vpop.permute.xlu0 %2150
      %2152 = vrot.lane.b32.xlu0 %v429, 16
      %v2153 = vpop.permute.xlu0 %2152
      %2154 = vrot.lane.b32.xlu0 %v430, 16
      %v2155 = vpop.permute.xlu0 %2154
      %2156 = vrot.lane.b32.xlu0 %v433, 16
      %v2157 = vpop.permute.xlu0 %2156
      %2158 = vrot.lane.b32.xlu0 %v434, 16
      %v2159 = vpop.permute.xlu0 %2158
      %2160 = vrot.lane.b32.xlu0 %v435, 16
      %v2161 = vpop.permute.xlu0 %2160
      %2162 = vrot.lane.b32.xlu0 %v436, 16
      %v2163 = vpop.permute.xlu0 %2162
      %2164 = vrot.lane.b32.xlu0 %v437, 16
      %v2165 = vpop.permute.xlu0 %2164
      %2166 = vrot.lane.b32.xlu0 %v438, 16
      %v2167 = vpop.permute.xlu0 %2166
      %2168 = vrot.lane.b32.xlu0 %v439, 16
      %v2169 = vpop.permute.xlu0 %2168
      %2170 = vrot.lane.b32.xlu0 %v440, 16
      %v2171 = vpop.permute.xlu0 %2170
      %2172 = vrot.lane.b32.xlu0 %v443, 16
      %v2173 = vpop.permute.xlu0 %2172
      %2174 = vrot.lane.b32.xlu0 %v444, 16
      %v2175 = vpop.permute.xlu0 %2174
      %2176 = vrot.lane.b32.xlu0 %v445, 16
      %v2177 = vpop.permute.xlu0 %2176
      %2178 = vrot.lane.b32.xlu0 %v446, 16
      %v2179 = vpop.permute.xlu0 %2178
      %2180 = vrot.lane.b32.xlu0 %v447, 16
      %v2181 = vpop.permute.xlu0 %2180
      %2182 = vrot.lane.b32.xlu0 %v448, 16
      %v2183 = vpop.permute.xlu0 %2182
      %2184 = vrot.lane.b32.xlu0 %v449, 16
      %v2185 = vpop.permute.xlu0 %2184
      %2186 = vrot.lane.b32.xlu0 %v450, 16
      %v2187 = vpop.permute.xlu0 %2186
      %2188 = vrot.lane.b32.xlu0 %v453, 16
      %v2189 = vpop.permute.xlu0 %2188
      %2190 = vrot.lane.b32.xlu0 %v454, 16
      %v2191 = vpop.permute.xlu0 %2190
      %2192 = vrot.lane.b32.xlu0 %v455, 16
      %v2193 = vpop.permute.xlu0 %2192
      %2194 = vrot.lane.b32.xlu0 %v456, 16
      %v2195 = vpop.permute.xlu0 %2194
      %2196 = vrot.lane.b32.xlu0 %v457, 16
      %v2197 = vpop.permute.xlu0 %2196
      %2198 = vrot.lane.b32.xlu0 %v458, 16
      %v2199 = vpop.permute.xlu0 %2198
      %2200 = vrot.lane.b32.xlu0 %v459, 16
      %v2201 = vpop.permute.xlu0 %2200
      %2202 = vrot.lane.b32.xlu0 %v460, 16
      %v2203 = vpop.permute.xlu0 %2202
      %2294 = vrot.lane.b32.xlu0 %v945, 20
      %v2295 = vpop.permute.xlu0 %2294
      %2296 = vrot.lane.b32.xlu0 %v946, 20
      %v2297 = vpop.permute.xlu0 %2296
      %2298 = vrot.lane.b32.xlu0 %v947, 20
      %v2299 = vpop.permute.xlu0 %2298
      %2300 = vrot.lane.b32.xlu0 %v948, 20
      %v2301 = vpop.permute.xlu0 %2300
      %2302 = vrot.lane.b32.xlu0 %v949, 20
      %v2303 = vpop.permute.xlu0 %2302
      %2304 = vrot.lane.b32.xlu0 %v950, 20
      %v2305 = vpop.permute.xlu0 %2304
      %2306 = vrot.lane.b32.xlu0 %v951, 20
      %v2307 = vpop.permute.xlu0 %2306
      %2308 = vrot.lane.b32.xlu0 %v1084, 20
      %v2309 = vpop.permute.xlu0 %2308
      %2310 = vrot.lane.b32.xlu0 %v953, 20
      %v2311 = vpop.permute.xlu0 %2310
      %2312 = vrot.lane.b32.xlu0 %v954, 20
      %v2313 = vpop.permute.xlu0 %2312
      %2314 = vrot.lane.b32.xlu0 %v955, 20
      %v2315 = vpop.permute.xlu0 %2314
      %2316 = vrot.lane.b32.xlu0 %v956, 20
      %v2317 = vpop.permute.xlu0 %2316
      %2318 = vrot.lane.b32.xlu0 %v957, 20
      %v2319 = vpop.permute.xlu0 %2318
      %2320 = vrot.lane.b32.xlu0 %v958, 20
      %v2321 = vpop.permute.xlu0 %2320
      %2322 = vrot.lane.b32.xlu0 %v959, 20
      %v2323 = vpop.permute.xlu0 %2322
      %2324 = vrot.lane.b32.xlu0 %v1085, 20
      %v2325 = vpop.permute.xlu0 %2324
      %2326 = vrot.lane.b32.xlu0 %v961, 20
      %v2327 = vpop.permute.xlu0 %2326
      %2328 = vrot.lane.b32.xlu0 %v962, 20
      %v2329 = vpop.permute.xlu0 %2328
      %2330 = vrot.lane.b32.xlu0 %v963, 20
      %v2331 = vpop.permute.xlu0 %2330
      %2332 = vrot.lane.b32.xlu0 %v964, 20
      %v2333 = vpop.permute.xlu0 %2332
      %2334 = vrot.lane.b32.xlu0 %v965, 20
      %v2335 = vpop.permute.xlu0 %2334
      %2336 = vrot.lane.b32.xlu0 %v966, 20
      %v2337 = vpop.permute.xlu0 %2336
      %2338 = vrot.lane.b32.xlu0 %v967, 20
      %v2339 = vpop.permute.xlu0 %2338
      %2340 = vrot.lane.b32.xlu0 %v1086, 20
      %v2341 = vpop.permute.xlu0 %2340
      %2342 = vrot.lane.b32.xlu0 %v969, 20
      %v2343 = vpop.permute.xlu0 %2342
      %2344 = vrot.lane.b32.xlu0 %v970, 20
      %v2345 = vpop.permute.xlu0 %2344
      %2346 = vrot.lane.b32.xlu0 %v971, 20
      %v2347 = vpop.permute.xlu0 %2346
      %2348 = vrot.lane.b32.xlu0 %v972, 20
      %v2349 = vpop.permute.xlu0 %2348
      %2350 = vrot.lane.b32.xlu0 %v973, 20
      %v2351 = vpop.permute.xlu0 %2350
      %2352 = vrot.lane.b32.xlu0 %v974, 20
      %v2353 = vpop.permute.xlu0 %2352
      %2354 = vrot.lane.b32.xlu0 %v975, 20
      %v2355 = vpop.permute.xlu0 %2354
      %2356 = vrot.lane.b32.xlu0 %v1087, 20
      %v2357 = vpop.permute.xlu0 %2356
      %2358 = vrot.lane.b32.xlu0 %v977, 20
      %v2359 = vpop.permute.xlu0 %2358
      %2360 = vrot.lane.b32.xlu0 %v978, 20
      %v2361 = vpop.permute.xlu0 %2360
      %2362 = vrot.lane.b32.xlu0 %v979, 20
      %v2363 = vpop.permute.xlu0 %2362
      %2364 = vrot.lane.b32.xlu0 %v980, 20
      %v2365 = vpop.permute.xlu0 %2364
      %2366 = vrot.lane.b32.xlu0 %v981, 20
      %v2367 = vpop.permute.xlu0 %2366
      %2368 = vrot.lane.b32.xlu0 %v982, 20
      %v2369 = vpop.permute.xlu0 %2368
      %2370 = vrot.lane.b32.xlu0 %v983, 20
      %v2371 = vpop.permute.xlu0 %2370
      %2372 = vrot.lane.b32.xlu0 %v1088, 20
      %v2373 = vpop.permute.xlu0 %2372
      %2374 = vrot.lane.b32.xlu0 %v985, 20
      %v2375 = vpop.permute.xlu0 %2374
      %2376 = vrot.lane.b32.xlu0 %v986, 20
      %v2377 = vpop.permute.xlu0 %2376
      %2378 = vrot.lane.b32.xlu0 %v987, 20
      %v2379 = vpop.permute.xlu0 %2378
      %2380 = vrot.lane.b32.xlu0 %v988, 20
      %v2381 = vpop.permute.xlu0 %2380
      %2382 = vrot.lane.b32.xlu0 %v989, 20
      %v2383 = vpop.permute.xlu0 %2382
      %2384 = vrot.lane.b32.xlu0 %v990, 20
      %v2385 = vpop.permute.xlu0 %2384
      %2386 = vrot.lane.b32.xlu0 %v991, 20
      %v2387 = vpop.permute.xlu0 %2386
      %2388 = vrot.lane.b32.xlu0 %v1089, 20
      %v2389 = vpop.permute.xlu0 %2388
      %2390 = vrot.lane.b32.xlu0 %v993, 20
      %v2391 = vpop.permute.xlu0 %2390
      %2392 = vrot.lane.b32.xlu0 %v994, 20
      %v2393 = vpop.permute.xlu0 %2392
      %2394 = vrot.lane.b32.xlu0 %v995, 20
      %v2395 = vpop.permute.xlu0 %2394
      %2396 = vrot.lane.b32.xlu0 %v996, 20
      %v2397 = vpop.permute.xlu0 %2396
      %2398 = vrot.lane.b32.xlu0 %v997, 20
      %v2399 = vpop.permute.xlu0 %2398
      %2400 = vrot.lane.b32.xlu0 %v998, 20
      %v2401 = vpop.permute.xlu0 %2400
      %2402 = vrot.lane.b32.xlu0 %v999, 20
      %v2403 = vpop.permute.xlu0 %2402
      %2404 = vrot.lane.b32.xlu0 %v1090, 20
      %v2405 = vpop.permute.xlu0 %2404
      %2406 = vrot.lane.b32.xlu0 %v1001, 20
      %v2407 = vpop.permute.xlu0 %2406
      %2408 = vrot.lane.b32.xlu0 %v1002, 20
      %v2409 = vpop.permute.xlu0 %2408
      %2410 = vrot.lane.b32.xlu0 %v1003, 20
      %v2411 = vpop.permute.xlu0 %2410
      %2412 = vrot.lane.b32.xlu0 %v1004, 20
      %v2413 = vpop.permute.xlu0 %2412
      %2414 = vrot.lane.b32.xlu0 %v1005, 20
      %v2415 = vpop.permute.xlu0 %2414
      %2416 = vrot.lane.b32.xlu0 %v1006, 20
      %v2417 = vpop.permute.xlu0 %2416
      %2418 = vrot.lane.b32.xlu0 %v1007, 20
      %v2419 = vpop.permute.xlu0 %2418
      %2420 = vrot.lane.b32.xlu0 %v1091, 20
      %v2421 = vpop.permute.xlu0 %2420
      %2422 = vrot.lane.b32.xlu0 %v1009, 20
      %v2423 = vpop.permute.xlu0 %2422
      %2424 = vrot.lane.b32.xlu0 %v1010, 20
      %v2425 = vpop.permute.xlu0 %2424
      %2426 = vrot.lane.b32.xlu0 %v1011, 20
      %v2427 = vpop.permute.xlu0 %2426
      %2428 = vrot.lane.b32.xlu0 %v1012, 20
      %v2429 = vpop.permute.xlu0 %2428
      %2430 = vrot.lane.b32.xlu0 %v1013, 20
      %v2431 = vpop.permute.xlu0 %2430
      %2432 = vrot.lane.b32.xlu0 %v1014, 20
      %v2433 = vpop.permute.xlu0 %2432
      %2434 = vrot.lane.b32.xlu0 %v1015, 20
      %v2435 = vpop.permute.xlu0 %2434
      %2436 = vrot.lane.b32.xlu0 %v1092, 20
      %v2437 = vpop.permute.xlu0 %2436
      %2438 = vrot.lane.b32.xlu0 %v1017, 20
      %v2439 = vpop.permute.xlu0 %2438
      %2440 = vrot.lane.b32.xlu0 %v1018, 20
      %v2441 = vpop.permute.xlu0 %2440
      %2442 = vrot.lane.b32.xlu0 %v1019, 20
      %v2443 = vpop.permute.xlu0 %2442
      %2444 = vrot.lane.b32.xlu0 %v1020, 20
      %v2445 = vpop.permute.xlu0 %2444
      %2446 = vrot.lane.b32.xlu0 %v1021, 20
      %v2447 = vpop.permute.xlu0 %2446
      %2448 = vrot.lane.b32.xlu0 %v1022, 20
      %v2449 = vpop.permute.xlu0 %2448
      %2450 = vrot.lane.b32.xlu0 %v1023, 20
      %v2451 = vpop.permute.xlu0 %2450
      %2452 = vrot.lane.b32.xlu0 %v1093, 20
      %v2453 = vpop.permute.xlu0 %2452
      %2544 = vrot.lane.b32.xlu0 %v865, 24
      %v2545 = vpop.permute.xlu0 %2544
      %2546 = vrot.lane.b32.xlu0 %v866, 24
      %v2547 = vpop.permute.xlu0 %2546
      %2548 = vrot.lane.b32.xlu0 %v867, 24
      %v2549 = vpop.permute.xlu0 %2548
      %2550 = vrot.lane.b32.xlu0 %v868, 24
      %v2551 = vpop.permute.xlu0 %2550
      %2552 = vrot.lane.b32.xlu0 %v869, 24
      %v2553 = vpop.permute.xlu0 %2552
      %2554 = vrot.lane.b32.xlu0 %v870, 24
      %v2555 = vpop.permute.xlu0 %2554
      %2556 = vrot.lane.b32.xlu0 %v1074, 24
      %v2557 = vpop.permute.xlu0 %2556
      %2558 = vrot.lane.b32.xlu0 %v1144, 24
      %v2559 = vpop.permute.xlu0 %2558
      %2560 = vrot.lane.b32.xlu0 %v873, 24
      %v2561 = vpop.permute.xlu0 %2560
      %2562 = vrot.lane.b32.xlu0 %v874, 24
      %v2563 = vpop.permute.xlu0 %2562
      %2564 = vrot.lane.b32.xlu0 %v875, 24
      %v2565 = vpop.permute.xlu0 %2564
      %2566 = vrot.lane.b32.xlu0 %v876, 24
      %v2567 = vpop.permute.xlu0 %2566
      %2568 = vrot.lane.b32.xlu0 %v877, 24
      %v2569 = vpop.permute.xlu0 %2568
      %2570 = vrot.lane.b32.xlu0 %v878, 24
      %v2571 = vpop.permute.xlu0 %2570
      %2572 = vrot.lane.b32.xlu0 %v1075, 24
      %v2573 = vpop.permute.xlu0 %2572
      %2574 = vrot.lane.b32.xlu0 %v1145, 24
      %v2575 = vpop.permute.xlu0 %2574
      %2576 = vrot.lane.b32.xlu0 %v881, 24
      %v2577 = vpop.permute.xlu0 %2576
      %2578 = vrot.lane.b32.xlu0 %v882, 24
      %v2579 = vpop.permute.xlu0 %2578
      %2580 = vrot.lane.b32.xlu0 %v883, 24
      %v2581 = vpop.permute.xlu0 %2580
      %2582 = vrot.lane.b32.xlu0 %v884, 24
      %v2583 = vpop.permute.xlu0 %2582
      %2584 = vrot.lane.b32.xlu0 %v885, 24
      %v2585 = vpop.permute.xlu0 %2584
      %2586 = vrot.lane.b32.xlu0 %v886, 24
      %v2587 = vpop.permute.xlu0 %2586
      %2588 = vrot.lane.b32.xlu0 %v1076, 24
      %v2589 = vpop.permute.xlu0 %2588
      %2590 = vrot.lane.b32.xlu0 %v1146, 24
      %v2591 = vpop.permute.xlu0 %2590
      %2592 = vrot.lane.b32.xlu0 %v889, 24
      %v2593 = vpop.permute.xlu0 %2592
      %2594 = vrot.lane.b32.xlu0 %v890, 24
      %v2595 = vpop.permute.xlu0 %2594
      %2596 = vrot.lane.b32.xlu0 %v891, 24
      %v2597 = vpop.permute.xlu0 %2596
      %2598 = vrot.lane.b32.xlu0 %v892, 24
      %v2599 = vpop.permute.xlu0 %2598
      %2600 = vrot.lane.b32.xlu0 %v893, 24
      %v2601 = vpop.permute.xlu0 %2600
      %2602 = vrot.lane.b32.xlu0 %v894, 24
      %v2603 = vpop.permute.xlu0 %2602
      %2604 = vrot.lane.b32.xlu0 %v1077, 24
      %v2605 = vpop.permute.xlu0 %2604
      %2606 = vrot.lane.b32.xlu0 %v1147, 24
      %v2607 = vpop.permute.xlu0 %2606
      %2608 = vrot.lane.b32.xlu0 %v897, 24
      %v2609 = vpop.permute.xlu0 %2608
      %2610 = vrot.lane.b32.xlu0 %v898, 24
      %v2611 = vpop.permute.xlu0 %2610
      %2612 = vrot.lane.b32.xlu0 %v899, 24
      %v2613 = vpop.permute.xlu0 %2612
      %2614 = vrot.lane.b32.xlu0 %v900, 24
      %v2615 = vpop.permute.xlu0 %2614
      %2616 = vrot.lane.b32.xlu0 %v901, 24
      %v2617 = vpop.permute.xlu0 %2616
      %2618 = vrot.lane.b32.xlu0 %v902, 24
      %v2619 = vpop.permute.xlu0 %2618
      %2620 = vrot.lane.b32.xlu0 %v1078, 24
      %v2621 = vpop.permute.xlu0 %2620
      %2622 = vrot.lane.b32.xlu0 %v1148, 24
      %v2623 = vpop.permute.xlu0 %2622
      %2624 = vrot.lane.b32.xlu0 %v905, 24
      %v2625 = vpop.permute.xlu0 %2624
      %2626 = vrot.lane.b32.xlu0 %v906, 24
      %v2627 = vpop.permute.xlu0 %2626
      %2628 = vrot.lane.b32.xlu0 %v907, 24
      %v2629 = vpop.permute.xlu0 %2628
      %2630 = vrot.lane.b32.xlu0 %v908, 24
      %v2631 = vpop.permute.xlu0 %2630
      %2632 = vrot.lane.b32.xlu0 %v909, 24
      %v2633 = vpop.permute.xlu0 %2632
      %2634 = vrot.lane.b32.xlu0 %v910, 24
      %v2635 = vpop.permute.xlu0 %2634
      %2636 = vrot.lane.b32.xlu0 %v1079, 24
      %v2637 = vpop.permute.xlu0 %2636
      %2638 = vrot.lane.b32.xlu0 %v1149, 24
      %v2639 = vpop.permute.xlu0 %2638
      %2640 = vrot.lane.b32.xlu0 %v913, 24
      %v2641 = vpop.permute.xlu0 %2640
      %2642 = vrot.lane.b32.xlu0 %v914, 24
      %v2643 = vpop.permute.xlu0 %2642
      %2644 = vrot.lane.b32.xlu0 %v915, 24
      %v2645 = vpop.permute.xlu0 %2644
      %2646 = vrot.lane.b32.xlu0 %v916, 24
      %v2647 = vpop.permute.xlu0 %2646
      %2648 = vrot.lane.b32.xlu0 %v917, 24
      %v2649 = vpop.permute.xlu0 %2648
      %2650 = vrot.lane.b32.xlu0 %v918, 24
      %v2651 = vpop.permute.xlu0 %2650
      %2652 = vrot.lane.b32.xlu0 %v1080, 24
      %v2653 = vpop.permute.xlu0 %2652
      %2654 = vrot.lane.b32.xlu0 %v1150, 24
      %v2655 = vpop.permute.xlu0 %2654
      %2656 = vrot.lane.b32.xlu0 %v921, 24
      %v2657 = vpop.permute.xlu0 %2656
      %2658 = vrot.lane.b32.xlu0 %v922, 24
      %v2659 = vpop.permute.xlu0 %2658
      %2660 = vrot.lane.b32.xlu0 %v923, 24
      %v2661 = vpop.permute.xlu0 %2660
      %2662 = vrot.lane.b32.xlu0 %v924, 24
      %v2663 = vpop.permute.xlu0 %2662
      %2664 = vrot.lane.b32.xlu0 %v925, 24
      %v2665 = vpop.permute.xlu0 %2664
      %2666 = vrot.lane.b32.xlu0 %v926, 24
      %v2667 = vpop.permute.xlu0 %2666
      %2668 = vrot.lane.b32.xlu0 %v1081, 24
      %v2669 = vpop.permute.xlu0 %2668
      %2670 = vrot.lane.b32.xlu0 %v1151, 24
      %v2671 = vpop.permute.xlu0 %2670
      %2672 = vrot.lane.b32.xlu0 %v929, 24
      %v2673 = vpop.permute.xlu0 %2672
      %2674 = vrot.lane.b32.xlu0 %v930, 24
      %v2675 = vpop.permute.xlu0 %2674
      %2676 = vrot.lane.b32.xlu0 %v931, 24
      %v2677 = vpop.permute.xlu0 %2676
      %2678 = vrot.lane.b32.xlu0 %v932, 24
      %v2679 = vpop.permute.xlu0 %2678
      %2680 = vrot.lane.b32.xlu0 %v933, 24
      %v2681 = vpop.permute.xlu0 %2680
      %2682 = vrot.lane.b32.xlu0 %v934, 24
      %v2683 = vpop.permute.xlu0 %2682
      %2684 = vrot.lane.b32.xlu0 %v1082, 24
      %v2685 = vpop.permute.xlu0 %2684
      %2686 = vrot.lane.b32.xlu0 %v1152, 24
      %v2687 = vpop.permute.xlu0 %2686
      %2688 = vrot.lane.b32.xlu0 %v937, 24
      %v2689 = vpop.permute.xlu0 %2688
      %2690 = vrot.lane.b32.xlu0 %v938, 24
      %v2691 = vpop.permute.xlu0 %2690
      %2692 = vrot.lane.b32.xlu0 %v939, 24
      %v2693 = vpop.permute.xlu0 %2692
      %2694 = vrot.lane.b32.xlu0 %v940, 24
      %v2695 = vpop.permute.xlu0 %2694
      %2696 = vrot.lane.b32.xlu0 %v941, 24
      %v2697 = vpop.permute.xlu0 %2696
      %2698 = vrot.lane.b32.xlu0 %v942, 24
      %v2699 = vpop.permute.xlu0 %2698
      %2700 = vrot.lane.b32.xlu0 %v1083, 24
      %v2701 = vpop.permute.xlu0 %2700
      %2702 = vrot.lane.b32.xlu0 %v1153, 24
      %v2703 = vpop.permute.xlu0 %2702
      %2784 = vrot.lane.b32.xlu0 %v364, 28
      %v2785 = vpop.permute.xlu0 %2784
      %2786 = vrot.lane.b32.xlu0 %v365, 28
      %v2787 = vpop.permute.xlu0 %2786
      %2788 = vrot.lane.b32.xlu0 %v366, 28
      %v2789 = vpop.permute.xlu0 %2788
      %2790 = vrot.lane.b32.xlu0 %v367, 28
      %v2791 = vpop.permute.xlu0 %2790
      %2792 = vrot.lane.b32.xlu0 %v368, 28
      %v2793 = vpop.permute.xlu0 %2792
      %2794 = vrot.lane.b32.xlu0 %v369, 28
      %v2795 = vpop.permute.xlu0 %2794
      %2796 = vrot.lane.b32.xlu0 %v370, 28
      %v2797 = vpop.permute.xlu0 %2796
      %2798 = vrot.lane.b32.xlu0 %v371, 28
      %v2799 = vpop.permute.xlu0 %2798
      %2800 = vrot.lane.b32.xlu0 %v374, 28
      %v2801 = vpop.permute.xlu0 %2800
      %2802 = vrot.lane.b32.xlu0 %v375, 28
      %v2803 = vpop.permute.xlu0 %2802
      %2804 = vrot.lane.b32.xlu0 %v376, 28
      %v2805 = vpop.permute.xlu0 %2804
      %2806 = vrot.lane.b32.xlu0 %v377, 28
      %v2807 = vpop.permute.xlu0 %2806
      %2808 = vrot.lane.b32.xlu0 %v378, 28
      %v2809 = vpop.permute.xlu0 %2808
      %2810 = vrot.lane.b32.xlu0 %v379, 28
      %v2811 = vpop.permute.xlu0 %2810
      %2812 = vrot.lane.b32.xlu0 %v380, 28
      %v2813 = vpop.permute.xlu0 %2812
      %2814 = vrot.lane.b32.xlu0 %v381, 28
      %v2815 = vpop.permute.xlu0 %2814
      %2816 = vrot.lane.b32.xlu0 %v384, 28
      %v2817 = vpop.permute.xlu0 %2816
      %2818 = vrot.lane.b32.xlu0 %v385, 28
      %v2819 = vpop.permute.xlu0 %2818
      %2820 = vrot.lane.b32.xlu0 %v386, 28
      %v2821 = vpop.permute.xlu0 %2820
      %2822 = vrot.lane.b32.xlu0 %v387, 28
      %v2823 = vpop.permute.xlu0 %2822
      %2824 = vrot.lane.b32.xlu0 %v388, 28
      %v2825 = vpop.permute.xlu0 %2824
      %2826 = vrot.lane.b32.xlu0 %v389, 28
      %v2827 = vpop.permute.xlu0 %2826
      %2828 = vrot.lane.b32.xlu0 %v390, 28
      %v2829 = vpop.permute.xlu0 %2828
      %2830 = vrot.lane.b32.xlu0 %v391, 28
      %v2831 = vpop.permute.xlu0 %2830
      %2832 = vrot.lane.b32.xlu0 %v394, 28
      %v2833 = vpop.permute.xlu0 %2832
      %2834 = vrot.lane.b32.xlu0 %v395, 28
      %v2835 = vpop.permute.xlu0 %2834
      %2836 = vrot.lane.b32.xlu0 %v396, 28
      %v2837 = vpop.permute.xlu0 %2836
      %2838 = vrot.lane.b32.xlu0 %v397, 28
      %v2839 = vpop.permute.xlu0 %2838
      %2840 = vrot.lane.b32.xlu0 %v398, 28
      %v2841 = vpop.permute.xlu0 %2840
      %2842 = vrot.lane.b32.xlu0 %v399, 28
      %v2843 = vpop.permute.xlu0 %2842
      %2844 = vrot.lane.b32.xlu0 %v400, 28
      %v2845 = vpop.permute.xlu0 %2844
      %2846 = vrot.lane.b32.xlu0 %v401, 28
      %v2847 = vpop.permute.xlu0 %2846
      %2848 = vrot.lane.b32.xlu0 %v404, 28
      %v2849 = vpop.permute.xlu0 %2848
      %2850 = vrot.lane.b32.xlu0 %v405, 28
      %v2851 = vpop.permute.xlu0 %2850
      %2852 = vrot.lane.b32.xlu0 %v406, 28
      %v2853 = vpop.permute.xlu0 %2852
      %2854 = vrot.lane.b32.xlu0 %v407, 28
      %v2855 = vpop.permute.xlu0 %2854
      %2856 = vrot.lane.b32.xlu0 %v408, 28
      %v2857 = vpop.permute.xlu0 %2856
      %2858 = vrot.lane.b32.xlu0 %v409, 28
      %v2859 = vpop.permute.xlu0 %2858
      %2860 = vrot.lane.b32.xlu0 %v410, 28
      %v2861 = vpop.permute.xlu0 %2860
      %2862 = vrot.lane.b32.xlu0 %v411, 28
      %v2863 = vpop.permute.xlu0 %2862
      %2864 = vrot.lane.b32.xlu0 %v414, 28
      %v2865 = vpop.permute.xlu0 %2864
      %2866 = vrot.lane.b32.xlu0 %v415, 28
      %v2867 = vpop.permute.xlu0 %2866
      %2868 = vrot.lane.b32.xlu0 %v416, 28
      %v2869 = vpop.permute.xlu0 %2868
      %2870 = vrot.lane.b32.xlu0 %v417, 28
      %v2871 = vpop.permute.xlu0 %2870
      %2872 = vrot.lane.b32.xlu0 %v418, 28
      %v2873 = vpop.permute.xlu0 %2872
      %2874 = vrot.lane.b32.xlu0 %v419, 28
      %v2875 = vpop.permute.xlu0 %2874
      %2876 = vrot.lane.b32.xlu0 %v420, 28
      %v2877 = vpop.permute.xlu0 %2876
      %2878 = vrot.lane.b32.xlu0 %v421, 28
      %v2879 = vpop.permute.xlu0 %2878
      %2880 = vrot.lane.b32.xlu0 %v424, 28
      %v2881 = vpop.permute.xlu0 %2880
      %2882 = vrot.lane.b32.xlu0 %v425, 28
      %v2883 = vpop.permute.xlu0 %2882
      %2884 = vrot.lane.b32.xlu0 %v426, 28
      %v2885 = vpop.permute.xlu0 %2884
      %2886 = vrot.lane.b32.xlu0 %v427, 28
      %v2887 = vpop.permute.xlu0 %2886
      %2888 = vrot.lane.b32.xlu0 %v428, 28
      %v2889 = vpop.permute.xlu0 %2888
      %2890 = vrot.lane.b32.xlu0 %v429, 28
      %v2891 = vpop.permute.xlu0 %2890
      %2892 = vrot.lane.b32.xlu0 %v430, 28
      %v2893 = vpop.permute.xlu0 %2892
      %2894 = vrot.lane.b32.xlu0 %v431, 28
      %v2895 = vpop.permute.xlu0 %2894
      %2896 = vrot.lane.b32.xlu0 %v434, 28
      %v2897 = vpop.permute.xlu0 %2896
      %2898 = vrot.lane.b32.xlu0 %v435, 28
      %v2899 = vpop.permute.xlu0 %2898
      %2900 = vrot.lane.b32.xlu0 %v436, 28
      %v2901 = vpop.permute.xlu0 %2900
      %2902 = vrot.lane.b32.xlu0 %v437, 28
      %v2903 = vpop.permute.xlu0 %2902
      %2904 = vrot.lane.b32.xlu0 %v438, 28
      %v2905 = vpop.permute.xlu0 %2904
      %2906 = vrot.lane.b32.xlu0 %v439, 28
      %v2907 = vpop.permute.xlu0 %2906
      %2908 = vrot.lane.b32.xlu0 %v440, 28
      %v2909 = vpop.permute.xlu0 %2908
      %2910 = vrot.lane.b32.xlu0 %v441, 28
      %v2911 = vpop.permute.xlu0 %2910
      %2912 = vrot.lane.b32.xlu0 %v444, 28
      %v2913 = vpop.permute.xlu0 %2912
      %2914 = vrot.lane.b32.xlu0 %v445, 28
      %v2915 = vpop.permute.xlu0 %2914
      %2916 = vrot.lane.b32.xlu0 %v446, 28
      %v2917 = vpop.permute.xlu0 %2916
      %2918 = vrot.lane.b32.xlu0 %v447, 28
      %v2919 = vpop.permute.xlu0 %2918
      %2920 = vrot.lane.b32.xlu0 %v448, 28
      %v2921 = vpop.permute.xlu0 %2920
      %2922 = vrot.lane.b32.xlu0 %v449, 28
      %v2923 = vpop.permute.xlu0 %2922
      %2924 = vrot.lane.b32.xlu0 %v450, 28
      %v2925 = vpop.permute.xlu0 %2924
      %2926 = vrot.lane.b32.xlu0 %v451, 28
      %v2927 = vpop.permute.xlu0 %2926
      %2928 = vrot.lane.b32.xlu0 %v454, 28
      %v2929 = vpop.permute.xlu0 %2928
      %2930 = vrot.lane.b32.xlu0 %v455, 28
      %v2931 = vpop.permute.xlu0 %2930
      %2932 = vrot.lane.b32.xlu0 %v456, 28
      %v2933 = vpop.permute.xlu0 %2932
      %2934 = vrot.lane.b32.xlu0 %v457, 28
      %v2935 = vpop.permute.xlu0 %2934
      %2936 = vrot.lane.b32.xlu0 %v458, 28
      %v2937 = vpop.permute.xlu0 %2936
      %2938 = vrot.lane.b32.xlu0 %v459, 28
      %v2939 = vpop.permute.xlu0 %2938
      %2940 = vrot.lane.b32.xlu0 %v460, 28
      %v2941 = vpop.permute.xlu0 %2940
      %2942 = vrot.lane.b32.xlu0 %v461, 28
      %v2943 = vpop.permute.xlu0 %2942
      %3034 = vrot.lane.b32.xlu0 %v946, 32
      %v3035 = vpop.permute.xlu0 %3034
      %3036 = vrot.lane.b32.xlu0 %v947, 32
      %v3037 = vpop.permute.xlu0 %3036
      %3038 = vrot.lane.b32.xlu0 %v948, 32
      %v3039 = vpop.permute.xlu0 %3038
      %3040 = vrot.lane.b32.xlu0 %v949, 32
      %v3041 = vpop.permute.xlu0 %3040
      %3042 = vrot.lane.b32.xlu0 %v950, 32
      %v3043 = vpop.permute.xlu0 %3042
      %3044 = vrot.lane.b32.xlu0 %v951, 32
      %v3045 = vpop.permute.xlu0 %3044
      %3046 = vrot.lane.b32.xlu0 %v1084, 32
      %v3047 = vpop.permute.xlu0 %3046
      %3048 = vrot.lane.b32.xlu0 %v1154, 32
      %v3049 = vpop.permute.xlu0 %3048
      %3050 = vrot.lane.b32.xlu0 %v954, 32
      %v3051 = vpop.permute.xlu0 %3050
      %3052 = vrot.lane.b32.xlu0 %v955, 32
      %v3053 = vpop.permute.xlu0 %3052
      %3054 = vrot.lane.b32.xlu0 %v956, 32
      %v3055 = vpop.permute.xlu0 %3054
      %3056 = vrot.lane.b32.xlu0 %v957, 32
      %v3057 = vpop.permute.xlu0 %3056
      %3058 = vrot.lane.b32.xlu0 %v958, 32
      %v3059 = vpop.permute.xlu0 %3058
      %3060 = vrot.lane.b32.xlu0 %v959, 32
      %v3061 = vpop.permute.xlu0 %3060
      %3062 = vrot.lane.b32.xlu0 %v1085, 32
      %v3063 = vpop.permute.xlu0 %3062
      %3064 = vrot.lane.b32.xlu0 %v1155, 32
      %v3065 = vpop.permute.xlu0 %3064
      %3066 = vrot.lane.b32.xlu0 %v962, 32
      %v3067 = vpop.permute.xlu0 %3066
      %3068 = vrot.lane.b32.xlu0 %v963, 32
      %v3069 = vpop.permute.xlu0 %3068
      %3070 = vrot.lane.b32.xlu0 %v964, 32
      %v3071 = vpop.permute.xlu0 %3070
      %3072 = vrot.lane.b32.xlu0 %v965, 32
      %v3073 = vpop.permute.xlu0 %3072
      %3074 = vrot.lane.b32.xlu0 %v966, 32
      %v3075 = vpop.permute.xlu0 %3074
      %3076 = vrot.lane.b32.xlu0 %v967, 32
      %v3077 = vpop.permute.xlu0 %3076
      %3078 = vrot.lane.b32.xlu0 %v1086, 32
      %v3079 = vpop.permute.xlu0 %3078
      %3080 = vrot.lane.b32.xlu0 %v1156, 32
      %v3081 = vpop.permute.xlu0 %3080
      %3082 = vrot.lane.b32.xlu0 %v970, 32
      %v3083 = vpop.permute.xlu0 %3082
      %3084 = vrot.lane.b32.xlu0 %v971, 32
      %v3085 = vpop.permute.xlu0 %3084
      %3086 = vrot.lane.b32.xlu0 %v972, 32
      %v3087 = vpop.permute.xlu0 %3086
      %3088 = vrot.lane.b32.xlu0 %v973, 32
      %v3089 = vpop.permute.xlu0 %3088
      %3090 = vrot.lane.b32.xlu0 %v974, 32
      %v3091 = vpop.permute.xlu0 %3090
      %3092 = vrot.lane.b32.xlu0 %v975, 32
      %v3093 = vpop.permute.xlu0 %3092
      %3094 = vrot.lane.b32.xlu0 %v1087, 32
      %v3095 = vpop.permute.xlu0 %3094
      %3096 = vrot.lane.b32.xlu0 %v1157, 32
      %v3097 = vpop.permute.xlu0 %3096
      %3098 = vrot.lane.b32.xlu0 %v978, 32
      %v3099 = vpop.permute.xlu0 %3098
      %3100 = vrot.lane.b32.xlu0 %v979, 32
      %v3101 = vpop.permute.xlu0 %3100
      %3102 = vrot.lane.b32.xlu0 %v980, 32
      %v3103 = vpop.permute.xlu0 %3102
      %3104 = vrot.lane.b32.xlu0 %v981, 32
      %v3105 = vpop.permute.xlu0 %3104
      %3106 = vrot.lane.b32.xlu0 %v982, 32
      %v3107 = vpop.permute.xlu0 %3106
      %3108 = vrot.lane.b32.xlu0 %v983, 32
      %v3109 = vpop.permute.xlu0 %3108
      %3110 = vrot.lane.b32.xlu0 %v1088, 32
      %v3111 = vpop.permute.xlu0 %3110
      %3112 = vrot.lane.b32.xlu0 %v1158, 32
      %v3113 = vpop.permute.xlu0 %3112
      %3114 = vrot.lane.b32.xlu0 %v986, 32
      %v3115 = vpop.permute.xlu0 %3114
      %3116 = vrot.lane.b32.xlu0 %v987, 32
      %v3117 = vpop.permute.xlu0 %3116
      %3118 = vrot.lane.b32.xlu0 %v988, 32
      %v3119 = vpop.permute.xlu0 %3118
      %3120 = vrot.lane.b32.xlu0 %v989, 32
      %v3121 = vpop.permute.xlu0 %3120
      %3122 = vrot.lane.b32.xlu0 %v990, 32
      %v3123 = vpop.permute.xlu0 %3122
      %3124 = vrot.lane.b32.xlu0 %v991, 32
      %v3125 = vpop.permute.xlu0 %3124
      %3126 = vrot.lane.b32.xlu0 %v1089, 32
      %v3127 = vpop.permute.xlu0 %3126
      %3128 = vrot.lane.b32.xlu0 %v1159, 32
      %v3129 = vpop.permute.xlu0 %3128
      %3130 = vrot.lane.b32.xlu0 %v994, 32
      %v3131 = vpop.permute.xlu0 %3130
      %3132 = vrot.lane.b32.xlu0 %v995, 32
      %v3133 = vpop.permute.xlu0 %3132
      %3134 = vrot.lane.b32.xlu0 %v996, 32
      %v3135 = vpop.permute.xlu0 %3134
      %3136 = vrot.lane.b32.xlu0 %v997, 32
      %v3137 = vpop.permute.xlu0 %3136
      %3138 = vrot.lane.b32.xlu0 %v998, 32
      %v3139 = vpop.permute.xlu0 %3138
      %3140 = vrot.lane.b32.xlu0 %v999, 32
      %v3141 = vpop.permute.xlu0 %3140
      %3142 = vrot.lane.b32.xlu0 %v1090, 32
      %v3143 = vpop.permute.xlu0 %3142
      %3144 = vrot.lane.b32.xlu0 %v1160, 32
      %v3145 = vpop.permute.xlu0 %3144
      %3146 = vrot.lane.b32.xlu0 %v1002, 32
      %v3147 = vpop.permute.xlu0 %3146
      %3148 = vrot.lane.b32.xlu0 %v1003, 32
      %v3149 = vpop.permute.xlu0 %3148
      %3150 = vrot.lane.b32.xlu0 %v1004, 32
      %v3151 = vpop.permute.xlu0 %3150
      %3152 = vrot.lane.b32.xlu0 %v1005, 32
      %v3153 = vpop.permute.xlu0 %3152
      %3154 = vrot.lane.b32.xlu0 %v1006, 32
      %v3155 = vpop.permute.xlu0 %3154
      %3156 = vrot.lane.b32.xlu0 %v1007, 32
      %v3157 = vpop.permute.xlu0 %3156
      %3158 = vrot.lane.b32.xlu0 %v1091, 32
      %v3159 = vpop.permute.xlu0 %3158
      %3160 = vrot.lane.b32.xlu0 %v1161, 32
      %v3161 = vpop.permute.xlu0 %3160
      %3162 = vrot.lane.b32.xlu0 %v1010, 32
      %v3163 = vpop.permute.xlu0 %3162
      %3164 = vrot.lane.b32.xlu0 %v1011, 32
      %v3165 = vpop.permute.xlu0 %3164
      %3166 = vrot.lane.b32.xlu0 %v1012, 32
      %v3167 = vpop.permute.xlu0 %3166
      %3168 = vrot.lane.b32.xlu0 %v1013, 32
      %v3169 = vpop.permute.xlu0 %3168
      %3170 = vrot.lane.b32.xlu0 %v1014, 32
      %v3171 = vpop.permute.xlu0 %3170
      %3172 = vrot.lane.b32.xlu0 %v1015, 32
      %v3173 = vpop.permute.xlu0 %3172
      %3174 = vrot.lane.b32.xlu0 %v1092, 32
      %v3175 = vpop.permute.xlu0 %3174
      %3176 = vrot.lane.b32.xlu0 %v1162, 32
      %v3177 = vpop.permute.xlu0 %3176
      %3178 = vrot.lane.b32.xlu0 %v1018, 32
      %v3179 = vpop.permute.xlu0 %3178
      %3180 = vrot.lane.b32.xlu0 %v1019, 32
      %v3181 = vpop.permute.xlu0 %3180
      %3182 = vrot.lane.b32.xlu0 %v1020, 32
      %v3183 = vpop.permute.xlu0 %3182
      %3184 = vrot.lane.b32.xlu0 %v1021, 32
      %v3185 = vpop.permute.xlu0 %3184
      %3186 = vrot.lane.b32.xlu0 %v1022, 32
      %v3187 = vpop.permute.xlu0 %3186
      %3188 = vrot.lane.b32.xlu0 %v1023, 32
      %v3189 = vpop.permute.xlu0 %3188
      %3190 = vrot.lane.b32.xlu0 %v1093, 32
      %v3191 = vpop.permute.xlu0 %3190
      %3192 = vrot.lane.b32.xlu0 %v1163, 32
      %v3193 = vpop.permute.xlu0 %3192
      %v3274 = vsel %vm236, %v863, %v1165
      %v3275 = vsel %vm236, %v864, %v1167
      %v3276 = vsel %vm236, %v865, %v1169
      %v3277 = vsel %vm236, %v866, %v1171
      %v3278 = vsel %vm236, %v867, %v1173
      %v3279 = vsel %vm236, %v868, %v1175
      %v3280 = vsel %vm236, %v869, %v1177
      %v3281 = vsel %vm236, %v870, %v1179
      %v3282 = vsel %vm236, %v871, %v1181
      %v3283 = vsel %vm236, %v872, %v1183
      %v3284 = vsel %vm236, %v873, %v1185
      %v3285 = vsel %vm236, %v874, %v1187
      %v3286 = vsel %vm236, %v875, %v1189
      %v3287 = vsel %vm236, %v876, %v1191
      %v3288 = vsel %vm236, %v877, %v1193
      %v3289 = vsel %vm236, %v878, %v1195
      %v3290 = vsel %vm236, %v879, %v1197
      %v3291 = vsel %vm236, %v880, %v1199
      %v3292 = vsel %vm236, %v881, %v1201
      %v3293 = vsel %vm236, %v882, %v1203
      %v3294 = vsel %vm236, %v883, %v1205
      %v3295 = vsel %vm236, %v884, %v1207
      %v3296 = vsel %vm236, %v885, %v1209
      %v3297 = vsel %vm236, %v886, %v1211
      %v3298 = vsel %vm236, %v887, %v1213
      %v3299 = vsel %vm236, %v888, %v1215
      %v3300 = vsel %vm236, %v889, %v1217
      %v3301 = vsel %vm236, %v890, %v1219
      %v3302 = vsel %vm236, %v891, %v1221
      %v3303 = vsel %vm236, %v892, %v1223
      %v3304 = vsel %vm236, %v893, %v1225
      %v3305 = vsel %vm236, %v894, %v1227
      %v3306 = vsel %vm236, %v895, %v1229
      %v3307 = vsel %vm236, %v896, %v1231
      %v3308 = vsel %vm236, %v897, %v1233
      %v3309 = vsel %vm236, %v898, %v1235
      %v3310 = vsel %vm236, %v899, %v1237
      %v3311 = vsel %vm236, %v900, %v1239
      %v3312 = vsel %vm236, %v901, %v1241
      %v3313 = vsel %vm236, %v902, %v1243
      %v3314 = vsel %vm236, %v903, %v1245
      %v3315 = vsel %vm236, %v904, %v1247
      %v3316 = vsel %vm236, %v905, %v1249
      %v3317 = vsel %vm236, %v906, %v1251
      %v3318 = vsel %vm236, %v907, %v1253
      %v3319 = vsel %vm236, %v908, %v1255
      %v3320 = vsel %vm236, %v909, %v1257
      %v3321 = vsel %vm236, %v910, %v1259
      %v3322 = vsel %vm236, %v911, %v1261
      %v3323 = vsel %vm236, %v912, %v1263
      %v3324 = vsel %vm236, %v913, %v1265
      %v3325 = vsel %vm236, %v914, %v1267
      %v3326 = vsel %vm236, %v915, %v1269
      %v3327 = vsel %vm236, %v916, %v1271
      %v3328 = vsel %vm236, %v917, %v1273
      %v3329 = vsel %vm236, %v918, %v1275
      %v3330 = vsel %vm236, %v919, %v1277
      %v3331 = vsel %vm236, %v920, %v1279
      %v3332 = vsel %vm236, %v921, %v1281
      %v3333 = vsel %vm236, %v922, %v1283
      %v3334 = vsel %vm236, %v923, %v1285
      %v3335 = vsel %vm236, %v924, %v1287
      %v3336 = vsel %vm236, %v925, %v1289
      %v3337 = vsel %vm236, %v926, %v1291
      %v3338 = vsel %vm236, %v927, %v1293
      %v3339 = vsel %vm236, %v928, %v1295
      %v3340 = vsel %vm236, %v929, %v1297
      %v3341 = vsel %vm236, %v930, %v1299
      %v3342 = vsel %vm236, %v931, %v1301
      %v3343 = vsel %vm236, %v932, %v1303
      %v3344 = vsel %vm236, %v933, %v1305
      %v3345 = vsel %vm236, %v934, %v1307
      %v3346 = vsel %vm236, %v935, %v1309
      %v3347 = vsel %vm236, %v936, %v1311
      %v3348 = vsel %vm236, %v937, %v1313
      %v3349 = vsel %vm236, %v938, %v1315
      %v3350 = vsel %vm236, %v939, %v1317
      %v3351 = vsel %vm236, %v940, %v1319
      %v3352 = vsel %vm236, %v941, %v1321
      %v3353 = vsel %vm236, %v942, %v1323
      %vm3354 = vcmask 64512
      %v3355 = vsel %vm3354, %v3274, %v1485
      %v3356 = vsel %vm3354, %v3275, %v1487
      %v3357 = vsel %vm3354, %v3276, %v1489
      %v3358 = vsel %vm3354, %v3277, %v1491
      %v3359 = vsel %vm3354, %v3278, %v1493
      %v3360 = vsel %vm3354, %v3279, %v1495
      %v3361 = vsel %vm3354, %v3280, %v1497
      %v3362 = vsel %vm3354, %v3281, %v1499
      %v3363 = vsel %vm3354, %v3282, %v1501
      %v3364 = vsel %vm3354, %v3283, %v1503
      %v3365 = vsel %vm3354, %v3284, %v1505
      %v3366 = vsel %vm3354, %v3285, %v1507
      %v3367 = vsel %vm3354, %v3286, %v1509
      %v3368 = vsel %vm3354, %v3287, %v1511
      %v3369 = vsel %vm3354, %v3288, %v1513
      %v3370 = vsel %vm3354, %v3289, %v1515
      %v3371 = vsel %vm3354, %v3290, %v1517
      %v3372 = vsel %vm3354, %v3291, %v1519
      %v3373 = vsel %vm3354, %v3292, %v1521
      %v3374 = vsel %vm3354, %v3293, %v1523
      %v3375 = vsel %vm3354, %v3294, %v1525
      %v3376 = vsel %vm3354, %v3295, %v1527
      %v3377 = vsel %vm3354, %v3296, %v1529
      %v3378 = vsel %vm3354, %v3297, %v1531
      %v3379 = vsel %vm3354, %v3298, %v1533
      %v3380 = vsel %vm3354, %v3299, %v1535
      %v3381 = vsel %vm3354, %v3300, %v1537
      %v3382 = vsel %vm3354, %v3301, %v1539
      %v3383 = vsel %vm3354, %v3302, %v1541
      %v3384 = vsel %vm3354, %v3303, %v1543
      %v3385 = vsel %vm3354, %v3304, %v1545
      %v3386 = vsel %vm3354, %v3305, %v1547
      %v3387 = vsel %vm3354, %v3306, %v1549
      %v3388 = vsel %vm3354, %v3307, %v1551
      %v3389 = vsel %vm3354, %v3308, %v1553
      %v3390 = vsel %vm3354, %v3309, %v1555
      %v3391 = vsel %vm3354, %v3310, %v1557
      %v3392 = vsel %vm3354, %v3311, %v1559
      %v3393 = vsel %vm3354, %v3312, %v1561
      %v3394 = vsel %vm3354, %v3313, %v1563
      %v3395 = vsel %vm3354, %v3314, %v1565
      %v3396 = vsel %vm3354, %v3315, %v1567
      %v3397 = vsel %vm3354, %v3316, %v1569
      %v3398 = vsel %vm3354, %v3317, %v1571
      %v3399 = vsel %vm3354, %v3318, %v1573
      %v3400 = vsel %vm3354, %v3319, %v1575
      %v3401 = vsel %vm3354, %v3320, %v1577
      %v3402 = vsel %vm3354, %v3321, %v1579
      %v3403 = vsel %vm3354, %v3322, %v1581
      %v3404 = vsel %vm3354, %v3323, %v1583
      %v3405 = vsel %vm3354, %v3324, %v1585
      %v3406 = vsel %vm3354, %v3325, %v1587
      %v3407 = vsel %vm3354, %v3326, %v1589
      %v3408 = vsel %vm3354, %v3327, %v1591
      %v3409 = vsel %vm3354, %v3328, %v1593
      %v3410 = vsel %vm3354, %v3329, %v1595
      %v3411 = vsel %vm3354, %v3330, %v1597
      %v3412 = vsel %vm3354, %v3331, %v1599
      %v3413 = vsel %vm3354, %v3332, %v1601
      %v3414 = vsel %vm3354, %v3333, %v1603
      %v3415 = vsel %vm3354, %v3334, %v1605
      %v3416 = vsel %vm3354, %v3335, %v1607
      %v3417 = vsel %vm3354, %v3336, %v1609
      %v3418 = vsel %vm3354, %v3337, %v1611
      %v3419 = vsel %vm3354, %v3338, %v1613
      %v3420 = vsel %vm3354, %v3339, %v1615
      %v3421 = vsel %vm3354, %v3340, %v1617
      %v3422 = vsel %vm3354, %v3341, %v1619
      %v3423 = vsel %vm3354, %v3342, %v1621
      %v3424 = vsel %vm3354, %v3343, %v1623
      %v3425 = vsel %vm3354, %v3344, %v1625
      %v3426 = vsel %vm3354, %v3345, %v1627
      %v3427 = vsel %vm3354, %v3346, %v1629
      %v3428 = vsel %vm3354, %v3347, %v1631
      %v3429 = vsel %vm3354, %v3348, %v1633
      %v3430 = vsel %vm3354, %v3349, %v1635
      %v3431 = vsel %vm3354, %v3350, %v1637
      %v3432 = vsel %vm3354, %v3351, %v1639
      %v3433 = vsel %vm3354, %v3352, %v1641
      %v3434 = vsel %vm3354, %v3353, %v1643
      %vm3435 = vcmask 97280
      %v3436 = vsel %vm3435, %v3355, %v1805
      %v3437 = vsel %vm3435, %v3356, %v1807
      %v3438 = vsel %vm3435, %v3357, %v1809
      %v3439 = vsel %vm3435, %v3358, %v1811
      %v3440 = vsel %vm3435, %v3359, %v1813
      %v3441 = vsel %vm3435, %v3360, %v1815
      %v3442 = vsel %vm3435, %v3361, %v1817
      %v3443 = vsel %vm3435, %v3362, %v1819
      %v3444 = vsel %vm3435, %v3363, %v1821
      %v3445 = vsel %vm3435, %v3364, %v1823
      %v3446 = vsel %vm3435, %v3365, %v1825
      %v3447 = vsel %vm3435, %v3366, %v1827
      %v3448 = vsel %vm3435, %v3367, %v1829
      %v3449 = vsel %vm3435, %v3368, %v1831
      %v3450 = vsel %vm3435, %v3369, %v1833
      %v3451 = vsel %vm3435, %v3370, %v1835
      %v3452 = vsel %vm3435, %v3371, %v1837
      %v3453 = vsel %vm3435, %v3372, %v1839
      %v3454 = vsel %vm3435, %v3373, %v1841
      %v3455 = vsel %vm3435, %v3374, %v1843
      %v3456 = vsel %vm3435, %v3375, %v1845
      %v3457 = vsel %vm3435, %v3376, %v1847
      %v3458 = vsel %vm3435, %v3377, %v1849
      %v3459 = vsel %vm3435, %v3378, %v1851
      %v3460 = vsel %vm3435, %v3379, %v1853
      %v3461 = vsel %vm3435, %v3380, %v1855
      %v3462 = vsel %vm3435, %v3381, %v1857
      %v3463 = vsel %vm3435, %v3382, %v1859
      %v3464 = vsel %vm3435, %v3383, %v1861
      %v3465 = vsel %vm3435, %v3384, %v1863
      %v3466 = vsel %vm3435, %v3385, %v1865
      %v3467 = vsel %vm3435, %v3386, %v1867
      %v3468 = vsel %vm3435, %v3387, %v1869
      %v3469 = vsel %vm3435, %v3388, %v1871
      %v3470 = vsel %vm3435, %v3389, %v1873
      %v3471 = vsel %vm3435, %v3390, %v1875
      %v3472 = vsel %vm3435, %v3391, %v1877
      %v3473 = vsel %vm3435, %v3392, %v1879
      %v3474 = vsel %vm3435, %v3393, %v1881
      %v3475 = vsel %vm3435, %v3394, %v1883
      %v3476 = vsel %vm3435, %v3395, %v1885
      %v3477 = vsel %vm3435, %v3396, %v1887
      %v3478 = vsel %vm3435, %v3397, %v1889
      %v3479 = vsel %vm3435, %v3398, %v1891
      %v3480 = vsel %vm3435, %v3399, %v1893
      %v3481 = vsel %vm3435, %v3400, %v1895
      %v3482 = vsel %vm3435, %v3401, %v1897
      %v3483 = vsel %vm3435, %v3402, %v1899
      %v3484 = vsel %vm3435, %v3403, %v1901
      %v3485 = vsel %vm3435, %v3404, %v1903
      %v3486 = vsel %vm3435, %v3405, %v1905
      %v3487 = vsel %vm3435, %v3406, %v1907
      %v3488 = vsel %vm3435, %v3407, %v1909
      %v3489 = vsel %vm3435, %v3408, %v1911
      %v3490 = vsel %vm3435, %v3409, %v1913
      %v3491 = vsel %vm3435, %v3410, %v1915
      %v3492 = vsel %vm3435, %v3411, %v1917
      %v3493 = vsel %vm3435, %v3412, %v1919
      %v3494 = vsel %vm3435, %v3413, %v1921
      %v3495 = vsel %vm3435, %v3414, %v1923
      %v3496 = vsel %vm3435, %v3415, %v1925
      %v3497 = vsel %vm3435, %v3416, %v1927
      %v3498 = vsel %vm3435, %v3417, %v1929
      %v3499 = vsel %vm3435, %v3418, %v1931
      %v3500 = vsel %vm3435, %v3419, %v1933
      %v3501 = vsel %vm3435, %v3420, %v1935
      %v3502 = vsel %vm3435, %v3421, %v1937
      %v3503 = vsel %vm3435, %v3422, %v1939
      %v3504 = vsel %vm3435, %v3423, %v1941
      %v3505 = vsel %vm3435, %v3424, %v1943
      %v3506 = vsel %vm3435, %v3425, %v1945
      %v3507 = vsel %vm3435, %v3426, %v1947
      %v3508 = vsel %vm3435, %v3427, %v1949
      %v3509 = vsel %vm3435, %v3428, %v1951
      %v3510 = vsel %vm3435, %v3429, %v1953
      %v3511 = vsel %vm3435, %v3430, %v1955
      %v3512 = vsel %vm3435, %v3431, %v1957
      %v3513 = vsel %vm3435, %v3432, %v1959
      %v3514 = vsel %vm3435, %v3433, %v1961
      %v3515 = vsel %vm3435, %v3434, %v1963
      %vm3516 = vcmask 130048
      %v3517 = vsel %vm3516, %v3436, %v2045
      %v3518 = vsel %vm3516, %v3437, %v2047
      %v3519 = vsel %vm3516, %v3438, %v2049
      %v3520 = vsel %vm3516, %v3439, %v2051
      %v3521 = vsel %vm3516, %v3440, %v2053
      %v3522 = vsel %vm3516, %v3441, %v2055
      %v3523 = vsel %vm3516, %v3442, %v2057
      %v3524 = vsel %vm3516, %v3443, %v2059
      %v3525 = vsel %vm3516, %v3444, %v2061
      %v3526 = vsel %vm3516, %v3445, %v2063
      %v3527 = vsel %vm3516, %v3446, %v2065
      %v3528 = vsel %vm3516, %v3447, %v2067
      %v3529 = vsel %vm3516, %v3448, %v2069
      %v3530 = vsel %vm3516, %v3449, %v2071
      %v3531 = vsel %vm3516, %v3450, %v2073
      %v3532 = vsel %vm3516, %v3451, %v2075
      %v3533 = vsel %vm3516, %v3452, %v2077
      %v3534 = vsel %vm3516, %v3453, %v2079
      %v3535 = vsel %vm3516, %v3454, %v2081
      %v3536 = vsel %vm3516, %v3455, %v2083
      %v3537 = vsel %vm3516, %v3456, %v2085
      %v3538 = vsel %vm3516, %v3457, %v2087
      %v3539 = vsel %vm3516, %v3458, %v2089
      %v3540 = vsel %vm3516, %v3459, %v2091
      %v3541 = vsel %vm3516, %v3460, %v2093
      %v3542 = vsel %vm3516, %v3461, %v2095
      %v3543 = vsel %vm3516, %v3462, %v2097
      %v3544 = vsel %vm3516, %v3463, %v2099
      %v3545 = vsel %vm3516, %v3464, %v2101
      %v3546 = vsel %vm3516, %v3465, %v2103
      %v3547 = vsel %vm3516, %v3466, %v2105
      %v3548 = vsel %vm3516, %v3467, %v2107
      %v3549 = vsel %vm3516, %v3468, %v2109
      %v3550 = vsel %vm3516, %v3469, %v2111
      %v3551 = vsel %vm3516, %v3470, %v2113
      %v3552 = vsel %vm3516, %v3471, %v2115
      %v3553 = vsel %vm3516, %v3472, %v2117
      %v3554 = vsel %vm3516, %v3473, %v2119
      %v3555 = vsel %vm3516, %v3474, %v2121
      %v3556 = vsel %vm3516, %v3475, %v2123
      %v3557 = vsel %vm3516, %v3476, %v2125
      %v3558 = vsel %vm3516, %v3477, %v2127
      %v3559 = vsel %vm3516, %v3478, %v2129
      %v3560 = vsel %vm3516, %v3479, %v2131
      %v3561 = vsel %vm3516, %v3480, %v2133
      %v3562 = vsel %vm3516, %v3481, %v2135
      %v3563 = vsel %vm3516, %v3482, %v2137
      %v3564 = vsel %vm3516, %v3483, %v2139
      %v3565 = vsel %vm3516, %v3484, %v2141
      %v3566 = vsel %vm3516, %v3485, %v2143
      %v3567 = vsel %vm3516, %v3486, %v2145
      %v3568 = vsel %vm3516, %v3487, %v2147
      %v3569 = vsel %vm3516, %v3488, %v2149
      %v3570 = vsel %vm3516, %v3489, %v2151
      %v3571 = vsel %vm3516, %v3490, %v2153
      %v3572 = vsel %vm3516, %v3491, %v2155
      %v3573 = vsel %vm3516, %v3492, %v2157
      %v3574 = vsel %vm3516, %v3493, %v2159
      %v3575 = vsel %vm3516, %v3494, %v2161
      %v3576 = vsel %vm3516, %v3495, %v2163
      %v3577 = vsel %vm3516, %v3496, %v2165
      %v3578 = vsel %vm3516, %v3497, %v2167
      %v3579 = vsel %vm3516, %v3498, %v2169
      %v3580 = vsel %vm3516, %v3499, %v2171
      %v3581 = vsel %vm3516, %v3500, %v2173
      %v3582 = vsel %vm3516, %v3501, %v2175
      %v3583 = vsel %vm3516, %v3502, %v2177
      %v3584 = vsel %vm3516, %v3503, %v2179
      %v3585 = vsel %vm3516, %v3504, %v2181
      %v3586 = vsel %vm3516, %v3505, %v2183
      %v3587 = vsel %vm3516, %v3506, %v2185
      %v3588 = vsel %vm3516, %v3507, %v2187
      %v3589 = vsel %vm3516, %v3508, %v2189
      %v3590 = vsel %vm3516, %v3509, %v2191
      %v3591 = vsel %vm3516, %v3510, %v2193
      %v3592 = vsel %vm3516, %v3511, %v2195
      %v3593 = vsel %vm3516, %v3512, %v2197
      %v3594 = vsel %vm3516, %v3513, %v2199
      %v3595 = vsel %vm3516, %v3514, %v2201
      %v3596 = vsel %vm3516, %v3515, %v2203
      %vm3597 = vcmask 162816
      %v3598 = vsel %vm3597, %v3517, %v2295
      %v3599 = vsel %vm3597, %v3518, %v2297
      %v3600 = vsel %vm3597, %v3519, %v2299
      %v3601 = vsel %vm3597, %v3520, %v2301
      %v3602 = vsel %vm3597, %v3521, %v2303
      %v3603 = vsel %vm3597, %v3522, %v2305
      %v3604 = vsel %vm3597, %v3523, %v2307
      %v3605 = vsel %vm3597, %v3524, %v2309
      %v3606 = vsel %vm3597, %v3525, %v2311
      %v3607 = vsel %vm3597, %v3526, %v2313
      %v3608 = vsel %vm3597, %v3527, %v2315
      %v3609 = vsel %vm3597, %v3528, %v2317
      %v3610 = vsel %vm3597, %v3529, %v2319
      %v3611 = vsel %vm3597, %v3530, %v2321
      %v3612 = vsel %vm3597, %v3531, %v2323
      %v3613 = vsel %vm3597, %v3532, %v2325
      %v3614 = vsel %vm3597, %v3533, %v2327
      %v3615 = vsel %vm3597, %v3534, %v2329
      %v3616 = vsel %vm3597, %v3535, %v2331
      %v3617 = vsel %vm3597, %v3536, %v2333
      %v3618 = vsel %vm3597, %v3537, %v2335
      %v3619 = vsel %vm3597, %v3538, %v2337
      %v3620 = vsel %vm3597, %v3539, %v2339
      %v3621 = vsel %vm3597, %v3540, %v2341
      %v3622 = vsel %vm3597, %v3541, %v2343
      %v3623 = vsel %vm3597, %v3542, %v2345
      %v3624 = vsel %vm3597, %v3543, %v2347
      %v3625 = vsel %vm3597, %v3544, %v2349
      %v3626 = vsel %vm3597, %v3545, %v2351
      %v3627 = vsel %vm3597, %v3546, %v2353
      %v3628 = vsel %vm3597, %v3547, %v2355
      %v3629 = vsel %vm3597, %v3548, %v2357
      %v3630 = vsel %vm3597, %v3549, %v2359
      %v3631 = vsel %vm3597, %v3550, %v2361
      %v3632 = vsel %vm3597, %v3551, %v2363
      %v3633 = vsel %vm3597, %v3552, %v2365
      %v3634 = vsel %vm3597, %v3553, %v2367
      %v3635 = vsel %vm3597, %v3554, %v2369
      %v3636 = vsel %vm3597, %v3555, %v2371
      %v3637 = vsel %vm3597, %v3556, %v2373
      %v3638 = vsel %vm3597, %v3557, %v2375
      %v3639 = vsel %vm3597, %v3558, %v2377
      %v3640 = vsel %vm3597, %v3559, %v2379
      %v3641 = vsel %vm3597, %v3560, %v2381
      %v3642 = vsel %vm3597, %v3561, %v2383
      %v3643 = vsel %vm3597, %v3562, %v2385
      %v3644 = vsel %vm3597, %v3563, %v2387
      %v3645 = vsel %vm3597, %v3564, %v2389
      %v3646 = vsel %vm3597, %v3565, %v2391
      %v3647 = vsel %vm3597, %v3566, %v2393
      %v3648 = vsel %vm3597, %v3567, %v2395
      %v3649 = vsel %vm3597, %v3568, %v2397
      %v3650 = vsel %vm3597, %v3569, %v2399
      %v3651 = vsel %vm3597, %v3570, %v2401
      %v3652 = vsel %vm3597, %v3571, %v2403
      %v3653 = vsel %vm3597, %v3572, %v2405
      %v3654 = vsel %vm3597, %v3573, %v2407
      %v3655 = vsel %vm3597, %v3574, %v2409
      %v3656 = vsel %vm3597, %v3575, %v2411
      %v3657 = vsel %vm3597, %v3576, %v2413
      %v3658 = vsel %vm3597, %v3577, %v2415
      %v3659 = vsel %vm3597, %v3578, %v2417
      %v3660 = vsel %vm3597, %v3579, %v2419
      %v3661 = vsel %vm3597, %v3580, %v2421
      %v3662 = vsel %vm3597, %v3581, %v2423
      %v3663 = vsel %vm3597, %v3582, %v2425
      %v3664 = vsel %vm3597, %v3583, %v2427
      %v3665 = vsel %vm3597, %v3584, %v2429
      %v3666 = vsel %vm3597, %v3585, %v2431
      %v3667 = vsel %vm3597, %v3586, %v2433
      %v3668 = vsel %vm3597, %v3587, %v2435
      %v3669 = vsel %vm3597, %v3588, %v2437
      %v3670 = vsel %vm3597, %v3589, %v2439
      %v3671 = vsel %vm3597, %v3590, %v2441
      %v3672 = vsel %vm3597, %v3591, %v2443
      %v3673 = vsel %vm3597, %v3592, %v2445
      %v3674 = vsel %vm3597, %v3593, %v2447
      %v3675 = vsel %vm3597, %v3594, %v2449
      %v3676 = vsel %vm3597, %v3595, %v2451
      %v3677 = vsel %vm3597, %v3596, %v2453
      %vm3678 = vcmask 195584
      %v3679 = vsel %vm3678, %v3598, %v2545
      %v3680 = vsel %vm3678, %v3599, %v2547
      %v3681 = vsel %vm3678, %v3600, %v2549
      %v3682 = vsel %vm3678, %v3601, %v2551
      %v3683 = vsel %vm3678, %v3602, %v2553
      %v3684 = vsel %vm3678, %v3603, %v2555
      %v3685 = vsel %vm3678, %v3604, %v2557
      %v3686 = vsel %vm3678, %v3605, %v2559
      %v3687 = vsel %vm3678, %v3606, %v2561
      %v3688 = vsel %vm3678, %v3607, %v2563
      %v3689 = vsel %vm3678, %v3608, %v2565
      %v3690 = vsel %vm3678, %v3609, %v2567
      %v3691 = vsel %vm3678, %v3610, %v2569
      %v3692 = vsel %vm3678, %v3611, %v2571
      %v3693 = vsel %vm3678, %v3612, %v2573
      %v3694 = vsel %vm3678, %v3613, %v2575
      %v3695 = vsel %vm3678, %v3614, %v2577
      %v3696 = vsel %vm3678, %v3615, %v2579
      %v3697 = vsel %vm3678, %v3616, %v2581
      %v3698 = vsel %vm3678, %v3617, %v2583
      %v3699 = vsel %vm3678, %v3618, %v2585
      %v3700 = vsel %vm3678, %v3619, %v2587
      %v3701 = vsel %vm3678, %v3620, %v2589
      %v3702 = vsel %vm3678, %v3621, %v2591
      %v3703 = vsel %vm3678, %v3622, %v2593
      %v3704 = vsel %vm3678, %v3623, %v2595
      %v3705 = vsel %vm3678, %v3624, %v2597
      %v3706 = vsel %vm3678, %v3625, %v2599
      %v3707 = vsel %vm3678, %v3626, %v2601
      %v3708 = vsel %vm3678, %v3627, %v2603
      %v3709 = vsel %vm3678, %v3628, %v2605
      %v3710 = vsel %vm3678, %v3629, %v2607
      %v3711 = vsel %vm3678, %v3630, %v2609
      %v3712 = vsel %vm3678, %v3631, %v2611
      %v3713 = vsel %vm3678, %v3632, %v2613
      %v3714 = vsel %vm3678, %v3633, %v2615
      %v3715 = vsel %vm3678, %v3634, %v2617
      %v3716 = vsel %vm3678, %v3635, %v2619
      %v3717 = vsel %vm3678, %v3636, %v2621
      %v3718 = vsel %vm3678, %v3637, %v2623
      %v3719 = vsel %vm3678, %v3638, %v2625
      %v3720 = vsel %vm3678, %v3639, %v2627
      %v3721 = vsel %vm3678, %v3640, %v2629
      %v3722 = vsel %vm3678, %v3641, %v2631
      %v3723 = vsel %vm3678, %v3642, %v2633
      %v3724 = vsel %vm3678, %v3643, %v2635
      %v3725 = vsel %vm3678, %v3644, %v2637
      %v3726 = vsel %vm3678, %v3645, %v2639
      %v3727 = vsel %vm3678, %v3646, %v2641
      %v3728 = vsel %vm3678, %v3647, %v2643
      %v3729 = vsel %vm3678, %v3648, %v2645
      %v3730 = vsel %vm3678, %v3649, %v2647
      %v3731 = vsel %vm3678, %v3650, %v2649
      %v3732 = vsel %vm3678, %v3651, %v2651
      %v3733 = vsel %vm3678, %v3652, %v2653
      %v3734 = vsel %vm3678, %v3653, %v2655
      %v3735 = vsel %vm3678, %v3654, %v2657
      %v3736 = vsel %vm3678, %v3655, %v2659
      %v3737 = vsel %vm3678, %v3656, %v2661
      %v3738 = vsel %vm3678, %v3657, %v2663
      %v3739 = vsel %vm3678, %v3658, %v2665
      %v3740 = vsel %vm3678, %v3659, %v2667
      %v3741 = vsel %vm3678, %v3660, %v2669
      %v3742 = vsel %vm3678, %v3661, %v2671
      %v3743 = vsel %vm3678, %v3662, %v2673
      %v3744 = vsel %vm3678, %v3663, %v2675
      %v3745 = vsel %vm3678, %v3664, %v2677
      %v3746 = vsel %vm3678, %v3665, %v2679
      %v3747 = vsel %vm3678, %v3666, %v2681
      %v3748 = vsel %vm3678, %v3667, %v2683
      %v3749 = vsel %vm3678, %v3668, %v2685
      %v3750 = vsel %vm3678, %v3669, %v2687
      %v3751 = vsel %vm3678, %v3670, %v2689
      %v3752 = vsel %vm3678, %v3671, %v2691
      %v3753 = vsel %vm3678, %v3672, %v2693
      %v3754 = vsel %vm3678, %v3673, %v2695
      %v3755 = vsel %vm3678, %v3674, %v2697
      %v3756 = vsel %vm3678, %v3675, %v2699
      %v3757 = vsel %vm3678, %v3676, %v2701
      %v3758 = vsel %vm3678, %v3677, %v2703
      %vm3759 = vcmask 228352
      %v3760 = vsel %vm3759, %v3679, %v2785
      %v3761 = vsel %vm3759, %v3680, %v2787
      %v3762 = vsel %vm3759, %v3681, %v2789
      %v3763 = vsel %vm3759, %v3682, %v2791
      %v3764 = vsel %vm3759, %v3683, %v2793
      %v3765 = vsel %vm3759, %v3684, %v2795
      %v3766 = vsel %vm3759, %v3685, %v2797
      %v3767 = vsel %vm3759, %v3686, %v2799
      %v3768 = vsel %vm3759, %v3687, %v2801
      %v3769 = vsel %vm3759, %v3688, %v2803
      %v3770 = vsel %vm3759, %v3689, %v2805
      %v3771 = vsel %vm3759, %v3690, %v2807
      %v3772 = vsel %vm3759, %v3691, %v2809
      %v3773 = vsel %vm3759, %v3692, %v2811
      %v3774 = vsel %vm3759, %v3693, %v2813
      %v3775 = vsel %vm3759, %v3694, %v2815
      %v3776 = vsel %vm3759, %v3695, %v2817
      %v3777 = vsel %vm3759, %v3696, %v2819
      %v3778 = vsel %vm3759, %v3697, %v2821
      %v3779 = vsel %vm3759, %v3698, %v2823
      %v3780 = vsel %vm3759, %v3699, %v2825
      %v3781 = vsel %vm3759, %v3700, %v2827
      %v3782 = vsel %vm3759, %v3701, %v2829
      %v3783 = vsel %vm3759, %v3702, %v2831
      %v3784 = vsel %vm3759, %v3703, %v2833
      %v3785 = vsel %vm3759, %v3704, %v2835
      %v3786 = vsel %vm3759, %v3705, %v2837
      %v3787 = vsel %vm3759, %v3706, %v2839
      %v3788 = vsel %vm3759, %v3707, %v2841
      %v3789 = vsel %vm3759, %v3708, %v2843
      %v3790 = vsel %vm3759, %v3709, %v2845
      %v3791 = vsel %vm3759, %v3710, %v2847
      %v3792 = vsel %vm3759, %v3711, %v2849
      %v3793 = vsel %vm3759, %v3712, %v2851
      %v3794 = vsel %vm3759, %v3713, %v2853
      %v3795 = vsel %vm3759, %v3714, %v2855
      %v3796 = vsel %vm3759, %v3715, %v2857
      %v3797 = vsel %vm3759, %v3716, %v2859
      %v3798 = vsel %vm3759, %v3717, %v2861
      %v3799 = vsel %vm3759, %v3718, %v2863
      %v3800 = vsel %vm3759, %v3719, %v2865
      %v3801 = vsel %vm3759, %v3720, %v2867
      %v3802 = vsel %vm3759, %v3721, %v2869
      %v3803 = vsel %vm3759, %v3722, %v2871
      %v3804 = vsel %vm3759, %v3723, %v2873
      %v3805 = vsel %vm3759, %v3724, %v2875
      %v3806 = vsel %vm3759, %v3725, %v2877
      %v3807 = vsel %vm3759, %v3726, %v2879
      %v3808 = vsel %vm3759, %v3727, %v2881
      %v3809 = vsel %vm3759, %v3728, %v2883
      %v3810 = vsel %vm3759, %v3729, %v2885
      %v3811 = vsel %vm3759, %v3730, %v2887
      %v3812 = vsel %vm3759, %v3731, %v2889
      %v3813 = vsel %vm3759, %v3732, %v2891
      %v3814 = vsel %vm3759, %v3733, %v2893
      %v3815 = vsel %vm3759, %v3734, %v2895
      %v3816 = vsel %vm3759, %v3735, %v2897
      %v3817 = vsel %vm3759, %v3736, %v2899
      %v3818 = vsel %vm3759, %v3737, %v2901
      %v3819 = vsel %vm3759, %v3738, %v2903
      %v3820 = vsel %vm3759, %v3739, %v2905
      %v3821 = vsel %vm3759, %v3740, %v2907
      %v3822 = vsel %vm3759, %v3741, %v2909
      %v3823 = vsel %vm3759, %v3742, %v2911
      %v3824 = vsel %vm3759, %v3743, %v2913
      %v3825 = vsel %vm3759, %v3744, %v2915
      %v3826 = vsel %vm3759, %v3745, %v2917
      %v3827 = vsel %vm3759, %v3746, %v2919
      %v3828 = vsel %vm3759, %v3747, %v2921
      %v3829 = vsel %vm3759, %v3748, %v2923
      %v3830 = vsel %vm3759, %v3749, %v2925
      %v3831 = vsel %vm3759, %v3750, %v2927
      %v3832 = vsel %vm3759, %v3751, %v2929
      %v3833 = vsel %vm3759, %v3752, %v2931
      %v3834 = vsel %vm3759, %v3753, %v2933
      %v3835 = vsel %vm3759, %v3754, %v2935
      %v3836 = vsel %vm3759, %v3755, %v2937
      %v3837 = vsel %vm3759, %v3756, %v2939
      %v3838 = vsel %vm3759, %v3757, %v2941
      %v3839 = vsel %vm3759, %v3758, %v2943
      %vm3840 = vcmask 261120
      %v3841 = vsel %vm3840, %v3760, %v3035
      %v3842 = vsel %vm3840, %v3761, %v3037
      %v3843 = vsel %vm3840, %v3762, %v3039
      %v3844 = vsel %vm3840, %v3763, %v3041
      %v3845 = vsel %vm3840, %v3764, %v3043
      %v3846 = vsel %vm3840, %v3765, %v3045
      %v3847 = vsel %vm3840, %v3766, %v3047
      %v3848 = vsel %vm3840, %v3767, %v3049
      %v3849 = vsel %vm3840, %v3768, %v3051
      %v3850 = vsel %vm3840, %v3769, %v3053
      %v3851 = vsel %vm3840, %v3770, %v3055
      %v3852 = vsel %vm3840, %v3771, %v3057
      %v3853 = vsel %vm3840, %v3772, %v3059
      %v3854 = vsel %vm3840, %v3773, %v3061
      %v3855 = vsel %vm3840, %v3774, %v3063
      %v3856 = vsel %vm3840, %v3775, %v3065
      %v3857 = vsel %vm3840, %v3776, %v3067
      %v3858 = vsel %vm3840, %v3777, %v3069
      %v3859 = vsel %vm3840, %v3778, %v3071
      %v3860 = vsel %vm3840, %v3779, %v3073
      %v3861 = vsel %vm3840, %v3780, %v3075
      %v3862 = vsel %vm3840, %v3781, %v3077
      %v3863 = vsel %vm3840, %v3782, %v3079
      %v3864 = vsel %vm3840, %v3783, %v3081
      %v3865 = vsel %vm3840, %v3784, %v3083
      %v3866 = vsel %vm3840, %v3785, %v3085
      %v3867 = vsel %vm3840, %v3786, %v3087
      %v3868 = vsel %vm3840, %v3787, %v3089
      %v3869 = vsel %vm3840, %v3788, %v3091
      %v3870 = vsel %vm3840, %v3789, %v3093
      %v3871 = vsel %vm3840, %v3790, %v3095
      %v3872 = vsel %vm3840, %v3791, %v3097
      %v3873 = vsel %vm3840, %v3792, %v3099
      %v3874 = vsel %vm3840, %v3793, %v3101
      %v3875 = vsel %vm3840, %v3794, %v3103
      %v3876 = vsel %vm3840, %v3795, %v3105
      %v3877 = vsel %vm3840, %v3796, %v3107
      %v3878 = vsel %vm3840, %v3797, %v3109
      %v3879 = vsel %vm3840, %v3798, %v3111
      %v3880 = vsel %vm3840, %v3799, %v3113
      %v3881 = vsel %vm3840, %v3800, %v3115
      %v3882 = vsel %vm3840, %v3801, %v3117
      %v3883 = vsel %vm3840, %v3802, %v3119
      %v3884 = vsel %vm3840, %v3803, %v3121
      %v3885 = vsel %vm3840, %v3804, %v3123
      %v3886 = vsel %vm3840, %v3805, %v3125
      %v3887 = vsel %vm3840, %v3806, %v3127
      %v3888 = vsel %vm3840, %v3807, %v3129
      %v3889 = vsel %vm3840, %v3808, %v3131
      %v3890 = vsel %vm3840, %v3809, %v3133
      %v3891 = vsel %vm3840, %v3810, %v3135
      %v3892 = vsel %vm3840, %v3811, %v3137
      %v3893 = vsel %vm3840, %v3812, %v3139
      %v3894 = vsel %vm3840, %v3813, %v3141
      %v3895 = vsel %vm3840, %v3814, %v3143
      %v3896 = vsel %vm3840, %v3815, %v3145
      %v3897 = vsel %vm3840, %v3816, %v3147
      %v3898 = vsel %vm3840, %v3817, %v3149
      %v3899 = vsel %vm3840, %v3818, %v3151
      %v3900 = vsel %vm3840, %v3819, %v3153
      %v3901 = vsel %vm3840, %v3820, %v3155
      %v3902 = vsel %vm3840, %v3821, %v3157
      %v3903 = vsel %vm3840, %v3822, %v3159
      %v3904 = vsel %vm3840, %v3823, %v3161
      %v3905 = vsel %vm3840, %v3824, %v3163
      %v3906 = vsel %vm3840, %v3825, %v3165
      %v3907 = vsel %vm3840, %v3826, %v3167
      %v3908 = vsel %vm3840, %v3827, %v3169
      %v3909 = vsel %vm3840, %v3828, %v3171
      %v3910 = vsel %vm3840, %v3829, %v3173
      %v3911 = vsel %vm3840, %v3830, %v3175
      %v3912 = vsel %vm3840, %v3831, %v3177
      %v3913 = vsel %vm3840, %v3832, %v3179
      %v3914 = vsel %vm3840, %v3833, %v3181
      %v3915 = vsel %vm3840, %v3834, %v3183
      %v3916 = vsel %vm3840, %v3835, %v3185
      %v3917 = vsel %vm3840, %v3836, %v3187
      %v3918 = vsel %vm3840, %v3837, %v3189
      %v3919 = vsel %vm3840, %v3838, %v3191
      %v3920 = vsel %vm3840, %v3839, %v3193
      %v3921 = vld [vmem:[%s1] sm:$0xff]
      %v3922 = vld [vmem:[%s1 + $0x8] sm:$0xff]
      %v3923 = vld [vmem:[%s1 + $0x10] sm:$0xff]
      %v3924 = vld [vmem:[%s1 + $0x18] sm:$0xff]
      %v3925 = vld [vmem:[%s1 + $0x20] sm:$0xf]
      %v3926 = vld [vmem:[%s1 + $0x24] sm:$0xff]
      %v3927 = vld [vmem:[%s1 + $0x2c] sm:$0xff]
      %v3928 = vld [vmem:[%s1 + $0x34] sm:$0xff]
      %v3929 = vld [vmem:[%s1 + $0x3c] sm:$0xff]
      %v3930 = vld [vmem:[%s1 + $0x44] sm:$0xf]
      %vm3931 = vcmask 293888
      %v3933 = vsel %vm3931, %v3849, 0
      %v3936 = vsel %vm3931, %v3850, 0
      %v3939 = vsel %vm3931, %v3851, 0
      %v3942 = vsel %vm3931, %v3852, 0
      %v3945 = vsel %vm3931, %v3853, 0
      %v3948 = vsel %vm3931, %v3854, 0
      %v3951 = vsel %vm3931, %v3855, 0
      %v3954 = vsel %vm3931, %v3856, 0
      %v3957 = vsel %vm3931, %v3857, 0
      %v3960 = vsel %vm3931, %v3858, 0
      %v3963 = vsel %vm3931, %v3859, 0
      %v3966 = vsel %vm3931, %v3860, 0
      %v3969 = vsel %vm3931, %v3861, 0
      %v3972 = vsel %vm3931, %v3862, 0
      %v3975 = vsel %vm3931, %v3863, 0
      %v3978 = vsel %vm3931, %v3864, 0
      %v3981 = vsel %vm3931, %v3865, 0
      %v3984 = vsel %vm3931, %v3866, 0
      %v3987 = vsel %vm3931, %v3867, 0
      %v3990 = vsel %vm3931, %v3868, 0
      %v3993 = vsel %vm3931, %v3869, 0
      %v3996 = vsel %vm3931, %v3870, 0
      %v3999 = vsel %vm3931, %v3871, 0
      %v4002 = vsel %vm3931, %v3872, 0
      %v4005 = vsel %vm3931, %v3873, 0
      %v4008 = vsel %vm3931, %v3874, 0
      %v4011 = vsel %vm3931, %v3875, 0
      %v4014 = vsel %vm3931, %v3876, 0
      %v4017 = vsel %vm3931, %v3877, 0
      %v4020 = vsel %vm3931, %v3878, 0
      %v4023 = vsel %vm3931, %v3879, 0
      %v4026 = vsel %vm3931, %v3880, 0
      %v4029 = vsel %vm3931, %v3881, 0
      %v4032 = vsel %vm3931, %v3882, 0
      %v4035 = vsel %vm3931, %v3883, 0
      %v4038 = vsel %vm3931, %v3884, 0
      %v4041 = vsel %vm3931, %v3885, 0
      %v4044 = vsel %vm3931, %v3886, 0
      %v4047 = vsel %vm3931, %v3887, 0
      %v4050 = vsel %vm3931, %v3888, 0
      %v4053 = vsel %vm3931, %v3889, 0
      %v4056 = vsel %vm3931, %v3890, 0
      %v4059 = vsel %vm3931, %v3891, 0
      %v4062 = vsel %vm3931, %v3892, 0
      %v4065 = vsel %vm3931, %v3893, 0
      %v4068 = vsel %vm3931, %v3894, 0
      %v4071 = vsel %vm3931, %v3895, 0
      %v4074 = vsel %vm3931, %v3896, 0
      %v4077 = vsel %vm3931, %v3897, 0
      %v4080 = vsel %vm3931, %v3898, 0
      %v4083 = vsel %vm3931, %v3899, 0
      %v4086 = vsel %vm3931, %v3900, 0
      %v4089 = vsel %vm3931, %v3901, 0
      %v4092 = vsel %vm3931, %v3902, 0
      %v4095 = vsel %vm3931, %v3903, 0
      %v4098 = vsel %vm3931, %v3904, 0
      %v4101 = vsel %vm3931, %v3905, 0
      %v4104 = vsel %vm3931, %v3906, 0
      %v4107 = vsel %vm3931, %v3907, 0
      %v4110 = vsel %vm3931, %v3908, 0
      %v4113 = vsel %vm3931, %v3909, 0
      %v4116 = vsel %vm3931, %v3910, 0
      %v4119 = vsel %vm3931, %v3911, 0
      %v4122 = vsel %vm3931, %v3912, 0
      %vm4124 = vcmask 1043456
      %v4126 = vsel %vm4124, %v3930, 0
      %4128 = vmatpush.msra.mxu0 0.0
      %4129 = vmatpush.msra.mxu0 0.0
      %4130 = vmatpush.msra.mxu0 0.0
      %4131 = vmatpush.msra.mxu0 0.0
      %4132 = vmatpush.msra.mxu0 0.0
      %4133 = vmatpush.msra.mxu0 0.0
      %4134 = vmatpush.msra.mxu0 0.0
      %4135 = vmatpush.msra.mxu0 0.0
      %4136 = vmatpush.msra.mxu0 0.0
      %4137 = vmatpush.msra.mxu0 0.0
      %4138 = vmatpush.msra.mxu0 0.0
      %4139 = vmatpush.msra.mxu0 %v4126
      %4140 = vmatpush.msra.mxu0 %v3929
      %4141 = vmatpush.msra.mxu0 %v3928
      %4142 = vmatpush.msra.mxu0 %v3927
      %4143 = vmatpush.msra.mxu0 %v3926
      %4144 = vmatmul.f32.gmra.mxu0 %v3933
      %v4145 = vpop.f32.mrf.mxu0
      %v4146 = vadd.f32 0.0, %v4145
      %4147 = vmatmul.f32.gmra.mxu0 %v3936
      %v4148 = vpop.f32.mrf.mxu0
      %v4149 = vadd.f32 0.0, %v4148
      %4150 = vmatmul.f32.gmra.mxu0 %v3939
      %v4151 = vpop.f32.mrf.mxu0
      %v4152 = vadd.f32 0.0, %v4151
      %4153 = vmatmul.f32.gmra.mxu0 %v3942
      %v4154 = vpop.f32.mrf.mxu0
      %v4155 = vadd.f32 0.0, %v4154
      %4156 = vmatmul.f32.gmra.mxu0 %v3945
      %v4157 = vpop.f32.mrf.mxu0
      %v4158 = vadd.f32 0.0, %v4157
      %4159 = vmatmul.f32.gmra.mxu0 %v3948
      %v4160 = vpop.f32.mrf.mxu0
      %v4161 = vadd.f32 0.0, %v4160
      %4162 = vmatmul.f32.gmra.mxu0 %v3951
      %v4163 = vpop.f32.mrf.mxu0
      %v4164 = vadd.f32 0.0, %v4163
      %4165 = vmatmul.f32.gmra.mxu0 %v3954
      %v4166 = vpop.f32.mrf.mxu0
      %v4167 = vadd.f32 0.0, %v4166
      %4168 = vmatmul.f32.gmra.mxu0 %v3957
      %v4169 = vpop.f32.mrf.mxu0
      %v4170 = vadd.f32 0.0, %v4169
      %4171 = vmatmul.f32.gmra.mxu0 %v3960
      %v4172 = vpop.f32.mrf.mxu0
      %v4173 = vadd.f32 0.0, %v4172
      %4174 = vmatmul.f32.gmra.mxu0 %v3963
      %v4175 = vpop.f32.mrf.mxu0
      %v4176 = vadd.f32 0.0, %v4175
      %4177 = vmatmul.f32.gmra.mxu0 %v3966
      %v4178 = vpop.f32.mrf.mxu0
      %v4179 = vadd.f32 0.0, %v4178
      %4180 = vmatmul.f32.gmra.mxu0 %v3969
      %v4181 = vpop.f32.mrf.mxu0
      %v4182 = vadd.f32 0.0, %v4181
      %4183 = vmatmul.f32.gmra.mxu0 %v3972
      %v4184 = vpop.f32.mrf.mxu0
      %v4185 = vadd.f32 0.0, %v4184
      %4186 = vmatmul.f32.gmra.mxu0 %v3975
      %v4187 = vpop.f32.mrf.mxu0
      %v4188 = vadd.f32 0.0, %v4187
      %4189 = vmatmul.f32.gmra.mxu0 %v3978
      %v4190 = vpop.f32.mrf.mxu0
      %v4191 = vadd.f32 0.0, %v4190
      %4192 = vmatmul.f32.gmra.mxu0 %v3981
      %v4193 = vpop.f32.mrf.mxu0
      %v4194 = vadd.f32 0.0, %v4193
      %4195 = vmatmul.f32.gmra.mxu0 %v3984
      %v4196 = vpop.f32.mrf.mxu0
      %v4197 = vadd.f32 0.0, %v4196
      %4198 = vmatmul.f32.gmra.mxu0 %v3987
      %v4199 = vpop.f32.mrf.mxu0
      %v4200 = vadd.f32 0.0, %v4199
      %4201 = vmatmul.f32.gmra.mxu0 %v3990
      %v4202 = vpop.f32.mrf.mxu0
      %v4203 = vadd.f32 0.0, %v4202
      %4204 = vmatmul.f32.gmra.mxu0 %v3993
      %v4205 = vpop.f32.mrf.mxu0
      %v4206 = vadd.f32 0.0, %v4205
      %4207 = vmatmul.f32.gmra.mxu0 %v3996
      %v4208 = vpop.f32.mrf.mxu0
      %v4209 = vadd.f32 0.0, %v4208
      %4210 = vmatmul.f32.gmra.mxu0 %v3999
      %v4211 = vpop.f32.mrf.mxu0
      %v4212 = vadd.f32 0.0, %v4211
      %4213 = vmatmul.f32.gmra.mxu0 %v4002
      %v4214 = vpop.f32.mrf.mxu0
      %v4215 = vadd.f32 0.0, %v4214
      %4216 = vmatmul.f32.gmra.mxu0 %v4005
      %v4217 = vpop.f32.mrf.mxu0
      %v4218 = vadd.f32 0.0, %v4217
      %4219 = vmatmul.f32.gmra.mxu0 %v4008
      %v4220 = vpop.f32.mrf.mxu0
      %v4221 = vadd.f32 0.0, %v4220
      %4222 = vmatmul.f32.gmra.mxu0 %v4011
      %v4223 = vpop.f32.mrf.mxu0
      %v4224 = vadd.f32 0.0, %v4223
      %4225 = vmatmul.f32.gmra.mxu0 %v4014
      %v4226 = vpop.f32.mrf.mxu0
      %v4227 = vadd.f32 0.0, %v4226
      %4228 = vmatmul.f32.gmra.mxu0 %v4017
      %v4229 = vpop.f32.mrf.mxu0
      %v4230 = vadd.f32 0.0, %v4229
      %4231 = vmatmul.f32.gmra.mxu0 %v4020
      %v4232 = vpop.f32.mrf.mxu0
      %v4233 = vadd.f32 0.0, %v4232
      %4234 = vmatmul.f32.gmra.mxu0 %v4023
      %v4235 = vpop.f32.mrf.mxu0
      %v4236 = vadd.f32 0.0, %v4235
      %4237 = vmatmul.f32.gmra.mxu0 %v4026
      %v4238 = vpop.f32.mrf.mxu0
      %v4239 = vadd.f32 0.0, %v4238
      %4240 = vmatmul.f32.gmra.mxu0 %v4029
      %v4241 = vpop.f32.mrf.mxu0
      %v4242 = vadd.f32 0.0, %v4241
      %4243 = vmatmul.f32.gmra.mxu0 %v4032
      %v4244 = vpop.f32.mrf.mxu0
      %v4245 = vadd.f32 0.0, %v4244
      %4246 = vmatmul.f32.gmra.mxu0 %v4035
      %v4247 = vpop.f32.mrf.mxu0
      %v4248 = vadd.f32 0.0, %v4247
      %4249 = vmatmul.f32.gmra.mxu0 %v4038
      %v4250 = vpop.f32.mrf.mxu0
      %v4251 = vadd.f32 0.0, %v4250
      %4252 = vmatmul.f32.gmra.mxu0 %v4041
      %v4253 = vpop.f32.mrf.mxu0
      %v4254 = vadd.f32 0.0, %v4253
      %4255 = vmatmul.f32.gmra.mxu0 %v4044
      %v4256 = vpop.f32.mrf.mxu0
      %v4257 = vadd.f32 0.0, %v4256
      %4258 = vmatmul.f32.gmra.mxu0 %v4047
      %v4259 = vpop.f32.mrf.mxu0
      %v4260 = vadd.f32 0.0, %v4259
      %4261 = vmatmul.f32.gmra.mxu0 %v4050
      %v4262 = vpop.f32.mrf.mxu0
      %v4263 = vadd.f32 0.0, %v4262
      %4264 = vmatmul.f32.gmra.mxu0 %v4053
      %v4265 = vpop.f32.mrf.mxu0
      %v4266 = vadd.f32 0.0, %v4265
      %4267 = vmatmul.f32.gmra.mxu0 %v4056
      %v4268 = vpop.f32.mrf.mxu0
      %v4269 = vadd.f32 0.0, %v4268
      %4270 = vmatmul.f32.gmra.mxu0 %v4059
      %v4271 = vpop.f32.mrf.mxu0
      %v4272 = vadd.f32 0.0, %v4271
      %4273 = vmatmul.f32.gmra.mxu0 %v4062
      %v4274 = vpop.f32.mrf.mxu0
      %v4275 = vadd.f32 0.0, %v4274
      %4276 = vmatmul.f32.gmra.mxu0 %v4065
      %v4277 = vpop.f32.mrf.mxu0
      %v4278 = vadd.f32 0.0, %v4277
      %4279 = vmatmul.f32.gmra.mxu0 %v4068
      %v4280 = vpop.f32.mrf.mxu0
      %v4281 = vadd.f32 0.0, %v4280
      %4282 = vmatmul.f32.gmra.mxu0 %v4071
      %v4283 = vpop.f32.mrf.mxu0
      %v4284 = vadd.f32 0.0, %v4283
      %4285 = vmatmul.f32.gmra.mxu0 %v4074
      %v4286 = vpop.f32.mrf.mxu0
      %v4287 = vadd.f32 0.0, %v4286
      %4288 = vmatmul.f32.gmra.mxu0 %v4077
      %v4289 = vpop.f32.mrf.mxu0
      %v4290 = vadd.f32 0.0, %v4289
      %4291 = vmatmul.f32.gmra.mxu0 %v4080
      %v4292 = vpop.f32.mrf.mxu0
      %v4293 = vadd.f32 0.0, %v4292
      %4294 = vmatmul.f32.gmra.mxu0 %v4083
      %v4295 = vpop.f32.mrf.mxu0
      %v4296 = vadd.f32 0.0, %v4295
      %4297 = vmatmul.f32.gmra.mxu0 %v4086
      %v4298 = vpop.f32.mrf.mxu0
      %v4299 = vadd.f32 0.0, %v4298
      %4300 = vmatmul.f32.gmra.mxu0 %v4089
      %v4301 = vpop.f32.mrf.mxu0
      %v4302 = vadd.f32 0.0, %v4301
      %4303 = vmatmul.f32.gmra.mxu0 %v4092
      %v4304 = vpop.f32.mrf.mxu0
      %v4305 = vadd.f32 0.0, %v4304
      %4306 = vmatmul.f32.gmra.mxu0 %v4095
      %v4307 = vpop.f32.mrf.mxu0
      %v4308 = vadd.f32 0.0, %v4307
      %4309 = vmatmul.f32.gmra.mxu0 %v4098
      %v4310 = vpop.f32.mrf.mxu0
      %v4311 = vadd.f32 0.0, %v4310
      %4312 = vmatmul.f32.gmra.mxu0 %v4101
      %v4313 = vpop.f32.mrf.mxu0
      %v4314 = vadd.f32 0.0, %v4313
      %4315 = vmatmul.f32.gmra.mxu0 %v4104
      %v4316 = vpop.f32.mrf.mxu0
      %v4317 = vadd.f32 0.0, %v4316
      %4318 = vmatmul.f32.gmra.mxu0 %v4107
      %v4319 = vpop.f32.mrf.mxu0
      %v4320 = vadd.f32 0.0, %v4319
      %4321 = vmatmul.f32.gmra.mxu0 %v4110
      %v4322 = vpop.f32.mrf.mxu0
      %v4323 = vadd.f32 0.0, %v4322
      %4324 = vmatmul.f32.gmra.mxu0 %v4113
      %v4325 = vpop.f32.mrf.mxu0
      %v4326 = vadd.f32 0.0, %v4325
      %4327 = vmatmul.f32.gmra.mxu0 %v4116
      %v4328 = vpop.f32.mrf.mxu0
      %v4329 = vadd.f32 0.0, %v4328
      %4330 = vmatmul.f32.gmra.mxu0 %v4119
      %v4331 = vpop.f32.mrf.mxu0
      %v4332 = vadd.f32 0.0, %v4331
      %4333 = vmatmul.f32.gmra.mxu0 %v4122
      %v4334 = vpop.f32.mrf.mxu0
      %v4335 = vadd.f32 0.0, %v4334
      %4336 = vdwg.mxu0
      %v4338 = vsel %vm3931, %v3841, 0
      %v4341 = vsel %vm3931, %v3842, 0
      %v4344 = vsel %vm3931, %v3843, 0
      %v4347 = vsel %vm3931, %v3844, 0
      %v4350 = vsel %vm3931, %v3845, 0
      %v4353 = vsel %vm3931, %v3846, 0
      %v4356 = vsel %vm3931, %v3847, 0
      %v4359 = vsel %vm3931, %v3848, 0
      %v4362 = vsel %vm4124, %v3925, 0
      %4364 = vmatpush.msra.mxu0 0.0
      %4365 = vmatpush.msra.mxu0 0.0
      %4366 = vmatpush.msra.mxu0 0.0
      %4367 = vmatpush.msra.mxu0 0.0
      %4368 = vmatpush.msra.mxu0 0.0
      %4369 = vmatpush.msra.mxu0 0.0
      %4370 = vmatpush.msra.mxu0 0.0
      %4371 = vmatpush.msra.mxu0 0.0
      %4372 = vmatpush.msra.mxu0 0.0
      %4373 = vmatpush.msra.mxu0 0.0
      %4374 = vmatpush.msra.mxu0 0.0
      %4375 = vmatpush.msra.mxu0 %v4362
      %4376 = vmatpush.msra.mxu0 %v3924
      %4377 = vmatpush.msra.mxu0 %v3923
      %4378 = vmatpush.msra.mxu0 %v3922
      %4379 = vmatpush.msra.mxu0 %v3921
      %4380 = vmatmul.f32.gmra.mxu0 %v4338
      %v4381 = vpop.f32.mrf.mxu0
      %v4382 = vadd.f32 %v4146, %v4381
      %4383 = vmatmul.f32.gmra.mxu0 %v4341
      %v4384 = vpop.f32.mrf.mxu0
      %v4385 = vadd.f32 %v4149, %v4384
      %4386 = vmatmul.f32.gmra.mxu0 %v4344
      %v4387 = vpop.f32.mrf.mxu0
      %v4388 = vadd.f32 %v4152, %v4387
      %4389 = vmatmul.f32.gmra.mxu0 %v4347
      %v4390 = vpop.f32.mrf.mxu0
      %v4391 = vadd.f32 %v4155, %v4390
      %4392 = vmatmul.f32.gmra.mxu0 %v4350
      %v4393 = vpop.f32.mrf.mxu0
      %v4394 = vadd.f32 %v4158, %v4393
      %4395 = vmatmul.f32.gmra.mxu0 %v4353
      %v4396 = vpop.f32.mrf.mxu0
      %v4397 = vadd.f32 %v4161, %v4396
      %4398 = vmatmul.f32.gmra.mxu0 %v4356
      %v4399 = vpop.f32.mrf.mxu0
      %v4400 = vadd.f32 %v4164, %v4399
      %4401 = vmatmul.f32.gmra.mxu0 %v4359
      %v4402 = vpop.f32.mrf.mxu0
      %v4403 = vadd.f32 %v4167, %v4402
      %4404 = vmatmul.f32.gmra.mxu0 %v3933
      %v4405 = vpop.f32.mrf.mxu0
      %v4406 = vadd.f32 %v4170, %v4405
      %4407 = vmatmul.f32.gmra.mxu0 %v3936
      %v4408 = vpop.f32.mrf.mxu0
      %v4409 = vadd.f32 %v4173, %v4408
      %4410 = vmatmul.f32.gmra.mxu0 %v3939
      %v4411 = vpop.f32.mrf.mxu0
      %v4412 = vadd.f32 %v4176, %v4411
      %4413 = vmatmul.f32.gmra.mxu0 %v3942
      %v4414 = vpop.f32.mrf.mxu0
      %v4415 = vadd.f32 %v4179, %v4414
      %4416 = vmatmul.f32.gmra.mxu0 %v3945
      %v4417 = vpop.f32.mrf.mxu0
      %v4418 = vadd.f32 %v4182, %v4417
      %4419 = vmatmul.f32.gmra.mxu0 %v3948
      %v4420 = vpop.f32.mrf.mxu0
      %v4421 = vadd.f32 %v4185, %v4420
      %4422 = vmatmul.f32.gmra.mxu0 %v3951
      %v4423 = vpop.f32.mrf.mxu0
      %v4424 = vadd.f32 %v4188, %v4423
      %4425 = vmatmul.f32.gmra.mxu0 %v3954
      %v4426 = vpop.f32.mrf.mxu0
      %v4427 = vadd.f32 %v4191, %v4426
      %4428 = vmatmul.f32.gmra.mxu0 %v3957
      %v4429 = vpop.f32.mrf.mxu0
      %v4430 = vadd.f32 %v4194, %v4429
      %4431 = vmatmul.f32.gmra.mxu0 %v3960
      %v4432 = vpop.f32.mrf.mxu0
      %v4433 = vadd.f32 %v4197, %v4432
      %4434 = vmatmul.f32.gmra.mxu0 %v3963
      %v4435 = vpop.f32.mrf.mxu0
      %v4436 = vadd.f32 %v4200, %v4435
      %4437 = vmatmul.f32.gmra.mxu0 %v3966
      %v4438 = vpop.f32.mrf.mxu0
      %v4439 = vadd.f32 %v4203, %v4438
      %4440 = vmatmul.f32.gmra.mxu0 %v3969
      %v4441 = vpop.f32.mrf.mxu0
      %v4442 = vadd.f32 %v4206, %v4441
      %4443 = vmatmul.f32.gmra.mxu0 %v3972
      %v4444 = vpop.f32.mrf.mxu0
      %v4445 = vadd.f32 %v4209, %v4444
      %4446 = vmatmul.f32.gmra.mxu0 %v3975
      %v4447 = vpop.f32.mrf.mxu0
      %v4448 = vadd.f32 %v4212, %v4447
      %4449 = vmatmul.f32.gmra.mxu0 %v3978
      %v4450 = vpop.f32.mrf.mxu0
      %v4451 = vadd.f32 %v4215, %v4450
      %4452 = vmatmul.f32.gmra.mxu0 %v3981
      %v4453 = vpop.f32.mrf.mxu0
      %v4454 = vadd.f32 %v4218, %v4453
      %4455 = vmatmul.f32.gmra.mxu0 %v3984
      %v4456 = vpop.f32.mrf.mxu0
      %v4457 = vadd.f32 %v4221, %v4456
      %4458 = vmatmul.f32.gmra.mxu0 %v3987
      %v4459 = vpop.f32.mrf.mxu0
      %v4460 = vadd.f32 %v4224, %v4459
      %4461 = vmatmul.f32.gmra.mxu0 %v3990
      %v4462 = vpop.f32.mrf.mxu0
      %v4463 = vadd.f32 %v4227, %v4462
      %4464 = vmatmul.f32.gmra.mxu0 %v3993
      %v4465 = vpop.f32.mrf.mxu0
      %v4466 = vadd.f32 %v4230, %v4465
      %4467 = vmatmul.f32.gmra.mxu0 %v3996
      %v4468 = vpop.f32.mrf.mxu0
      %v4469 = vadd.f32 %v4233, %v4468
      %4470 = vmatmul.f32.gmra.mxu0 %v3999
      %v4471 = vpop.f32.mrf.mxu0
      %v4472 = vadd.f32 %v4236, %v4471
      %4473 = vmatmul.f32.gmra.mxu0 %v4002
      %v4474 = vpop.f32.mrf.mxu0
      %v4475 = vadd.f32 %v4239, %v4474
      %4476 = vmatmul.f32.gmra.mxu0 %v4005
      %v4477 = vpop.f32.mrf.mxu0
      %v4478 = vadd.f32 %v4242, %v4477
      %4479 = vmatmul.f32.gmra.mxu0 %v4008
      %v4480 = vpop.f32.mrf.mxu0
      %v4481 = vadd.f32 %v4245, %v4480
      %4482 = vmatmul.f32.gmra.mxu0 %v4011
      %v4483 = vpop.f32.mrf.mxu0
      %v4484 = vadd.f32 %v4248, %v4483
      %4485 = vmatmul.f32.gmra.mxu0 %v4014
      %v4486 = vpop.f32.mrf.mxu0
      %v4487 = vadd.f32 %v4251, %v4486
      %4488 = vmatmul.f32.gmra.mxu0 %v4017
      %v4489 = vpop.f32.mrf.mxu0
      %v4490 = vadd.f32 %v4254, %v4489
      %4491 = vmatmul.f32.gmra.mxu0 %v4020
      %v4492 = vpop.f32.mrf.mxu0
      %v4493 = vadd.f32 %v4257, %v4492
      %4494 = vmatmul.f32.gmra.mxu0 %v4023
      %v4495 = vpop.f32.mrf.mxu0
      %v4496 = vadd.f32 %v4260, %v4495
      %4497 = vmatmul.f32.gmra.mxu0 %v4026
      %v4498 = vpop.f32.mrf.mxu0
      %v4499 = vadd.f32 %v4263, %v4498
      %4500 = vmatmul.f32.gmra.mxu0 %v4029
      %v4501 = vpop.f32.mrf.mxu0
      %v4502 = vadd.f32 %v4266, %v4501
      %4503 = vmatmul.f32.gmra.mxu0 %v4032
      %v4504 = vpop.f32.mrf.mxu0
      %v4505 = vadd.f32 %v4269, %v4504
      %4506 = vmatmul.f32.gmra.mxu0 %v4035
      %v4507 = vpop.f32.mrf.mxu0
      %v4508 = vadd.f32 %v4272, %v4507
      %4509 = vmatmul.f32.gmra.mxu0 %v4038
      %v4510 = vpop.f32.mrf.mxu0
      %v4511 = vadd.f32 %v4275, %v4510
      %4512 = vmatmul.f32.gmra.mxu0 %v4041
      %v4513 = vpop.f32.mrf.mxu0
      %v4514 = vadd.f32 %v4278, %v4513
      %4515 = vmatmul.f32.gmra.mxu0 %v4044
      %v4516 = vpop.f32.mrf.mxu0
      %v4517 = vadd.f32 %v4281, %v4516
      %4518 = vmatmul.f32.gmra.mxu0 %v4047
      %v4519 = vpop.f32.mrf.mxu0
      %v4520 = vadd.f32 %v4284, %v4519
      %4521 = vmatmul.f32.gmra.mxu0 %v4050
      %v4522 = vpop.f32.mrf.mxu0
      %v4523 = vadd.f32 %v4287, %v4522
      %4524 = vmatmul.f32.gmra.mxu0 %v4053
      %v4525 = vpop.f32.mrf.mxu0
      %v4526 = vadd.f32 %v4290, %v4525
      %4527 = vmatmul.f32.gmra.mxu0 %v4056
      %v4528 = vpop.f32.mrf.mxu0
      %v4529 = vadd.f32 %v4293, %v4528
      %4530 = vmatmul.f32.gmra.mxu0 %v4059
      %v4531 = vpop.f32.mrf.mxu0
      %v4532 = vadd.f32 %v4296, %v4531
      %4533 = vmatmul.f32.gmra.mxu0 %v4062
      %v4534 = vpop.f32.mrf.mxu0
      %v4535 = vadd.f32 %v4299, %v4534
      %4536 = vmatmul.f32.gmra.mxu0 %v4065
      %v4537 = vpop.f32.mrf.mxu0
      %v4538 = vadd.f32 %v4302, %v4537
      %4539 = vmatmul.f32.gmra.mxu0 %v4068
      %v4540 = vpop.f32.mrf.mxu0
      %v4541 = vadd.f32 %v4305, %v4540
      %4542 = vmatmul.f32.gmra.mxu0 %v4071
      %v4543 = vpop.f32.mrf.mxu0
      %v4544 = vadd.f32 %v4308, %v4543
      %4545 = vmatmul.f32.gmra.mxu0 %v4074
      %v4546 = vpop.f32.mrf.mxu0
      %v4547 = vadd.f32 %v4311, %v4546
      %4548 = vmatmul.f32.gmra.mxu0 %v4077
      %v4549 = vpop.f32.mrf.mxu0
      %v4550 = vadd.f32 %v4314, %v4549
      %4551 = vmatmul.f32.gmra.mxu0 %v4080
      %v4552 = vpop.f32.mrf.mxu0
      %v4553 = vadd.f32 %v4317, %v4552
      %4554 = vmatmul.f32.gmra.mxu0 %v4083
      %v4555 = vpop.f32.mrf.mxu0
      %v4556 = vadd.f32 %v4320, %v4555
      %4557 = vmatmul.f32.gmra.mxu0 %v4086
      %v4558 = vpop.f32.mrf.mxu0
      %v4559 = vadd.f32 %v4323, %v4558
      %4560 = vmatmul.f32.gmra.mxu0 %v4089
      %v4561 = vpop.f32.mrf.mxu0
      %v4562 = vadd.f32 %v4326, %v4561
      %4563 = vmatmul.f32.gmra.mxu0 %v4092
      %v4564 = vpop.f32.mrf.mxu0
      %v4565 = vadd.f32 %v4329, %v4564
      %4566 = vmatmul.f32.gmra.mxu0 %v4095
      %v4567 = vpop.f32.mrf.mxu0
      %v4568 = vadd.f32 %v4332, %v4567
      %4569 = vmatmul.f32.gmra.mxu0 %v4098
      %v4570 = vpop.f32.mrf.mxu0
      %v4571 = vadd.f32 %v4335, %v4570
      %4572 = vdwg.mxu0
      %v4573 = vld [vmem:[%s1 + $0x48] sm:$0xff]
      %v4574 = vld [vmem:[%s1 + $0x50] sm:$0xff]
      %v4575 = vld [vmem:[%s1 + $0x58] sm:$0xff]
      %v4576 = vld [vmem:[%s1 + $0x60] sm:$0xff]
      %v4577 = vld [vmem:[%s1 + $0x68] sm:$0xf]
      %v4579 = vsel %vm3931, %v3913, 0
      %v4582 = vsel %vm3931, %v3914, 0
      %v4585 = vsel %vm3931, %v3915, 0
      %v4588 = vsel %vm3931, %v3916, 0
      %v4591 = vsel %vm3931, %v3917, 0
      %v4594 = vsel %vm3931, %v3918, 0
      %v4597 = vsel %vm3931, %v3919, 0
      %v4600 = vsel %vm3931, %v3920, 0
      %v4603 = vsel %vm4124, %v4577, 0
      %4605 = vmatpush.msra.mxu0 0.0
      %4606 = vmatpush.msra.mxu0 0.0
      %4607 = vmatpush.msra.mxu0 0.0
      %4608 = vmatpush.msra.mxu0 0.0
      %4609 = vmatpush.msra.mxu0 0.0
      %4610 = vmatpush.msra.mxu0 0.0
      %4611 = vmatpush.msra.mxu0 0.0
      %4612 = vmatpush.msra.mxu0 0.0
      %4613 = vmatpush.msra.mxu0 0.0
      %4614 = vmatpush.msra.mxu0 0.0
      %4615 = vmatpush.msra.mxu0 0.0
      %4616 = vmatpush.msra.mxu0 %v4603
      %4617 = vmatpush.msra.mxu0 %v4576
      %4618 = vmatpush.msra.mxu0 %v4575
      %4619 = vmatpush.msra.mxu0 %v4574
      %4620 = vmatpush.msra.mxu0 %v4573
      %4621 = vmatmul.f32.gmra.mxu0 %v3957
      %v4622 = vpop.f32.mrf.mxu0
      %v4623 = vadd.f32 0.0, %v4622
      %4624 = vmatmul.f32.gmra.mxu0 %v3960
      %v4625 = vpop.f32.mrf.mxu0
      %v4626 = vadd.f32 0.0, %v4625
      %4627 = vmatmul.f32.gmra.mxu0 %v3963
      %v4628 = vpop.f32.mrf.mxu0
      %v4629 = vadd.f32 0.0, %v4628
      %4630 = vmatmul.f32.gmra.mxu0 %v3966
      %v4631 = vpop.f32.mrf.mxu0
      %v4632 = vadd.f32 0.0, %v4631
      %4633 = vmatmul.f32.gmra.mxu0 %v3969
      %v4634 = vpop.f32.mrf.mxu0
      %v4635 = vadd.f32 0.0, %v4634
      %4636 = vmatmul.f32.gmra.mxu0 %v3972
      %v4637 = vpop.f32.mrf.mxu0
      %v4638 = vadd.f32 0.0, %v4637
      %4639 = vmatmul.f32.gmra.mxu0 %v3975
      %v4640 = vpop.f32.mrf.mxu0
      %v4641 = vadd.f32 0.0, %v4640
      %4642 = vmatmul.f32.gmra.mxu0 %v3978
      %v4643 = vpop.f32.mrf.mxu0
      %v4644 = vadd.f32 0.0, %v4643
      %4645 = vmatmul.f32.gmra.mxu0 %v3981
      %v4646 = vpop.f32.mrf.mxu0
      %v4647 = vadd.f32 0.0, %v4646
      %4648 = vmatmul.f32.gmra.mxu0 %v3984
      %v4649 = vpop.f32.mrf.mxu0
      %v4650 = vadd.f32 0.0, %v4649
      %4651 = vmatmul.f32.gmra.mxu0 %v3987
      %v4652 = vpop.f32.mrf.mxu0
      %v4653 = vadd.f32 0.0, %v4652
      %4654 = vmatmul.f32.gmra.mxu0 %v3990
      %v4655 = vpop.f32.mrf.mxu0
      %v4656 = vadd.f32 0.0, %v4655
      %4657 = vmatmul.f32.gmra.mxu0 %v3993
      %v4658 = vpop.f32.mrf.mxu0
      %v4659 = vadd.f32 0.0, %v4658
      %4660 = vmatmul.f32.gmra.mxu0 %v3996
      %v4661 = vpop.f32.mrf.mxu0
      %v4662 = vadd.f32 0.0, %v4661
      %4663 = vmatmul.f32.gmra.mxu0 %v3999
      %v4664 = vpop.f32.mrf.mxu0
      %v4665 = vadd.f32 0.0, %v4664
      %4666 = vmatmul.f32.gmra.mxu0 %v4002
      %v4667 = vpop.f32.mrf.mxu0
      %v4668 = vadd.f32 0.0, %v4667
      %4669 = vmatmul.f32.gmra.mxu0 %v4005
      %v4670 = vpop.f32.mrf.mxu0
      %v4671 = vadd.f32 0.0, %v4670
      %4672 = vmatmul.f32.gmra.mxu0 %v4008
      %v4673 = vpop.f32.mrf.mxu0
      %v4674 = vadd.f32 0.0, %v4673
      %4675 = vmatmul.f32.gmra.mxu0 %v4011
      %v4676 = vpop.f32.mrf.mxu0
      %v4677 = vadd.f32 0.0, %v4676
      %4678 = vmatmul.f32.gmra.mxu0 %v4014
      %v4679 = vpop.f32.mrf.mxu0
      %v4680 = vadd.f32 0.0, %v4679
      %4681 = vmatmul.f32.gmra.mxu0 %v4017
      %v4682 = vpop.f32.mrf.mxu0
      %v4683 = vadd.f32 0.0, %v4682
      %4684 = vmatmul.f32.gmra.mxu0 %v4020
      %v4685 = vpop.f32.mrf.mxu0
      %v4686 = vadd.f32 0.0, %v4685
      %4687 = vmatmul.f32.gmra.mxu0 %v4023
      %v4688 = vpop.f32.mrf.mxu0
      %v4689 = vadd.f32 0.0, %v4688
      %4690 = vmatmul.f32.gmra.mxu0 %v4026
      %v4691 = vpop.f32.mrf.mxu0
      %v4692 = vadd.f32 0.0, %v4691
      %4693 = vmatmul.f32.gmra.mxu0 %v4029
      %v4694 = vpop.f32.mrf.mxu0
      %v4695 = vadd.f32 0.0, %v4694
      %4696 = vmatmul.f32.gmra.mxu0 %v4032
      %v4697 = vpop.f32.mrf.mxu0
      %v4698 = vadd.f32 0.0, %v4697
      %4699 = vmatmul.f32.gmra.mxu0 %v4035
      %v4700 = vpop.f32.mrf.mxu0
      %v4701 = vadd.f32 0.0, %v4700
      %4702 = vmatmul.f32.gmra.mxu0 %v4038
      %v4703 = vpop.f32.mrf.mxu0
      %v4704 = vadd.f32 0.0, %v4703
      %4705 = vmatmul.f32.gmra.mxu0 %v4041
      %v4706 = vpop.f32.mrf.mxu0
      %v4707 = vadd.f32 0.0, %v4706
      %4708 = vmatmul.f32.gmra.mxu0 %v4044
      %v4709 = vpop.f32.mrf.mxu0
      %v4710 = vadd.f32 0.0, %v4709
      %4711 = vmatmul.f32.gmra.mxu0 %v4047
      %v4712 = vpop.f32.mrf.mxu0
      %v4713 = vadd.f32 0.0, %v4712
      %4714 = vmatmul.f32.gmra.mxu0 %v4050
      %v4715 = vpop.f32.mrf.mxu0
      %v4716 = vadd.f32 0.0, %v4715
      %4717 = vmatmul.f32.gmra.mxu0 %v4053
      %v4718 = vpop.f32.mrf.mxu0
      %v4719 = vadd.f32 0.0, %v4718
      %4720 = vmatmul.f32.gmra.mxu0 %v4056
      %v4721 = vpop.f32.mrf.mxu0
      %v4722 = vadd.f32 0.0, %v4721
      %4723 = vmatmul.f32.gmra.mxu0 %v4059
      %v4724 = vpop.f32.mrf.mxu0
      %v4725 = vadd.f32 0.0, %v4724
      %4726 = vmatmul.f32.gmra.mxu0 %v4062
      %v4727 = vpop.f32.mrf.mxu0
      %v4728 = vadd.f32 0.0, %v4727
      %4729 = vmatmul.f32.gmra.mxu0 %v4065
      %v4730 = vpop.f32.mrf.mxu0
      %v4731 = vadd.f32 0.0, %v4730
      %4732 = vmatmul.f32.gmra.mxu0 %v4068
      %v4733 = vpop.f32.mrf.mxu0
      %v4734 = vadd.f32 0.0, %v4733
      %4735 = vmatmul.f32.gmra.mxu0 %v4071
      %v4736 = vpop.f32.mrf.mxu0
      %v4737 = vadd.f32 0.0, %v4736
      %4738 = vmatmul.f32.gmra.mxu0 %v4074
      %v4739 = vpop.f32.mrf.mxu0
      %v4740 = vadd.f32 0.0, %v4739
      %4741 = vmatmul.f32.gmra.mxu0 %v4077
      %v4742 = vpop.f32.mrf.mxu0
      %v4743 = vadd.f32 0.0, %v4742
      %4744 = vmatmul.f32.gmra.mxu0 %v4080
      %v4745 = vpop.f32.mrf.mxu0
      %v4746 = vadd.f32 0.0, %v4745
      %4747 = vmatmul.f32.gmra.mxu0 %v4083
      %v4748 = vpop.f32.mrf.mxu0
      %v4749 = vadd.f32 0.0, %v4748
      %4750 = vmatmul.f32.gmra.mxu0 %v4086
      %v4751 = vpop.f32.mrf.mxu0
      %v4752 = vadd.f32 0.0, %v4751
      %4753 = vmatmul.f32.gmra.mxu0 %v4089
      %v4754 = vpop.f32.mrf.mxu0
      %v4755 = vadd.f32 0.0, %v4754
      %4756 = vmatmul.f32.gmra.mxu0 %v4092
      %v4757 = vpop.f32.mrf.mxu0
      %v4758 = vadd.f32 0.0, %v4757
      %4759 = vmatmul.f32.gmra.mxu0 %v4095
      %v4760 = vpop.f32.mrf.mxu0
      %v4761 = vadd.f32 0.0, %v4760
      %4762 = vmatmul.f32.gmra.mxu0 %v4098
      %v4763 = vpop.f32.mrf.mxu0
      %v4764 = vadd.f32 0.0, %v4763
      %4765 = vmatmul.f32.gmra.mxu0 %v4101
      %v4766 = vpop.f32.mrf.mxu0
      %v4767 = vadd.f32 0.0, %v4766
      %4768 = vmatmul.f32.gmra.mxu0 %v4104
      %v4769 = vpop.f32.mrf.mxu0
      %v4770 = vadd.f32 0.0, %v4769
      %4771 = vmatmul.f32.gmra.mxu0 %v4107
      %v4772 = vpop.f32.mrf.mxu0
      %v4773 = vadd.f32 0.0, %v4772
      %4774 = vmatmul.f32.gmra.mxu0 %v4110
      %v4775 = vpop.f32.mrf.mxu0
      %v4776 = vadd.f32 0.0, %v4775
      %4777 = vmatmul.f32.gmra.mxu0 %v4113
      %v4778 = vpop.f32.mrf.mxu0
      %v4779 = vadd.f32 0.0, %v4778
      %4780 = vmatmul.f32.gmra.mxu0 %v4116
      %v4781 = vpop.f32.mrf.mxu0
      %v4782 = vadd.f32 0.0, %v4781
      %4783 = vmatmul.f32.gmra.mxu0 %v4119
      %v4784 = vpop.f32.mrf.mxu0
      %v4785 = vadd.f32 0.0, %v4784
      %4786 = vmatmul.f32.gmra.mxu0 %v4122
      %v4787 = vpop.f32.mrf.mxu0
      %v4788 = vadd.f32 0.0, %v4787
      %4789 = vmatmul.f32.gmra.mxu0 %v4579
      %v4790 = vpop.f32.mrf.mxu0
      %v4791 = vadd.f32 0.0, %v4790
      %4792 = vmatmul.f32.gmra.mxu0 %v4582
      %v4793 = vpop.f32.mrf.mxu0
      %v4794 = vadd.f32 0.0, %v4793
      %4795 = vmatmul.f32.gmra.mxu0 %v4585
      %v4796 = vpop.f32.mrf.mxu0
      %v4797 = vadd.f32 0.0, %v4796
      %4798 = vmatmul.f32.gmra.mxu0 %v4588
      %v4799 = vpop.f32.mrf.mxu0
      %v4800 = vadd.f32 0.0, %v4799
      %4801 = vmatmul.f32.gmra.mxu0 %v4591
      %v4802 = vpop.f32.mrf.mxu0
      %v4803 = vadd.f32 0.0, %v4802
      %4804 = vmatmul.f32.gmra.mxu0 %v4594
      %v4805 = vpop.f32.mrf.mxu0
      %v4806 = vadd.f32 0.0, %v4805
      %4807 = vmatmul.f32.gmra.mxu0 %v4597
      %v4808 = vpop.f32.mrf.mxu0
      %v4809 = vadd.f32 0.0, %v4808
      %4810 = vmatmul.f32.gmra.mxu0 %v4600
      %v4811 = vpop.f32.mrf.mxu0
      %v4812 = vadd.f32 0.0, %v4811
      %4813 = vdwg.mxu0
      %v4814 = vadd.f32 %v4382, %v4623
      %v4815 = vadd.f32 %v4385, %v4626
      %v4816 = vadd.f32 %v4388, %v4629
      %v4817 = vadd.f32 %v4391, %v4632
      %v4818 = vadd.f32 %v4394, %v4635
      %v4819 = vadd.f32 %v4397, %v4638
      %v4820 = vadd.f32 %v4400, %v4641
      %v4821 = vadd.f32 %v4403, %v4644
      %v4822 = vadd.f32 %v4406, %v4647
      %v4823 = vadd.f32 %v4409, %v4650
      %v4824 = vadd.f32 %v4412, %v4653
      %v4825 = vadd.f32 %v4415, %v4656
      %v4826 = vadd.f32 %v4418, %v4659
      %v4827 = vadd.f32 %v4421, %v4662
      %v4828 = vadd.f32 %v4424, %v4665
      %v4829 = vadd.f32 %v4427, %v4668
      %v4830 = vadd.f32 %v4430, %v4671
      %v4831 = vadd.f32 %v4433, %v4674
      %v4832 = vadd.f32 %v4436, %v4677
      %v4833 = vadd.f32 %v4439, %v4680
      %v4834 = vadd.f32 %v4442, %v4683
      %v4835 = vadd.f32 %v4445, %v4686
      %v4836 = vadd.f32 %v4448, %v4689
      %v4837 = vadd.f32 %v4451, %v4692
      %v4838 = vadd.f32 %v4454, %v4695
      %v4839 = vadd.f32 %v4457, %v4698
      %v4840 = vadd.f32 %v4460, %v4701
      %v4841 = vadd.f32 %v4463, %v4704
      %v4842 = vadd.f32 %v4466, %v4707
      %v4843 = vadd.f32 %v4469, %v4710
      %v4844 = vadd.f32 %v4472, %v4713
      %v4845 = vadd.f32 %v4475, %v4716
      %v4846 = vadd.f32 %v4478, %v4719
      %v4847 = vadd.f32 %v4481, %v4722
      %v4848 = vadd.f32 %v4484, %v4725
      %v4849 = vadd.f32 %v4487, %v4728
      %v4850 = vadd.f32 %v4490, %v4731
      %v4851 = vadd.f32 %v4493, %v4734
      %v4852 = vadd.f32 %v4496, %v4737
      %v4853 = vadd.f32 %v4499, %v4740
      %v4854 = vadd.f32 %v4502, %v4743
      %v4855 = vadd.f32 %v4505, %v4746
      %v4856 = vadd.f32 %v4508, %v4749
      %v4857 = vadd.f32 %v4511, %v4752
      %v4858 = vadd.f32 %v4514, %v4755
      %v4859 = vadd.f32 %v4517, %v4758
      %v4860 = vadd.f32 %v4520, %v4761
      %v4861 = vadd.f32 %v4523, %v4764
      %v4862 = vadd.f32 %v4526, %v4767
      %v4863 = vadd.f32 %v4529, %v4770
      %v4864 = vadd.f32 %v4532, %v4773
      %v4865 = vadd.f32 %v4535, %v4776
      %v4866 = vadd.f32 %v4538, %v4779
      %v4867 = vadd.f32 %v4541, %v4782
      %v4868 = vadd.f32 %v4544, %v4785
      %v4869 = vadd.f32 %v4547, %v4788
      %v4870 = vadd.f32 %v4550, %v4791
      %v4871 = vadd.f32 %v4553, %v4794
      %v4872 = vadd.f32 %v4556, %v4797
      %v4873 = vadd.f32 %v4559, %v4800
      %v4874 = vadd.f32 %v4562, %v4803
      %v4875 = vadd.f32 %v4565, %v4806
      %v4876 = vadd.f32 %v4568, %v4809
      %v4877 = vadd.f32 %v4571, %v4812
      %v4878 = vmul.f32 %v4814, %v4814
      %v4879 = vmul.f32 %v4815, %v4815
      %v4880 = vmul.f32 %v4816, %v4816
      %v4881 = vmul.f32 %v4817, %v4817
      %v4882 = vmul.f32 %v4818, %v4818
      %v4883 = vmul.f32 %v4819, %v4819
      %v4884 = vmul.f32 %v4820, %v4820
      %v4885 = vmul.f32 %v4821, %v4821
      %v4886 = vmul.f32 %v4822, %v4822
      %v4887 = vmul.f32 %v4823, %v4823
      %v4888 = vmul.f32 %v4824, %v4824
      %v4889 = vmul.f32 %v4825, %v4825
      %v4890 = vmul.f32 %v4826, %v4826
      %v4891 = vmul.f32 %v4827, %v4827
      %v4892 = vmul.f32 %v4828, %v4828
      %v4893 = vmul.f32 %v4829, %v4829
      %v4894 = vmul.f32 %v4830, %v4830
      %v4895 = vmul.f32 %v4831, %v4831
      %v4896 = vmul.f32 %v4832, %v4832
      %v4897 = vmul.f32 %v4833, %v4833
      %v4898 = vmul.f32 %v4834, %v4834
      %v4899 = vmul.f32 %v4835, %v4835
      %v4900 = vmul.f32 %v4836, %v4836
      %v4901 = vmul.f32 %v4837, %v4837
      %v4902 = vmul.f32 %v4838, %v4838
      %v4903 = vmul.f32 %v4839, %v4839
      %v4904 = vmul.f32 %v4840, %v4840
      %v4905 = vmul.f32 %v4841, %v4841
      %v4906 = vmul.f32 %v4842, %v4842
      %v4907 = vmul.f32 %v4843, %v4843
      %v4908 = vmul.f32 %v4844, %v4844
      %v4909 = vmul.f32 %v4845, %v4845
      %v4910 = vmul.f32 %v4846, %v4846
      %v4911 = vmul.f32 %v4847, %v4847
      %v4912 = vmul.f32 %v4848, %v4848
      %v4913 = vmul.f32 %v4849, %v4849
      %v4914 = vmul.f32 %v4850, %v4850
      %v4915 = vmul.f32 %v4851, %v4851
      %v4916 = vmul.f32 %v4852, %v4852
      %v4917 = vmul.f32 %v4853, %v4853
      %v4918 = vmul.f32 %v4854, %v4854
      %v4919 = vmul.f32 %v4855, %v4855
      %v4920 = vmul.f32 %v4856, %v4856
      %v4921 = vmul.f32 %v4857, %v4857
      %v4922 = vmul.f32 %v4858, %v4858
      %v4923 = vmul.f32 %v4859, %v4859
      %v4924 = vmul.f32 %v4860, %v4860
      %v4925 = vmul.f32 %v4861, %v4861
      %v4926 = vmul.f32 %v4862, %v4862
      %v4927 = vmul.f32 %v4863, %v4863
      %v4928 = vmul.f32 %v4864, %v4864
      %v4929 = vmul.f32 %v4865, %v4865
      %v4930 = vmul.f32 %v4866, %v4866
      %v4931 = vmul.f32 %v4867, %v4867
      %v4932 = vmul.f32 %v4868, %v4868
      %v4933 = vmul.f32 %v4869, %v4869
      %v4934 = vmul.f32 %v4870, %v4870
      %v4935 = vmul.f32 %v4871, %v4871
      %v4936 = vmul.f32 %v4872, %v4872
      %v4937 = vmul.f32 %v4873, %v4873
      %v4938 = vmul.f32 %v4874, %v4874
      %v4939 = vmul.f32 %v4875, %v4875
      %v4940 = vmul.f32 %v4876, %v4876
      %v4941 = vmul.f32 %v4877, %v4877
      %5006 = vrot.lane.b32.xlu0 %v4878, 4
      %v5007 = vpop.permute.xlu0 %5006
      %5008 = vrot.lane.b32.xlu0 %v4879, 4
      %v5009 = vpop.permute.xlu0 %5008
      %5010 = vrot.lane.b32.xlu0 %v4880, 4
      %v5011 = vpop.permute.xlu0 %5010
      %5012 = vrot.lane.b32.xlu0 %v4881, 4
      %v5013 = vpop.permute.xlu0 %5012
      %5014 = vrot.lane.b32.xlu0 %v4882, 4
      %v5015 = vpop.permute.xlu0 %5014
      %5016 = vrot.lane.b32.xlu0 %v4883, 4
      %v5017 = vpop.permute.xlu0 %5016
      %5018 = vrot.lane.b32.xlu0 %v4884, 4
      %v5019 = vpop.permute.xlu0 %5018
      %5020 = vrot.lane.b32.xlu0 %v4885, 4
      %v5021 = vpop.permute.xlu0 %5020
      %5022 = vrot.lane.b32.xlu0 %v4886, 4
      %v5023 = vpop.permute.xlu0 %5022
      %5024 = vrot.lane.b32.xlu0 %v4887, 4
      %v5025 = vpop.permute.xlu0 %5024
      %5026 = vrot.lane.b32.xlu0 %v4888, 4
      %v5027 = vpop.permute.xlu0 %5026
      %5028 = vrot.lane.b32.xlu0 %v4889, 4
      %v5029 = vpop.permute.xlu0 %5028
      %5030 = vrot.lane.b32.xlu0 %v4890, 4
      %v5031 = vpop.permute.xlu0 %5030
      %5032 = vrot.lane.b32.xlu0 %v4891, 4
      %v5033 = vpop.permute.xlu0 %5032
      %5034 = vrot.lane.b32.xlu0 %v4892, 4
      %v5035 = vpop.permute.xlu0 %5034
      %5036 = vrot.lane.b32.xlu0 %v4893, 4
      %v5037 = vpop.permute.xlu0 %5036
      %5038 = vrot.lane.b32.xlu0 %v4894, 4
      %v5039 = vpop.permute.xlu0 %5038
      %5040 = vrot.lane.b32.xlu0 %v4895, 4
      %v5041 = vpop.permute.xlu0 %5040
      %5042 = vrot.lane.b32.xlu0 %v4896, 4
      %v5043 = vpop.permute.xlu0 %5042
      %5044 = vrot.lane.b32.xlu0 %v4897, 4
      %v5045 = vpop.permute.xlu0 %5044
      %5046 = vrot.lane.b32.xlu0 %v4898, 4
      %v5047 = vpop.permute.xlu0 %5046
      %5048 = vrot.lane.b32.xlu0 %v4899, 4
      %v5049 = vpop.permute.xlu0 %5048
      %5050 = vrot.lane.b32.xlu0 %v4900, 4
      %v5051 = vpop.permute.xlu0 %5050
      %5052 = vrot.lane.b32.xlu0 %v4901, 4
      %v5053 = vpop.permute.xlu0 %5052
      %5054 = vrot.lane.b32.xlu0 %v4902, 4
      %v5055 = vpop.permute.xlu0 %5054
      %5056 = vrot.lane.b32.xlu0 %v4903, 4
      %v5057 = vpop.permute.xlu0 %5056
      %5058 = vrot.lane.b32.xlu0 %v4904, 4
      %v5059 = vpop.permute.xlu0 %5058
      %5060 = vrot.lane.b32.xlu0 %v4905, 4
      %v5061 = vpop.permute.xlu0 %5060
      %5062 = vrot.lane.b32.xlu0 %v4906, 4
      %v5063 = vpop.permute.xlu0 %5062
      %5064 = vrot.lane.b32.xlu0 %v4907, 4
      %v5065 = vpop.permute.xlu0 %5064
      %5066 = vrot.lane.b32.xlu0 %v4908, 4
      %v5067 = vpop.permute.xlu0 %5066
      %5068 = vrot.lane.b32.xlu0 %v4909, 4
      %v5069 = vpop.permute.xlu0 %5068
      %5070 = vrot.lane.b32.xlu0 %v4910, 4
      %v5071 = vpop.permute.xlu0 %5070
      %5072 = vrot.lane.b32.xlu0 %v4911, 4
      %v5073 = vpop.permute.xlu0 %5072
      %5074 = vrot.lane.b32.xlu0 %v4912, 4
      %v5075 = vpop.permute.xlu0 %5074
      %5076 = vrot.lane.b32.xlu0 %v4913, 4
      %v5077 = vpop.permute.xlu0 %5076
      %5078 = vrot.lane.b32.xlu0 %v4914, 4
      %v5079 = vpop.permute.xlu0 %5078
      %5080 = vrot.lane.b32.xlu0 %v4915, 4
      %v5081 = vpop.permute.xlu0 %5080
      %5082 = vrot.lane.b32.xlu0 %v4916, 4
      %v5083 = vpop.permute.xlu0 %5082
      %5084 = vrot.lane.b32.xlu0 %v4917, 4
      %v5085 = vpop.permute.xlu0 %5084
      %5086 = vrot.lane.b32.xlu0 %v4918, 4
      %v5087 = vpop.permute.xlu0 %5086
      %5088 = vrot.lane.b32.xlu0 %v4919, 4
      %v5089 = vpop.permute.xlu0 %5088
      %5090 = vrot.lane.b32.xlu0 %v4920, 4
      %v5091 = vpop.permute.xlu0 %5090
      %5092 = vrot.lane.b32.xlu0 %v4921, 4
      %v5093 = vpop.permute.xlu0 %5092
      %5094 = vrot.lane.b32.xlu0 %v4922, 4
      %v5095 = vpop.permute.xlu0 %5094
      %5096 = vrot.lane.b32.xlu0 %v4923, 4
      %v5097 = vpop.permute.xlu0 %5096
      %5098 = vrot.lane.b32.xlu0 %v4924, 4
      %v5099 = vpop.permute.xlu0 %5098
      %5100 = vrot.lane.b32.xlu0 %v4925, 4
      %v5101 = vpop.permute.xlu0 %5100
      %5102 = vrot.lane.b32.xlu0 %v4926, 4
      %v5103 = vpop.permute.xlu0 %5102
      %5104 = vrot.lane.b32.xlu0 %v4927, 4
      %v5105 = vpop.permute.xlu0 %5104
      %5106 = vrot.lane.b32.xlu0 %v4928, 4
      %v5107 = vpop.permute.xlu0 %5106
      %5108 = vrot.lane.b32.xlu0 %v4929, 4
      %v5109 = vpop.permute.xlu0 %5108
      %5110 = vrot.lane.b32.xlu0 %v4930, 4
      %v5111 = vpop.permute.xlu0 %5110
      %5112 = vrot.lane.b32.xlu0 %v4931, 4
      %v5113 = vpop.permute.xlu0 %5112
      %5114 = vrot.lane.b32.xlu0 %v4932, 4
      %v5115 = vpop.permute.xlu0 %5114
      %5116 = vrot.lane.b32.xlu0 %v4933, 4
      %v5117 = vpop.permute.xlu0 %5116
      %5118 = vrot.lane.b32.xlu0 %v4934, 4
      %v5119 = vpop.permute.xlu0 %5118
      %5120 = vrot.lane.b32.xlu0 %v4935, 4
      %v5121 = vpop.permute.xlu0 %5120
      %5122 = vrot.lane.b32.xlu0 %v4936, 4
      %v5123 = vpop.permute.xlu0 %5122
      %5124 = vrot.lane.b32.xlu0 %v4937, 4
      %v5125 = vpop.permute.xlu0 %5124
      %5126 = vrot.lane.b32.xlu0 %v4938, 4
      %v5127 = vpop.permute.xlu0 %5126
      %5128 = vrot.lane.b32.xlu0 %v4939, 4
      %v5129 = vpop.permute.xlu0 %5128
      %5130 = vrot.lane.b32.xlu0 %v4940, 4
      %v5131 = vpop.permute.xlu0 %5130
      %5132 = vrot.lane.b32.xlu0 %v4941, 4
      %v5133 = vpop.permute.xlu0 %5132
      %v5198 = vsel %vm236, %v4814, %v5007
      %v5199 = vsel %vm236, %v4815, %v5009
      %v5200 = vsel %vm236, %v4816, %v5011
      %v5201 = vsel %vm236, %v4817, %v5013
      %v5202 = vsel %vm236, %v4818, %v5015
      %v5203 = vsel %vm236, %v4819, %v5017
      %v5204 = vsel %vm236, %v4820, %v5019
      %v5205 = vsel %vm236, %v4821, %v5021
      %v5206 = vsel %vm236, %v4822, %v5023
      %v5207 = vsel %vm236, %v4823, %v5025
      %v5208 = vsel %vm236, %v4824, %v5027
      %v5209 = vsel %vm236, %v4825, %v5029
      %v5210 = vsel %vm236, %v4826, %v5031
      %v5211 = vsel %vm236, %v4827, %v5033
      %v5212 = vsel %vm236, %v4828, %v5035
      %v5213 = vsel %vm236, %v4829, %v5037
      %v5214 = vsel %vm236, %v4830, %v5039
      %v5215 = vsel %vm236, %v4831, %v5041
      %v5216 = vsel %vm236, %v4832, %v5043
      %v5217 = vsel %vm236, %v4833, %v5045
      %v5218 = vsel %vm236, %v4834, %v5047
      %v5219 = vsel %vm236, %v4835, %v5049
      %v5220 = vsel %vm236, %v4836, %v5051
      %v5221 = vsel %vm236, %v4837, %v5053
      %v5222 = vsel %vm236, %v4838, %v5055
      %v5223 = vsel %vm236, %v4839, %v5057
      %v5224 = vsel %vm236, %v4840, %v5059
      %v5225 = vsel %vm236, %v4841, %v5061
      %v5226 = vsel %vm236, %v4842, %v5063
      %v5227 = vsel %vm236, %v4843, %v5065
      %v5228 = vsel %vm236, %v4844, %v5067
      %v5229 = vsel %vm236, %v4845, %v5069
      %v5230 = vsel %vm236, %v4846, %v5071
      %v5231 = vsel %vm236, %v4847, %v5073
      %v5232 = vsel %vm236, %v4848, %v5075
      %v5233 = vsel %vm236, %v4849, %v5077
      %v5234 = vsel %vm236, %v4850, %v5079
      %v5235 = vsel %vm236, %v4851, %v5081
      %v5236 = vsel %vm236, %v4852, %v5083
      %v5237 = vsel %vm236, %v4853, %v5085
      %v5238 = vsel %vm236, %v4854, %v5087
      %v5239 = vsel %vm236, %v4855, %v5089
      %v5240 = vsel %vm236, %v4856, %v5091
      %v5241 = vsel %vm236, %v4857, %v5093
      %v5242 = vsel %vm236, %v4858, %v5095
      %v5243 = vsel %vm236, %v4859, %v5097
      %v5244 = vsel %vm236, %v4860, %v5099
      %v5245 = vsel %vm236, %v4861, %v5101
      %v5246 = vsel %vm236, %v4862, %v5103
      %v5247 = vsel %vm236, %v4863, %v5105
      %v5248 = vsel %vm236, %v4864, %v5107
      %v5249 = vsel %vm236, %v4865, %v5109
      %v5250 = vsel %vm236, %v4866, %v5111
      %v5251 = vsel %vm236, %v4867, %v5113
      %v5252 = vsel %vm236, %v4868, %v5115
      %v5253 = vsel %vm236, %v4869, %v5117
      %v5254 = vsel %vm236, %v4870, %v5119
      %v5255 = vsel %vm236, %v4871, %v5121
      %v5256 = vsel %vm236, %v4872, %v5123
      %v5257 = vsel %vm236, %v4873, %v5125
      %v5258 = vsel %vm236, %v4874, %v5127
      %v5259 = vsel %vm236, %v4875, %v5129
      %v5260 = vsel %vm236, %v4876, %v5131
      %v5261 = vsel %vm236, %v4877, %v5133
      %v5262 = vsel %vm3354, %v5198, 0.0
      %v5263 = vsel %vm3354, %v5199, 0.0
      %v5264 = vadd.f32 %v5262, %v5263
      %v5265 = vsel %vm3354, %v5200, 0.0
      %v5266 = vadd.f32 %v5264, %v5265
      %v5267 = vsel %vm3354, %v5201, 0.0
      %v5268 = vadd.f32 %v5266, %v5267
      %v5269 = vsel %vm3354, %v5202, 0.0
      %v5270 = vadd.f32 %v5268, %v5269
      %v5271 = vsel %vm3354, %v5203, 0.0
      %v5272 = vadd.f32 %v5270, %v5271
      %v5273 = vsel %vm3354, %v5204, 0.0
      %v5274 = vadd.f32 %v5272, %v5273
      %v5275 = vsel %vm3354, %v5205, 0.0
      %v5276 = vadd.f32 %v5274, %v5275
      %v5277 = vsel %vm3354, %v5206, 0.0
      %v5278 = vadd.f32 %v5276, %v5277
      %v5279 = vsel %vm3354, %v5207, 0.0
      %v5280 = vadd.f32 %v5278, %v5279
      %v5281 = vsel %vm3354, %v5208, 0.0
      %v5282 = vadd.f32 %v5280, %v5281
      %v5283 = vsel %vm3354, %v5209, 0.0
      %v5284 = vadd.f32 %v5282, %v5283
      %v5285 = vsel %vm3354, %v5210, 0.0
      %v5286 = vadd.f32 %v5284, %v5285
      %v5287 = vsel %vm3354, %v5211, 0.0
      %v5288 = vadd.f32 %v5286, %v5287
      %v5289 = vsel %vm3354, %v5212, 0.0
      %v5290 = vadd.f32 %v5288, %v5289
      %v5291 = vsel %vm3354, %v5213, 0.0
      %v5292 = vadd.f32 %v5290, %v5291
      %v5293 = vsel %vm3354, %v5214, 0.0
      %v5294 = vadd.f32 %v5292, %v5293
      %v5295 = vsel %vm3354, %v5215, 0.0
      %v5296 = vadd.f32 %v5294, %v5295
      %v5297 = vsel %vm3354, %v5216, 0.0
      %v5298 = vadd.f32 %v5296, %v5297
      %v5299 = vsel %vm3354, %v5217, 0.0
      %v5300 = vadd.f32 %v5298, %v5299
      %v5301 = vsel %vm3354, %v5218, 0.0
      %v5302 = vadd.f32 %v5300, %v5301
      %v5303 = vsel %vm3354, %v5219, 0.0
      %v5304 = vadd.f32 %v5302, %v5303
      %v5305 = vsel %vm3354, %v5220, 0.0
      %v5306 = vadd.f32 %v5304, %v5305
      %v5307 = vsel %vm3354, %v5221, 0.0
      %v5308 = vadd.f32 %v5306, %v5307
      %v5309 = vsel %vm3354, %v5222, 0.0
      %v5310 = vadd.f32 %v5308, %v5309
      %v5311 = vsel %vm3354, %v5223, 0.0
      %v5312 = vadd.f32 %v5310, %v5311
      %v5313 = vsel %vm3354, %v5224, 0.0
      %v5314 = vadd.f32 %v5312, %v5313
      %v5315 = vsel %vm3354, %v5225, 0.0
      %v5316 = vadd.f32 %v5314, %v5315
      %v5317 = vsel %vm3354, %v5226, 0.0
      %v5318 = vadd.f32 %v5316, %v5317
      %v5319 = vsel %vm3354, %v5227, 0.0
      %v5320 = vadd.f32 %v5318, %v5319
      %v5321 = vsel %vm3354, %v5228, 0.0
      %v5322 = vadd.f32 %v5320, %v5321
      %v5323 = vsel %vm3354, %v5229, 0.0
      %v5324 = vadd.f32 %v5322, %v5323
      %v5325 = vsel %vm3354, %v5230, 0.0
      %v5326 = vadd.f32 %v5324, %v5325
      %v5327 = vsel %vm3354, %v5231, 0.0
      %v5328 = vadd.f32 %v5326, %v5327
      %v5329 = vsel %vm3354, %v5232, 0.0
      %v5330 = vadd.f32 %v5328, %v5329
      %v5331 = vsel %vm3354, %v5233, 0.0
      %v5332 = vadd.f32 %v5330, %v5331
      %v5333 = vsel %vm3354, %v5234, 0.0
      %v5334 = vadd.f32 %v5332, %v5333
      %v5335 = vsel %vm3354, %v5235, 0.0
      %v5336 = vadd.f32 %v5334, %v5335
      %v5337 = vsel %vm3354, %v5236, 0.0
      %v5338 = vadd.f32 %v5336, %v5337
      %v5339 = vsel %vm3354, %v5237, 0.0
      %v5340 = vadd.f32 %v5338, %v5339
      %v5341 = vsel %vm3354, %v5238, 0.0
      %v5342 = vadd.f32 %v5340, %v5341
      %v5343 = vsel %vm3354, %v5239, 0.0
      %v5344 = vadd.f32 %v5342, %v5343
      %v5345 = vsel %vm3354, %v5240, 0.0
      %v5346 = vadd.f32 %v5344, %v5345
      %v5347 = vsel %vm3354, %v5241, 0.0
      %v5348 = vadd.f32 %v5346, %v5347
      %v5349 = vsel %vm3354, %v5242, 0.0
      %v5350 = vadd.f32 %v5348, %v5349
      %v5351 = vsel %vm3354, %v5243, 0.0
      %v5352 = vadd.f32 %v5350, %v5351
      %v5353 = vsel %vm3354, %v5244, 0.0
      %v5354 = vadd.f32 %v5352, %v5353
      %v5355 = vsel %vm3354, %v5245, 0.0
      %v5356 = vadd.f32 %v5354, %v5355
      %v5357 = vsel %vm3354, %v5246, 0.0
      %v5358 = vadd.f32 %v5356, %v5357
      %v5359 = vsel %vm3354, %v5247, 0.0
      %v5360 = vadd.f32 %v5358, %v5359
      %v5361 = vsel %vm3354, %v5248, 0.0
      %v5362 = vadd.f32 %v5360, %v5361
      %v5363 = vsel %vm3354, %v5249, 0.0
      %v5364 = vadd.f32 %v5362, %v5363
      %v5365 = vsel %vm3354, %v5250, 0.0
      %v5366 = vadd.f32 %v5364, %v5365
      %v5367 = vsel %vm3354, %v5251, 0.0
      %v5368 = vadd.f32 %v5366, %v5367
      %v5369 = vsel %vm3354, %v5252, 0.0
      %v5370 = vadd.f32 %v5368, %v5369
      %v5371 = vsel %vm3354, %v5253, 0.0
      %v5372 = vadd.f32 %v5370, %v5371
      %v5373 = vsel %vm3354, %v5254, 0.0
      %v5374 = vadd.f32 %v5372, %v5373
      %v5375 = vsel %vm3354, %v5255, 0.0
      %v5376 = vadd.f32 %v5374, %v5375
      %v5377 = vsel %vm3354, %v5256, 0.0
      %v5378 = vadd.f32 %v5376, %v5377
      %v5379 = vsel %vm3354, %v5257, 0.0
      %v5380 = vadd.f32 %v5378, %v5379
      %v5381 = vsel %vm3354, %v5258, 0.0
      %v5382 = vadd.f32 %v5380, %v5381
      %v5383 = vsel %vm3354, %v5259, 0.0
      %v5384 = vadd.f32 %v5382, %v5383
      %v5385 = vsel %vm3354, %v5260, 0.0
      %v5386 = vadd.f32 %v5384, %v5385
      %v5387 = vsel %vm3354, %v5261, 0.0
      %v5388 = vadd.f32 %v5386, %v5387
      %v5389 = vrot.slane %v5388, 4
      %v5390 = vadd.f32 %v5388, %v5389
      %v5391 = vrot.slane %v5390, 2
      %v5392 = vadd.f32 %v5390, %v5391
      %v5393 = vrot.slane %v5392, 1
      %v5394 = vadd.f32 %v5392, %v5393
      %v5395 = vmul.f32 %v5394, 0.001953125
      %v5396 = vmul.f32 %v5395, %v5395
      %5398 = vrot.lane.b32.xlu0 %v5396, 4
      %v5399 = vpop.permute.xlu0 %5398
      %v5401 = vsub.f32 %v5395, %v5399
      %v5402 = vsub.f32 %v4814, %v5395
      %v5403 = vsub.f32 %v4815, %v5395
      %v5404 = vsub.f32 %v4816, %v5395
      %v5405 = vsub.f32 %v4817, %v5395
      %v5406 = vsub.f32 %v4818, %v5395
      %v5407 = vsub.f32 %v4819, %v5395
      %v5408 = vsub.f32 %v4820, %v5395
      %v5409 = vsub.f32 %v4821, %v5395
      %v5410 = vsub.f32 %v4822, %v5395
      %v5411 = vsub.f32 %v4823, %v5395
      %v5412 = vsub.f32 %v4824, %v5395
      %v5413 = vsub.f32 %v4825, %v5395
      %v5414 = vsub.f32 %v4826, %v5395
      %v5415 = vsub.f32 %v4827, %v5395
      %v5416 = vsub.f32 %v4828, %v5395
      %v5417 = vsub.f32 %v4829, %v5395
      %v5418 = vsub.f32 %v4830, %v5395
      %v5419 = vsub.f32 %v4831, %v5395
      %v5420 = vsub.f32 %v4832, %v5395
      %v5421 = vsub.f32 %v4833, %v5395
      %v5422 = vsub.f32 %v4834, %v5395
      %v5423 = vsub.f32 %v4835, %v5395
      %v5424 = vsub.f32 %v4836, %v5395
      %v5425 = vsub.f32 %v4837, %v5395
      %v5426 = vsub.f32 %v4838, %v5395
      %v5427 = vsub.f32 %v4839, %v5395
      %v5428 = vsub.f32 %v4840, %v5395
      %v5429 = vsub.f32 %v4841, %v5395
      %v5430 = vsub.f32 %v4842, %v5395
      %v5431 = vsub.f32 %v4843, %v5395
      %v5432 = vsub.f32 %v4844, %v5395
      %v5433 = vsub.f32 %v4845, %v5395
      %v5434 = vsub.f32 %v4846, %v5395
      %v5435 = vsub.f32 %v4847, %v5395
      %v5436 = vsub.f32 %v4848, %v5395
      %v5437 = vsub.f32 %v4849, %v5395
      %v5438 = vsub.f32 %v4850, %v5395
      %v5439 = vsub.f32 %v4851, %v5395
      %v5440 = vsub.f32 %v4852, %v5395
      %v5441 = vsub.f32 %v4853, %v5395
      %v5442 = vsub.f32 %v4854, %v5395
      %v5443 = vsub.f32 %v4855, %v5395
      %v5444 = vsub.f32 %v4856, %v5395
      %v5445 = vsub.f32 %v4857, %v5395
      %v5446 = vsub.f32 %v4858, %v5395
      %v5447 = vsub.f32 %v4859, %v5395
      %v5448 = vsub.f32 %v4860, %v5395
      %v5449 = vsub.f32 %v4861, %v5395
      %v5450 = vsub.f32 %v4862, %v5395
      %v5451 = vsub.f32 %v4863, %v5395
      %v5452 = vsub.f32 %v4864, %v5395
      %v5453 = vsub.f32 %v4865, %v5395
      %v5454 = vsub.f32 %v4866, %v5395
      %v5455 = vsub.f32 %v4867, %v5395
      %v5456 = vsub.f32 %v4868, %v5395
      %v5457 = vsub.f32 %v4869, %v5395
      %v5458 = vsub.f32 %v4870, %v5395
      %v5459 = vsub.f32 %v4871, %v5395
      %v5460 = vsub.f32 %v4872, %v5395
      %v5461 = vsub.f32 %v4873, %v5395
      %v5462 = vsub.f32 %v4874, %v5395
      %v5463 = vsub.f32 %v4875, %v5395
      %v5464 = vsub.f32 %v4876, %v5395
      %v5465 = vsub.f32 %v4877, %v5395
      %v5466 = vadd.f32 %v5401, 1e-05
      %v5467 = vrsqrt.pop %v5466
      %v5468 = vmul.f32 %v5467, %v5466
      %v5469 = vmul.f32 %v5468, %v5467
      %v5470 = vmul.f32 0.5, %v5469
      %v5471 = vsub.f32 1.5, %v5470
      %v5472 = vmul.f32 %v5467, %v5471
      %vm5473 = vweird.f32 %v5466
      %vm5474 = vweird.f32 %v5467
      %vm5475 = vmor %vm5473, %vm5474
      %v5476 = vsel %vm5475, %v5467, %v5472
      %v5477 = vperm.slane %v5476, 0
      %5479 = vrot.lane.b32.xlu0 %v5477, 124
      %v5480 = vpop.permute.xlu0 %5479
      %v5482 = vmul.f32 %v5402, %v5480
      %v5483 = vmul.f32 %v5403, %v5480
      %v5484 = vmul.f32 %v5404, %v5480
      %v5485 = vmul.f32 %v5405, %v5480
      %v5486 = vmul.f32 %v5406, %v5480
      %v5487 = vmul.f32 %v5407, %v5480
      %v5488 = vmul.f32 %v5408, %v5480
      %v5489 = vmul.f32 %v5409, %v5480
      %v5490 = vmul.f32 %v5410, %v5480
      %v5491 = vmul.f32 %v5411, %v5480
      %v5492 = vmul.f32 %v5412, %v5480
      %v5493 = vmul.f32 %v5413, %v5480
      %v5494 = vmul.f32 %v5414, %v5480
      %v5495 = vmul.f32 %v5415, %v5480
      %v5496 = vmul.f32 %v5416, %v5480
      %v5497 = vmul.f32 %v5417, %v5480
      %v5498 = vmul.f32 %v5418, %v5480
      %v5499 = vmul.f32 %v5419, %v5480
      %v5500 = vmul.f32 %v5420, %v5480
      %v5501 = vmul.f32 %v5421, %v5480
      %v5502 = vmul.f32 %v5422, %v5480
      %v5503 = vmul.f32 %v5423, %v5480
      %v5504 = vmul.f32 %v5424, %v5480
      %v5505 = vmul.f32 %v5425, %v5480
      %v5506 = vmul.f32 %v5426, %v5480
      %v5507 = vmul.f32 %v5427, %v5480
      %v5508 = vmul.f32 %v5428, %v5480
      %v5509 = vmul.f32 %v5429, %v5480
      %v5510 = vmul.f32 %v5430, %v5480
      %v5511 = vmul.f32 %v5431, %v5480
      %v5512 = vmul.f32 %v5432, %v5480
      %v5513 = vmul.f32 %v5433, %v5480
      %v5514 = vmul.f32 %v5434, %v5480
      %v5515 = vmul.f32 %v5435, %v5480
      %v5516 = vmul.f32 %v5436, %v5480
      %v5517 = vmul.f32 %v5437, %v5480
      %v5518 = vmul.f32 %v5438, %v5480
      %v5519 = vmul.f32 %v5439, %v5480
      %v5520 = vmul.f32 %v5440, %v5480
      %v5521 = vmul.f32 %v5441, %v5480
      %v5522 = vmul.f32 %v5442, %v5480
      %v5523 = vmul.f32 %v5443, %v5480
      %v5524 = vmul.f32 %v5444, %v5480
      %v5525 = vmul.f32 %v5445, %v5480
      %v5526 = vmul.f32 %v5446, %v5480
      %v5527 = vmul.f32 %v5447, %v5480
      %v5528 = vmul.f32 %v5448, %v5480
      %v5529 = vmul.f32 %v5449, %v5480
      %v5530 = vmul.f32 %v5450, %v5480
      %v5531 = vmul.f32 %v5451, %v5480
      %v5532 = vmul.f32 %v5452, %v5480
      %v5533 = vmul.f32 %v5453, %v5480
      %v5534 = vmul.f32 %v5454, %v5480
      %v5535 = vmul.f32 %v5455, %v5480
      %v5536 = vmul.f32 %v5456, %v5480
      %v5537 = vmul.f32 %v5457, %v5480
      %v5538 = vmul.f32 %v5458, %v5480
      %v5539 = vmul.f32 %v5459, %v5480
      %v5540 = vmul.f32 %v5460, %v5480
      %v5541 = vmul.f32 %v5461, %v5480
      %v5542 = vmul.f32 %v5462, %v5480
      %v5543 = vmul.f32 %v5463, %v5480
      %v5544 = vmul.f32 %v5464, %v5480
      %v5545 = vmul.f32 %v5465, %v5480
      %v5546 = vmax.f32 %v5482, 0.0
      %v5547 = vmax.f32 %v5483, 0.0
      %v5548 = vmax.f32 %v5484, 0.0
      %v5549 = vmax.f32 %v5485, 0.0
      %v5550 = vmax.f32 %v5486, 0.0
      %v5551 = vmax.f32 %v5487, 0.0
      %v5552 = vmax.f32 %v5488, 0.0
      %v5553 = vmax.f32 %v5489, 0.0
      %v5554 = vmax.f32 %v5490, 0.0
      %v5555 = vmax.f32 %v5491, 0.0
      %v5556 = vmax.f32 %v5492, 0.0
      %v5557 = vmax.f32 %v5493, 0.0
      %v5558 = vmax.f32 %v5494, 0.0
      %v5559 = vmax.f32 %v5495, 0.0
      %v5560 = vmax.f32 %v5496, 0.0
      %v5561 = vmax.f32 %v5497, 0.0
      %v5562 = vmax.f32 %v5498, 0.0
      %v5563 = vmax.f32 %v5499, 0.0
      %v5564 = vmax.f32 %v5500, 0.0
      %v5565 = vmax.f32 %v5501, 0.0
      %v5566 = vmax.f32 %v5502, 0.0
      %v5567 = vmax.f32 %v5503, 0.0
      %v5568 = vmax.f32 %v5504, 0.0
      %v5569 = vmax.f32 %v5505, 0.0
      %v5570 = vmax.f32 %v5506, 0.0
      %v5571 = vmax.f32 %v5507, 0.0
      %v5572 = vmax.f32 %v5508, 0.0
      %v5573 = vmax.f32 %v5509, 0.0
      %v5574 = vmax.f32 %v5510, 0.0
      %v5575 = vmax.f32 %v5511, 0.0
      %v5576 = vmax.f32 %v5512, 0.0
      %v5577 = vmax.f32 %v5513, 0.0
      %v5578 = vmax.f32 %v5514, 0.0
      %v5579 = vmax.f32 %v5515, 0.0
      %v5580 = vmax.f32 %v5516, 0.0
      %v5581 = vmax.f32 %v5517, 0.0
      %v5582 = vmax.f32 %v5518, 0.0
      %v5583 = vmax.f32 %v5519, 0.0
      %v5584 = vmax.f32 %v5520, 0.0
      %v5585 = vmax.f32 %v5521, 0.0
      %v5586 = vmax.f32 %v5522, 0.0
      %v5587 = vmax.f32 %v5523, 0.0
      %v5588 = vmax.f32 %v5524, 0.0
      %v5589 = vmax.f32 %v5525, 0.0
      %v5590 = vmax.f32 %v5526, 0.0
      %v5591 = vmax.f32 %v5527, 0.0
      %v5592 = vmax.f32 %v5528, 0.0
      %v5593 = vmax.f32 %v5529, 0.0
      %v5594 = vmax.f32 %v5530, 0.0
      %v5595 = vmax.f32 %v5531, 0.0
      %v5596 = vmax.f32 %v5532, 0.0
      %v5597 = vmax.f32 %v5533, 0.0
      %v5598 = vmax.f32 %v5534, 0.0
      %v5599 = vmax.f32 %v5535, 0.0
      %v5600 = vmax.f32 %v5536, 0.0
      %v5601 = vmax.f32 %v5537, 0.0
      %v5602 = vmax.f32 %v5538, 0.0
      %v5603 = vmax.f32 %v5539, 0.0
      %v5604 = vmax.f32 %v5540, 0.0
      %v5605 = vmax.f32 %v5541, 0.0
      %v5606 = vmax.f32 %v5542, 0.0
      %v5607 = vmax.f32 %v5543, 0.0
      %v5608 = vmax.f32 %v5544, 0.0
      %v5609 = vmax.f32 %v5545, 0.0
      %5610 = vst.msk [vmem:[%s235] sm:$0xff] %vm236, %v5546
      %5611 = vst.msk [vmem:[%s235 + $0x8] sm:$0xff] %vm236, %v5547
      %5612 = vst.msk [vmem:[%s235 + $0x10] sm:$0xff] %vm236, %v5548
      %5613 = vst.msk [vmem:[%s235 + $0x18] sm:$0xff] %vm236, %v5549
      %5614 = vst.msk [vmem:[%s235 + $0x20] sm:$0xff] %vm236, %v5550
      %5615 = vst.msk [vmem:[%s235 + $0x28] sm:$0xff] %vm236, %v5551
      %5616 = vst.msk [vmem:[%s235 + $0x30] sm:$0xff] %vm236, %v5552
      %5617 = vst.msk [vmem:[%s235 + $0x38] sm:$0xff] %vm236, %v5553
      %5618 = vst.msk [vmem:[%s235 + $0x50] sm:$0xff] %vm236, %v5554
      %5619 = vst.msk [vmem:[%s235 + $0x58] sm:$0xff] %vm236, %v5555
      %5620 = vst.msk [vmem:[%s235 + $0x60] sm:$0xff] %vm236, %v5556
      %5621 = vst.msk [vmem:[%s235 + $0x68] sm:$0xff] %vm236, %v5557
      %5622 = vst.msk [vmem:[%s235 + $0x70] sm:$0xff] %vm236, %v5558
      %5623 = vst.msk [vmem:[%s235 + $0x78] sm:$0xff] %vm236, %v5559
      %5624 = vst.msk [vmem:[%s235 + $0x80] sm:$0xff] %vm236, %v5560
      %5625 = vst.msk [vmem:[%s235 + $0x88] sm:$0xff] %vm236, %v5561
      %5626 = vst.msk [vmem:[%s235 + $0xa0] sm:$0xff] %vm236, %v5562
      %5627 = vst.msk [vmem:[%s235 + $0xa8] sm:$0xff] %vm236, %v5563
      %5628 = vst.msk [vmem:[%s235 + $0xb0] sm:$0xff] %vm236, %v5564
      %5629 = vst.msk [vmem:[%s235 + $0xb8] sm:$0xff] %vm236, %v5565
      %5630 = vst.msk [vmem:[%s235 + $0xc0] sm:$0xff] %vm236, %v5566
      %5631 = vst.msk [vmem:[%s235 + $0xc8] sm:$0xff] %vm236, %v5567
      %5632 = vst.msk [vmem:[%s235 + $0xd0] sm:$0xff] %vm236, %v5568
      %5633 = vst.msk [vmem:[%s235 + $0xd8] sm:$0xff] %vm236, %v5569
      %5634 = vst.msk [vmem:[%s235 + $0xf0] sm:$0xff] %vm236, %v5570
      %5635 = vst.msk [vmem:[%s235 + $0xf8] sm:$0xff] %vm236, %v5571
      %5636 = vst.msk [vmem:[%s235 + $0x100] sm:$0xff] %vm236, %v5572
      %5637 = vst.msk [vmem:[%s235 + $0x108] sm:$0xff] %vm236, %v5573
      %5638 = vst.msk [vmem:[%s235 + $0x110] sm:$0xff] %vm236, %v5574
      %5639 = vst.msk [vmem:[%s235 + $0x118] sm:$0xff] %vm236, %v5575
      %5640 = vst.msk [vmem:[%s235 + $0x120] sm:$0xff] %vm236, %v5576
      %5641 = vst.msk [vmem:[%s235 + $0x128] sm:$0xff] %vm236, %v5577
      %5642 = vst.msk [vmem:[%s235 + $0x140] sm:$0xff] %vm236, %v5578
      %5643 = vst.msk [vmem:[%s235 + $0x148] sm:$0xff] %vm236, %v5579
      %5644 = vst.msk [vmem:[%s235 + $0x150] sm:$0xff] %vm236, %v5580
      %5645 = vst.msk [vmem:[%s235 + $0x158] sm:$0xff] %vm236, %v5581
      %5646 = vst.msk [vmem:[%s235 + $0x160] sm:$0xff] %vm236, %v5582
      %5647 = vst.msk [vmem:[%s235 + $0x168] sm:$0xff] %vm236, %v5583
      %5648 = vst.msk [vmem:[%s235 + $0x170] sm:$0xff] %vm236, %v5584
      %5649 = vst.msk [vmem:[%s235 + $0x178] sm:$0xff] %vm236, %v5585
      %5650 = vst.msk [vmem:[%s235 + $0x190] sm:$0xff] %vm236, %v5586
      %5651 = vst.msk [vmem:[%s235 + $0x198] sm:$0xff] %vm236, %v5587
      %5652 = vst.msk [vmem:[%s235 + $0x1a0] sm:$0xff] %vm236, %v5588
      %5653 = vst.msk [vmem:[%s235 + $0x1a8] sm:$0xff] %vm236, %v5589
      %5654 = vst.msk [vmem:[%s235 + $0x1b0] sm:$0xff] %vm236, %v5590
      %5655 = vst.msk [vmem:[%s235 + $0x1b8] sm:$0xff] %vm236, %v5591
      %5656 = vst.msk [vmem:[%s235 + $0x1c0] sm:$0xff] %vm236, %v5592
      %5657 = vst.msk [vmem:[%s235 + $0x1c8] sm:$0xff] %vm236, %v5593
      %5658 = vst.msk [vmem:[%s235 + $0x1e0] sm:$0xff] %vm236, %v5594
      %5659 = vst.msk [vmem:[%s235 + $0x1e8] sm:$0xff] %vm236, %v5595
      %5660 = vst.msk [vmem:[%s235 + $0x1f0] sm:$0xff] %vm236, %v5596
      %5661 = vst.msk [vmem:[%s235 + $0x1f8] sm:$0xff] %vm236, %v5597
      %5662 = vst.msk [vmem:[%s235 + $0x200] sm:$0xff] %vm236, %v5598
      %5663 = vst.msk [vmem:[%s235 + $0x208] sm:$0xff] %vm236, %v5599
      %5664 = vst.msk [vmem:[%s235 + $0x210] sm:$0xff] %vm236, %v5600
      %5665 = vst.msk [vmem:[%s235 + $0x218] sm:$0xff] %vm236, %v5601
      %5666 = vst.msk [vmem:[%s235 + $0x230] sm:$0xff] %vm236, %v5602
      %5667 = vst.msk [vmem:[%s235 + $0x238] sm:$0xff] %vm236, %v5603
      %5668 = vst.msk [vmem:[%s235 + $0x240] sm:$0xff] %vm236, %v5604
      %5669 = vst.msk [vmem:[%s235 + $0x248] sm:$0xff] %vm236, %v5605
      %5670 = vst.msk [vmem:[%s235 + $0x250] sm:$0xff] %vm236, %v5606
      %5671 = vst.msk [vmem:[%s235 + $0x258] sm:$0xff] %vm236, %v5607
      %5672 = vst.msk [vmem:[%s235 + $0x260] sm:$0xff] %vm236, %v5608
      %5673 = vst.msk [vmem:[%s235 + $0x268] sm:$0xff] %vm236, %v5609
      %5674 = vst.msk [vmem:[%s301] sm:$0xff] %vm236, %v5554
      %5675 = vst.msk [vmem:[%s301 + $0x8] sm:$0xff] %vm236, %v5555
      %5676 = vst.msk [vmem:[%s301 + $0x10] sm:$0xff] %vm236, %v5556
      %5677 = vst.msk [vmem:[%s301 + $0x18] sm:$0xff] %vm236, %v5557
      %5678 = vst.msk [vmem:[%s301 + $0x20] sm:$0xff] %vm236, %v5558
      %5679 = vst.msk [vmem:[%s301 + $0x28] sm:$0xff] %vm236, %v5559
      %5680 = vst.msk [vmem:[%s301 + $0x30] sm:$0xff] %vm236, %v5560
      %5681 = vst.msk [vmem:[%s301 + $0x38] sm:$0xff] %vm236, %v5561
      %5682 = vst.msk [vmem:[%s310] sm:$0xff] %vm236, %v5594
      %5683 = vst.msk [vmem:[%s310 + $0x8] sm:$0xff] %vm236, %v5595
      %5684 = vst.msk [vmem:[%s310 + $0x10] sm:$0xff] %vm236, %v5596
      %5685 = vst.msk [vmem:[%s310 + $0x18] sm:$0xff] %vm236, %v5597
      %5686 = vst.msk [vmem:[%s310 + $0x20] sm:$0xff] %vm236, %v5598
      %5687 = vst.msk [vmem:[%s310 + $0x28] sm:$0xff] %vm236, %v5599
      %5688 = vst.msk [vmem:[%s310 + $0x30] sm:$0xff] %vm236, %v5600
      %5689 = vst.msk [vmem:[%s310 + $0x38] sm:$0xff] %vm236, %v5601
      %v5690 = vld [vmem:[%s319] sm:$0xff]
      %v5691 = vld [vmem:[%s319 + $0x50] sm:$0xff]
      %v5692 = vld [vmem:[%s319 + $0xa0] sm:$0xff]
      %v5693 = vld [vmem:[%s319 + $0xf0] sm:$0xff]
      %v5694 = vld [vmem:[%s319 + $0x140] sm:$0xff]
      %v5695 = vld [vmem:[%s319 + $0x190] sm:$0xff]
      %v5696 = vld [vmem:[%s319 + $0x1e0] sm:$0xff]
      %v5697 = vld [vmem:[%s319 + $0x230] sm:$0xff]
      %v5698 = vld [vmem:[%s319 + $0x280] sm:$0xff]
      %v5699 = vld [vmem:[%s319 + $0x2d0] sm:$0xff]
      %5700 = vst.msk [vmem:[#allocation2] sm:$0xff] %vm236, %v5690
      %5701 = vst.msk [vmem:[#allocation2 + $0x50] sm:$0xff] %vm236, %v5691
      %5702 = vst.msk [vmem:[#allocation2 + $0xa0] sm:$0xff] %vm236, %v5692
      %5703 = vst.msk [vmem:[#allocation2 + $0xf0] sm:$0xff] %vm236, %v5693
      %5704 = vst.msk [vmem:[#allocation2 + $0x140] sm:$0xff] %vm236, %v5694
      %5705 = vst.msk [vmem:[#allocation2 + $0x190] sm:$0xff] %vm236, %v5695
      %5706 = vst.msk [vmem:[#allocation2 + $0x1e0] sm:$0xff] %vm236, %v5696
      %5707 = vst.msk [vmem:[#allocation2 + $0x230] sm:$0xff] %vm236, %v5697
      %5708 = vst.msk [vmem:[#allocation2 + $0x280] sm:$0xff] %vm236, %v5698
      %5709 = vst.msk [vmem:[#allocation2 + $0x2d0] sm:$0xff] %vm236, %v5699
      %v5710 = vld [vmem:[%s340] sm:$0xff]
      %v5711 = vld [vmem:[%s340 + $0x50] sm:$0xff]
      %v5712 = vld [vmem:[%s340 + $0xa0] sm:$0xff]
      %v5713 = vld [vmem:[%s340 + $0xf0] sm:$0xff]
      %v5714 = vld [vmem:[%s340 + $0x140] sm:$0xff]
      %v5715 = vld [vmem:[%s340 + $0x190] sm:$0xff]
      %v5716 = vld [vmem:[%s340 + $0x1e0] sm:$0xff]
      %v5717 = vld [vmem:[%s340 + $0x230] sm:$0xff]
      %v5718 = vld [vmem:[%s340 + $0x280] sm:$0xff]
      %v5719 = vld [vmem:[%s340 + $0x2d0] sm:$0xff]
      %5720 = vst.msk [vmem:[%s351] sm:$0xff] %vm236, %v5710
      %5721 = vst.msk [vmem:[%s351 + $0x50] sm:$0xff] %vm236, %v5711
      %5722 = vst.msk [vmem:[%s351 + $0xa0] sm:$0xff] %vm236, %v5712
      %5723 = vst.msk [vmem:[%s351 + $0xf0] sm:$0xff] %vm236, %v5713
      %5724 = vst.msk [vmem:[%s351 + $0x140] sm:$0xff] %vm236, %v5714
      %5725 = vst.msk [vmem:[%s351 + $0x190] sm:$0xff] %vm236, %v5715
      %5726 = vst.msk [vmem:[%s351 + $0x1e0] sm:$0xff] %vm236, %v5716
      %5727 = vst.msk [vmem:[%s351 + $0x230] sm:$0xff] %vm236, %v5717
      %5728 = vst.msk [vmem:[%s351 + $0x280] sm:$0xff] %vm236, %v5718
      %5729 = vst.msk [vmem:[%s351 + $0x2d0] sm:$0xff] %vm236, %v5719
      %v5730 = vld [vmem:[#allocation2] sm:$0xff]
      %v5731 = vld [vmem:[#allocation2 + $0x8] sm:$0xff]
      %v5732 = vld [vmem:[#allocation2 + $0x10] sm:$0xff]
      %v5733 = vld [vmem:[#allocation2 + $0x18] sm:$0xff]
      %v5734 = vld [vmem:[#allocation2 + $0x20] sm:$0xff]
      %v5735 = vld [vmem:[#allocation2 + $0x28] sm:$0xff]
      %v5736 = vld [vmem:[#allocation2 + $0x30] sm:$0xff]
      %v5737 = vld [vmem:[#allocation2 + $0x38] sm:$0xff]
      %v5738 = vld [vmem:[#allocation2 + $0x40] sm:$0xff]
      %v5739 = vld [vmem:[#allocation2 + $0x48] sm:$0xff]
      %v5740 = vld [vmem:[#allocation2 + $0x50] sm:$0xff]
      %v5741 = vld [vmem:[#allocation2 + $0x58] sm:$0xff]
      %v5742 = vld [vmem:[#allocation2 + $0x60] sm:$0xff]
      %v5743 = vld [vmem:[#allocation2 + $0x68] sm:$0xff]
      %v5744 = vld [vmem:[#allocation2 + $0x70] sm:$0xff]
      %v5745 = vld [vmem:[#allocation2 + $0x78] sm:$0xff]
      %v5746 = vld [vmem:[#allocation2 + $0x80] sm:$0xff]
      %v5747 = vld [vmem:[#allocation2 + $0x88] sm:$0xff]
      %v5748 = vld [vmem:[#allocation2 + $0x90] sm:$0xff]
      %v5749 = vld [vmem:[#allocation2 + $0x98] sm:$0xff]
      %v5750 = vld [vmem:[#allocation2 + $0xa0] sm:$0xff]
      %v5751 = vld [vmem:[#allocation2 + $0xa8] sm:$0xff]
      %v5752 = vld [vmem:[#allocation2 + $0xb0] sm:$0xff]
      %v5753 = vld [vmem:[#allocation2 + $0xb8] sm:$0xff]
      %v5754 = vld [vmem:[#allocation2 + $0xc0] sm:$0xff]
      %v5755 = vld [vmem:[#allocation2 + $0xc8] sm:$0xff]
      %v5756 = vld [vmem:[#allocation2 + $0xd0] sm:$0xff]
      %v5757 = vld [vmem:[#allocation2 + $0xd8] sm:$0xff]
      %v5758 = vld [vmem:[#allocation2 + $0xe0] sm:$0xff]
      %v5759 = vld [vmem:[#allocation2 + $0xe8] sm:$0xff]
      %v5760 = vld [vmem:[#allocation2 + $0xf0] sm:$0xff]
      %v5761 = vld [vmem:[#allocation2 + $0xf8] sm:$0xff]
      %v5762 = vld [vmem:[#allocation2 + $0x100] sm:$0xff]
      %v5763 = vld [vmem:[#allocation2 + $0x108] sm:$0xff]
      %v5764 = vld [vmem:[#allocation2 + $0x110] sm:$0xff]
      %v5765 = vld [vmem:[#allocation2 + $0x118] sm:$0xff]
      %v5766 = vld [vmem:[#allocation2 + $0x120] sm:$0xff]
      %v5767 = vld [vmem:[#allocation2 + $0x128] sm:$0xff]
      %v5768 = vld [vmem:[#allocation2 + $0x130] sm:$0xff]
      %v5769 = vld [vmem:[#allocation2 + $0x138] sm:$0xff]
      %v5770 = vld [vmem:[#allocation2 + $0x140] sm:$0xff]
      %v5771 = vld [vmem:[#allocation2 + $0x148] sm:$0xff]
      %v5772 = vld [vmem:[#allocation2 + $0x150] sm:$0xff]
      %v5773 = vld [vmem:[#allocation2 + $0x158] sm:$0xff]
      %v5774 = vld [vmem:[#allocation2 + $0x160] sm:$0xff]
      %v5775 = vld [vmem:[#allocation2 + $0x168] sm:$0xff]
      %v5776 = vld [vmem:[#allocation2 + $0x170] sm:$0xff]
      %v5777 = vld [vmem:[#allocation2 + $0x178] sm:$0xff]
      %v5778 = vld [vmem:[#allocation2 + $0x180] sm:$0xff]
      %v5779 = vld [vmem:[#allocation2 + $0x188] sm:$0xff]
      %v5780 = vld [vmem:[#allocation2 + $0x190] sm:$0xff]
      %v5781 = vld [vmem:[#allocation2 + $0x198] sm:$0xff]
      %v5782 = vld [vmem:[#allocation2 + $0x1a0] sm:$0xff]
      %v5783 = vld [vmem:[#allocation2 + $0x1a8] sm:$0xff]
      %v5784 = vld [vmem:[#allocation2 + $0x1b0] sm:$0xff]
      %v5785 = vld [vmem:[#allocation2 + $0x1b8] sm:$0xff]
      %v5786 = vld [vmem:[#allocation2 + $0x1c0] sm:$0xff]
      %v5787 = vld [vmem:[#allocation2 + $0x1c8] sm:$0xff]
      %v5788 = vld [vmem:[#allocation2 + $0x1d0] sm:$0xff]
      %v5789 = vld [vmem:[#allocation2 + $0x1d8] sm:$0xff]
      %v5790 = vld [vmem:[#allocation2 + $0x1e0] sm:$0xff]
      %v5791 = vld [vmem:[#allocation2 + $0x1e8] sm:$0xff]
      %v5792 = vld [vmem:[#allocation2 + $0x1f0] sm:$0xff]
      %v5793 = vld [vmem:[#allocation2 + $0x1f8] sm:$0xff]
      %v5794 = vld [vmem:[#allocation2 + $0x200] sm:$0xff]
      %v5795 = vld [vmem:[#allocation2 + $0x208] sm:$0xff]
      %v5796 = vld [vmem:[#allocation2 + $0x210] sm:$0xff]
      %v5797 = vld [vmem:[#allocation2 + $0x218] sm:$0xff]
      %v5798 = vld [vmem:[#allocation2 + $0x220] sm:$0xff]
      %v5799 = vld [vmem:[#allocation2 + $0x228] sm:$0xff]
      %v5800 = vld [vmem:[#allocation2 + $0x230] sm:$0xff]
      %v5801 = vld [vmem:[#allocation2 + $0x238] sm:$0xff]
      %v5802 = vld [vmem:[#allocation2 + $0x240] sm:$0xff]
      %v5803 = vld [vmem:[#allocation2 + $0x248] sm:$0xff]
      %v5804 = vld [vmem:[#allocation2 + $0x250] sm:$0xff]
      %v5805 = vld [vmem:[#allocation2 + $0x258] sm:$0xff]
      %v5806 = vld [vmem:[#allocation2 + $0x260] sm:$0xff]
      %v5807 = vld [vmem:[#allocation2 + $0x268] sm:$0xff]
      %v5808 = vld [vmem:[#allocation2 + $0x270] sm:$0xff]
      %v5809 = vld [vmem:[#allocation2 + $0x278] sm:$0xff]
      %v5810 = vld [vmem:[#allocation2 + $0x280] sm:$0xff]
      %v5811 = vld [vmem:[#allocation2 + $0x288] sm:$0xff]
      %v5812 = vld [vmem:[#allocation2 + $0x290] sm:$0xff]
      %v5813 = vld [vmem:[#allocation2 + $0x298] sm:$0xff]
      %v5814 = vld [vmem:[#allocation2 + $0x2a0] sm:$0xff]
      %v5815 = vld [vmem:[#allocation2 + $0x2a8] sm:$0xff]
      %v5816 = vld [vmem:[#allocation2 + $0x2b0] sm:$0xff]
      %v5817 = vld [vmem:[#allocation2 + $0x2b8] sm:$0xff]
      %v5818 = vld [vmem:[#allocation2 + $0x2c0] sm:$0xff]
      %v5819 = vld [vmem:[#allocation2 + $0x2c8] sm:$0xff]
      %v5820 = vld [vmem:[#allocation2 + $0x2d0] sm:$0xff]
      %v5821 = vld [vmem:[#allocation2 + $0x2d8] sm:$0xff]
      %v5822 = vld [vmem:[#allocation2 + $0x2e0] sm:$0xff]
      %v5823 = vld [vmem:[#allocation2 + $0x2e8] sm:$0xff]
      %v5824 = vld [vmem:[#allocation2 + $0x2f0] sm:$0xff]
      %v5825 = vld [vmem:[#allocation2 + $0x2f8] sm:$0xff]
      %v5826 = vld [vmem:[#allocation2 + $0x300] sm:$0xff]
      %v5827 = vld [vmem:[#allocation2 + $0x308] sm:$0xff]
      %v5828 = vld [vmem:[#allocation2 + $0x310] sm:$0xff]
      %v5829 = vld [vmem:[#allocation2 + $0x318] sm:$0xff]
      %v5910 = vrot.slane %v5730, 1
      %v5911 = vrot.slane %v5731, 1
      %v5912 = vrot.slane %v5732, 1
      %v5913 = vrot.slane %v5733, 1
      %v5914 = vrot.slane %v5734, 1
      %v5915 = vrot.slane %v5735, 1
      %v5916 = vrot.slane %v5736, 1
      %v5917 = vrot.slane %v5737, 1
      %v5918 = vrot.slane %v5740, 1
      %v5919 = vrot.slane %v5741, 1
      %v5920 = vrot.slane %v5742, 1
      %v5921 = vrot.slane %v5743, 1
      %v5922 = vrot.slane %v5744, 1
      %v5923 = vrot.slane %v5745, 1
      %v5924 = vrot.slane %v5746, 1
      %v5925 = vrot.slane %v5747, 1
      %v5926 = vrot.slane %v5750, 1
      %v5927 = vrot.slane %v5751, 1
      %v5928 = vrot.slane %v5752, 1
      %v5929 = vrot.slane %v5753, 1
      %v5930 = vrot.slane %v5754, 1
      %v5931 = vrot.slane %v5755, 1
      %v5932 = vrot.slane %v5756, 1
      %v5933 = vrot.slane %v5757, 1
      %v5934 = vrot.slane %v5760, 1
      %v5935 = vrot.slane %v5761, 1
      %v5936 = vrot.slane %v5762, 1
      %v5937 = vrot.slane %v5763, 1
      %v5938 = vrot.slane %v5764, 1
      %v5939 = vrot.slane %v5765, 1
      %v5940 = vrot.slane %v5766, 1
      %v5941 = vrot.slane %v5767, 1
      %v5942 = vrot.slane %v5770, 1
      %v5943 = vrot.slane %v5771, 1
      %v5944 = vrot.slane %v5772, 1
      %v5945 = vrot.slane %v5773, 1
      %v5946 = vrot.slane %v5774, 1
      %v5947 = vrot.slane %v5775, 1
      %v5948 = vrot.slane %v5776, 1
      %v5949 = vrot.slane %v5777, 1
      %v5950 = vrot.slane %v5780, 1
      %v5951 = vrot.slane %v5781, 1
      %v5952 = vrot.slane %v5782, 1
      %v5953 = vrot.slane %v5783, 1
      %v5954 = vrot.slane %v5784, 1
      %v5955 = vrot.slane %v5785, 1
      %v5956 = vrot.slane %v5786, 1
      %v5957 = vrot.slane %v5787, 1
      %v5958 = vrot.slane %v5790, 1
      %v5959 = vrot.slane %v5791, 1
      %v5960 = vrot.slane %v5792, 1
      %v5961 = vrot.slane %v5793, 1
      %v5962 = vrot.slane %v5794, 1
      %v5963 = vrot.slane %v5795, 1
      %v5964 = vrot.slane %v5796, 1
      %v5965 = vrot.slane %v5797, 1
      %v5966 = vrot.slane %v5800, 1
      %v5967 = vrot.slane %v5801, 1
      %v5968 = vrot.slane %v5802, 1
      %v5969 = vrot.slane %v5803, 1
      %v5970 = vrot.slane %v5804, 1
      %v5971 = vrot.slane %v5805, 1
      %v5972 = vrot.slane %v5806, 1
      %v5973 = vrot.slane %v5807, 1
      %v5974 = vrot.slane %v5810, 1
      %v5975 = vrot.slane %v5811, 1
      %v5976 = vrot.slane %v5812, 1
      %v5977 = vrot.slane %v5813, 1
      %v5978 = vrot.slane %v5814, 1
      %v5979 = vrot.slane %v5815, 1
      %v5980 = vrot.slane %v5816, 1
      %v5981 = vrot.slane %v5817, 1
      %v5982 = vrot.slane %v5820, 1
      %v5983 = vrot.slane %v5821, 1
      %v5984 = vrot.slane %v5822, 1
      %v5985 = vrot.slane %v5823, 1
      %v5986 = vrot.slane %v5824, 1
      %v5987 = vrot.slane %v5825, 1
      %v5988 = vrot.slane %v5826, 1
      %v5989 = vrot.slane %v5827, 1
      %v6070 = vrot.slane %v5730, 7
      %v6071 = vrot.slane %v5731, 7
      %v6072 = vrot.slane %v5732, 7
      %v6073 = vrot.slane %v5733, 7
      %v6074 = vrot.slane %v5734, 7
      %v6075 = vrot.slane %v5735, 7
      %v6076 = vrot.slane %v5736, 7
      %v6077 = vrot.slane %v5737, 7
      %v6078 = vrot.slane %v5740, 7
      %v6079 = vrot.slane %v5741, 7
      %v6080 = vrot.slane %v5742, 7
      %v6081 = vrot.slane %v5743, 7
      %v6082 = vrot.slane %v5744, 7
      %v6083 = vrot.slane %v5745, 7
      %v6084 = vrot.slane %v5746, 7
      %v6085 = vrot.slane %v5747, 7
      %v6086 = vrot.slane %v5750, 7
      %v6087 = vrot.slane %v5751, 7
      %v6088 = vrot.slane %v5752, 7
      %v6089 = vrot.slane %v5753, 7
      %v6090 = vrot.slane %v5754, 7
      %v6091 = vrot.slane %v5755, 7
      %v6092 = vrot.slane %v5756, 7
      %v6093 = vrot.slane %v5757, 7
      %v6094 = vrot.slane %v5760, 7
      %v6095 = vrot.slane %v5761, 7
      %v6096 = vrot.slane %v5762, 7
      %v6097 = vrot.slane %v5763, 7
      %v6098 = vrot.slane %v5764, 7
      %v6099 = vrot.slane %v5765, 7
      %v6100 = vrot.slane %v5766, 7
      %v6101 = vrot.slane %v5767, 7
      %v6102 = vrot.slane %v5770, 7
      %v6103 = vrot.slane %v5771, 7
      %v6104 = vrot.slane %v5772, 7
      %v6105 = vrot.slane %v5773, 7
      %v6106 = vrot.slane %v5774, 7
      %v6107 = vrot.slane %v5775, 7
      %v6108 = vrot.slane %v5776, 7
      %v6109 = vrot.slane %v5777, 7
      %v6110 = vrot.slane %v5780, 7
      %v6111 = vrot.slane %v5781, 7
      %v6112 = vrot.slane %v5782, 7
      %v6113 = vrot.slane %v5783, 7
      %v6114 = vrot.slane %v5784, 7
      %v6115 = vrot.slane %v5785, 7
      %v6116 = vrot.slane %v5786, 7
      %v6117 = vrot.slane %v5787, 7
      %v6118 = vrot.slane %v5790, 7
      %v6119 = vrot.slane %v5791, 7
      %v6120 = vrot.slane %v5792, 7
      %v6121 = vrot.slane %v5793, 7
      %v6122 = vrot.slane %v5794, 7
      %v6123 = vrot.slane %v5795, 7
      %v6124 = vrot.slane %v5796, 7
      %v6125 = vrot.slane %v5797, 7
      %v6126 = vrot.slane %v5800, 7
      %v6127 = vrot.slane %v5801, 7
      %v6128 = vrot.slane %v5802, 7
      %v6129 = vrot.slane %v5803, 7
      %v6130 = vrot.slane %v5804, 7
      %v6131 = vrot.slane %v5805, 7
      %v6132 = vrot.slane %v5806, 7
      %v6133 = vrot.slane %v5807, 7
      %v6134 = vrot.slane %v5810, 7
      %v6135 = vrot.slane %v5811, 7
      %v6136 = vrot.slane %v5812, 7
      %v6137 = vrot.slane %v5813, 7
      %v6138 = vrot.slane %v5814, 7
      %v6139 = vrot.slane %v5815, 7
      %v6140 = vrot.slane %v5816, 7
      %v6141 = vrot.slane %v5817, 7
      %v6142 = vrot.slane %v5820, 7
      %v6143 = vrot.slane %v5821, 7
      %v6144 = vrot.slane %v5822, 7
      %v6145 = vrot.slane %v5823, 7
      %v6146 = vrot.slane %v5824, 7
      %v6147 = vrot.slane %v5825, 7
      %v6148 = vrot.slane %v5826, 7
      %v6149 = vrot.slane %v5827, 7
      %v6230 = vsel %vm862, %v5910, %v6070
      %v6231 = vsel %vm862, %v5911, %v6071
      %v6232 = vsel %vm862, %v5912, %v6072
      %v6233 = vsel %vm862, %v5913, %v6073
      %v6234 = vsel %vm862, %v5914, %v6074
      %v6235 = vsel %vm862, %v5915, %v6075
      %v6236 = vsel %vm862, %v5916, %v6076
      %v6237 = vsel %vm862, %v5917, %v6077
      %v6238 = vsel %vm862, %v5918, %v6078
      %v6239 = vsel %vm862, %v5919, %v6079
      %v6240 = vsel %vm862, %v5920, %v6080
      %v6241 = vsel %vm862, %v5921, %v6081
      %v6242 = vsel %vm862, %v5922, %v6082
      %v6243 = vsel %vm862, %v5923, %v6083
      %v6244 = vsel %vm862, %v5924, %v6084
      %v6245 = vsel %vm862, %v5925, %v6085
      %v6246 = vsel %vm862, %v5926, %v6086
      %v6247 = vsel %vm862, %v5927, %v6087
      %v6248 = vsel %vm862, %v5928, %v6088
      %v6249 = vsel %vm862, %v5929, %v6089
      %v6250 = vsel %vm862, %v5930, %v6090
      %v6251 = vsel %vm862, %v5931, %v6091
      %v6252 = vsel %vm862, %v5932, %v6092
      %v6253 = vsel %vm862, %v5933, %v6093
      %v6254 = vsel %vm862, %v5934, %v6094
      %v6255 = vsel %vm862, %v5935, %v6095
      %v6256 = vsel %vm862, %v5936, %v6096
      %v6257 = vsel %vm862, %v5937, %v6097
      %v6258 = vsel %vm862, %v5938, %v6098
      %v6259 = vsel %vm862, %v5939, %v6099
      %v6260 = vsel %vm862, %v5940, %v6100
      %v6261 = vsel %vm862, %v5941, %v6101
      %v6262 = vsel %vm862, %v5942, %v6102
      %v6263 = vsel %vm862, %v5943, %v6103
      %v6264 = vsel %vm862, %v5944, %v6104
      %v6265 = vsel %vm862, %v5945, %v6105
      %v6266 = vsel %vm862, %v5946, %v6106
      %v6267 = vsel %vm862, %v5947, %v6107
      %v6268 = vsel %vm862, %v5948, %v6108
      %v6269 = vsel %vm862, %v5949, %v6109
      %v6270 = vsel %vm862, %v5950, %v6110
      %v6271 = vsel %vm862, %v5951, %v6111
      %v6272 = vsel %vm862, %v5952, %v6112
      %v6273 = vsel %vm862, %v5953, %v6113
      %v6274 = vsel %vm862, %v5954, %v6114
      %v6275 = vsel %vm862, %v5955, %v6115
      %v6276 = vsel %vm862, %v5956, %v6116
      %v6277 = vsel %vm862, %v5957, %v6117
      %v6278 = vsel %vm862, %v5958, %v6118
      %v6279 = vsel %vm862, %v5959, %v6119
      %v6280 = vsel %vm862, %v5960, %v6120
      %v6281 = vsel %vm862, %v5961, %v6121
      %v6282 = vsel %vm862, %v5962, %v6122
      %v6283 = vsel %vm862, %v5963, %v6123
      %v6284 = vsel %vm862, %v5964, %v6124
      %v6285 = vsel %vm862, %v5965, %v6125
      %v6286 = vsel %vm862, %v5966, %v6126
      %v6287 = vsel %vm862, %v5967, %v6127
      %v6288 = vsel %vm862, %v5968, %v6128
      %v6289 = vsel %vm862, %v5969, %v6129
      %v6290 = vsel %vm862, %v5970, %v6130
      %v6291 = vsel %vm862, %v5971, %v6131
      %v6292 = vsel %vm862, %v5972, %v6132
      %v6293 = vsel %vm862, %v5973, %v6133
      %v6294 = vsel %vm862, %v5974, %v6134
      %v6295 = vsel %vm862, %v5975, %v6135
      %v6296 = vsel %vm862, %v5976, %v6136
      %v6297 = vsel %vm862, %v5977, %v6137
      %v6298 = vsel %vm862, %v5978, %v6138
      %v6299 = vsel %vm862, %v5979, %v6139
      %v6300 = vsel %vm862, %v5980, %v6140
      %v6301 = vsel %vm862, %v5981, %v6141
      %v6302 = vsel %vm862, %v5982, %v6142
      %v6303 = vsel %vm862, %v5983, %v6143
      %v6304 = vsel %vm862, %v5984, %v6144
      %v6305 = vsel %vm862, %v5985, %v6145
      %v6306 = vsel %vm862, %v5986, %v6146
      %v6307 = vsel %vm862, %v5987, %v6147
      %v6308 = vsel %vm862, %v5988, %v6148
      %v6309 = vsel %vm862, %v5989, %v6149
      %v6310 = vsel %vm943, %v5910, %v6070
      %v6311 = vsel %vm943, %v5911, %v6071
      %v6312 = vsel %vm943, %v5912, %v6072
      %v6313 = vsel %vm943, %v5913, %v6073
      %v6314 = vsel %vm943, %v5914, %v6074
      %v6315 = vsel %vm943, %v5915, %v6075
      %v6316 = vsel %vm943, %v5916, %v6076
      %v6317 = vsel %vm943, %v5917, %v6077
      %v6318 = vsel %vm943, %v5918, %v6078
      %v6319 = vsel %vm943, %v5919, %v6079
      %v6320 = vsel %vm943, %v5920, %v6080
      %v6321 = vsel %vm943, %v5921, %v6081
      %v6322 = vsel %vm943, %v5922, %v6082
      %v6323 = vsel %vm943, %v5923, %v6083
      %v6324 = vsel %vm943, %v5924, %v6084
      %v6325 = vsel %vm943, %v5925, %v6085
      %v6326 = vsel %vm943, %v5926, %v6086
      %v6327 = vsel %vm943, %v5927, %v6087
      %v6328 = vsel %vm943, %v5928, %v6088
      %v6329 = vsel %vm943, %v5929, %v6089
      %v6330 = vsel %vm943, %v5930, %v6090
      %v6331 = vsel %vm943, %v5931, %v6091
      %v6332 = vsel %vm943, %v5932, %v6092
      %v6333 = vsel %vm943, %v5933, %v6093
      %v6334 = vsel %vm943, %v5934, %v6094
      %v6335 = vsel %vm943, %v5935, %v6095
      %v6336 = vsel %vm943, %v5936, %v6096
      %v6337 = vsel %vm943, %v5937, %v6097
      %v6338 = vsel %vm943, %v5938, %v6098
      %v6339 = vsel %vm943, %v5939, %v6099
      %v6340 = vsel %vm943, %v5940, %v6100
      %v6341 = vsel %vm943, %v5941, %v6101
      %v6342 = vsel %vm943, %v5942, %v6102
      %v6343 = vsel %vm943, %v5943, %v6103
      %v6344 = vsel %vm943, %v5944, %v6104
      %v6345 = vsel %vm943, %v5945, %v6105
      %v6346 = vsel %vm943, %v5946, %v6106
      %v6347 = vsel %vm943, %v5947, %v6107
      %v6348 = vsel %vm943, %v5948, %v6108
      %v6349 = vsel %vm943, %v5949, %v6109
      %v6350 = vsel %vm943, %v5950, %v6110
      %v6351 = vsel %vm943, %v5951, %v6111
      %v6352 = vsel %vm943, %v5952, %v6112
      %v6353 = vsel %vm943, %v5953, %v6113
      %v6354 = vsel %vm943, %v5954, %v6114
      %v6355 = vsel %vm943, %v5955, %v6115
      %v6356 = vsel %vm943, %v5956, %v6116
      %v6357 = vsel %vm943, %v5957, %v6117
      %v6358 = vsel %vm943, %v5958, %v6118
      %v6359 = vsel %vm943, %v5959, %v6119
      %v6360 = vsel %vm943, %v5960, %v6120
      %v6361 = vsel %vm943, %v5961, %v6121
      %v6362 = vsel %vm943, %v5962, %v6122
      %v6363 = vsel %vm943, %v5963, %v6123
      %v6364 = vsel %vm943, %v5964, %v6124
      %v6365 = vsel %vm943, %v5965, %v6125
      %v6366 = vsel %vm943, %v5966, %v6126
      %v6367 = vsel %vm943, %v5967, %v6127
      %v6368 = vsel %vm943, %v5968, %v6128
      %v6369 = vsel %vm943, %v5969, %v6129
      %v6370 = vsel %vm943, %v5970, %v6130
      %v6371 = vsel %vm943, %v5971, %v6131
      %v6372 = vsel %vm943, %v5972, %v6132
      %v6373 = vsel %vm943, %v5973, %v6133
      %v6374 = vsel %vm943, %v5974, %v6134
      %v6375 = vsel %vm943, %v5975, %v6135
      %v6376 = vsel %vm943, %v5976, %v6136
      %v6377 = vsel %vm943, %v5977, %v6137
      %v6378 = vsel %vm943, %v5978, %v6138
      %v6379 = vsel %vm943, %v5979, %v6139
      %v6380 = vsel %vm943, %v5980, %v6140
      %v6381 = vsel %vm943, %v5981, %v6141
      %v6382 = vsel %vm943, %v5982, %v6142
      %v6383 = vsel %vm943, %v5983, %v6143
      %v6384 = vsel %vm943, %v5984, %v6144
      %v6385 = vsel %vm943, %v5985, %v6145
      %v6386 = vsel %vm943, %v5986, %v6146
      %v6387 = vsel %vm943, %v5987, %v6147
      %v6388 = vsel %vm943, %v5988, %v6148
      %v6389 = vsel %vm943, %v5989, %v6149
      %v6400 = vrot.slane %v5738, 1
      %v6401 = vrot.slane %v5748, 1
      %v6402 = vrot.slane %v5758, 1
      %v6403 = vrot.slane %v5768, 1
      %v6404 = vrot.slane %v5778, 1
      %v6405 = vrot.slane %v5788, 1
      %v6406 = vrot.slane %v5798, 1
      %v6407 = vrot.slane %v5808, 1
      %v6408 = vrot.slane %v5818, 1
      %v6409 = vrot.slane %v5828, 1
      %v6420 = vrot.slane %v5738, 7
      %v6421 = vrot.slane %v5748, 7
      %v6422 = vrot.slane %v5758, 7
      %v6423 = vrot.slane %v5768, 7
      %v6424 = vrot.slane %v5778, 7
      %v6425 = vrot.slane %v5788, 7
      %v6426 = vrot.slane %v5798, 7
      %v6427 = vrot.slane %v5808, 7
      %v6428 = vrot.slane %v5818, 7
      %v6429 = vrot.slane %v5828, 7
      %v6440 = vsel %vm862, %v6400, %v6420
      %v6441 = vsel %vm862, %v6401, %v6421
      %v6442 = vsel %vm862, %v6402, %v6422
      %v6443 = vsel %vm862, %v6403, %v6423
      %v6444 = vsel %vm862, %v6404, %v6424
      %v6445 = vsel %vm862, %v6405, %v6425
      %v6446 = vsel %vm862, %v6406, %v6426
      %v6447 = vsel %vm862, %v6407, %v6427
      %v6448 = vsel %vm862, %v6408, %v6428
      %v6449 = vsel %vm862, %v6409, %v6429
      %v6450 = vsel %vm943, %v6400, %v6420
      %v6451 = vsel %vm943, %v6401, %v6421
      %v6452 = vsel %vm943, %v6402, %v6422
      %v6453 = vsel %vm943, %v6403, %v6423
      %v6454 = vsel %vm943, %v6404, %v6424
      %v6455 = vsel %vm943, %v6405, %v6425
      %v6456 = vsel %vm943, %v6406, %v6426
      %v6457 = vsel %vm943, %v6407, %v6427
      %v6458 = vsel %vm943, %v6408, %v6428
      %v6459 = vsel %vm943, %v6409, %v6429
      %v6470 = vrot.slane %v5739, 1
      %v6471 = vrot.slane %v5749, 1
      %v6472 = vrot.slane %v5759, 1
      %v6473 = vrot.slane %v5769, 1
      %v6474 = vrot.slane %v5779, 1
      %v6475 = vrot.slane %v5789, 1
      %v6476 = vrot.slane %v5799, 1
      %v6477 = vrot.slane %v5809, 1
      %v6478 = vrot.slane %v5819, 1
      %v6479 = vrot.slane %v5829, 1
      %v6490 = vrot.slane %v5739, 7
      %v6491 = vrot.slane %v5749, 7
      %v6492 = vrot.slane %v5759, 7
      %v6493 = vrot.slane %v5769, 7
      %v6494 = vrot.slane %v5779, 7
      %v6495 = vrot.slane %v5789, 7
      %v6496 = vrot.slane %v5799, 7
      %v6497 = vrot.slane %v5809, 7
      %v6498 = vrot.slane %v5819, 7
      %v6499 = vrot.slane %v5829, 7
      %v6510 = vsel %vm862, %v6470, %v6490
      %v6511 = vsel %vm862, %v6471, %v6491
      %v6512 = vsel %vm862, %v6472, %v6492
      %v6513 = vsel %vm862, %v6473, %v6493
      %v6514 = vsel %vm862, %v6474, %v6494
      %v6515 = vsel %vm862, %v6475, %v6495
      %v6516 = vsel %vm862, %v6476, %v6496
      %v6517 = vsel %vm862, %v6477, %v6497
      %v6518 = vsel %vm862, %v6478, %v6498
      %v6519 = vsel %vm862, %v6479, %v6499
      %v6520 = vsel %vm943, %v6470, %v6490
      %v6521 = vsel %vm943, %v6471, %v6491
      %v6522 = vsel %vm943, %v6472, %v6492
      %v6523 = vsel %vm943, %v6473, %v6493
      %v6524 = vsel %vm943, %v6474, %v6494
      %v6525 = vsel %vm943, %v6475, %v6495
      %v6526 = vsel %vm943, %v6476, %v6496
      %v6527 = vsel %vm943, %v6477, %v6497
      %v6528 = vsel %vm943, %v6478, %v6498
      %v6529 = vsel %vm943, %v6479, %v6499
      %6530 = vrot.lane.b32.xlu0 %v5730, 4
      %v6531 = vpop.permute.xlu0 %6530
      %6532 = vrot.lane.b32.xlu0 %v5731, 4
      %v6533 = vpop.permute.xlu0 %6532
      %6534 = vrot.lane.b32.xlu0 %v5732, 4
      %v6535 = vpop.permute.xlu0 %6534
      %6536 = vrot.lane.b32.xlu0 %v5733, 4
      %v6537 = vpop.permute.xlu0 %6536
      %6538 = vrot.lane.b32.xlu0 %v5734, 4
      %v6539 = vpop.permute.xlu0 %6538
      %6540 = vrot.lane.b32.xlu0 %v5735, 4
      %v6541 = vpop.permute.xlu0 %6540
      %6542 = vrot.lane.b32.xlu0 %v5736, 4
      %v6543 = vpop.permute.xlu0 %6542
      %6544 = vrot.lane.b32.xlu0 %v5737, 4
      %v6545 = vpop.permute.xlu0 %6544
      %6546 = vrot.lane.b32.xlu0 %v5740, 4
      %v6547 = vpop.permute.xlu0 %6546
      %6548 = vrot.lane.b32.xlu0 %v5741, 4
      %v6549 = vpop.permute.xlu0 %6548
      %6550 = vrot.lane.b32.xlu0 %v5742, 4
      %v6551 = vpop.permute.xlu0 %6550
      %6552 = vrot.lane.b32.xlu0 %v5743, 4
      %v6553 = vpop.permute.xlu0 %6552
      %6554 = vrot.lane.b32.xlu0 %v5744, 4
      %v6555 = vpop.permute.xlu0 %6554
      %6556 = vrot.lane.b32.xlu0 %v5745, 4
      %v6557 = vpop.permute.xlu0 %6556
      %6558 = vrot.lane.b32.xlu0 %v5746, 4
      %v6559 = vpop.permute.xlu0 %6558
      %6560 = vrot.lane.b32.xlu0 %v5747, 4
      %v6561 = vpop.permute.xlu0 %6560
      %6562 = vrot.lane.b32.xlu0 %v5750, 4
      %v6563 = vpop.permute.xlu0 %6562
      %6564 = vrot.lane.b32.xlu0 %v5751, 4
      %v6565 = vpop.permute.xlu0 %6564
      %6566 = vrot.lane.b32.xlu0 %v5752, 4
      %v6567 = vpop.permute.xlu0 %6566
      %6568 = vrot.lane.b32.xlu0 %v5753, 4
      %v6569 = vpop.permute.xlu0 %6568
      %6570 = vrot.lane.b32.xlu0 %v5754, 4
      %v6571 = vpop.permute.xlu0 %6570
      %6572 = vrot.lane.b32.xlu0 %v5755, 4
      %v6573 = vpop.permute.xlu0 %6572
      %6574 = vrot.lane.b32.xlu0 %v5756, 4
      %v6575 = vpop.permute.xlu0 %6574
      %6576 = vrot.lane.b32.xlu0 %v5757, 4
      %v6577 = vpop.permute.xlu0 %6576
      %6578 = vrot.lane.b32.xlu0 %v5760, 4
      %v6579 = vpop.permute.xlu0 %6578
      %6580 = vrot.lane.b32.xlu0 %v5761, 4
      %v6581 = vpop.permute.xlu0 %6580
      %6582 = vrot.lane.b32.xlu0 %v5762, 4
      %v6583 = vpop.permute.xlu0 %6582
      %6584 = vrot.lane.b32.xlu0 %v5763, 4
      %v6585 = vpop.permute.xlu0 %6584
      %6586 = vrot.lane.b32.xlu0 %v5764, 4
      %v6587 = vpop.permute.xlu0 %6586
      %6588 = vrot.lane.b32.xlu0 %v5765, 4
      %v6589 = vpop.permute.xlu0 %6588
      %6590 = vrot.lane.b32.xlu0 %v5766, 4
      %v6591 = vpop.permute.xlu0 %6590
      %6592 = vrot.lane.b32.xlu0 %v5767, 4
      %v6593 = vpop.permute.xlu0 %6592
      %6594 = vrot.lane.b32.xlu0 %v5770, 4
      %v6595 = vpop.permute.xlu0 %6594
      %6596 = vrot.lane.b32.xlu0 %v5771, 4
      %v6597 = vpop.permute.xlu0 %6596
      %6598 = vrot.lane.b32.xlu0 %v5772, 4
      %v6599 = vpop.permute.xlu0 %6598
      %6600 = vrot.lane.b32.xlu0 %v5773, 4
      %v6601 = vpop.permute.xlu0 %6600
      %6602 = vrot.lane.b32.xlu0 %v5774, 4
      %v6603 = vpop.permute.xlu0 %6602
      %6604 = vrot.lane.b32.xlu0 %v5775, 4
      %v6605 = vpop.permute.xlu0 %6604
      %6606 = vrot.lane.b32.xlu0 %v5776, 4
      %v6607 = vpop.permute.xlu0 %6606
      %6608 = vrot.lane.b32.xlu0 %v5777, 4
      %v6609 = vpop.permute.xlu0 %6608
      %6610 = vrot.lane.b32.xlu0 %v5780, 4
      %v6611 = vpop.permute.xlu0 %6610
      %6612 = vrot.lane.b32.xlu0 %v5781, 4
      %v6613 = vpop.permute.xlu0 %6612
      %6614 = vrot.lane.b32.xlu0 %v5782, 4
      %v6615 = vpop.permute.xlu0 %6614
      %6616 = vrot.lane.b32.xlu0 %v5783, 4
      %v6617 = vpop.permute.xlu0 %6616
      %6618 = vrot.lane.b32.xlu0 %v5784, 4
      %v6619 = vpop.permute.xlu0 %6618
      %6620 = vrot.lane.b32.xlu0 %v5785, 4
      %v6621 = vpop.permute.xlu0 %6620
      %6622 = vrot.lane.b32.xlu0 %v5786, 4
      %v6623 = vpop.permute.xlu0 %6622
      %6624 = vrot.lane.b32.xlu0 %v5787, 4
      %v6625 = vpop.permute.xlu0 %6624
      %6626 = vrot.lane.b32.xlu0 %v5790, 4
      %v6627 = vpop.permute.xlu0 %6626
      %6628 = vrot.lane.b32.xlu0 %v5791, 4
      %v6629 = vpop.permute.xlu0 %6628
      %6630 = vrot.lane.b32.xlu0 %v5792, 4
      %v6631 = vpop.permute.xlu0 %6630
      %6632 = vrot.lane.b32.xlu0 %v5793, 4
      %v6633 = vpop.permute.xlu0 %6632
      %6634 = vrot.lane.b32.xlu0 %v5794, 4
      %v6635 = vpop.permute.xlu0 %6634
      %6636 = vrot.lane.b32.xlu0 %v5795, 4
      %v6637 = vpop.permute.xlu0 %6636
      %6638 = vrot.lane.b32.xlu0 %v5796, 4
      %v6639 = vpop.permute.xlu0 %6638
      %6640 = vrot.lane.b32.xlu0 %v5797, 4
      %v6641 = vpop.permute.xlu0 %6640
      %6642 = vrot.lane.b32.xlu0 %v5800, 4
      %v6643 = vpop.permute.xlu0 %6642
      %6644 = vrot.lane.b32.xlu0 %v5801, 4
      %v6645 = vpop.permute.xlu0 %6644
      %6646 = vrot.lane.b32.xlu0 %v5802, 4
      %v6647 = vpop.permute.xlu0 %6646
      %6648 = vrot.lane.b32.xlu0 %v5803, 4
      %v6649 = vpop.permute.xlu0 %6648
      %6650 = vrot.lane.b32.xlu0 %v5804, 4
      %v6651 = vpop.permute.xlu0 %6650
      %6652 = vrot.lane.b32.xlu0 %v5805, 4
      %v6653 = vpop.permute.xlu0 %6652
      %6654 = vrot.lane.b32.xlu0 %v5806, 4
      %v6655 = vpop.permute.xlu0 %6654
      %6656 = vrot.lane.b32.xlu0 %v5807, 4
      %v6657 = vpop.permute.xlu0 %6656
      %6658 = vrot.lane.b32.xlu0 %v5810, 4
      %v6659 = vpop.permute.xlu0 %6658
      %6660 = vrot.lane.b32.xlu0 %v5811, 4
      %v6661 = vpop.permute.xlu0 %6660
      %6662 = vrot.lane.b32.xlu0 %v5812, 4
      %v6663 = vpop.permute.xlu0 %6662
      %6664 = vrot.lane.b32.xlu0 %v5813, 4
      %v6665 = vpop.permute.xlu0 %6664
      %6666 = vrot.lane.b32.xlu0 %v5814, 4
      %v6667 = vpop.permute.xlu0 %6666
      %6668 = vrot.lane.b32.xlu0 %v5815, 4
      %v6669 = vpop.permute.xlu0 %6668
      %6670 = vrot.lane.b32.xlu0 %v5816, 4
      %v6671 = vpop.permute.xlu0 %6670
      %6672 = vrot.lane.b32.xlu0 %v5817, 4
      %v6673 = vpop.permute.xlu0 %6672
      %6674 = vrot.lane.b32.xlu0 %v5820, 4
      %v6675 = vpop.permute.xlu0 %6674
      %6676 = vrot.lane.b32.xlu0 %v5821, 4
      %v6677 = vpop.permute.xlu0 %6676
      %6678 = vrot.lane.b32.xlu0 %v5822, 4
      %v6679 = vpop.permute.xlu0 %6678
      %6680 = vrot.lane.b32.xlu0 %v5823, 4
      %v6681 = vpop.permute.xlu0 %6680
      %6682 = vrot.lane.b32.xlu0 %v5824, 4
      %v6683 = vpop.permute.xlu0 %6682
      %6684 = vrot.lane.b32.xlu0 %v5825, 4
      %v6685 = vpop.permute.xlu0 %6684
      %6686 = vrot.lane.b32.xlu0 %v5826, 4
      %v6687 = vpop.permute.xlu0 %6686
      %6688 = vrot.lane.b32.xlu0 %v5827, 4
      %v6689 = vpop.permute.xlu0 %6688
      %6850 = vrot.lane.b32.xlu0 %v6310, 8
      %v6851 = vpop.permute.xlu0 %6850
      %6852 = vrot.lane.b32.xlu0 %v6311, 8
      %v6853 = vpop.permute.xlu0 %6852
      %6854 = vrot.lane.b32.xlu0 %v6312, 8
      %v6855 = vpop.permute.xlu0 %6854
      %6856 = vrot.lane.b32.xlu0 %v6313, 8
      %v6857 = vpop.permute.xlu0 %6856
      %6858 = vrot.lane.b32.xlu0 %v6314, 8
      %v6859 = vpop.permute.xlu0 %6858
      %6860 = vrot.lane.b32.xlu0 %v6315, 8
      %v6861 = vpop.permute.xlu0 %6860
      %6862 = vrot.lane.b32.xlu0 %v6316, 8
      %v6863 = vpop.permute.xlu0 %6862
      %6864 = vrot.lane.b32.xlu0 %v6317, 8
      %v6865 = vpop.permute.xlu0 %6864
      %6866 = vrot.lane.b32.xlu0 %v6318, 8
      %v6867 = vpop.permute.xlu0 %6866
      %6868 = vrot.lane.b32.xlu0 %v6319, 8
      %v6869 = vpop.permute.xlu0 %6868
      %6870 = vrot.lane.b32.xlu0 %v6320, 8
      %v6871 = vpop.permute.xlu0 %6870
      %6872 = vrot.lane.b32.xlu0 %v6321, 8
      %v6873 = vpop.permute.xlu0 %6872
      %6874 = vrot.lane.b32.xlu0 %v6322, 8
      %v6875 = vpop.permute.xlu0 %6874
      %6876 = vrot.lane.b32.xlu0 %v6323, 8
      %v6877 = vpop.permute.xlu0 %6876
      %6878 = vrot.lane.b32.xlu0 %v6324, 8
      %v6879 = vpop.permute.xlu0 %6878
      %6880 = vrot.lane.b32.xlu0 %v6325, 8
      %v6881 = vpop.permute.xlu0 %6880
      %6882 = vrot.lane.b32.xlu0 %v6326, 8
      %v6883 = vpop.permute.xlu0 %6882
      %6884 = vrot.lane.b32.xlu0 %v6327, 8
      %v6885 = vpop.permute.xlu0 %6884
      %6886 = vrot.lane.b32.xlu0 %v6328, 8
      %v6887 = vpop.permute.xlu0 %6886
      %6888 = vrot.lane.b32.xlu0 %v6329, 8
      %v6889 = vpop.permute.xlu0 %6888
      %6890 = vrot.lane.b32.xlu0 %v6330, 8
      %v6891 = vpop.permute.xlu0 %6890
      %6892 = vrot.lane.b32.xlu0 %v6331, 8
      %v6893 = vpop.permute.xlu0 %6892
      %6894 = vrot.lane.b32.xlu0 %v6332, 8
      %v6895 = vpop.permute.xlu0 %6894
      %6896 = vrot.lane.b32.xlu0 %v6333, 8
      %v6897 = vpop.permute.xlu0 %6896
      %6898 = vrot.lane.b32.xlu0 %v6334, 8
      %v6899 = vpop.permute.xlu0 %6898
      %6900 = vrot.lane.b32.xlu0 %v6335, 8
      %v6901 = vpop.permute.xlu0 %6900
      %6902 = vrot.lane.b32.xlu0 %v6336, 8
      %v6903 = vpop.permute.xlu0 %6902
      %6904 = vrot.lane.b32.xlu0 %v6337, 8
      %v6905 = vpop.permute.xlu0 %6904
      %6906 = vrot.lane.b32.xlu0 %v6338, 8
      %v6907 = vpop.permute.xlu0 %6906
      %6908 = vrot.lane.b32.xlu0 %v6339, 8
      %v6909 = vpop.permute.xlu0 %6908
      %6910 = vrot.lane.b32.xlu0 %v6340, 8
      %v6911 = vpop.permute.xlu0 %6910
      %6912 = vrot.lane.b32.xlu0 %v6341, 8
      %v6913 = vpop.permute.xlu0 %6912
      %6914 = vrot.lane.b32.xlu0 %v6342, 8
      %v6915 = vpop.permute.xlu0 %6914
      %6916 = vrot.lane.b32.xlu0 %v6343, 8
      %v6917 = vpop.permute.xlu0 %6916
      %6918 = vrot.lane.b32.xlu0 %v6344, 8
      %v6919 = vpop.permute.xlu0 %6918
      %6920 = vrot.lane.b32.xlu0 %v6345, 8
      %v6921 = vpop.permute.xlu0 %6920
      %6922 = vrot.lane.b32.xlu0 %v6346, 8
      %v6923 = vpop.permute.xlu0 %6922
      %6924 = vrot.lane.b32.xlu0 %v6347, 8
      %v6925 = vpop.permute.xlu0 %6924
      %6926 = vrot.lane.b32.xlu0 %v6348, 8
      %v6927 = vpop.permute.xlu0 %6926
      %6928 = vrot.lane.b32.xlu0 %v6349, 8
      %v6929 = vpop.permute.xlu0 %6928
      %6930 = vrot.lane.b32.xlu0 %v6350, 8
      %v6931 = vpop.permute.xlu0 %6930
      %6932 = vrot.lane.b32.xlu0 %v6351, 8
      %v6933 = vpop.permute.xlu0 %6932
      %6934 = vrot.lane.b32.xlu0 %v6352, 8
      %v6935 = vpop.permute.xlu0 %6934
      %6936 = vrot.lane.b32.xlu0 %v6353, 8
      %v6937 = vpop.permute.xlu0 %6936
      %6938 = vrot.lane.b32.xlu0 %v6354, 8
      %v6939 = vpop.permute.xlu0 %6938
      %6940 = vrot.lane.b32.xlu0 %v6355, 8
      %v6941 = vpop.permute.xlu0 %6940
      %6942 = vrot.lane.b32.xlu0 %v6356, 8
      %v6943 = vpop.permute.xlu0 %6942
      %6944 = vrot.lane.b32.xlu0 %v6357, 8
      %v6945 = vpop.permute.xlu0 %6944
      %6946 = vrot.lane.b32.xlu0 %v6358, 8
      %v6947 = vpop.permute.xlu0 %6946
      %6948 = vrot.lane.b32.xlu0 %v6359, 8
      %v6949 = vpop.permute.xlu0 %6948
      %6950 = vrot.lane.b32.xlu0 %v6360, 8
      %v6951 = vpop.permute.xlu0 %6950
      %6952 = vrot.lane.b32.xlu0 %v6361, 8
      %v6953 = vpop.permute.xlu0 %6952
      %6954 = vrot.lane.b32.xlu0 %v6362, 8
      %v6955 = vpop.permute.xlu0 %6954
      %6956 = vrot.lane.b32.xlu0 %v6363, 8
      %v6957 = vpop.permute.xlu0 %6956
      %6958 = vrot.lane.b32.xlu0 %v6364, 8
      %v6959 = vpop.permute.xlu0 %6958
      %6960 = vrot.lane.b32.xlu0 %v6365, 8
      %v6961 = vpop.permute.xlu0 %6960
      %6962 = vrot.lane.b32.xlu0 %v6366, 8
      %v6963 = vpop.permute.xlu0 %6962
      %6964 = vrot.lane.b32.xlu0 %v6367, 8
      %v6965 = vpop.permute.xlu0 %6964
      %6966 = vrot.lane.b32.xlu0 %v6368, 8
      %v6967 = vpop.permute.xlu0 %6966
      %6968 = vrot.lane.b32.xlu0 %v6369, 8
      %v6969 = vpop.permute.xlu0 %6968
      %6970 = vrot.lane.b32.xlu0 %v6370, 8
      %v6971 = vpop.permute.xlu0 %6970
      %6972 = vrot.lane.b32.xlu0 %v6371, 8
      %v6973 = vpop.permute.xlu0 %6972
      %6974 = vrot.lane.b32.xlu0 %v6372, 8
      %v6975 = vpop.permute.xlu0 %6974
      %6976 = vrot.lane.b32.xlu0 %v6373, 8
      %v6977 = vpop.permute.xlu0 %6976
      %6978 = vrot.lane.b32.xlu0 %v6374, 8
      %v6979 = vpop.permute.xlu0 %6978
      %6980 = vrot.lane.b32.xlu0 %v6375, 8
      %v6981 = vpop.permute.xlu0 %6980
      %6982 = vrot.lane.b32.xlu0 %v6376, 8
      %v6983 = vpop.permute.xlu0 %6982
      %6984 = vrot.lane.b32.xlu0 %v6377, 8
      %v6985 = vpop.permute.xlu0 %6984
      %6986 = vrot.lane.b32.xlu0 %v6378, 8
      %v6987 = vpop.permute.xlu0 %6986
      %6988 = vrot.lane.b32.xlu0 %v6379, 8
      %v6989 = vpop.permute.xlu0 %6988
      %6990 = vrot.lane.b32.xlu0 %v6380, 8
      %v6991 = vpop.permute.xlu0 %6990
      %6992 = vrot.lane.b32.xlu0 %v6381, 8
      %v6993 = vpop.permute.xlu0 %6992
      %6994 = vrot.lane.b32.xlu0 %v6382, 8
      %v6995 = vpop.permute.xlu0 %6994
      %6996 = vrot.lane.b32.xlu0 %v6383, 8
      %v6997 = vpop.permute.xlu0 %6996
      %6998 = vrot.lane.b32.xlu0 %v6384, 8
      %v6999 = vpop.permute.xlu0 %6998
      %7000 = vrot.lane.b32.xlu0 %v6385, 8
      %v7001 = vpop.permute.xlu0 %7000
      %7002 = vrot.lane.b32.xlu0 %v6386, 8
      %v7003 = vpop.permute.xlu0 %7002
      %7004 = vrot.lane.b32.xlu0 %v6387, 8
      %v7005 = vpop.permute.xlu0 %7004
      %7006 = vrot.lane.b32.xlu0 %v6388, 8
      %v7007 = vpop.permute.xlu0 %7006
      %7008 = vrot.lane.b32.xlu0 %v6389, 8
      %v7009 = vpop.permute.xlu0 %7008
      %7170 = vrot.lane.b32.xlu0 %v6231, 12
      %v7171 = vpop.permute.xlu0 %7170
      %7172 = vrot.lane.b32.xlu0 %v6232, 12
      %v7173 = vpop.permute.xlu0 %7172
      %7174 = vrot.lane.b32.xlu0 %v6233, 12
      %v7175 = vpop.permute.xlu0 %7174
      %7176 = vrot.lane.b32.xlu0 %v6234, 12
      %v7177 = vpop.permute.xlu0 %7176
      %7178 = vrot.lane.b32.xlu0 %v6235, 12
      %v7179 = vpop.permute.xlu0 %7178
      %7180 = vrot.lane.b32.xlu0 %v6236, 12
      %v7181 = vpop.permute.xlu0 %7180
      %7182 = vrot.lane.b32.xlu0 %v6237, 12
      %v7183 = vpop.permute.xlu0 %7182
      %7184 = vrot.lane.b32.xlu0 %v6440, 12
      %v7185 = vpop.permute.xlu0 %7184
      %7186 = vrot.lane.b32.xlu0 %v6239, 12
      %v7187 = vpop.permute.xlu0 %7186
      %7188 = vrot.lane.b32.xlu0 %v6240, 12
      %v7189 = vpop.permute.xlu0 %7188
      %7190 = vrot.lane.b32.xlu0 %v6241, 12
      %v7191 = vpop.permute.xlu0 %7190
      %7192 = vrot.lane.b32.xlu0 %v6242, 12
      %v7193 = vpop.permute.xlu0 %7192
      %7194 = vrot.lane.b32.xlu0 %v6243, 12
      %v7195 = vpop.permute.xlu0 %7194
      %7196 = vrot.lane.b32.xlu0 %v6244, 12
      %v7197 = vpop.permute.xlu0 %7196
      %7198 = vrot.lane.b32.xlu0 %v6245, 12
      %v7199 = vpop.permute.xlu0 %7198
      %7200 = vrot.lane.b32.xlu0 %v6441, 12
      %v7201 = vpop.permute.xlu0 %7200
      %7202 = vrot.lane.b32.xlu0 %v6247, 12
      %v7203 = vpop.permute.xlu0 %7202
      %7204 = vrot.lane.b32.xlu0 %v6248, 12
      %v7205 = vpop.permute.xlu0 %7204
      %7206 = vrot.lane.b32.xlu0 %v6249, 12
      %v7207 = vpop.permute.xlu0 %7206
      %7208 = vrot.lane.b32.xlu0 %v6250, 12
      %v7209 = vpop.permute.xlu0 %7208
      %7210 = vrot.lane.b32.xlu0 %v6251, 12
      %v7211 = vpop.permute.xlu0 %7210
      %7212 = vrot.lane.b32.xlu0 %v6252, 12
      %v7213 = vpop.permute.xlu0 %7212
      %7214 = vrot.lane.b32.xlu0 %v6253, 12
      %v7215 = vpop.permute.xlu0 %7214
      %7216 = vrot.lane.b32.xlu0 %v6442, 12
      %v7217 = vpop.permute.xlu0 %7216
      %7218 = vrot.lane.b32.xlu0 %v6255, 12
      %v7219 = vpop.permute.xlu0 %7218
      %7220 = vrot.lane.b32.xlu0 %v6256, 12
      %v7221 = vpop.permute.xlu0 %7220
      %7222 = vrot.lane.b32.xlu0 %v6257, 12
      %v7223 = vpop.permute.xlu0 %7222
      %7224 = vrot.lane.b32.xlu0 %v6258, 12
      %v7225 = vpop.permute.xlu0 %7224
      %7226 = vrot.lane.b32.xlu0 %v6259, 12
      %v7227 = vpop.permute.xlu0 %7226
      %7228 = vrot.lane.b32.xlu0 %v6260, 12
      %v7229 = vpop.permute.xlu0 %7228
      %7230 = vrot.lane.b32.xlu0 %v6261, 12
      %v7231 = vpop.permute.xlu0 %7230
      %7232 = vrot.lane.b32.xlu0 %v6443, 12
      %v7233 = vpop.permute.xlu0 %7232
      %7234 = vrot.lane.b32.xlu0 %v6263, 12
      %v7235 = vpop.permute.xlu0 %7234
      %7236 = vrot.lane.b32.xlu0 %v6264, 12
      %v7237 = vpop.permute.xlu0 %7236
      %7238 = vrot.lane.b32.xlu0 %v6265, 12
      %v7239 = vpop.permute.xlu0 %7238
      %7240 = vrot.lane.b32.xlu0 %v6266, 12
      %v7241 = vpop.permute.xlu0 %7240
      %7242 = vrot.lane.b32.xlu0 %v6267, 12
      %v7243 = vpop.permute.xlu0 %7242
      %7244 = vrot.lane.b32.xlu0 %v6268, 12
      %v7245 = vpop.permute.xlu0 %7244
      %7246 = vrot.lane.b32.xlu0 %v6269, 12
      %v7247 = vpop.permute.xlu0 %7246
      %7248 = vrot.lane.b32.xlu0 %v6444, 12
      %v7249 = vpop.permute.xlu0 %7248
      %7250 = vrot.lane.b32.xlu0 %v6271, 12
      %v7251 = vpop.permute.xlu0 %7250
      %7252 = vrot.lane.b32.xlu0 %v6272, 12
      %v7253 = vpop.permute.xlu0 %7252
      %7254 = vrot.lane.b32.xlu0 %v6273, 12
      %v7255 = vpop.permute.xlu0 %7254
      %7256 = vrot.lane.b32.xlu0 %v6274, 12
      %v7257 = vpop.permute.xlu0 %7256
      %7258 = vrot.lane.b32.xlu0 %v6275, 12
      %v7259 = vpop.permute.xlu0 %7258
      %7260 = vrot.lane.b32.xlu0 %v6276, 12
      %v7261 = vpop.permute.xlu0 %7260
      %7262 = vrot.lane.b32.xlu0 %v6277, 12
      %v7263 = vpop.permute.xlu0 %7262
      %7264 = vrot.lane.b32.xlu0 %v6445, 12
      %v7265 = vpop.permute.xlu0 %7264
      %7266 = vrot.lane.b32.xlu0 %v6279, 12
      %v7267 = vpop.permute.xlu0 %7266
      %7268 = vrot.lane.b32.xlu0 %v6280, 12
      %v7269 = vpop.permute.xlu0 %7268
      %7270 = vrot.lane.b32.xlu0 %v6281, 12
      %v7271 = vpop.permute.xlu0 %7270
      %7272 = vrot.lane.b32.xlu0 %v6282, 12
      %v7273 = vpop.permute.xlu0 %7272
      %7274 = vrot.lane.b32.xlu0 %v6283, 12
      %v7275 = vpop.permute.xlu0 %7274
      %7276 = vrot.lane.b32.xlu0 %v6284, 12
      %v7277 = vpop.permute.xlu0 %7276
      %7278 = vrot.lane.b32.xlu0 %v6285, 12
      %v7279 = vpop.permute.xlu0 %7278
      %7280 = vrot.lane.b32.xlu0 %v6446, 12
      %v7281 = vpop.permute.xlu0 %7280
      %7282 = vrot.lane.b32.xlu0 %v6287, 12
      %v7283 = vpop.permute.xlu0 %7282
      %7284 = vrot.lane.b32.xlu0 %v6288, 12
      %v7285 = vpop.permute.xlu0 %7284
      %7286 = vrot.lane.b32.xlu0 %v6289, 12
      %v7287 = vpop.permute.xlu0 %7286
      %7288 = vrot.lane.b32.xlu0 %v6290, 12
      %v7289 = vpop.permute.xlu0 %7288
      %7290 = vrot.lane.b32.xlu0 %v6291, 12
      %v7291 = vpop.permute.xlu0 %7290
      %7292 = vrot.lane.b32.xlu0 %v6292, 12
      %v7293 = vpop.permute.xlu0 %7292
      %7294 = vrot.lane.b32.xlu0 %v6293, 12
      %v7295 = vpop.permute.xlu0 %7294
      %7296 = vrot.lane.b32.xlu0 %v6447, 12
      %v7297 = vpop.permute.xlu0 %7296
      %7298 = vrot.lane.b32.xlu0 %v6295, 12
      %v7299 = vpop.permute.xlu0 %7298
      %7300 = vrot.lane.b32.xlu0 %v6296, 12
      %v7301 = vpop.permute.xlu0 %7300
      %7302 = vrot.lane.b32.xlu0 %v6297, 12
      %v7303 = vpop.permute.xlu0 %7302
      %7304 = vrot.lane.b32.xlu0 %v6298, 12
      %v7305 = vpop.permute.xlu0 %7304
      %7306 = vrot.lane.b32.xlu0 %v6299, 12
      %v7307 = vpop.permute.xlu0 %7306
      %7308 = vrot.lane.b32.xlu0 %v6300, 12
      %v7309 = vpop.permute.xlu0 %7308
      %7310 = vrot.lane.b32.xlu0 %v6301, 12
      %v7311 = vpop.permute.xlu0 %7310
      %7312 = vrot.lane.b32.xlu0 %v6448, 12
      %v7313 = vpop.permute.xlu0 %7312
      %7314 = vrot.lane.b32.xlu0 %v6303, 12
      %v7315 = vpop.permute.xlu0 %7314
      %7316 = vrot.lane.b32.xlu0 %v6304, 12
      %v7317 = vpop.permute.xlu0 %7316
      %7318 = vrot.lane.b32.xlu0 %v6305, 12
      %v7319 = vpop.permute.xlu0 %7318
      %7320 = vrot.lane.b32.xlu0 %v6306, 12
      %v7321 = vpop.permute.xlu0 %7320
      %7322 = vrot.lane.b32.xlu0 %v6307, 12
      %v7323 = vpop.permute.xlu0 %7322
      %7324 = vrot.lane.b32.xlu0 %v6308, 12
      %v7325 = vpop.permute.xlu0 %7324
      %7326 = vrot.lane.b32.xlu0 %v6309, 12
      %v7327 = vpop.permute.xlu0 %7326
      %7328 = vrot.lane.b32.xlu0 %v6449, 12
      %v7329 = vpop.permute.xlu0 %7328
      %7410 = vrot.lane.b32.xlu0 %v5731, 16
      %v7411 = vpop.permute.xlu0 %7410
      %7412 = vrot.lane.b32.xlu0 %v5732, 16
      %v7413 = vpop.permute.xlu0 %7412
      %7414 = vrot.lane.b32.xlu0 %v5733, 16
      %v7415 = vpop.permute.xlu0 %7414
      %7416 = vrot.lane.b32.xlu0 %v5734, 16
      %v7417 = vpop.permute.xlu0 %7416
      %7418 = vrot.lane.b32.xlu0 %v5735, 16
      %v7419 = vpop.permute.xlu0 %7418
      %7420 = vrot.lane.b32.xlu0 %v5736, 16
      %v7421 = vpop.permute.xlu0 %7420
      %7422 = vrot.lane.b32.xlu0 %v5737, 16
      %v7423 = vpop.permute.xlu0 %7422
      %7424 = vrot.lane.b32.xlu0 %v5738, 16
      %v7425 = vpop.permute.xlu0 %7424
      %7426 = vrot.lane.b32.xlu0 %v5741, 16
      %v7427 = vpop.permute.xlu0 %7426
      %7428 = vrot.lane.b32.xlu0 %v5742, 16
      %v7429 = vpop.permute.xlu0 %7428
      %7430 = vrot.lane.b32.xlu0 %v5743, 16
      %v7431 = vpop.permute.xlu0 %7430
      %7432 = vrot.lane.b32.xlu0 %v5744, 16
      %v7433 = vpop.permute.xlu0 %7432
      %7434 = vrot.lane.b32.xlu0 %v5745, 16
      %v7435 = vpop.permute.xlu0 %7434
      %7436 = vrot.lane.b32.xlu0 %v5746, 16
      %v7437 = vpop.permute.xlu0 %7436
      %7438 = vrot.lane.b32.xlu0 %v5747, 16
      %v7439 = vpop.permute.xlu0 %7438
      %7440 = vrot.lane.b32.xlu0 %v5748, 16
      %v7441 = vpop.permute.xlu0 %7440
      %7442 = vrot.lane.b32.xlu0 %v5751, 16
      %v7443 = vpop.permute.xlu0 %7442
      %7444 = vrot.lane.b32.xlu0 %v5752, 16
      %v7445 = vpop.permute.xlu0 %7444
      %7446 = vrot.lane.b32.xlu0 %v5753, 16
      %v7447 = vpop.permute.xlu0 %7446
      %7448 = vrot.lane.b32.xlu0 %v5754, 16
      %v7449 = vpop.permute.xlu0 %7448
      %7450 = vrot.lane.b32.xlu0 %v5755, 16
      %v7451 = vpop.permute.xlu0 %7450
      %7452 = vrot.lane.b32.xlu0 %v5756, 16
      %v7453 = vpop.permute.xlu0 %7452
      %7454 = vrot.lane.b32.xlu0 %v5757, 16
      %v7455 = vpop.permute.xlu0 %7454
      %7456 = vrot.lane.b32.xlu0 %v5758, 16
      %v7457 = vpop.permute.xlu0 %7456
      %7458 = vrot.lane.b32.xlu0 %v5761, 16
      %v7459 = vpop.permute.xlu0 %7458
      %7460 = vrot.lane.b32.xlu0 %v5762, 16
      %v7461 = vpop.permute.xlu0 %7460
      %7462 = vrot.lane.b32.xlu0 %v5763, 16
      %v7463 = vpop.permute.xlu0 %7462
      %7464 = vrot.lane.b32.xlu0 %v5764, 16
      %v7465 = vpop.permute.xlu0 %7464
      %7466 = vrot.lane.b32.xlu0 %v5765, 16
      %v7467 = vpop.permute.xlu0 %7466
      %7468 = vrot.lane.b32.xlu0 %v5766, 16
      %v7469 = vpop.permute.xlu0 %7468
      %7470 = vrot.lane.b32.xlu0 %v5767, 16
      %v7471 = vpop.permute.xlu0 %7470
      %7472 = vrot.lane.b32.xlu0 %v5768, 16
      %v7473 = vpop.permute.xlu0 %7472
      %7474 = vrot.lane.b32.xlu0 %v5771, 16
      %v7475 = vpop.permute.xlu0 %7474
      %7476 = vrot.lane.b32.xlu0 %v5772, 16
      %v7477 = vpop.permute.xlu0 %7476
      %7478 = vrot.lane.b32.xlu0 %v5773, 16
      %v7479 = vpop.permute.xlu0 %7478
      %7480 = vrot.lane.b32.xlu0 %v5774, 16
      %v7481 = vpop.permute.xlu0 %7480
      %7482 = vrot.lane.b32.xlu0 %v5775, 16
      %v7483 = vpop.permute.xlu0 %7482
      %7484 = vrot.lane.b32.xlu0 %v5776, 16
      %v7485 = vpop.permute.xlu0 %7484
      %7486 = vrot.lane.b32.xlu0 %v5777, 16
      %v7487 = vpop.permute.xlu0 %7486
      %7488 = vrot.lane.b32.xlu0 %v5778, 16
      %v7489 = vpop.permute.xlu0 %7488
      %7490 = vrot.lane.b32.xlu0 %v5781, 16
      %v7491 = vpop.permute.xlu0 %7490
      %7492 = vrot.lane.b32.xlu0 %v5782, 16
      %v7493 = vpop.permute.xlu0 %7492
      %7494 = vrot.lane.b32.xlu0 %v5783, 16
      %v7495 = vpop.permute.xlu0 %7494
      %7496 = vrot.lane.b32.xlu0 %v5784, 16
      %v7497 = vpop.permute.xlu0 %7496
      %7498 = vrot.lane.b32.xlu0 %v5785, 16
      %v7499 = vpop.permute.xlu0 %7498
      %7500 = vrot.lane.b32.xlu0 %v5786, 16
      %v7501 = vpop.permute.xlu0 %7500
      %7502 = vrot.lane.b32.xlu0 %v5787, 16
      %v7503 = vpop.permute.xlu0 %7502
      %7504 = vrot.lane.b32.xlu0 %v5788, 16
      %v7505 = vpop.permute.xlu0 %7504
      %7506 = vrot.lane.b32.xlu0 %v5791, 16
      %v7507 = vpop.permute.xlu0 %7506
      %7508 = vrot.lane.b32.xlu0 %v5792, 16
      %v7509 = vpop.permute.xlu0 %7508
      %7510 = vrot.lane.b32.xlu0 %v5793, 16
      %v7511 = vpop.permute.xlu0 %7510
      %7512 = vrot.lane.b32.xlu0 %v5794, 16
      %v7513 = vpop.permute.xlu0 %7512
      %7514 = vrot.lane.b32.xlu0 %v5795, 16
      %v7515 = vpop.permute.xlu0 %7514
      %7516 = vrot.lane.b32.xlu0 %v5796, 16
      %v7517 = vpop.permute.xlu0 %7516
      %7518 = vrot.lane.b32.xlu0 %v5797, 16
      %v7519 = vpop.permute.xlu0 %7518
      %7520 = vrot.lane.b32.xlu0 %v5798, 16
      %v7521 = vpop.permute.xlu0 %7520
      %7522 = vrot.lane.b32.xlu0 %v5801, 16
      %v7523 = vpop.permute.xlu0 %7522
      %7524 = vrot.lane.b32.xlu0 %v5802, 16
      %v7525 = vpop.permute.xlu0 %7524
      %7526 = vrot.lane.b32.xlu0 %v5803, 16
      %v7527 = vpop.permute.xlu0 %7526
      %7528 = vrot.lane.b32.xlu0 %v5804, 16
      %v7529 = vpop.permute.xlu0 %7528
      %7530 = vrot.lane.b32.xlu0 %v5805, 16
      %v7531 = vpop.permute.xlu0 %7530
      %7532 = vrot.lane.b32.xlu0 %v5806, 16
      %v7533 = vpop.permute.xlu0 %7532
      %7534 = vrot.lane.b32.xlu0 %v5807, 16
      %v7535 = vpop.permute.xlu0 %7534
      %7536 = vrot.lane.b32.xlu0 %v5808, 16
      %v7537 = vpop.permute.xlu0 %7536
      %7538 = vrot.lane.b32.xlu0 %v5811, 16
      %v7539 = vpop.permute.xlu0 %7538
      %7540 = vrot.lane.b32.xlu0 %v5812, 16
      %v7541 = vpop.permute.xlu0 %7540
      %7542 = vrot.lane.b32.xlu0 %v5813, 16
      %v7543 = vpop.permute.xlu0 %7542
      %7544 = vrot.lane.b32.xlu0 %v5814, 16
      %v7545 = vpop.permute.xlu0 %7544
      %7546 = vrot.lane.b32.xlu0 %v5815, 16
      %v7547 = vpop.permute.xlu0 %7546
      %7548 = vrot.lane.b32.xlu0 %v5816, 16
      %v7549 = vpop.permute.xlu0 %7548
      %7550 = vrot.lane.b32.xlu0 %v5817, 16
      %v7551 = vpop.permute.xlu0 %7550
      %7552 = vrot.lane.b32.xlu0 %v5818, 16
      %v7553 = vpop.permute.xlu0 %7552
      %7554 = vrot.lane.b32.xlu0 %v5821, 16
      %v7555 = vpop.permute.xlu0 %7554
      %7556 = vrot.lane.b32.xlu0 %v5822, 16
      %v7557 = vpop.permute.xlu0 %7556
      %7558 = vrot.lane.b32.xlu0 %v5823, 16
      %v7559 = vpop.permute.xlu0 %7558
      %7560 = vrot.lane.b32.xlu0 %v5824, 16
      %v7561 = vpop.permute.xlu0 %7560
      %7562 = vrot.lane.b32.xlu0 %v5825, 16
      %v7563 = vpop.permute.xlu0 %7562
      %7564 = vrot.lane.b32.xlu0 %v5826, 16
      %v7565 = vpop.permute.xlu0 %7564
      %7566 = vrot.lane.b32.xlu0 %v5827, 16
      %v7567 = vpop.permute.xlu0 %7566
      %7568 = vrot.lane.b32.xlu0 %v5828, 16
      %v7569 = vpop.permute.xlu0 %7568
      %7660 = vrot.lane.b32.xlu0 %v6311, 20
      %v7661 = vpop.permute.xlu0 %7660
      %7662 = vrot.lane.b32.xlu0 %v6312, 20
      %v7663 = vpop.permute.xlu0 %7662
      %7664 = vrot.lane.b32.xlu0 %v6313, 20
      %v7665 = vpop.permute.xlu0 %7664
      %7666 = vrot.lane.b32.xlu0 %v6314, 20
      %v7667 = vpop.permute.xlu0 %7666
      %7668 = vrot.lane.b32.xlu0 %v6315, 20
      %v7669 = vpop.permute.xlu0 %7668
      %7670 = vrot.lane.b32.xlu0 %v6316, 20
      %v7671 = vpop.permute.xlu0 %7670
      %7672 = vrot.lane.b32.xlu0 %v6317, 20
      %v7673 = vpop.permute.xlu0 %7672
      %7674 = vrot.lane.b32.xlu0 %v6450, 20
      %v7675 = vpop.permute.xlu0 %7674
      %7676 = vrot.lane.b32.xlu0 %v6319, 20
      %v7677 = vpop.permute.xlu0 %7676
      %7678 = vrot.lane.b32.xlu0 %v6320, 20
      %v7679 = vpop.permute.xlu0 %7678
      %7680 = vrot.lane.b32.xlu0 %v6321, 20
      %v7681 = vpop.permute.xlu0 %7680
      %7682 = vrot.lane.b32.xlu0 %v6322, 20
      %v7683 = vpop.permute.xlu0 %7682
      %7684 = vrot.lane.b32.xlu0 %v6323, 20
      %v7685 = vpop.permute.xlu0 %7684
      %7686 = vrot.lane.b32.xlu0 %v6324, 20
      %v7687 = vpop.permute.xlu0 %7686
      %7688 = vrot.lane.b32.xlu0 %v6325, 20
      %v7689 = vpop.permute.xlu0 %7688
      %7690 = vrot.lane.b32.xlu0 %v6451, 20
      %v7691 = vpop.permute.xlu0 %7690
      %7692 = vrot.lane.b32.xlu0 %v6327, 20
      %v7693 = vpop.permute.xlu0 %7692
      %7694 = vrot.lane.b32.xlu0 %v6328, 20
      %v7695 = vpop.permute.xlu0 %7694
      %7696 = vrot.lane.b32.xlu0 %v6329, 20
      %v7697 = vpop.permute.xlu0 %7696
      %7698 = vrot.lane.b32.xlu0 %v6330, 20
      %v7699 = vpop.permute.xlu0 %7698
      %7700 = vrot.lane.b32.xlu0 %v6331, 20
      %v7701 = vpop.permute.xlu0 %7700
      %7702 = vrot.lane.b32.xlu0 %v6332, 20
      %v7703 = vpop.permute.xlu0 %7702
      %7704 = vrot.lane.b32.xlu0 %v6333, 20
      %v7705 = vpop.permute.xlu0 %7704
      %7706 = vrot.lane.b32.xlu0 %v6452, 20
      %v7707 = vpop.permute.xlu0 %7706
      %7708 = vrot.lane.b32.xlu0 %v6335, 20
      %v7709 = vpop.permute.xlu0 %7708
      %7710 = vrot.lane.b32.xlu0 %v6336, 20
      %v7711 = vpop.permute.xlu0 %7710
      %7712 = vrot.lane.b32.xlu0 %v6337, 20
      %v7713 = vpop.permute.xlu0 %7712
      %7714 = vrot.lane.b32.xlu0 %v6338, 20
      %v7715 = vpop.permute.xlu0 %7714
      %7716 = vrot.lane.b32.xlu0 %v6339, 20
      %v7717 = vpop.permute.xlu0 %7716
      %7718 = vrot.lane.b32.xlu0 %v6340, 20
      %v7719 = vpop.permute.xlu0 %7718
      %7720 = vrot.lane.b32.xlu0 %v6341, 20
      %v7721 = vpop.permute.xlu0 %7720
      %7722 = vrot.lane.b32.xlu0 %v6453, 20
      %v7723 = vpop.permute.xlu0 %7722
      %7724 = vrot.lane.b32.xlu0 %v6343, 20
      %v7725 = vpop.permute.xlu0 %7724
      %7726 = vrot.lane.b32.xlu0 %v6344, 20
      %v7727 = vpop.permute.xlu0 %7726
      %7728 = vrot.lane.b32.xlu0 %v6345, 20
      %v7729 = vpop.permute.xlu0 %7728
      %7730 = vrot.lane.b32.xlu0 %v6346, 20
      %v7731 = vpop.permute.xlu0 %7730
      %7732 = vrot.lane.b32.xlu0 %v6347, 20
      %v7733 = vpop.permute.xlu0 %7732
      %7734 = vrot.lane.b32.xlu0 %v6348, 20
      %v7735 = vpop.permute.xlu0 %7734
      %7736 = vrot.lane.b32.xlu0 %v6349, 20
      %v7737 = vpop.permute.xlu0 %7736
      %7738 = vrot.lane.b32.xlu0 %v6454, 20
      %v7739 = vpop.permute.xlu0 %7738
      %7740 = vrot.lane.b32.xlu0 %v6351, 20
      %v7741 = vpop.permute.xlu0 %7740
      %7742 = vrot.lane.b32.xlu0 %v6352, 20
      %v7743 = vpop.permute.xlu0 %7742
      %7744 = vrot.lane.b32.xlu0 %v6353, 20
      %v7745 = vpop.permute.xlu0 %7744
      %7746 = vrot.lane.b32.xlu0 %v6354, 20
      %v7747 = vpop.permute.xlu0 %7746
      %7748 = vrot.lane.b32.xlu0 %v6355, 20
      %v7749 = vpop.permute.xlu0 %7748
      %7750 = vrot.lane.b32.xlu0 %v6356, 20
      %v7751 = vpop.permute.xlu0 %7750
      %7752 = vrot.lane.b32.xlu0 %v6357, 20
      %v7753 = vpop.permute.xlu0 %7752
      %7754 = vrot.lane.b32.xlu0 %v6455, 20
      %v7755 = vpop.permute.xlu0 %7754
      %7756 = vrot.lane.b32.xlu0 %v6359, 20
      %v7757 = vpop.permute.xlu0 %7756
      %7758 = vrot.lane.b32.xlu0 %v6360, 20
      %v7759 = vpop.permute.xlu0 %7758
      %7760 = vrot.lane.b32.xlu0 %v6361, 20
      %v7761 = vpop.permute.xlu0 %7760
      %7762 = vrot.lane.b32.xlu0 %v6362, 20
      %v7763 = vpop.permute.xlu0 %7762
      %7764 = vrot.lane.b32.xlu0 %v6363, 20
      %v7765 = vpop.permute.xlu0 %7764
      %7766 = vrot.lane.b32.xlu0 %v6364, 20
      %v7767 = vpop.permute.xlu0 %7766
      %7768 = vrot.lane.b32.xlu0 %v6365, 20
      %v7769 = vpop.permute.xlu0 %7768
      %7770 = vrot.lane.b32.xlu0 %v6456, 20
      %v7771 = vpop.permute.xlu0 %7770
      %7772 = vrot.lane.b32.xlu0 %v6367, 20
      %v7773 = vpop.permute.xlu0 %7772
      %7774 = vrot.lane.b32.xlu0 %v6368, 20
      %v7775 = vpop.permute.xlu0 %7774
      %7776 = vrot.lane.b32.xlu0 %v6369, 20
      %v7777 = vpop.permute.xlu0 %7776
      %7778 = vrot.lane.b32.xlu0 %v6370, 20
      %v7779 = vpop.permute.xlu0 %7778
      %7780 = vrot.lane.b32.xlu0 %v6371, 20
      %v7781 = vpop.permute.xlu0 %7780
      %7782 = vrot.lane.b32.xlu0 %v6372, 20
      %v7783 = vpop.permute.xlu0 %7782
      %7784 = vrot.lane.b32.xlu0 %v6373, 20
      %v7785 = vpop.permute.xlu0 %7784
      %7786 = vrot.lane.b32.xlu0 %v6457, 20
      %v7787 = vpop.permute.xlu0 %7786
      %7788 = vrot.lane.b32.xlu0 %v6375, 20
      %v7789 = vpop.permute.xlu0 %7788
      %7790 = vrot.lane.b32.xlu0 %v6376, 20
      %v7791 = vpop.permute.xlu0 %7790
      %7792 = vrot.lane.b32.xlu0 %v6377, 20
      %v7793 = vpop.permute.xlu0 %7792
      %7794 = vrot.lane.b32.xlu0 %v6378, 20
      %v7795 = vpop.permute.xlu0 %7794
      %7796 = vrot.lane.b32.xlu0 %v6379, 20
      %v7797 = vpop.permute.xlu0 %7796
      %7798 = vrot.lane.b32.xlu0 %v6380, 20
      %v7799 = vpop.permute.xlu0 %7798
      %7800 = vrot.lane.b32.xlu0 %v6381, 20
      %v7801 = vpop.permute.xlu0 %7800
      %7802 = vrot.lane.b32.xlu0 %v6458, 20
      %v7803 = vpop.permute.xlu0 %7802
      %7804 = vrot.lane.b32.xlu0 %v6383, 20
      %v7805 = vpop.permute.xlu0 %7804
      %7806 = vrot.lane.b32.xlu0 %v6384, 20
      %v7807 = vpop.permute.xlu0 %7806
      %7808 = vrot.lane.b32.xlu0 %v6385, 20
      %v7809 = vpop.permute.xlu0 %7808
      %7810 = vrot.lane.b32.xlu0 %v6386, 20
      %v7811 = vpop.permute.xlu0 %7810
      %7812 = vrot.lane.b32.xlu0 %v6387, 20
      %v7813 = vpop.permute.xlu0 %7812
      %7814 = vrot.lane.b32.xlu0 %v6388, 20
      %v7815 = vpop.permute.xlu0 %7814
      %7816 = vrot.lane.b32.xlu0 %v6389, 20
      %v7817 = vpop.permute.xlu0 %7816
      %7818 = vrot.lane.b32.xlu0 %v6459, 20
      %v7819 = vpop.permute.xlu0 %7818
      %7910 = vrot.lane.b32.xlu0 %v6232, 24
      %v7911 = vpop.permute.xlu0 %7910
      %7912 = vrot.lane.b32.xlu0 %v6233, 24
      %v7913 = vpop.permute.xlu0 %7912
      %7914 = vrot.lane.b32.xlu0 %v6234, 24
      %v7915 = vpop.permute.xlu0 %7914
      %7916 = vrot.lane.b32.xlu0 %v6235, 24
      %v7917 = vpop.permute.xlu0 %7916
      %7918 = vrot.lane.b32.xlu0 %v6236, 24
      %v7919 = vpop.permute.xlu0 %7918
      %7920 = vrot.lane.b32.xlu0 %v6237, 24
      %v7921 = vpop.permute.xlu0 %7920
      %7922 = vrot.lane.b32.xlu0 %v6440, 24
      %v7923 = vpop.permute.xlu0 %7922
      %7924 = vrot.lane.b32.xlu0 %v6510, 24
      %v7925 = vpop.permute.xlu0 %7924
      %7926 = vrot.lane.b32.xlu0 %v6240, 24
      %v7927 = vpop.permute.xlu0 %7926
      %7928 = vrot.lane.b32.xlu0 %v6241, 24
      %v7929 = vpop.permute.xlu0 %7928
      %7930 = vrot.lane.b32.xlu0 %v6242, 24
      %v7931 = vpop.permute.xlu0 %7930
      %7932 = vrot.lane.b32.xlu0 %v6243, 24
      %v7933 = vpop.permute.xlu0 %7932
      %7934 = vrot.lane.b32.xlu0 %v6244, 24
      %v7935 = vpop.permute.xlu0 %7934
      %7936 = vrot.lane.b32.xlu0 %v6245, 24
      %v7937 = vpop.permute.xlu0 %7936
      %7938 = vrot.lane.b32.xlu0 %v6441, 24
      %v7939 = vpop.permute.xlu0 %7938
      %7940 = vrot.lane.b32.xlu0 %v6511, 24
      %v7941 = vpop.permute.xlu0 %7940
      %7942 = vrot.lane.b32.xlu0 %v6248, 24
      %v7943 = vpop.permute.xlu0 %7942
      %7944 = vrot.lane.b32.xlu0 %v6249, 24
      %v7945 = vpop.permute.xlu0 %7944
      %7946 = vrot.lane.b32.xlu0 %v6250, 24
      %v7947 = vpop.permute.xlu0 %7946
      %7948 = vrot.lane.b32.xlu0 %v6251, 24
      %v7949 = vpop.permute.xlu0 %7948
      %7950 = vrot.lane.b32.xlu0 %v6252, 24
      %v7951 = vpop.permute.xlu0 %7950
      %7952 = vrot.lane.b32.xlu0 %v6253, 24
      %v7953 = vpop.permute.xlu0 %7952
      %7954 = vrot.lane.b32.xlu0 %v6442, 24
      %v7955 = vpop.permute.xlu0 %7954
      %7956 = vrot.lane.b32.xlu0 %v6512, 24
      %v7957 = vpop.permute.xlu0 %7956
      %7958 = vrot.lane.b32.xlu0 %v6256, 24
      %v7959 = vpop.permute.xlu0 %7958
      %7960 = vrot.lane.b32.xlu0 %v6257, 24
      %v7961 = vpop.permute.xlu0 %7960
      %7962 = vrot.lane.b32.xlu0 %v6258, 24
      %v7963 = vpop.permute.xlu0 %7962
      %7964 = vrot.lane.b32.xlu0 %v6259, 24
      %v7965 = vpop.permute.xlu0 %7964
      %7966 = vrot.lane.b32.xlu0 %v6260, 24
      %v7967 = vpop.permute.xlu0 %7966
      %7968 = vrot.lane.b32.xlu0 %v6261, 24
      %v7969 = vpop.permute.xlu0 %7968
      %7970 = vrot.lane.b32.xlu0 %v6443, 24
      %v7971 = vpop.permute.xlu0 %7970
      %7972 = vrot.lane.b32.xlu0 %v6513, 24
      %v7973 = vpop.permute.xlu0 %7972
      %7974 = vrot.lane.b32.xlu0 %v6264, 24
      %v7975 = vpop.permute.xlu0 %7974
      %7976 = vrot.lane.b32.xlu0 %v6265, 24
      %v7977 = vpop.permute.xlu0 %7976
      %7978 = vrot.lane.b32.xlu0 %v6266, 24
      %v7979 = vpop.permute.xlu0 %7978
      %7980 = vrot.lane.b32.xlu0 %v6267, 24
      %v7981 = vpop.permute.xlu0 %7980
      %7982 = vrot.lane.b32.xlu0 %v6268, 24
      %v7983 = vpop.permute.xlu0 %7982
      %7984 = vrot.lane.b32.xlu0 %v6269, 24
      %v7985 = vpop.permute.xlu0 %7984
      %7986 = vrot.lane.b32.xlu0 %v6444, 24
      %v7987 = vpop.permute.xlu0 %7986
      %7988 = vrot.lane.b32.xlu0 %v6514, 24
      %v7989 = vpop.permute.xlu0 %7988
      %7990 = vrot.lane.b32.xlu0 %v6272, 24
      %v7991 = vpop.permute.xlu0 %7990
      %7992 = vrot.lane.b32.xlu0 %v6273, 24
      %v7993 = vpop.permute.xlu0 %7992
      %7994 = vrot.lane.b32.xlu0 %v6274, 24
      %v7995 = vpop.permute.xlu0 %7994
      %7996 = vrot.lane.b32.xlu0 %v6275, 24
      %v7997 = vpop.permute.xlu0 %7996
      %7998 = vrot.lane.b32.xlu0 %v6276, 24
      %v7999 = vpop.permute.xlu0 %7998
      %8000 = vrot.lane.b32.xlu0 %v6277, 24
      %v8001 = vpop.permute.xlu0 %8000
      %8002 = vrot.lane.b32.xlu0 %v6445, 24
      %v8003 = vpop.permute.xlu0 %8002
      %8004 = vrot.lane.b32.xlu0 %v6515, 24
      %v8005 = vpop.permute.xlu0 %8004
      %8006 = vrot.lane.b32.xlu0 %v6280, 24
      %v8007 = vpop.permute.xlu0 %8006
      %8008 = vrot.lane.b32.xlu0 %v6281, 24
      %v8009 = vpop.permute.xlu0 %8008
      %8010 = vrot.lane.b32.xlu0 %v6282, 24
      %v8011 = vpop.permute.xlu0 %8010
      %8012 = vrot.lane.b32.xlu0 %v6283, 24
      %v8013 = vpop.permute.xlu0 %8012
      %8014 = vrot.lane.b32.xlu0 %v6284, 24
      %v8015 = vpop.permute.xlu0 %8014
      %8016 = vrot.lane.b32.xlu0 %v6285, 24
      %v8017 = vpop.permute.xlu0 %8016
      %8018 = vrot.lane.b32.xlu0 %v6446, 24
      %v8019 = vpop.permute.xlu0 %8018
      %8020 = vrot.lane.b32.xlu0 %v6516, 24
      %v8021 = vpop.permute.xlu0 %8020
      %8022 = vrot.lane.b32.xlu0 %v6288, 24
      %v8023 = vpop.permute.xlu0 %8022
      %8024 = vrot.lane.b32.xlu0 %v6289, 24
      %v8025 = vpop.permute.xlu0 %8024
      %8026 = vrot.lane.b32.xlu0 %v6290, 24
      %v8027 = vpop.permute.xlu0 %8026
      %8028 = vrot.lane.b32.xlu0 %v6291, 24
      %v8029 = vpop.permute.xlu0 %8028
      %8030 = vrot.lane.b32.xlu0 %v6292, 24
      %v8031 = vpop.permute.xlu0 %8030
      %8032 = vrot.lane.b32.xlu0 %v6293, 24
      %v8033 = vpop.permute.xlu0 %8032
      %8034 = vrot.lane.b32.xlu0 %v6447, 24
      %v8035 = vpop.permute.xlu0 %8034
      %8036 = vrot.lane.b32.xlu0 %v6517, 24
      %v8037 = vpop.permute.xlu0 %8036
      %8038 = vrot.lane.b32.xlu0 %v6296, 24
      %v8039 = vpop.permute.xlu0 %8038
      %8040 = vrot.lane.b32.xlu0 %v6297, 24
      %v8041 = vpop.permute.xlu0 %8040
      %8042 = vrot.lane.b32.xlu0 %v6298, 24
      %v8043 = vpop.permute.xlu0 %8042
      %8044 = vrot.lane.b32.xlu0 %v6299, 24
      %v8045 = vpop.permute.xlu0 %8044
      %8046 = vrot.lane.b32.xlu0 %v6300, 24
      %v8047 = vpop.permute.xlu0 %8046
      %8048 = vrot.lane.b32.xlu0 %v6301, 24
      %v8049 = vpop.permute.xlu0 %8048
      %8050 = vrot.lane.b32.xlu0 %v6448, 24
      %v8051 = vpop.permute.xlu0 %8050
      %8052 = vrot.lane.b32.xlu0 %v6518, 24
      %v8053 = vpop.permute.xlu0 %8052
      %8054 = vrot.lane.b32.xlu0 %v6304, 24
      %v8055 = vpop.permute.xlu0 %8054
      %8056 = vrot.lane.b32.xlu0 %v6305, 24
      %v8057 = vpop.permute.xlu0 %8056
      %8058 = vrot.lane.b32.xlu0 %v6306, 24
      %v8059 = vpop.permute.xlu0 %8058
      %8060 = vrot.lane.b32.xlu0 %v6307, 24
      %v8061 = vpop.permute.xlu0 %8060
      %8062 = vrot.lane.b32.xlu0 %v6308, 24
      %v8063 = vpop.permute.xlu0 %8062
      %8064 = vrot.lane.b32.xlu0 %v6309, 24
      %v8065 = vpop.permute.xlu0 %8064
      %8066 = vrot.lane.b32.xlu0 %v6449, 24
      %v8067 = vpop.permute.xlu0 %8066
      %8068 = vrot.lane.b32.xlu0 %v6519, 24
      %v8069 = vpop.permute.xlu0 %8068
      %8150 = vrot.lane.b32.xlu0 %v5732, 28
      %v8151 = vpop.permute.xlu0 %8150
      %8152 = vrot.lane.b32.xlu0 %v5733, 28
      %v8153 = vpop.permute.xlu0 %8152
      %8154 = vrot.lane.b32.xlu0 %v5734, 28
      %v8155 = vpop.permute.xlu0 %8154
      %8156 = vrot.lane.b32.xlu0 %v5735, 28
      %v8157 = vpop.permute.xlu0 %8156
      %8158 = vrot.lane.b32.xlu0 %v5736, 28
      %v8159 = vpop.permute.xlu0 %8158
      %8160 = vrot.lane.b32.xlu0 %v5737, 28
      %v8161 = vpop.permute.xlu0 %8160
      %8162 = vrot.lane.b32.xlu0 %v5738, 28
      %v8163 = vpop.permute.xlu0 %8162
      %8164 = vrot.lane.b32.xlu0 %v5739, 28
      %v8165 = vpop.permute.xlu0 %8164
      %8166 = vrot.lane.b32.xlu0 %v5742, 28
      %v8167 = vpop.permute.xlu0 %8166
      %8168 = vrot.lane.b32.xlu0 %v5743, 28
      %v8169 = vpop.permute.xlu0 %8168
      %8170 = vrot.lane.b32.xlu0 %v5744, 28
      %v8171 = vpop.permute.xlu0 %8170
      %8172 = vrot.lane.b32.xlu0 %v5745, 28
      %v8173 = vpop.permute.xlu0 %8172
      %8174 = vrot.lane.b32.xlu0 %v5746, 28
      %v8175 = vpop.permute.xlu0 %8174
      %8176 = vrot.lane.b32.xlu0 %v5747, 28
      %v8177 = vpop.permute.xlu0 %8176
      %8178 = vrot.lane.b32.xlu0 %v5748, 28
      %v8179 = vpop.permute.xlu0 %8178
      %8180 = vrot.lane.b32.xlu0 %v5749, 28
      %v8181 = vpop.permute.xlu0 %8180
      %8182 = vrot.lane.b32.xlu0 %v5752, 28
      %v8183 = vpop.permute.xlu0 %8182
      %8184 = vrot.lane.b32.xlu0 %v5753, 28
      %v8185 = vpop.permute.xlu0 %8184
      %8186 = vrot.lane.b32.xlu0 %v5754, 28
      %v8187 = vpop.permute.xlu0 %8186
      %8188 = vrot.lane.b32.xlu0 %v5755, 28
      %v8189 = vpop.permute.xlu0 %8188
      %8190 = vrot.lane.b32.xlu0 %v5756, 28
      %v8191 = vpop.permute.xlu0 %8190
      %8192 = vrot.lane.b32.xlu0 %v5757, 28
      %v8193 = vpop.permute.xlu0 %8192
      %8194 = vrot.lane.b32.xlu0 %v5758, 28
      %v8195 = vpop.permute.xlu0 %8194
      %8196 = vrot.lane.b32.xlu0 %v5759, 28
      %v8197 = vpop.permute.xlu0 %8196
      %8198 = vrot.lane.b32.xlu0 %v5762, 28
      %v8199 = vpop.permute.xlu0 %8198
      %8200 = vrot.lane.b32.xlu0 %v5763, 28
      %v8201 = vpop.permute.xlu0 %8200
      %8202 = vrot.lane.b32.xlu0 %v5764, 28
      %v8203 = vpop.permute.xlu0 %8202
      %8204 = vrot.lane.b32.xlu0 %v5765, 28
      %v8205 = vpop.permute.xlu0 %8204
      %8206 = vrot.lane.b32.xlu0 %v5766, 28
      %v8207 = vpop.permute.xlu0 %8206
      %8208 = vrot.lane.b32.xlu0 %v5767, 28
      %v8209 = vpop.permute.xlu0 %8208
      %8210 = vrot.lane.b32.xlu0 %v5768, 28
      %v8211 = vpop.permute.xlu0 %8210
      %8212 = vrot.lane.b32.xlu0 %v5769, 28
      %v8213 = vpop.permute.xlu0 %8212
      %8214 = vrot.lane.b32.xlu0 %v5772, 28
      %v8215 = vpop.permute.xlu0 %8214
      %8216 = vrot.lane.b32.xlu0 %v5773, 28
      %v8217 = vpop.permute.xlu0 %8216
      %8218 = vrot.lane.b32.xlu0 %v5774, 28
      %v8219 = vpop.permute.xlu0 %8218
      %8220 = vrot.lane.b32.xlu0 %v5775, 28
      %v8221 = vpop.permute.xlu0 %8220
      %8222 = vrot.lane.b32.xlu0 %v5776, 28
      %v8223 = vpop.permute.xlu0 %8222
      %8224 = vrot.lane.b32.xlu0 %v5777, 28
      %v8225 = vpop.permute.xlu0 %8224
      %8226 = vrot.lane.b32.xlu0 %v5778, 28
      %v8227 = vpop.permute.xlu0 %8226
      %8228 = vrot.lane.b32.xlu0 %v5779, 28
      %v8229 = vpop.permute.xlu0 %8228
      %8230 = vrot.lane.b32.xlu0 %v5782, 28
      %v8231 = vpop.permute.xlu0 %8230
      %8232 = vrot.lane.b32.xlu0 %v5783, 28
      %v8233 = vpop.permute.xlu0 %8232
      %8234 = vrot.lane.b32.xlu0 %v5784, 28
      %v8235 = vpop.permute.xlu0 %8234
      %8236 = vrot.lane.b32.xlu0 %v5785, 28
      %v8237 = vpop.permute.xlu0 %8236
      %8238 = vrot.lane.b32.xlu0 %v5786, 28
      %v8239 = vpop.permute.xlu0 %8238
      %8240 = vrot.lane.b32.xlu0 %v5787, 28
      %v8241 = vpop.permute.xlu0 %8240
      %8242 = vrot.lane.b32.xlu0 %v5788, 28
      %v8243 = vpop.permute.xlu0 %8242
      %8244 = vrot.lane.b32.xlu0 %v5789, 28
      %v8245 = vpop.permute.xlu0 %8244
      %8246 = vrot.lane.b32.xlu0 %v5792, 28
      %v8247 = vpop.permute.xlu0 %8246
      %8248 = vrot.lane.b32.xlu0 %v5793, 28
      %v8249 = vpop.permute.xlu0 %8248
      %8250 = vrot.lane.b32.xlu0 %v5794, 28
      %v8251 = vpop.permute.xlu0 %8250
      %8252 = vrot.lane.b32.xlu0 %v5795, 28
      %v8253 = vpop.permute.xlu0 %8252
      %8254 = vrot.lane.b32.xlu0 %v5796, 28
      %v8255 = vpop.permute.xlu0 %8254
      %8256 = vrot.lane.b32.xlu0 %v5797, 28
      %v8257 = vpop.permute.xlu0 %8256
      %8258 = vrot.lane.b32.xlu0 %v5798, 28
      %v8259 = vpop.permute.xlu0 %8258
      %8260 = vrot.lane.b32.xlu0 %v5799, 28
      %v8261 = vpop.permute.xlu0 %8260
      %8262 = vrot.lane.b32.xlu0 %v5802, 28
      %v8263 = vpop.permute.xlu0 %8262
      %8264 = vrot.lane.b32.xlu0 %v5803, 28
      %v8265 = vpop.permute.xlu0 %8264
      %8266 = vrot.lane.b32.xlu0 %v5804, 28
      %v8267 = vpop.permute.xlu0 %8266
      %8268 = vrot.lane.b32.xlu0 %v5805, 28
      %v8269 = vpop.permute.xlu0 %8268
      %8270 = vrot.lane.b32.xlu0 %v5806, 28
      %v8271 = vpop.permute.xlu0 %8270
      %8272 = vrot.lane.b32.xlu0 %v5807, 28
      %v8273 = vpop.permute.xlu0 %8272
      %8274 = vrot.lane.b32.xlu0 %v5808, 28
      %v8275 = vpop.permute.xlu0 %8274
      %8276 = vrot.lane.b32.xlu0 %v5809, 28
      %v8277 = vpop.permute.xlu0 %8276
      %8278 = vrot.lane.b32.xlu0 %v5812, 28
      %v8279 = vpop.permute.xlu0 %8278
      %8280 = vrot.lane.b32.xlu0 %v5813, 28
      %v8281 = vpop.permute.xlu0 %8280
      %8282 = vrot.lane.b32.xlu0 %v5814, 28
      %v8283 = vpop.permute.xlu0 %8282
      %8284 = vrot.lane.b32.xlu0 %v5815, 28
      %v8285 = vpop.permute.xlu0 %8284
      %8286 = vrot.lane.b32.xlu0 %v5816, 28
      %v8287 = vpop.permute.xlu0 %8286
      %8288 = vrot.lane.b32.xlu0 %v5817, 28
      %v8289 = vpop.permute.xlu0 %8288
      %8290 = vrot.lane.b32.xlu0 %v5818, 28
      %v8291 = vpop.permute.xlu0 %8290
      %8292 = vrot.lane.b32.xlu0 %v5819, 28
      %v8293 = vpop.permute.xlu0 %8292
      %8294 = vrot.lane.b32.xlu0 %v5822, 28
      %v8295 = vpop.permute.xlu0 %8294
      %8296 = vrot.lane.b32.xlu0 %v5823, 28
      %v8297 = vpop.permute.xlu0 %8296
      %8298 = vrot.lane.b32.xlu0 %v5824, 28
      %v8299 = vpop.permute.xlu0 %8298
      %8300 = vrot.lane.b32.xlu0 %v5825, 28
      %v8301 = vpop.permute.xlu0 %8300
      %8302 = vrot.lane.b32.xlu0 %v5826, 28
      %v8303 = vpop.permute.xlu0 %8302
      %8304 = vrot.lane.b32.xlu0 %v5827, 28
      %v8305 = vpop.permute.xlu0 %8304
      %8306 = vrot.lane.b32.xlu0 %v5828, 28
      %v8307 = vpop.permute.xlu0 %8306
      %8308 = vrot.lane.b32.xlu0 %v5829, 28
      %v8309 = vpop.permute.xlu0 %8308
      %8400 = vrot.lane.b32.xlu0 %v6312, 32
      %v8401 = vpop.permute.xlu0 %8400
      %8402 = vrot.lane.b32.xlu0 %v6313, 32
      %v8403 = vpop.permute.xlu0 %8402
      %8404 = vrot.lane.b32.xlu0 %v6314, 32
      %v8405 = vpop.permute.xlu0 %8404
      %8406 = vrot.lane.b32.xlu0 %v6315, 32
      %v8407 = vpop.permute.xlu0 %8406
      %8408 = vrot.lane.b32.xlu0 %v6316, 32
      %v8409 = vpop.permute.xlu0 %8408
      %8410 = vrot.lane.b32.xlu0 %v6317, 32
      %v8411 = vpop.permute.xlu0 %8410
      %8412 = vrot.lane.b32.xlu0 %v6450, 32
      %v8413 = vpop.permute.xlu0 %8412
      %8414 = vrot.lane.b32.xlu0 %v6520, 32
      %v8415 = vpop.permute.xlu0 %8414
      %8416 = vrot.lane.b32.xlu0 %v6320, 32
      %v8417 = vpop.permute.xlu0 %8416
      %8418 = vrot.lane.b32.xlu0 %v6321, 32
      %v8419 = vpop.permute.xlu0 %8418
      %8420 = vrot.lane.b32.xlu0 %v6322, 32
      %v8421 = vpop.permute.xlu0 %8420
      %8422 = vrot.lane.b32.xlu0 %v6323, 32
      %v8423 = vpop.permute.xlu0 %8422
      %8424 = vrot.lane.b32.xlu0 %v6324, 32
      %v8425 = vpop.permute.xlu0 %8424
      %8426 = vrot.lane.b32.xlu0 %v6325, 32
      %v8427 = vpop.permute.xlu0 %8426
      %8428 = vrot.lane.b32.xlu0 %v6451, 32
      %v8429 = vpop.permute.xlu0 %8428
      %8430 = vrot.lane.b32.xlu0 %v6521, 32
      %v8431 = vpop.permute.xlu0 %8430
      %8432 = vrot.lane.b32.xlu0 %v6328, 32
      %v8433 = vpop.permute.xlu0 %8432
      %8434 = vrot.lane.b32.xlu0 %v6329, 32
      %v8435 = vpop.permute.xlu0 %8434
      %8436 = vrot.lane.b32.xlu0 %v6330, 32
      %v8437 = vpop.permute.xlu0 %8436
      %8438 = vrot.lane.b32.xlu0 %v6331, 32
      %v8439 = vpop.permute.xlu0 %8438
      %8440 = vrot.lane.b32.xlu0 %v6332, 32
      %v8441 = vpop.permute.xlu0 %8440
      %8442 = vrot.lane.b32.xlu0 %v6333, 32
      %v8443 = vpop.permute.xlu0 %8442
      %8444 = vrot.lane.b32.xlu0 %v6452, 32
      %v8445 = vpop.permute.xlu0 %8444
      %8446 = vrot.lane.b32.xlu0 %v6522, 32
      %v8447 = vpop.permute.xlu0 %8446
      %8448 = vrot.lane.b32.xlu0 %v6336, 32
      %v8449 = vpop.permute.xlu0 %8448
      %8450 = vrot.lane.b32.xlu0 %v6337, 32
      %v8451 = vpop.permute.xlu0 %8450
      %8452 = vrot.lane.b32.xlu0 %v6338, 32
      %v8453 = vpop.permute.xlu0 %8452
      %8454 = vrot.lane.b32.xlu0 %v6339, 32
      %v8455 = vpop.permute.xlu0 %8454
      %8456 = vrot.lane.b32.xlu0 %v6340, 32
      %v8457 = vpop.permute.xlu0 %8456
      %8458 = vrot.lane.b32.xlu0 %v6341, 32
      %v8459 = vpop.permute.xlu0 %8458
      %8460 = vrot.lane.b32.xlu0 %v6453, 32
      %v8461 = vpop.permute.xlu0 %8460
      %8462 = vrot.lane.b32.xlu0 %v6523, 32
      %v8463 = vpop.permute.xlu0 %8462
      %8464 = vrot.lane.b32.xlu0 %v6344, 32
      %v8465 = vpop.permute.xlu0 %8464
      %8466 = vrot.lane.b32.xlu0 %v6345, 32
      %v8467 = vpop.permute.xlu0 %8466
      %8468 = vrot.lane.b32.xlu0 %v6346, 32
      %v8469 = vpop.permute.xlu0 %8468
      %8470 = vrot.lane.b32.xlu0 %v6347, 32
      %v8471 = vpop.permute.xlu0 %8470
      %8472 = vrot.lane.b32.xlu0 %v6348, 32
      %v8473 = vpop.permute.xlu0 %8472
      %8474 = vrot.lane.b32.xlu0 %v6349, 32
      %v8475 = vpop.permute.xlu0 %8474
      %8476 = vrot.lane.b32.xlu0 %v6454, 32
      %v8477 = vpop.permute.xlu0 %8476
      %8478 = vrot.lane.b32.xlu0 %v6524, 32
      %v8479 = vpop.permute.xlu0 %8478
      %8480 = vrot.lane.b32.xlu0 %v6352, 32
      %v8481 = vpop.permute.xlu0 %8480
      %8482 = vrot.lane.b32.xlu0 %v6353, 32
      %v8483 = vpop.permute.xlu0 %8482
      %8484 = vrot.lane.b32.xlu0 %v6354, 32
      %v8485 = vpop.permute.xlu0 %8484
      %8486 = vrot.lane.b32.xlu0 %v6355, 32
      %v8487 = vpop.permute.xlu0 %8486
      %8488 = vrot.lane.b32.xlu0 %v6356, 32
      %v8489 = vpop.permute.xlu0 %8488
      %8490 = vrot.lane.b32.xlu0 %v6357, 32
      %v8491 = vpop.permute.xlu0 %8490
      %8492 = vrot.lane.b32.xlu0 %v6455, 32
      %v8493 = vpop.permute.xlu0 %8492
      %8494 = vrot.lane.b32.xlu0 %v6525, 32
      %v8495 = vpop.permute.xlu0 %8494
      %8496 = vrot.lane.b32.xlu0 %v6360, 32
      %v8497 = vpop.permute.xlu0 %8496
      %8498 = vrot.lane.b32.xlu0 %v6361, 32
      %v8499 = vpop.permute.xlu0 %8498
      %8500 = vrot.lane.b32.xlu0 %v6362, 32
      %v8501 = vpop.permute.xlu0 %8500
      %8502 = vrot.lane.b32.xlu0 %v6363, 32
      %v8503 = vpop.permute.xlu0 %8502
      %8504 = vrot.lane.b32.xlu0 %v6364, 32
      %v8505 = vpop.permute.xlu0 %8504
      %8506 = vrot.lane.b32.xlu0 %v6365, 32
      %v8507 = vpop.permute.xlu0 %8506
      %8508 = vrot.lane.b32.xlu0 %v6456, 32
      %v8509 = vpop.permute.xlu0 %8508
      %8510 = vrot.lane.b32.xlu0 %v6526, 32
      %v8511 = vpop.permute.xlu0 %8510
      %8512 = vrot.lane.b32.xlu0 %v6368, 32
      %v8513 = vpop.permute.xlu0 %8512
      %8514 = vrot.lane.b32.xlu0 %v6369, 32
      %v8515 = vpop.permute.xlu0 %8514
      %8516 = vrot.lane.b32.xlu0 %v6370, 32
      %v8517 = vpop.permute.xlu0 %8516
      %8518 = vrot.lane.b32.xlu0 %v6371, 32
      %v8519 = vpop.permute.xlu0 %8518
      %8520 = vrot.lane.b32.xlu0 %v6372, 32
      %v8521 = vpop.permute.xlu0 %8520
      %8522 = vrot.lane.b32.xlu0 %v6373, 32
      %v8523 = vpop.permute.xlu0 %8522
      %8524 = vrot.lane.b32.xlu0 %v6457, 32
      %v8525 = vpop.permute.xlu0 %8524
      %8526 = vrot.lane.b32.xlu0 %v6527, 32
      %v8527 = vpop.permute.xlu0 %8526
      %8528 = vrot.lane.b32.xlu0 %v6376, 32
      %v8529 = vpop.permute.xlu0 %8528
      %8530 = vrot.lane.b32.xlu0 %v6377, 32
      %v8531 = vpop.permute.xlu0 %8530
      %8532 = vrot.lane.b32.xlu0 %v6378, 32
      %v8533 = vpop.permute.xlu0 %8532
      %8534 = vrot.lane.b32.xlu0 %v6379, 32
      %v8535 = vpop.permute.xlu0 %8534
      %8536 = vrot.lane.b32.xlu0 %v6380, 32
      %v8537 = vpop.permute.xlu0 %8536
      %8538 = vrot.lane.b32.xlu0 %v6381, 32
      %v8539 = vpop.permute.xlu0 %8538
      %8540 = vrot.lane.b32.xlu0 %v6458, 32
      %v8541 = vpop.permute.xlu0 %8540
      %8542 = vrot.lane.b32.xlu0 %v6528, 32
      %v8543 = vpop.permute.xlu0 %8542
      %8544 = vrot.lane.b32.xlu0 %v6384, 32
      %v8545 = vpop.permute.xlu0 %8544
      %8546 = vrot.lane.b32.xlu0 %v6385, 32
      %v8547 = vpop.permute.xlu0 %8546
      %8548 = vrot.lane.b32.xlu0 %v6386, 32
      %v8549 = vpop.permute.xlu0 %8548
      %8550 = vrot.lane.b32.xlu0 %v6387, 32
      %v8551 = vpop.permute.xlu0 %8550
      %8552 = vrot.lane.b32.xlu0 %v6388, 32
      %v8553 = vpop.permute.xlu0 %8552
      %8554 = vrot.lane.b32.xlu0 %v6389, 32
      %v8555 = vpop.permute.xlu0 %8554
      %8556 = vrot.lane.b32.xlu0 %v6459, 32
      %v8557 = vpop.permute.xlu0 %8556
      %8558 = vrot.lane.b32.xlu0 %v6529, 32
      %v8559 = vpop.permute.xlu0 %8558
      %v8640 = vsel %vm236, %v6230, %v6531
      %v8641 = vsel %vm236, %v6231, %v6533
      %v8642 = vsel %vm236, %v6232, %v6535
      %v8643 = vsel %vm236, %v6233, %v6537
      %v8644 = vsel %vm236, %v6234, %v6539
      %v8645 = vsel %vm236, %v6235, %v6541
      %v8646 = vsel %vm236, %v6236, %v6543
      %v8647 = vsel %vm236, %v6237, %v6545
      %v8648 = vsel %vm236, %v6238, %v6547
      %v8649 = vsel %vm236, %v6239, %v6549
      %v8650 = vsel %vm236, %v6240, %v6551
      %v8651 = vsel %vm236, %v6241, %v6553
      %v8652 = vsel %vm236, %v6242, %v6555
      %v8653 = vsel %vm236, %v6243, %v6557
      %v8654 = vsel %vm236, %v6244, %v6559
      %v8655 = vsel %vm236, %v6245, %v6561
      %v8656 = vsel %vm236, %v6246, %v6563
      %v8657 = vsel %vm236, %v6247, %v6565
      %v8658 = vsel %vm236, %v6248, %v6567
      %v8659 = vsel %vm236, %v6249, %v6569
      %v8660 = vsel %vm236, %v6250, %v6571
      %v8661 = vsel %vm236, %v6251, %v6573
      %v8662 = vsel %vm236, %v6252, %v6575
      %v8663 = vsel %vm236, %v6253, %v6577
      %v8664 = vsel %vm236, %v6254, %v6579
      %v8665 = vsel %vm236, %v6255, %v6581
      %v8666 = vsel %vm236, %v6256, %v6583
      %v8667 = vsel %vm236, %v6257, %v6585
      %v8668 = vsel %vm236, %v6258, %v6587
      %v8669 = vsel %vm236, %v6259, %v6589
      %v8670 = vsel %vm236, %v6260, %v6591
      %v8671 = vsel %vm236, %v6261, %v6593
      %v8672 = vsel %vm236, %v6262, %v6595
      %v8673 = vsel %vm236, %v6263, %v6597
      %v8674 = vsel %vm236, %v6264, %v6599
      %v8675 = vsel %vm236, %v6265, %v6601
      %v8676 = vsel %vm236, %v6266, %v6603
      %v8677 = vsel %vm236, %v6267, %v6605
      %v8678 = vsel %vm236, %v6268, %v6607
      %v8679 = vsel %vm236, %v6269, %v6609
      %v8680 = vsel %vm236, %v6270, %v6611
      %v8681 = vsel %vm236, %v6271, %v6613
      %v8682 = vsel %vm236, %v6272, %v6615
      %v8683 = vsel %vm236, %v6273, %v6617
      %v8684 = vsel %vm236, %v6274, %v6619
      %v8685 = vsel %vm236, %v6275, %v6621
      %v8686 = vsel %vm236, %v6276, %v6623
      %v8687 = vsel %vm236, %v6277, %v6625
      %v8688 = vsel %vm236, %v6278, %v6627
      %v8689 = vsel %vm236, %v6279, %v6629
      %v8690 = vsel %vm236, %v6280, %v6631
      %v8691 = vsel %vm236, %v6281, %v6633
      %v8692 = vsel %vm236, %v6282, %v6635
      %v8693 = vsel %vm236, %v6283, %v6637
      %v8694 = vsel %vm236, %v6284, %v6639
      %v8695 = vsel %vm236, %v6285, %v6641
      %v8696 = vsel %vm236, %v6286, %v6643
      %v8697 = vsel %vm236, %v6287, %v6645
      %v8698 = vsel %vm236, %v6288, %v6647
      %v8699 = vsel %vm236, %v6289, %v6649
      %v8700 = vsel %vm236, %v6290, %v6651
      %v8701 = vsel %vm236, %v6291, %v6653
      %v8702 = vsel %vm236, %v6292, %v6655
      %v8703 = vsel %vm236, %v6293, %v6657
      %v8704 = vsel %vm236, %v6294, %v6659
      %v8705 = vsel %vm236, %v6295, %v6661
      %v8706 = vsel %vm236, %v6296, %v6663
      %v8707 = vsel %vm236, %v6297, %v6665
      %v8708 = vsel %vm236, %v6298, %v6667
      %v8709 = vsel %vm236, %v6299, %v6669
      %v8710 = vsel %vm236, %v6300, %v6671
      %v8711 = vsel %vm236, %v6301, %v6673
      %v8712 = vsel %vm236, %v6302, %v6675
      %v8713 = vsel %vm236, %v6303, %v6677
      %v8714 = vsel %vm236, %v6304, %v6679
      %v8715 = vsel %vm236, %v6305, %v6681
      %v8716 = vsel %vm236, %v6306, %v6683
      %v8717 = vsel %vm236, %v6307, %v6685
      %v8718 = vsel %vm236, %v6308, %v6687
      %v8719 = vsel %vm236, %v6309, %v6689
      %v8720 = vsel %vm3354, %v8640, %v6851
      %v8721 = vsel %vm3354, %v8641, %v6853
      %v8722 = vsel %vm3354, %v8642, %v6855
      %v8723 = vsel %vm3354, %v8643, %v6857
      %v8724 = vsel %vm3354, %v8644, %v6859
      %v8725 = vsel %vm3354, %v8645, %v6861
      %v8726 = vsel %vm3354, %v8646, %v6863
      %v8727 = vsel %vm3354, %v8647, %v6865
      %v8728 = vsel %vm3354, %v8648, %v6867
      %v8729 = vsel %vm3354, %v8649, %v6869
      %v8730 = vsel %vm3354, %v8650, %v6871
      %v8731 = vsel %vm3354, %v8651, %v6873
      %v8732 = vsel %vm3354, %v8652, %v6875
      %v8733 = vsel %vm3354, %v8653, %v6877
      %v8734 = vsel %vm3354, %v8654, %v6879
      %v8735 = vsel %vm3354, %v8655, %v6881
      %v8736 = vsel %vm3354, %v8656, %v6883
      %v8737 = vsel %vm3354, %v8657, %v6885
      %v8738 = vsel %vm3354, %v8658, %v6887
      %v8739 = vsel %vm3354, %v8659, %v6889
      %v8740 = vsel %vm3354, %v8660, %v6891
      %v8741 = vsel %vm3354, %v8661, %v6893
      %v8742 = vsel %vm3354, %v8662, %v6895
      %v8743 = vsel %vm3354, %v8663, %v6897
      %v8744 = vsel %vm3354, %v8664, %v6899
      %v8745 = vsel %vm3354, %v8665, %v6901
      %v8746 = vsel %vm3354, %v8666, %v6903
      %v8747 = vsel %vm3354, %v8667, %v6905
      %v8748 = vsel %vm3354, %v8668, %v6907
      %v8749 = vsel %vm3354, %v8669, %v6909
      %v8750 = vsel %vm3354, %v8670, %v6911
      %v8751 = vsel %vm3354, %v8671, %v6913
      %v8752 = vsel %vm3354, %v8672, %v6915
      %v8753 = vsel %vm3354, %v8673, %v6917
      %v8754 = vsel %vm3354, %v8674, %v6919
      %v8755 = vsel %vm3354, %v8675, %v6921
      %v8756 = vsel %vm3354, %v8676, %v6923
      %v8757 = vsel %vm3354, %v8677, %v6925
      %v8758 = vsel %vm3354, %v8678, %v6927
      %v8759 = vsel %vm3354, %v8679, %v6929
      %v8760 = vsel %vm3354, %v8680, %v6931
      %v8761 = vsel %vm3354, %v8681, %v6933
      %v8762 = vsel %vm3354, %v8682, %v6935
      %v8763 = vsel %vm3354, %v8683, %v6937
      %v8764 = vsel %vm3354, %v8684, %v6939
      %v8765 = vsel %vm3354, %v8685, %v6941
      %v8766 = vsel %vm3354, %v8686, %v6943
      %v8767 = vsel %vm3354, %v8687, %v6945
      %v8768 = vsel %vm3354, %v8688, %v6947
      %v8769 = vsel %vm3354, %v8689, %v6949
      %v8770 = vsel %vm3354, %v8690, %v6951
      %v8771 = vsel %vm3354, %v8691, %v6953
      %v8772 = vsel %vm3354, %v8692, %v6955
      %v8773 = vsel %vm3354, %v8693, %v6957
      %v8774 = vsel %vm3354, %v8694, %v6959
      %v8775 = vsel %vm3354, %v8695, %v6961
      %v8776 = vsel %vm3354, %v8696, %v6963
      %v8777 = vsel %vm3354, %v8697, %v6965
      %v8778 = vsel %vm3354, %v8698, %v6967
      %v8779 = vsel %vm3354, %v8699, %v6969
      %v8780 = vsel %vm3354, %v8700, %v6971
      %v8781 = vsel %vm3354, %v8701, %v6973
      %v8782 = vsel %vm3354, %v8702, %v6975
      %v8783 = vsel %vm3354, %v8703, %v6977
      %v8784 = vsel %vm3354, %v8704, %v6979
      %v8785 = vsel %vm3354, %v8705, %v6981
      %v8786 = vsel %vm3354, %v8706, %v6983
      %v8787 = vsel %vm3354, %v8707, %v6985
      %v8788 = vsel %vm3354, %v8708, %v6987
      %v8789 = vsel %vm3354, %v8709, %v6989
      %v8790 = vsel %vm3354, %v8710, %v6991
      %v8791 = vsel %vm3354, %v8711, %v6993
      %v8792 = vsel %vm3354, %v8712, %v6995
      %v8793 = vsel %vm3354, %v8713, %v6997
      %v8794 = vsel %vm3354, %v8714, %v6999
      %v8795 = vsel %vm3354, %v8715, %v7001
      %v8796 = vsel %vm3354, %v8716, %v7003
      %v8797 = vsel %vm3354, %v8717, %v7005
      %v8798 = vsel %vm3354, %v8718, %v7007
      %v8799 = vsel %vm3354, %v8719, %v7009
      %v8800 = vsel %vm3435, %v8720, %v7171
      %v8801 = vsel %vm3435, %v8721, %v7173
      %v8802 = vsel %vm3435, %v8722, %v7175
      %v8803 = vsel %vm3435, %v8723, %v7177
      %v8804 = vsel %vm3435, %v8724, %v7179
      %v8805 = vsel %vm3435, %v8725, %v7181
      %v8806 = vsel %vm3435, %v8726, %v7183
      %v8807 = vsel %vm3435, %v8727, %v7185
      %v8808 = vsel %vm3435, %v8728, %v7187
      %v8809 = vsel %vm3435, %v8729, %v7189
      %v8810 = vsel %vm3435, %v8730, %v7191
      %v8811 = vsel %vm3435, %v8731, %v7193
      %v8812 = vsel %vm3435, %v8732, %v7195
      %v8813 = vsel %vm3435, %v8733, %v7197
      %v8814 = vsel %vm3435, %v8734, %v7199
      %v8815 = vsel %vm3435, %v8735, %v7201
      %v8816 = vsel %vm3435, %v8736, %v7203
      %v8817 = vsel %vm3435, %v8737, %v7205
      %v8818 = vsel %vm3435, %v8738, %v7207
      %v8819 = vsel %vm3435, %v8739, %v7209
      %v8820 = vsel %vm3435, %v8740, %v7211
      %v8821 = vsel %vm3435, %v8741, %v7213
      %v8822 = vsel %vm3435, %v8742, %v7215
      %v8823 = vsel %vm3435, %v8743, %v7217
      %v8824 = vsel %vm3435, %v8744, %v7219
      %v8825 = vsel %vm3435, %v8745, %v7221
      %v8826 = vsel %vm3435, %v8746, %v7223
      %v8827 = vsel %vm3435, %v8747, %v7225
      %v8828 = vsel %vm3435, %v8748, %v7227
      %v8829 = vsel %vm3435, %v8749, %v7229
      %v8830 = vsel %vm3435, %v8750, %v7231
      %v8831 = vsel %vm3435, %v8751, %v7233
      %v8832 = vsel %vm3435, %v8752, %v7235
      %v8833 = vsel %vm3435, %v8753, %v7237
      %v8834 = vsel %vm3435, %v8754, %v7239
      %v8835 = vsel %vm3435, %v8755, %v7241
      %v8836 = vsel %vm3435, %v8756, %v7243
      %v8837 = vsel %vm3435, %v8757, %v7245
      %v8838 = vsel %vm3435, %v8758, %v7247
      %v8839 = vsel %vm3435, %v8759, %v7249
      %v8840 = vsel %vm3435, %v8760, %v7251
      %v8841 = vsel %vm3435, %v8761, %v7253
      %v8842 = vsel %vm3435, %v8762, %v7255
      %v8843 = vsel %vm3435, %v8763, %v7257
      %v8844 = vsel %vm3435, %v8764, %v7259
      %v8845 = vsel %vm3435, %v8765, %v7261
      %v8846 = vsel %vm3435, %v8766, %v7263
      %v8847 = vsel %vm3435, %v8767, %v7265
      %v8848 = vsel %vm3435, %v8768, %v7267
      %v8849 = vsel %vm3435, %v8769, %v7269
      %v8850 = vsel %vm3435, %v8770, %v7271
      %v8851 = vsel %vm3435, %v8771, %v7273
      %v8852 = vsel %vm3435, %v8772, %v7275
      %v8853 = vsel %vm3435, %v8773, %v7277
      %v8854 = vsel %vm3435, %v8774, %v7279
      %v8855 = vsel %vm3435, %v8775, %v7281
      %v8856 = vsel %vm3435, %v8776, %v7283
      %v8857 = vsel %vm3435, %v8777, %v7285
      %v8858 = vsel %vm3435, %v8778, %v7287
      %v8859 = vsel %vm3435, %v8779, %v7289
      %v8860 = vsel %vm3435, %v8780, %v7291
      %v8861 = vsel %vm3435, %v8781, %v7293
      %v8862 = vsel %vm3435, %v8782, %v7295
      %v8863 = vsel %vm3435, %v8783, %v7297
      %v8864 = vsel %vm3435, %v8784, %v7299
      %v8865 = vsel %vm3435, %v8785, %v7301
      %v8866 = vsel %vm3435, %v8786, %v7303
      %v8867 = vsel %vm3435, %v8787, %v7305
      %v8868 = vsel %vm3435, %v8788, %v7307
      %v8869 = vsel %vm3435, %v8789, %v7309
      %v8870 = vsel %vm3435, %v8790, %v7311
      %v8871 = vsel %vm3435, %v8791, %v7313
      %v8872 = vsel %vm3435, %v8792, %v7315
      %v8873 = vsel %vm3435, %v8793, %v7317
      %v8874 = vsel %vm3435, %v8794, %v7319
      %v8875 = vsel %vm3435, %v8795, %v7321
      %v8876 = vsel %vm3435, %v8796, %v7323
      %v8877 = vsel %vm3435, %v8797, %v7325
      %v8878 = vsel %vm3435, %v8798, %v7327
      %v8879 = vsel %vm3435, %v8799, %v7329
      %v8880 = vsel %vm3516, %v8800, %v7411
      %v8881 = vsel %vm3516, %v8801, %v7413
      %v8882 = vsel %vm3516, %v8802, %v7415
      %v8883 = vsel %vm3516, %v8803, %v7417
      %v8884 = vsel %vm3516, %v8804, %v7419
      %v8885 = vsel %vm3516, %v8805, %v7421
      %v8886 = vsel %vm3516, %v8806, %v7423
      %v8887 = vsel %vm3516, %v8807, %v7425
      %v8888 = vsel %vm3516, %v8808, %v7427
      %v8889 = vsel %vm3516, %v8809, %v7429
      %v8890 = vsel %vm3516, %v8810, %v7431
      %v8891 = vsel %vm3516, %v8811, %v7433
      %v8892 = vsel %vm3516, %v8812, %v7435
      %v8893 = vsel %vm3516, %v8813, %v7437
      %v8894 = vsel %vm3516, %v8814, %v7439
      %v8895 = vsel %vm3516, %v8815, %v7441
      %v8896 = vsel %vm3516, %v8816, %v7443
      %v8897 = vsel %vm3516, %v8817, %v7445
      %v8898 = vsel %vm3516, %v8818, %v7447
      %v8899 = vsel %vm3516, %v8819, %v7449
      %v8900 = vsel %vm3516, %v8820, %v7451
      %v8901 = vsel %vm3516, %v8821, %v7453
      %v8902 = vsel %vm3516, %v8822, %v7455
      %v8903 = vsel %vm3516, %v8823, %v7457
      %v8904 = vsel %vm3516, %v8824, %v7459
      %v8905 = vsel %vm3516, %v8825, %v7461
      %v8906 = vsel %vm3516, %v8826, %v7463
      %v8907 = vsel %vm3516, %v8827, %v7465
      %v8908 = vsel %vm3516, %v8828, %v7467
      %v8909 = vsel %vm3516, %v8829, %v7469
      %v8910 = vsel %vm3516, %v8830, %v7471
      %v8911 = vsel %vm3516, %v8831, %v7473
      %v8912 = vsel %vm3516, %v8832, %v7475
      %v8913 = vsel %vm3516, %v8833, %v7477
      %v8914 = vsel %vm3516, %v8834, %v7479
      %v8915 = vsel %vm3516, %v8835, %v7481
      %v8916 = vsel %vm3516, %v8836, %v7483
      %v8917 = vsel %vm3516, %v8837, %v7485
      %v8918 = vsel %vm3516, %v8838, %v7487
      %v8919 = vsel %vm3516, %v8839, %v7489
      %v8920 = vsel %vm3516, %v8840, %v7491
      %v8921 = vsel %vm3516, %v8841, %v7493
      %v8922 = vsel %vm3516, %v8842, %v7495
      %v8923 = vsel %vm3516, %v8843, %v7497
      %v8924 = vsel %vm3516, %v8844, %v7499
      %v8925 = vsel %vm3516, %v8845, %v7501
      %v8926 = vsel %vm3516, %v8846, %v7503
      %v8927 = vsel %vm3516, %v8847, %v7505
      %v8928 = vsel %vm3516, %v8848, %v7507
      %v8929 = vsel %vm3516, %v8849, %v7509
      %v8930 = vsel %vm3516, %v8850, %v7511
      %v8931 = vsel %vm3516, %v8851, %v7513
      %v8932 = vsel %vm3516, %v8852, %v7515
      %v8933 = vsel %vm3516, %v8853, %v7517
      %v8934 = vsel %vm3516, %v8854, %v7519
      %v8935 = vsel %vm3516, %v8855, %v7521
      %v8936 = vsel %vm3516, %v8856, %v7523
      %v8937 = vsel %vm3516, %v8857, %v7525
      %v8938 = vsel %vm3516, %v8858, %v7527
      %v8939 = vsel %vm3516, %v8859, %v7529
      %v8940 = vsel %vm3516, %v8860, %v7531
      %v8941 = vsel %vm3516, %v8861, %v7533
      %v8942 = vsel %vm3516, %v8862, %v7535
      %v8943 = vsel %vm3516, %v8863, %v7537
      %v8944 = vsel %vm3516, %v8864, %v7539
      %v8945 = vsel %vm3516, %v8865, %v7541
      %v8946 = vsel %vm3516, %v8866, %v7543
      %v8947 = vsel %vm3516, %v8867, %v7545
      %v8948 = vsel %vm3516, %v8868, %v7547
      %v8949 = vsel %vm3516, %v8869, %v7549
      %v8950 = vsel %vm3516, %v8870, %v7551
      %v8951 = vsel %vm3516, %v8871, %v7553
      %v8952 = vsel %vm3516, %v8872, %v7555
      %v8953 = vsel %vm3516, %v8873, %v7557
      %v8954 = vsel %vm3516, %v8874, %v7559
      %v8955 = vsel %vm3516, %v8875, %v7561
      %v8956 = vsel %vm3516, %v8876, %v7563
      %v8957 = vsel %vm3516, %v8877, %v7565
      %v8958 = vsel %vm3516, %v8878, %v7567
      %v8959 = vsel %vm3516, %v8879, %v7569
      %v8960 = vsel %vm3597, %v8880, %v7661
      %v8961 = vsel %vm3597, %v8881, %v7663
      %v8962 = vsel %vm3597, %v8882, %v7665
      %v8963 = vsel %vm3597, %v8883, %v7667
      %v8964 = vsel %vm3597, %v8884, %v7669
      %v8965 = vsel %vm3597, %v8885, %v7671
      %v8966 = vsel %vm3597, %v8886, %v7673
      %v8967 = vsel %vm3597, %v8887, %v7675
      %v8968 = vsel %vm3597, %v8888, %v7677
      %v8969 = vsel %vm3597, %v8889, %v7679
      %v8970 = vsel %vm3597, %v8890, %v7681
      %v8971 = vsel %vm3597, %v8891, %v7683
      %v8972 = vsel %vm3597, %v8892, %v7685
      %v8973 = vsel %vm3597, %v8893, %v7687
      %v8974 = vsel %vm3597, %v8894, %v7689
      %v8975 = vsel %vm3597, %v8895, %v7691
      %v8976 = vsel %vm3597, %v8896, %v7693
      %v8977 = vsel %vm3597, %v8897, %v7695
      %v8978 = vsel %vm3597, %v8898, %v7697
      %v8979 = vsel %vm3597, %v8899, %v7699
      %v8980 = vsel %vm3597, %v8900, %v7701
      %v8981 = vsel %vm3597, %v8901, %v7703
      %v8982 = vsel %vm3597, %v8902, %v7705
      %v8983 = vsel %vm3597, %v8903, %v7707
      %v8984 = vsel %vm3597, %v8904, %v7709
      %v8985 = vsel %vm3597, %v8905, %v7711
      %v8986 = vsel %vm3597, %v8906, %v7713
      %v8987 = vsel %vm3597, %v8907, %v7715
      %v8988 = vsel %vm3597, %v8908, %v7717
      %v8989 = vsel %vm3597, %v8909, %v7719
      %v8990 = vsel %vm3597, %v8910, %v7721
      %v8991 = vsel %vm3597, %v8911, %v7723
      %v8992 = vsel %vm3597, %v8912, %v7725
      %v8993 = vsel %vm3597, %v8913, %v7727
      %v8994 = vsel %vm3597, %v8914, %v7729
      %v8995 = vsel %vm3597, %v8915, %v7731
      %v8996 = vsel %vm3597, %v8916, %v7733
      %v8997 = vsel %vm3597, %v8917, %v7735
      %v8998 = vsel %vm3597, %v8918, %v7737
      %v8999 = vsel %vm3597, %v8919, %v7739
      %v9000 = vsel %vm3597, %v8920, %v7741
      %v9001 = vsel %vm3597, %v8921, %v7743
      %v9002 = vsel %vm3597, %v8922, %v7745
      %v9003 = vsel %vm3597, %v8923, %v7747
      %v9004 = vsel %vm3597, %v8924, %v7749
      %v9005 = vsel %vm3597, %v8925, %v7751
      %v9006 = vsel %vm3597, %v8926, %v7753
      %v9007 = vsel %vm3597, %v8927, %v7755
      %v9008 = vsel %vm3597, %v8928, %v7757
      %v9009 = vsel %vm3597, %v8929, %v7759
      %v9010 = vsel %vm3597, %v8930, %v7761
      %v9011 = vsel %vm3597, %v8931, %v7763
      %v9012 = vsel %vm3597, %v8932, %v7765
      %v9013 = vsel %vm3597, %v8933, %v7767
      %v9014 = vsel %vm3597, %v8934, %v7769
      %v9015 = vsel %vm3597, %v8935, %v7771
      %v9016 = vsel %vm3597, %v8936, %v7773
      %v9017 = vsel %vm3597, %v8937, %v7775
      %v9018 = vsel %vm3597, %v8938, %v7777
      %v9019 = vsel %vm3597, %v8939, %v7779
      %v9020 = vsel %vm3597, %v8940, %v7781
      %v9021 = vsel %vm3597, %v8941, %v7783
      %v9022 = vsel %vm3597, %v8942, %v7785
      %v9023 = vsel %vm3597, %v8943, %v7787
      %v9024 = vsel %vm3597, %v8944, %v7789
      %v9025 = vsel %vm3597, %v8945, %v7791
      %v9026 = vsel %vm3597, %v8946, %v7793
      %v9027 = vsel %vm3597, %v8947, %v7795
      %v9028 = vsel %vm3597, %v8948, %v7797
      %v9029 = vsel %vm3597, %v8949, %v7799
      %v9030 = vsel %vm3597, %v8950, %v7801
      %v9031 = vsel %vm3597, %v8951, %v7803
      %v9032 = vsel %vm3597, %v8952, %v7805
      %v9033 = vsel %vm3597, %v8953, %v7807
      %v9034 = vsel %vm3597, %v8954, %v7809
      %v9035 = vsel %vm3597, %v8955, %v7811
      %v9036 = vsel %vm3597, %v8956, %v7813
      %v9037 = vsel %vm3597, %v8957, %v7815
      %v9038 = vsel %vm3597, %v8958, %v7817
      %v9039 = vsel %vm3597, %v8959, %v7819
      %v9040 = vsel %vm3678, %v8960, %v7911
      %v9041 = vsel %vm3678, %v8961, %v7913
      %v9042 = vsel %vm3678, %v8962, %v7915
      %v9043 = vsel %vm3678, %v8963, %v7917
      %v9044 = vsel %vm3678, %v8964, %v7919
      %v9045 = vsel %vm3678, %v8965, %v7921
      %v9046 = vsel %vm3678, %v8966, %v7923
      %v9047 = vsel %vm3678, %v8967, %v7925
      %v9048 = vsel %vm3678, %v8968, %v7927
      %v9049 = vsel %vm3678, %v8969, %v7929
      %v9050 = vsel %vm3678, %v8970, %v7931
      %v9051 = vsel %vm3678, %v8971, %v7933
      %v9052 = vsel %vm3678, %v8972, %v7935
      %v9053 = vsel %vm3678, %v8973, %v7937
      %v9054 = vsel %vm3678, %v8974, %v7939
      %v9055 = vsel %vm3678, %v8975, %v7941
      %v9056 = vsel %vm3678, %v8976, %v7943
      %v9057 = vsel %vm3678, %v8977, %v7945
      %v9058 = vsel %vm3678, %v8978, %v7947
      %v9059 = vsel %vm3678, %v8979, %v7949
      %v9060 = vsel %vm3678, %v8980, %v7951
      %v9061 = vsel %vm3678, %v8981, %v7953
      %v9062 = vsel %vm3678, %v8982, %v7955
      %v9063 = vsel %vm3678, %v8983, %v7957
      %v9064 = vsel %vm3678, %v8984, %v7959
      %v9065 = vsel %vm3678, %v8985, %v7961
      %v9066 = vsel %vm3678, %v8986, %v7963
      %v9067 = vsel %vm3678, %v8987, %v7965
      %v9068 = vsel %vm3678, %v8988, %v7967
      %v9069 = vsel %vm3678, %v8989, %v7969
      %v9070 = vsel %vm3678, %v8990, %v7971
      %v9071 = vsel %vm3678, %v8991, %v7973
      %v9072 = vsel %vm3678, %v8992, %v7975
      %v9073 = vsel %vm3678, %v8993, %v7977
      %v9074 = vsel %vm3678, %v8994, %v7979
      %v9075 = vsel %vm3678, %v8995, %v7981
      %v9076 = vsel %vm3678, %v8996, %v7983
      %v9077 = vsel %vm3678, %v8997, %v7985
      %v9078 = vsel %vm3678, %v8998, %v7987
      %v9079 = vsel %vm3678, %v8999, %v7989
      %v9080 = vsel %vm3678, %v9000, %v7991
      %v9081 = vsel %vm3678, %v9001, %v7993
      %v9082 = vsel %vm3678, %v9002, %v7995
      %v9083 = vsel %vm3678, %v9003, %v7997
      %v9084 = vsel %vm3678, %v9004, %v7999
      %v9085 = vsel %vm3678, %v9005, %v8001
      %v9086 = vsel %vm3678, %v9006, %v8003
      %v9087 = vsel %vm3678, %v9007, %v8005
      %v9088 = vsel %vm3678, %v9008, %v8007
      %v9089 = vsel %vm3678, %v9009, %v8009
      %v9090 = vsel %vm3678, %v9010, %v8011
      %v9091 = vsel %vm3678, %v9011, %v8013
      %v9092 = vsel %vm3678, %v9012, %v8015
      %v9093 = vsel %vm3678, %v9013, %v8017
      %v9094 = vsel %vm3678, %v9014, %v8019
      %v9095 = vsel %vm3678, %v9015, %v8021
      %v9096 = vsel %vm3678, %v9016, %v8023
      %v9097 = vsel %vm3678, %v9017, %v8025
      %v9098 = vsel %vm3678, %v9018, %v8027
      %v9099 = vsel %vm3678, %v9019, %v8029
      %v9100 = vsel %vm3678, %v9020, %v8031
      %v9101 = vsel %vm3678, %v9021, %v8033
      %v9102 = vsel %vm3678, %v9022, %v8035
      %v9103 = vsel %vm3678, %v9023, %v8037
      %v9104 = vsel %vm3678, %v9024, %v8039
      %v9105 = vsel %vm3678, %v9025, %v8041
      %v9106 = vsel %vm3678, %v9026, %v8043
      %v9107 = vsel %vm3678, %v9027, %v8045
      %v9108 = vsel %vm3678, %v9028, %v8047
      %v9109 = vsel %vm3678, %v9029, %v8049
      %v9110 = vsel %vm3678, %v9030, %v8051
      %v9111 = vsel %vm3678, %v9031, %v8053
      %v9112 = vsel %vm3678, %v9032, %v8055
      %v9113 = vsel %vm3678, %v9033, %v8057
      %v9114 = vsel %vm3678, %v9034, %v8059
      %v9115 = vsel %vm3678, %v9035, %v8061
      %v9116 = vsel %vm3678, %v9036, %v8063
      %v9117 = vsel %vm3678, %v9037, %v8065
      %v9118 = vsel %vm3678, %v9038, %v8067
      %v9119 = vsel %vm3678, %v9039, %v8069
      %v9120 = vsel %vm3759, %v9040, %v8151
      %v9121 = vsel %vm3759, %v9041, %v8153
      %v9122 = vsel %vm3759, %v9042, %v8155
      %v9123 = vsel %vm3759, %v9043, %v8157
      %v9124 = vsel %vm3759, %v9044, %v8159
      %v9125 = vsel %vm3759, %v9045, %v8161
      %v9126 = vsel %vm3759, %v9046, %v8163
      %v9127 = vsel %vm3759, %v9047, %v8165
      %v9128 = vsel %vm3759, %v9048, %v8167
      %v9129 = vsel %vm3759, %v9049, %v8169
      %v9130 = vsel %vm3759, %v9050, %v8171
      %v9131 = vsel %vm3759, %v9051, %v8173
      %v9132 = vsel %vm3759, %v9052, %v8175
      %v9133 = vsel %vm3759, %v9053, %v8177
      %v9134 = vsel %vm3759, %v9054, %v8179
      %v9135 = vsel %vm3759, %v9055, %v8181
      %v9136 = vsel %vm3759, %v9056, %v8183
      %v9137 = vsel %vm3759, %v9057, %v8185
      %v9138 = vsel %vm3759, %v9058, %v8187
      %v9139 = vsel %vm3759, %v9059, %v8189
      %v9140 = vsel %vm3759, %v9060, %v8191
      %v9141 = vsel %vm3759, %v9061, %v8193
      %v9142 = vsel %vm3759, %v9062, %v8195
      %v9143 = vsel %vm3759, %v9063, %v8197
      %v9144 = vsel %vm3759, %v9064, %v8199
      %v9145 = vsel %vm3759, %v9065, %v8201
      %v9146 = vsel %vm3759, %v9066, %v8203
      %v9147 = vsel %vm3759, %v9067, %v8205
      %v9148 = vsel %vm3759, %v9068, %v8207
      %v9149 = vsel %vm3759, %v9069, %v8209
      %v9150 = vsel %vm3759, %v9070, %v8211
      %v9151 = vsel %vm3759, %v9071, %v8213
      %v9152 = vsel %vm3759, %v9072, %v8215
      %v9153 = vsel %vm3759, %v9073, %v8217
      %v9154 = vsel %vm3759, %v9074, %v8219
      %v9155 = vsel %vm3759, %v9075, %v8221
      %v9156 = vsel %vm3759, %v9076, %v8223
      %v9157 = vsel %vm3759, %v9077, %v8225
      %v9158 = vsel %vm3759, %v9078, %v8227
      %v9159 = vsel %vm3759, %v9079, %v8229
      %v9160 = vsel %vm3759, %v9080, %v8231
      %v9161 = vsel %vm3759, %v9081, %v8233
      %v9162 = vsel %vm3759, %v9082, %v8235
      %v9163 = vsel %vm3759, %v9083, %v8237
      %v9164 = vsel %vm3759, %v9084, %v8239
      %v9165 = vsel %vm3759, %v9085, %v8241
      %v9166 = vsel %vm3759, %v9086, %v8243
      %v9167 = vsel %vm3759, %v9087, %v8245
      %v9168 = vsel %vm3759, %v9088, %v8247
      %v9169 = vsel %vm3759, %v9089, %v8249
      %v9170 = vsel %vm3759, %v9090, %v8251
      %v9171 = vsel %vm3759, %v9091, %v8253
      %v9172 = vsel %vm3759, %v9092, %v8255
      %v9173 = vsel %vm3759, %v9093, %v8257
      %v9174 = vsel %vm3759, %v9094, %v8259
      %v9175 = vsel %vm3759, %v9095, %v8261
      %v9176 = vsel %vm3759, %v9096, %v8263
      %v9177 = vsel %vm3759, %v9097, %v8265
      %v9178 = vsel %vm3759, %v9098, %v8267
      %v9179 = vsel %vm3759, %v9099, %v8269
      %v9180 = vsel %vm3759, %v9100, %v8271
      %v9181 = vsel %vm3759, %v9101, %v8273
      %v9182 = vsel %vm3759, %v9102, %v8275
      %v9183 = vsel %vm3759, %v9103, %v8277
      %v9184 = vsel %vm3759, %v9104, %v8279
      %v9185 = vsel %vm3759, %v9105, %v8281
      %v9186 = vsel %vm3759, %v9106, %v8283
      %v9187 = vsel %vm3759, %v9107, %v8285
      %v9188 = vsel %vm3759, %v9108, %v8287
      %v9189 = vsel %vm3759, %v9109, %v8289
      %v9190 = vsel %vm3759, %v9110, %v8291
      %v9191 = vsel %vm3759, %v9111, %v8293
      %v9192 = vsel %vm3759, %v9112, %v8295
      %v9193 = vsel %vm3759, %v9113, %v8297
      %v9194 = vsel %vm3759, %v9114, %v8299
      %v9195 = vsel %vm3759, %v9115, %v8301
      %v9196 = vsel %vm3759, %v9116, %v8303
      %v9197 = vsel %vm3759, %v9117, %v8305
      %v9198 = vsel %vm3759, %v9118, %v8307
      %v9199 = vsel %vm3759, %v9119, %v8309
      %v9200 = vsel %vm3840, %v9120, %v8401
      %v9201 = vsel %vm3840, %v9121, %v8403
      %v9202 = vsel %vm3840, %v9122, %v8405
      %v9203 = vsel %vm3840, %v9123, %v8407
      %v9204 = vsel %vm3840, %v9124, %v8409
      %v9205 = vsel %vm3840, %v9125, %v8411
      %v9206 = vsel %vm3840, %v9126, %v8413
      %v9207 = vsel %vm3840, %v9127, %v8415
      %v9208 = vsel %vm3840, %v9128, %v8417
      %v9209 = vsel %vm3840, %v9129, %v8419
      %v9210 = vsel %vm3840, %v9130, %v8421
      %v9211 = vsel %vm3840, %v9131, %v8423
      %v9212 = vsel %vm3840, %v9132, %v8425
      %v9213 = vsel %vm3840, %v9133, %v8427
      %v9214 = vsel %vm3840, %v9134, %v8429
      %v9215 = vsel %vm3840, %v9135, %v8431
      %v9216 = vsel %vm3840, %v9136, %v8433
      %v9217 = vsel %vm3840, %v9137, %v8435
      %v9218 = vsel %vm3840, %v9138, %v8437
      %v9219 = vsel %vm3840, %v9139, %v8439
      %v9220 = vsel %vm3840, %v9140, %v8441
      %v9221 = vsel %vm3840, %v9141, %v8443
      %v9222 = vsel %vm3840, %v9142, %v8445
      %v9223 = vsel %vm3840, %v9143, %v8447
      %v9224 = vsel %vm3840, %v9144, %v8449
      %v9225 = vsel %vm3840, %v9145, %v8451
      %v9226 = vsel %vm3840, %v9146, %v8453
      %v9227 = vsel %vm3840, %v9147, %v8455
      %v9228 = vsel %vm3840, %v9148, %v8457
      %v9229 = vsel %vm3840, %v9149, %v8459
      %v9230 = vsel %vm3840, %v9150, %v8461
      %v9231 = vsel %vm3840, %v9151, %v8463
      %v9232 = vsel %vm3840, %v9152, %v8465
      %v9233 = vsel %vm3840, %v9153, %v8467
      %v9234 = vsel %vm3840, %v9154, %v8469
      %v9235 = vsel %vm3840, %v9155, %v8471
      %v9236 = vsel %vm3840, %v9156, %v8473
      %v9237 = vsel %vm3840, %v9157, %v8475
      %v9238 = vsel %vm3840, %v9158, %v8477
      %v9239 = vsel %vm3840, %v9159, %v8479
      %v9240 = vsel %vm3840, %v9160, %v8481
      %v9241 = vsel %vm3840, %v9161, %v8483
      %v9242 = vsel %vm3840, %v9162, %v8485
      %v9243 = vsel %vm3840, %v9163, %v8487
      %v9244 = vsel %vm3840, %v9164, %v8489
      %v9245 = vsel %vm3840, %v9165, %v8491
      %v9246 = vsel %vm3840, %v9166, %v8493
      %v9247 = vsel %vm3840, %v9167, %v8495
      %v9248 = vsel %vm3840, %v9168, %v8497
      %v9249 = vsel %vm3840, %v9169, %v8499
      %v9250 = vsel %vm3840, %v9170, %v8501
      %v9251 = vsel %vm3840, %v9171, %v8503
      %v9252 = vsel %vm3840, %v9172, %v8505
      %v9253 = vsel %vm3840, %v9173, %v8507
      %v9254 = vsel %vm3840, %v9174, %v8509
      %v9255 = vsel %vm3840, %v9175, %v8511
      %v9256 = vsel %vm3840, %v9176, %v8513
      %v9257 = vsel %vm3840, %v9177, %v8515
      %v9258 = vsel %vm3840, %v9178, %v8517
      %v9259 = vsel %vm3840, %v9179, %v8519
      %v9260 = vsel %vm3840, %v9180, %v8521
      %v9261 = vsel %vm3840, %v9181, %v8523
      %v9262 = vsel %vm3840, %v9182, %v8525
      %v9263 = vsel %vm3840, %v9183, %v8527
      %v9264 = vsel %vm3840, %v9184, %v8529
      %v9265 = vsel %vm3840, %v9185, %v8531
      %v9266 = vsel %vm3840, %v9186, %v8533
      %v9267 = vsel %vm3840, %v9187, %v8535
      %v9268 = vsel %vm3840, %v9188, %v8537
      %v9269 = vsel %vm3840, %v9189, %v8539
      %v9270 = vsel %vm3840, %v9190, %v8541
      %v9271 = vsel %vm3840, %v9191, %v8543
      %v9272 = vsel %vm3840, %v9192, %v8545
      %v9273 = vsel %vm3840, %v9193, %v8547
      %v9274 = vsel %vm3840, %v9194, %v8549
      %v9275 = vsel %vm3840, %v9195, %v8551
      %v9276 = vsel %vm3840, %v9196, %v8553
      %v9277 = vsel %vm3840, %v9197, %v8555
      %v9278 = vsel %vm3840, %v9198, %v8557
      %v9279 = vsel %vm3840, %v9199, %v8559
      %v9280 = vld [vmem:[%s2] sm:$0xff]
      %v9281 = vld [vmem:[%s2 + $0x8] sm:$0xff]
      %v9282 = vld [vmem:[%s2 + $0x10] sm:$0xff]
      %v9283 = vld [vmem:[%s2 + $0x18] sm:$0xff]
      %v9284 = vld [vmem:[%s2 + $0x20] sm:$0xf]
      %v9285 = vld [vmem:[%s2 + $0x24] sm:$0xff]
      %v9286 = vld [vmem:[%s2 + $0x2c] sm:$0xff]
      %v9287 = vld [vmem:[%s2 + $0x34] sm:$0xff]
      %v9288 = vld [vmem:[%s2 + $0x3c] sm:$0xff]
      %v9289 = vld [vmem:[%s2 + $0x44] sm:$0xf]
      %v9291 = vsel %vm3931, %v9208, 0
      %v9294 = vsel %vm3931, %v9209, 0
      %v9297 = vsel %vm3931, %v9210, 0
      %v9300 = vsel %vm3931, %v9211, 0
      %v9303 = vsel %vm3931, %v9212, 0
      %v9306 = vsel %vm3931, %v9213, 0
      %v9309 = vsel %vm3931, %v9214, 0
      %v9312 = vsel %vm3931, %v9215, 0
      %v9315 = vsel %vm3931, %v9216, 0
      %v9318 = vsel %vm3931, %v9217, 0
      %v9321 = vsel %vm3931, %v9218, 0
      %v9324 = vsel %vm3931, %v9219, 0
      %v9327 = vsel %vm3931, %v9220, 0
      %v9330 = vsel %vm3931, %v9221, 0
      %v9333 = vsel %vm3931, %v9222, 0
      %v9336 = vsel %vm3931, %v9223, 0
      %v9339 = vsel %vm3931, %v9224, 0
      %v9342 = vsel %vm3931, %v9225, 0
      %v9345 = vsel %vm3931, %v9226, 0
      %v9348 = vsel %vm3931, %v9227, 0
      %v9351 = vsel %vm3931, %v9228, 0
      %v9354 = vsel %vm3931, %v9229, 0
      %v9357 = vsel %vm3931, %v9230, 0
      %v9360 = vsel %vm3931, %v9231, 0
      %v9363 = vsel %vm3931, %v9232, 0
      %v9366 = vsel %vm3931, %v9233, 0
      %v9369 = vsel %vm3931, %v9234, 0
      %v9372 = vsel %vm3931, %v9235, 0
      %v9375 = vsel %vm3931, %v9236, 0
      %v9378 = vsel %vm3931, %v9237, 0
      %v9381 = vsel %vm3931, %v9238, 0
      %v9384 = vsel %vm3931, %v9239, 0
      %v9387 = vsel %vm3931, %v9240, 0
      %v9390 = vsel %vm3931, %v9241, 0
      %v9393 = vsel %vm3931, %v9242, 0
      %v9396 = vsel %vm3931, %v9243, 0
      %v9399 = vsel %vm3931, %v9244, 0
      %v9402 = vsel %vm3931, %v9245, 0
      %v9405 = vsel %vm3931, %v9246, 0
      %v9408 = vsel %vm3931, %v9247, 0
      %v9411 = vsel %vm3931, %v9248, 0
      %v9414 = vsel %vm3931, %v9249, 0
      %v9417 = vsel %vm3931, %v9250, 0
      %v9420 = vsel %vm3931, %v9251, 0
      %v9423 = vsel %vm3931, %v9252, 0
      %v9426 = vsel %vm3931, %v9253, 0
      %v9429 = vsel %vm3931, %v9254, 0
      %v9432 = vsel %vm3931, %v9255, 0
      %v9435 = vsel %vm3931, %v9256, 0
      %v9438 = vsel %vm3931, %v9257, 0
      %v9441 = vsel %vm3931, %v9258, 0
      %v9444 = vsel %vm3931, %v9259, 0
      %v9447 = vsel %vm3931, %v9260, 0
      %v9450 = vsel %vm3931, %v9261, 0
      %v9453 = vsel %vm3931, %v9262, 0
      %v9456 = vsel %vm3931, %v9263, 0
      %v9459 = vsel %vm3931, %v9264, 0
      %v9462 = vsel %vm3931, %v9265, 0
      %v9465 = vsel %vm3931, %v9266, 0
      %v9468 = vsel %vm3931, %v9267, 0
      %v9471 = vsel %vm3931, %v9268, 0
      %v9474 = vsel %vm3931, %v9269, 0
      %v9477 = vsel %vm3931, %v9270, 0
      %v9480 = vsel %vm3931, %v9271, 0
      %v9483 = vsel %vm4124, %v9289, 0
      %9485 = vmatpush.msra.mxu0 0.0
      %9486 = vmatpush.msra.mxu0 0.0
      %9487 = vmatpush.msra.mxu0 0.0
      %9488 = vmatpush.msra.mxu0 0.0
      %9489 = vmatpush.msra.mxu0 0.0
      %9490 = vmatpush.msra.mxu0 0.0
      %9491 = vmatpush.msra.mxu0 0.0
      %9492 = vmatpush.msra.mxu0 0.0
      %9493 = vmatpush.msra.mxu0 0.0
      %9494 = vmatpush.msra.mxu0 0.0
      %9495 = vmatpush.msra.mxu0 0.0
      %9496 = vmatpush.msra.mxu0 %v9483
      %9497 = vmatpush.msra.mxu0 %v9288
      %9498 = vmatpush.msra.mxu0 %v9287
      %9499 = vmatpush.msra.mxu0 %v9286
      %9500 = vmatpush.msra.mxu0 %v9285
      %9501 = vmatmul.f32.gmra.mxu0 %v9291
      %v9502 = vpop.f32.mrf.mxu0
      %v9503 = vadd.f32 0.0, %v9502
      %9504 = vmatmul.f32.gmra.mxu0 %v9294
      %v9505 = vpop.f32.mrf.mxu0
      %v9506 = vadd.f32 0.0, %v9505
      %9507 = vmatmul.f32.gmra.mxu0 %v9297
      %v9508 = vpop.f32.mrf.mxu0
      %v9509 = vadd.f32 0.0, %v9508
      %9510 = vmatmul.f32.gmra.mxu0 %v9300
      %v9511 = vpop.f32.mrf.mxu0
      %v9512 = vadd.f32 0.0, %v9511
      %9513 = vmatmul.f32.gmra.mxu0 %v9303
      %v9514 = vpop.f32.mrf.mxu0
      %v9515 = vadd.f32 0.0, %v9514
      %9516 = vmatmul.f32.gmra.mxu0 %v9306
      %v9517 = vpop.f32.mrf.mxu0
      %v9518 = vadd.f32 0.0, %v9517
      %9519 = vmatmul.f32.gmra.mxu0 %v9309
      %v9520 = vpop.f32.mrf.mxu0
      %v9521 = vadd.f32 0.0, %v9520
      %9522 = vmatmul.f32.gmra.mxu0 %v9312
      %v9523 = vpop.f32.mrf.mxu0
      %v9524 = vadd.f32 0.0, %v9523
      %9525 = vmatmul.f32.gmra.mxu0 %v9315
      %v9526 = vpop.f32.mrf.mxu0
      %v9527 = vadd.f32 0.0, %v9526
      %9528 = vmatmul.f32.gmra.mxu0 %v9318
      %v9529 = vpop.f32.mrf.mxu0
      %v9530 = vadd.f32 0.0, %v9529
      %9531 = vmatmul.f32.gmra.mxu0 %v9321
      %v9532 = vpop.f32.mrf.mxu0
      %v9533 = vadd.f32 0.0, %v9532
      %9534 = vmatmul.f32.gmra.mxu0 %v9324
      %v9535 = vpop.f32.mrf.mxu0
      %v9536 = vadd.f32 0.0, %v9535
      %9537 = vmatmul.f32.gmra.mxu0 %v9327
      %v9538 = vpop.f32.mrf.mxu0
      %v9539 = vadd.f32 0.0, %v9538
      %9540 = vmatmul.f32.gmra.mxu0 %v9330
      %v9541 = vpop.f32.mrf.mxu0
      %v9542 = vadd.f32 0.0, %v9541
      %9543 = vmatmul.f32.gmra.mxu0 %v9333
      %v9544 = vpop.f32.mrf.mxu0
      %v9545 = vadd.f32 0.0, %v9544
      %9546 = vmatmul.f32.gmra.mxu0 %v9336
      %v9547 = vpop.f32.mrf.mxu0
      %v9548 = vadd.f32 0.0, %v9547
      %9549 = vmatmul.f32.gmra.mxu0 %v9339
      %v9550 = vpop.f32.mrf.mxu0
      %v9551 = vadd.f32 0.0, %v9550
      %9552 = vmatmul.f32.gmra.mxu0 %v9342
      %v9553 = vpop.f32.mrf.mxu0
      %v9554 = vadd.f32 0.0, %v9553
      %9555 = vmatmul.f32.gmra.mxu0 %v9345
      %v9556 = vpop.f32.mrf.mxu0
      %v9557 = vadd.f32 0.0, %v9556
      %9558 = vmatmul.f32.gmra.mxu0 %v9348
      %v9559 = vpop.f32.mrf.mxu0
      %v9560 = vadd.f32 0.0, %v9559
      %9561 = vmatmul.f32.gmra.mxu0 %v9351
      %v9562 = vpop.f32.mrf.mxu0
      %v9563 = vadd.f32 0.0, %v9562
      %9564 = vmatmul.f32.gmra.mxu0 %v9354
      %v9565 = vpop.f32.mrf.mxu0
      %v9566 = vadd.f32 0.0, %v9565
      %9567 = vmatmul.f32.gmra.mxu0 %v9357
      %v9568 = vpop.f32.mrf.mxu0
      %v9569 = vadd.f32 0.0, %v9568
      %9570 = vmatmul.f32.gmra.mxu0 %v9360
      %v9571 = vpop.f32.mrf.mxu0
      %v9572 = vadd.f32 0.0, %v9571
      %9573 = vmatmul.f32.gmra.mxu0 %v9363
      %v9574 = vpop.f32.mrf.mxu0
      %v9575 = vadd.f32 0.0, %v9574
      %9576 = vmatmul.f32.gmra.mxu0 %v9366
      %v9577 = vpop.f32.mrf.mxu0
      %v9578 = vadd.f32 0.0, %v9577
      %9579 = vmatmul.f32.gmra.mxu0 %v9369
      %v9580 = vpop.f32.mrf.mxu0
      %v9581 = vadd.f32 0.0, %v9580
      %9582 = vmatmul.f32.gmra.mxu0 %v9372
      %v9583 = vpop.f32.mrf.mxu0
      %v9584 = vadd.f32 0.0, %v9583
      %9585 = vmatmul.f32.gmra.mxu0 %v9375
      %v9586 = vpop.f32.mrf.mxu0
      %v9587 = vadd.f32 0.0, %v9586
      %9588 = vmatmul.f32.gmra.mxu0 %v9378
      %v9589 = vpop.f32.mrf.mxu0
      %v9590 = vadd.f32 0.0, %v9589
      %9591 = vmatmul.f32.gmra.mxu0 %v9381
      %v9592 = vpop.f32.mrf.mxu0
      %v9593 = vadd.f32 0.0, %v9592
      %9594 = vmatmul.f32.gmra.mxu0 %v9384
      %v9595 = vpop.f32.mrf.mxu0
      %v9596 = vadd.f32 0.0, %v9595
      %9597 = vmatmul.f32.gmra.mxu0 %v9387
      %v9598 = vpop.f32.mrf.mxu0
      %v9599 = vadd.f32 0.0, %v9598
      %9600 = vmatmul.f32.gmra.mxu0 %v9390
      %v9601 = vpop.f32.mrf.mxu0
      %v9602 = vadd.f32 0.0, %v9601
      %9603 = vmatmul.f32.gmra.mxu0 %v9393
      %v9604 = vpop.f32.mrf.mxu0
      %v9605 = vadd.f32 0.0, %v9604
      %9606 = vmatmul.f32.gmra.mxu0 %v9396
      %v9607 = vpop.f32.mrf.mxu0
      %v9608 = vadd.f32 0.0, %v9607
      %9609 = vmatmul.f32.gmra.mxu0 %v9399
      %v9610 = vpop.f32.mrf.mxu0
      %v9611 = vadd.f32 0.0, %v9610
      %9612 = vmatmul.f32.gmra.mxu0 %v9402
      %v9613 = vpop.f32.mrf.mxu0
      %v9614 = vadd.f32 0.0, %v9613
      %9615 = vmatmul.f32.gmra.mxu0 %v9405
      %v9616 = vpop.f32.mrf.mxu0
      %v9617 = vadd.f32 0.0, %v9616
      %9618 = vmatmul.f32.gmra.mxu0 %v9408
      %v9619 = vpop.f32.mrf.mxu0
      %v9620 = vadd.f32 0.0, %v9619
      %9621 = vmatmul.f32.gmra.mxu0 %v9411
      %v9622 = vpop.f32.mrf.mxu0
      %v9623 = vadd.f32 0.0, %v9622
      %9624 = vmatmul.f32.gmra.mxu0 %v9414
      %v9625 = vpop.f32.mrf.mxu0
      %v9626 = vadd.f32 0.0, %v9625
      %9627 = vmatmul.f32.gmra.mxu0 %v9417
      %v9628 = vpop.f32.mrf.mxu0
      %v9629 = vadd.f32 0.0, %v9628
      %9630 = vmatmul.f32.gmra.mxu0 %v9420
      %v9631 = vpop.f32.mrf.mxu0
      %v9632 = vadd.f32 0.0, %v9631
      %9633 = vmatmul.f32.gmra.mxu0 %v9423
      %v9634 = vpop.f32.mrf.mxu0
      %v9635 = vadd.f32 0.0, %v9634
      %9636 = vmatmul.f32.gmra.mxu0 %v9426
      %v9637 = vpop.f32.mrf.mxu0
      %v9638 = vadd.f32 0.0, %v9637
      %9639 = vmatmul.f32.gmra.mxu0 %v9429
      %v9640 = vpop.f32.mrf.mxu0
      %v9641 = vadd.f32 0.0, %v9640
      %9642 = vmatmul.f32.gmra.mxu0 %v9432
      %v9643 = vpop.f32.mrf.mxu0
      %v9644 = vadd.f32 0.0, %v9643
      %9645 = vmatmul.f32.gmra.mxu0 %v9435
      %v9646 = vpop.f32.mrf.mxu0
      %v9647 = vadd.f32 0.0, %v9646
      %9648 = vmatmul.f32.gmra.mxu0 %v9438
      %v9649 = vpop.f32.mrf.mxu0
      %v9650 = vadd.f32 0.0, %v9649
      %9651 = vmatmul.f32.gmra.mxu0 %v9441
      %v9652 = vpop.f32.mrf.mxu0
      %v9653 = vadd.f32 0.0, %v9652
      %9654 = vmatmul.f32.gmra.mxu0 %v9444
      %v9655 = vpop.f32.mrf.mxu0
      %v9656 = vadd.f32 0.0, %v9655
      %9657 = vmatmul.f32.gmra.mxu0 %v9447
      %v9658 = vpop.f32.mrf.mxu0
      %v9659 = vadd.f32 0.0, %v9658
      %9660 = vmatmul.f32.gmra.mxu0 %v9450
      %v9661 = vpop.f32.mrf.mxu0
      %v9662 = vadd.f32 0.0, %v9661
      %9663 = vmatmul.f32.gmra.mxu0 %v9453
      %v9664 = vpop.f32.mrf.mxu0
      %v9665 = vadd.f32 0.0, %v9664
      %9666 = vmatmul.f32.gmra.mxu0 %v9456
      %v9667 = vpop.f32.mrf.mxu0
      %v9668 = vadd.f32 0.0, %v9667
      %9669 = vmatmul.f32.gmra.mxu0 %v9459
      %v9670 = vpop.f32.mrf.mxu0
      %v9671 = vadd.f32 0.0, %v9670
      %9672 = vmatmul.f32.gmra.mxu0 %v9462
      %v9673 = vpop.f32.mrf.mxu0
      %v9674 = vadd.f32 0.0, %v9673
      %9675 = vmatmul.f32.gmra.mxu0 %v9465
      %v9676 = vpop.f32.mrf.mxu0
      %v9677 = vadd.f32 0.0, %v9676
      %9678 = vmatmul.f32.gmra.mxu0 %v9468
      %v9679 = vpop.f32.mrf.mxu0
      %v9680 = vadd.f32 0.0, %v9679
      %9681 = vmatmul.f32.gmra.mxu0 %v9471
      %v9682 = vpop.f32.mrf.mxu0
      %v9683 = vadd.f32 0.0, %v9682
      %9684 = vmatmul.f32.gmra.mxu0 %v9474
      %v9685 = vpop.f32.mrf.mxu0
      %v9686 = vadd.f32 0.0, %v9685
      %9687 = vmatmul.f32.gmra.mxu0 %v9477
      %v9688 = vpop.f32.mrf.mxu0
      %v9689 = vadd.f32 0.0, %v9688
      %9690 = vmatmul.f32.gmra.mxu0 %v9480
      %v9691 = vpop.f32.mrf.mxu0
      %v9692 = vadd.f32 0.0, %v9691
      %9693 = vdwg.mxu0
      %v9695 = vsel %vm3931, %v9200, 0
      %v9698 = vsel %vm3931, %v9201, 0
      %v9701 = vsel %vm3931, %v9202, 0
      %v9704 = vsel %vm3931, %v9203, 0
      %v9707 = vsel %vm3931, %v9204, 0
      %v9710 = vsel %vm3931, %v9205, 0
      %v9713 = vsel %vm3931, %v9206, 0
      %v9716 = vsel %vm3931, %v9207, 0
      %v9719 = vsel %vm4124, %v9284, 0
      %9721 = vmatpush.msra.mxu0 0.0
      %9722 = vmatpush.msra.mxu0 0.0
      %9723 = vmatpush.msra.mxu0 0.0
      %9724 = vmatpush.msra.mxu0 0.0
      %9725 = vmatpush.msra.mxu0 0.0
      %9726 = vmatpush.msra.mxu0 0.0
      %9727 = vmatpush.msra.mxu0 0.0
      %9728 = vmatpush.msra.mxu0 0.0
      %9729 = vmatpush.msra.mxu0 0.0
      %9730 = vmatpush.msra.mxu0 0.0
      %9731 = vmatpush.msra.mxu0 0.0
      %9732 = vmatpush.msra.mxu0 %v9719
      %9733 = vmatpush.msra.mxu0 %v9283
      %9734 = vmatpush.msra.mxu0 %v9282
      %9735 = vmatpush.msra.mxu0 %v9281
      %9736 = vmatpush.msra.mxu0 %v9280
      %9737 = vmatmul.f32.gmra.mxu0 %v9695
      %v9738 = vpop.f32.mrf.mxu0
      %v9739 = vadd.f32 %v9503, %v9738
      %9740 = vmatmul.f32.gmra.mxu0 %v9698
      %v9741 = vpop.f32.mrf.mxu0
      %v9742 = vadd.f32 %v9506, %v9741
      %9743 = vmatmul.f32.gmra.mxu0 %v9701
      %v9744 = vpop.f32.mrf.mxu0
      %v9745 = vadd.f32 %v9509, %v9744
      %9746 = vmatmul.f32.gmra.mxu0 %v9704
      %v9747 = vpop.f32.mrf.mxu0
      %v9748 = vadd.f32 %v9512, %v9747
      %9749 = vmatmul.f32.gmra.mxu0 %v9707
      %v9750 = vpop.f32.mrf.mxu0
      %v9751 = vadd.f32 %v9515, %v9750
      %9752 = vmatmul.f32.gmra.mxu0 %v9710
      %v9753 = vpop.f32.mrf.mxu0
      %v9754 = vadd.f32 %v9518, %v9753
      %9755 = vmatmul.f32.gmra.mxu0 %v9713
      %v9756 = vpop.f32.mrf.mxu0
      %v9757 = vadd.f32 %v9521, %v9756
      %9758 = vmatmul.f32.gmra.mxu0 %v9716
      %v9759 = vpop.f32.mrf.mxu0
      %v9760 = vadd.f32 %v9524, %v9759
      %9761 = vmatmul.f32.gmra.mxu0 %v9291
      %v9762 = vpop.f32.mrf.mxu0
      %v9763 = vadd.f32 %v9527, %v9762
      %9764 = vmatmul.f32.gmra.mxu0 %v9294
      %v9765 = vpop.f32.mrf.mxu0
      %v9766 = vadd.f32 %v9530, %v9765
      %9767 = vmatmul.f32.gmra.mxu0 %v9297
      %v9768 = vpop.f32.mrf.mxu0
      %v9769 = vadd.f32 %v9533, %v9768
      %9770 = vmatmul.f32.gmra.mxu0 %v9300
      %v9771 = vpop.f32.mrf.mxu0
      %v9772 = vadd.f32 %v9536, %v9771
      %9773 = vmatmul.f32.gmra.mxu0 %v9303
      %v9774 = vpop.f32.mrf.mxu0
      %v9775 = vadd.f32 %v9539, %v9774
      %9776 = vmatmul.f32.gmra.mxu0 %v9306
      %v9777 = vpop.f32.mrf.mxu0
      %v9778 = vadd.f32 %v9542, %v9777
      %9779 = vmatmul.f32.gmra.mxu0 %v9309
      %v9780 = vpop.f32.mrf.mxu0
      %v9781 = vadd.f32 %v9545, %v9780
      %9782 = vmatmul.f32.gmra.mxu0 %v9312
      %v9783 = vpop.f32.mrf.mxu0
      %v9784 = vadd.f32 %v9548, %v9783
      %9785 = vmatmul.f32.gmra.mxu0 %v9315
      %v9786 = vpop.f32.mrf.mxu0
      %v9787 = vadd.f32 %v9551, %v9786
      %9788 = vmatmul.f32.gmra.mxu0 %v9318
      %v9789 = vpop.f32.mrf.mxu0
      %v9790 = vadd.f32 %v9554, %v9789
      %9791 = vmatmul.f32.gmra.mxu0 %v9321
      %v9792 = vpop.f32.mrf.mxu0
      %v9793 = vadd.f32 %v9557, %v9792
      %9794 = vmatmul.f32.gmra.mxu0 %v9324
      %v9795 = vpop.f32.mrf.mxu0
      %v9796 = vadd.f32 %v9560, %v9795
      %9797 = vmatmul.f32.gmra.mxu0 %v9327
      %v9798 = vpop.f32.mrf.mxu0
      %v9799 = vadd.f32 %v9563, %v9798
      %9800 = vmatmul.f32.gmra.mxu0 %v9330
      %v9801 = vpop.f32.mrf.mxu0
      %v9802 = vadd.f32 %v9566, %v9801
      %9803 = vmatmul.f32.gmra.mxu0 %v9333
      %v9804 = vpop.f32.mrf.mxu0
      %v9805 = vadd.f32 %v9569, %v9804
      %9806 = vmatmul.f32.gmra.mxu0 %v9336
      %v9807 = vpop.f32.mrf.mxu0
      %v9808 = vadd.f32 %v9572, %v9807
      %9809 = vmatmul.f32.gmra.mxu0 %v9339
      %v9810 = vpop.f32.mrf.mxu0
      %v9811 = vadd.f32 %v9575, %v9810
      %9812 = vmatmul.f32.gmra.mxu0 %v9342
      %v9813 = vpop.f32.mrf.mxu0
      %v9814 = vadd.f32 %v9578, %v9813
      %9815 = vmatmul.f32.gmra.mxu0 %v9345
      %v9816 = vpop.f32.mrf.mxu0
      %v9817 = vadd.f32 %v9581, %v9816
      %9818 = vmatmul.f32.gmra.mxu0 %v9348
      %v9819 = vpop.f32.mrf.mxu0
      %v9820 = vadd.f32 %v9584, %v9819
      %9821 = vmatmul.f32.gmra.mxu0 %v9351
      %v9822 = vpop.f32.mrf.mxu0
      %v9823 = vadd.f32 %v9587, %v9822
      %9824 = vmatmul.f32.gmra.mxu0 %v9354
      %v9825 = vpop.f32.mrf.mxu0
      %v9826 = vadd.f32 %v9590, %v9825
      %9827 = vmatmul.f32.gmra.mxu0 %v9357
      %v9828 = vpop.f32.mrf.mxu0
      %v9829 = vadd.f32 %v9593, %v9828
      %9830 = vmatmul.f32.gmra.mxu0 %v9360
      %v9831 = vpop.f32.mrf.mxu0
      %v9832 = vadd.f32 %v9596, %v9831
      %9833 = vmatmul.f32.gmra.mxu0 %v9363
      %v9834 = vpop.f32.mrf.mxu0
      %v9835 = vadd.f32 %v9599, %v9834
      %9836 = vmatmul.f32.gmra.mxu0 %v9366
      %v9837 = vpop.f32.mrf.mxu0
      %v9838 = vadd.f32 %v9602, %v9837
      %9839 = vmatmul.f32.gmra.mxu0 %v9369
      %v9840 = vpop.f32.mrf.mxu0
      %v9841 = vadd.f32 %v9605, %v9840
      %9842 = vmatmul.f32.gmra.mxu0 %v9372
      %v9843 = vpop.f32.mrf.mxu0
      %v9844 = vadd.f32 %v9608, %v9843
      %9845 = vmatmul.f32.gmra.mxu0 %v9375
      %v9846 = vpop.f32.mrf.mxu0
      %v9847 = vadd.f32 %v9611, %v9846
      %9848 = vmatmul.f32.gmra.mxu0 %v9378
      %v9849 = vpop.f32.mrf.mxu0
      %v9850 = vadd.f32 %v9614, %v9849
      %9851 = vmatmul.f32.gmra.mxu0 %v9381
      %v9852 = vpop.f32.mrf.mxu0
      %v9853 = vadd.f32 %v9617, %v9852
      %9854 = vmatmul.f32.gmra.mxu0 %v9384
      %v9855 = vpop.f32.mrf.mxu0
      %v9856 = vadd.f32 %v9620, %v9855
      %9857 = vmatmul.f32.gmra.mxu0 %v9387
      %v9858 = vpop.f32.mrf.mxu0
      %v9859 = vadd.f32 %v9623, %v9858
      %9860 = vmatmul.f32.gmra.mxu0 %v9390
      %v9861 = vpop.f32.mrf.mxu0
      %v9862 = vadd.f32 %v9626, %v9861
      %9863 = vmatmul.f32.gmra.mxu0 %v9393
      %v9864 = vpop.f32.mrf.mxu0
      %v9865 = vadd.f32 %v9629, %v9864
      %9866 = vmatmul.f32.gmra.mxu0 %v9396
      %v9867 = vpop.f32.mrf.mxu0
      %v9868 = vadd.f32 %v9632, %v9867
      %9869 = vmatmul.f32.gmra.mxu0 %v9399
      %v9870 = vpop.f32.mrf.mxu0
      %v9871 = vadd.f32 %v9635, %v9870
      %9872 = vmatmul.f32.gmra.mxu0 %v9402
      %v9873 = vpop.f32.mrf.mxu0
      %v9874 = vadd.f32 %v9638, %v9873
      %9875 = vmatmul.f32.gmra.mxu0 %v9405
      %v9876 = vpop.f32.mrf.mxu0
      %v9877 = vadd.f32 %v9641, %v9876
      %9878 = vmatmul.f32.gmra.mxu0 %v9408
      %v9879 = vpop.f32.mrf.mxu0
      %v9880 = vadd.f32 %v9644, %v9879
      %9881 = vmatmul.f32.gmra.mxu0 %v9411
      %v9882 = vpop.f32.mrf.mxu0
      %v9883 = vadd.f32 %v9647, %v9882
      %9884 = vmatmul.f32.gmra.mxu0 %v9414
      %v9885 = vpop.f32.mrf.mxu0
      %v9886 = vadd.f32 %v9650, %v9885
      %9887 = vmatmul.f32.gmra.mxu0 %v9417
      %v9888 = vpop.f32.mrf.mxu0
      %v9889 = vadd.f32 %v9653, %v9888
      %9890 = vmatmul.f32.gmra.mxu0 %v9420
      %v9891 = vpop.f32.mrf.mxu0
      %v9892 = vadd.f32 %v9656, %v9891
      %9893 = vmatmul.f32.gmra.mxu0 %v9423
      %v9894 = vpop.f32.mrf.mxu0
      %v9895 = vadd.f32 %v9659, %v9894
      %9896 = vmatmul.f32.gmra.mxu0 %v9426
      %v9897 = vpop.f32.mrf.mxu0
      %v9898 = vadd.f32 %v9662, %v9897
      %9899 = vmatmul.f32.gmra.mxu0 %v9429
      %v9900 = vpop.f32.mrf.mxu0
      %v9901 = vadd.f32 %v9665, %v9900
      %9902 = vmatmul.f32.gmra.mxu0 %v9432
      %v9903 = vpop.f32.mrf.mxu0
      %v9904 = vadd.f32 %v9668, %v9903
      %9905 = vmatmul.f32.gmra.mxu0 %v9435
      %v9906 = vpop.f32.mrf.mxu0
      %v9907 = vadd.f32 %v9671, %v9906
      %9908 = vmatmul.f32.gmra.mxu0 %v9438
      %v9909 = vpop.f32.mrf.mxu0
      %v9910 = vadd.f32 %v9674, %v9909
      %9911 = vmatmul.f32.gmra.mxu0 %v9441
      %v9912 = vpop.f32.mrf.mxu0
      %v9913 = vadd.f32 %v9677, %v9912
      %9914 = vmatmul.f32.gmra.mxu0 %v9444
      %v9915 = vpop.f32.mrf.mxu0
      %v9916 = vadd.f32 %v9680, %v9915
      %9917 = vmatmul.f32.gmra.mxu0 %v9447
      %v9918 = vpop.f32.mrf.mxu0
      %v9919 = vadd.f32 %v9683, %v9918
      %9920 = vmatmul.f32.gmra.mxu0 %v9450
      %v9921 = vpop.f32.mrf.mxu0
      %v9922 = vadd.f32 %v9686, %v9921
      %9923 = vmatmul.f32.gmra.mxu0 %v9453
      %v9924 = vpop.f32.mrf.mxu0
      %v9925 = vadd.f32 %v9689, %v9924
      %9926 = vmatmul.f32.gmra.mxu0 %v9456
      %v9927 = vpop.f32.mrf.mxu0
      %v9928 = vadd.f32 %v9692, %v9927
      %9929 = vdwg.mxu0
      %v9930 = vld [vmem:[%s2 + $0x48] sm:$0xff]
      %v9931 = vld [vmem:[%s2 + $0x50] sm:$0xff]
      %v9932 = vld [vmem:[%s2 + $0x58] sm:$0xff]
      %v9933 = vld [vmem:[%s2 + $0x60] sm:$0xff]
      %v9934 = vld [vmem:[%s2 + $0x68] sm:$0xf]
      %v9936 = vsel %vm3931, %v9272, 0
      %v9939 = vsel %vm3931, %v9273, 0
      %v9942 = vsel %vm3931, %v9274, 0
      %v9945 = vsel %vm3931, %v9275, 0
      %v9948 = vsel %vm3931, %v9276, 0
      %v9951 = vsel %vm3931, %v9277, 0
      %v9954 = vsel %vm3931, %v9278, 0
      %v9957 = vsel %vm3931, %v9279, 0
      %v9960 = vsel %vm4124, %v9934, 0
      %9962 = vmatpush.msra.mxu0 0.0
      %9963 = vmatpush.msra.mxu0 0.0
      %9964 = vmatpush.msra.mxu0 0.0
      %9965 = vmatpush.msra.mxu0 0.0
      %9966 = vmatpush.msra.mxu0 0.0
      %9967 = vmatpush.msra.mxu0 0.0
      %9968 = vmatpush.msra.mxu0 0.0
      %9969 = vmatpush.msra.mxu0 0.0
      %9970 = vmatpush.msra.mxu0 0.0
      %9971 = vmatpush.msra.mxu0 0.0
      %9972 = vmatpush.msra.mxu0 0.0
      %9973 = vmatpush.msra.mxu0 %v9960
      %9974 = vmatpush.msra.mxu0 %v9933
      %9975 = vmatpush.msra.mxu0 %v9932
      %9976 = vmatpush.msra.mxu0 %v9931
      %9977 = vmatpush.msra.mxu0 %v9930
      %9978 = vmatmul.f32.gmra.mxu0 %v9315
      %v9979 = vpop.f32.mrf.mxu0
      %v9980 = vadd.f32 0.0, %v9979
      %9981 = vmatmul.f32.gmra.mxu0 %v9318
      %v9982 = vpop.f32.mrf.mxu0
      %v9983 = vadd.f32 0.0, %v9982
      %9984 = vmatmul.f32.gmra.mxu0 %v9321
      %v9985 = vpop.f32.mrf.mxu0
      %v9986 = vadd.f32 0.0, %v9985
      %9987 = vmatmul.f32.gmra.mxu0 %v9324
      %v9988 = vpop.f32.mrf.mxu0
      %v9989 = vadd.f32 0.0, %v9988
      %9990 = vmatmul.f32.gmra.mxu0 %v9327
      %v9991 = vpop.f32.mrf.mxu0
      %v9992 = vadd.f32 0.0, %v9991
      %9993 = vmatmul.f32.gmra.mxu0 %v9330
      %v9994 = vpop.f32.mrf.mxu0
      %v9995 = vadd.f32 0.0, %v9994
      %9996 = vmatmul.f32.gmra.mxu0 %v9333
      %v9997 = vpop.f32.mrf.mxu0
      %v9998 = vadd.f32 0.0, %v9997
      %9999 = vmatmul.f32.gmra.mxu0 %v9336
      %v10000 = vpop.f32.mrf.mxu0
      %v10001 = vadd.f32 0.0, %v10000
      %10002 = vmatmul.f32.gmra.mxu0 %v9339
      %v10003 = vpop.f32.mrf.mxu0
      %v10004 = vadd.f32 0.0, %v10003
      %10005 = vmatmul.f32.gmra.mxu0 %v9342
      %v10006 = vpop.f32.mrf.mxu0
      %v10007 = vadd.f32 0.0, %v10006
      %10008 = vmatmul.f32.gmra.mxu0 %v9345
      %v10009 = vpop.f32.mrf.mxu0
      %v10010 = vadd.f32 0.0, %v10009
      %10011 = vmatmul.f32.gmra.mxu0 %v9348
      %v10012 = vpop.f32.mrf.mxu0
      %v10013 = vadd.f32 0.0, %v10012
      %10014 = vmatmul.f32.gmra.mxu0 %v9351
      %v10015 = vpop.f32.mrf.mxu0
      %v10016 = vadd.f32 0.0, %v10015
      %10017 = vmatmul.f32.gmra.mxu0 %v9354
      %v10018 = vpop.f32.mrf.mxu0
      %v10019 = vadd.f32 0.0, %v10018
      %10020 = vmatmul.f32.gmra.mxu0 %v9357
      %v10021 = vpop.f32.mrf.mxu0
      %v10022 = vadd.f32 0.0, %v10021
      %10023 = vmatmul.f32.gmra.mxu0 %v9360
      %v10024 = vpop.f32.mrf.mxu0
      %v10025 = vadd.f32 0.0, %v10024
      %10026 = vmatmul.f32.gmra.mxu0 %v9363
      %v10027 = vpop.f32.mrf.mxu0
      %v10028 = vadd.f32 0.0, %v10027
      %10029 = vmatmul.f32.gmra.mxu0 %v9366
      %v10030 = vpop.f32.mrf.mxu0
      %v10031 = vadd.f32 0.0, %v10030
      %10032 = vmatmul.f32.gmra.mxu0 %v9369
      %v10033 = vpop.f32.mrf.mxu0
      %v10034 = vadd.f32 0.0, %v10033
      %10035 = vmatmul.f32.gmra.mxu0 %v9372
      %v10036 = vpop.f32.mrf.mxu0
      %v10037 = vadd.f32 0.0, %v10036
      %10038 = vmatmul.f32.gmra.mxu0 %v9375
      %v10039 = vpop.f32.mrf.mxu0
      %v10040 = vadd.f32 0.0, %v10039
      %10041 = vmatmul.f32.gmra.mxu0 %v9378
      %v10042 = vpop.f32.mrf.mxu0
      %v10043 = vadd.f32 0.0, %v10042
      %10044 = vmatmul.f32.gmra.mxu0 %v9381
      %v10045 = vpop.f32.mrf.mxu0
      %v10046 = vadd.f32 0.0, %v10045
      %10047 = vmatmul.f32.gmra.mxu0 %v9384
      %v10048 = vpop.f32.mrf.mxu0
      %v10049 = vadd.f32 0.0, %v10048
      %10050 = vmatmul.f32.gmra.mxu0 %v9387
      %v10051 = vpop.f32.mrf.mxu0
      %v10052 = vadd.f32 0.0, %v10051
      %10053 = vmatmul.f32.gmra.mxu0 %v9390
      %v10054 = vpop.f32.mrf.mxu0
      %v10055 = vadd.f32 0.0, %v10054
      %10056 = vmatmul.f32.gmra.mxu0 %v9393
      %v10057 = vpop.f32.mrf.mxu0
      %v10058 = vadd.f32 0.0, %v10057
      %10059 = vmatmul.f32.gmra.mxu0 %v9396
      %v10060 = vpop.f32.mrf.mxu0
      %v10061 = vadd.f32 0.0, %v10060
      %10062 = vmatmul.f32.gmra.mxu0 %v9399
      %v10063 = vpop.f32.mrf.mxu0
      %v10064 = vadd.f32 0.0, %v10063
      %10065 = vmatmul.f32.gmra.mxu0 %v9402
      %v10066 = vpop.f32.mrf.mxu0
      %v10067 = vadd.f32 0.0, %v10066
      %10068 = vmatmul.f32.gmra.mxu0 %v9405
      %v10069 = vpop.f32.mrf.mxu0
      %v10070 = vadd.f32 0.0, %v10069
      %10071 = vmatmul.f32.gmra.mxu0 %v9408
      %v10072 = vpop.f32.mrf.mxu0
      %v10073 = vadd.f32 0.0, %v10072
      %10074 = vmatmul.f32.gmra.mxu0 %v9411
      %v10075 = vpop.f32.mrf.mxu0
      %v10076 = vadd.f32 0.0, %v10075
      %10077 = vmatmul.f32.gmra.mxu0 %v9414
      %v10078 = vpop.f32.mrf.mxu0
      %v10079 = vadd.f32 0.0, %v10078
      %10080 = vmatmul.f32.gmra.mxu0 %v9417
      %v10081 = vpop.f32.mrf.mxu0
      %v10082 = vadd.f32 0.0, %v10081
      %10083 = vmatmul.f32.gmra.mxu0 %v9420
      %v10084 = vpop.f32.mrf.mxu0
      %v10085 = vadd.f32 0.0, %v10084
      %10086 = vmatmul.f32.gmra.mxu0 %v9423
      %v10087 = vpop.f32.mrf.mxu0
      %v10088 = vadd.f32 0.0, %v10087
      %10089 = vmatmul.f32.gmra.mxu0 %v9426
      %v10090 = vpop.f32.mrf.mxu0
      %v10091 = vadd.f32 0.0, %v10090
      %10092 = vmatmul.f32.gmra.mxu0 %v9429
      %v10093 = vpop.f32.mrf.mxu0
      %v10094 = vadd.f32 0.0, %v10093
      %10095 = vmatmul.f32.gmra.mxu0 %v9432
      %v10096 = vpop.f32.mrf.mxu0
      %v10097 = vadd.f32 0.0, %v10096
      %10098 = vmatmul.f32.gmra.mxu0 %v9435
      %v10099 = vpop.f32.mrf.mxu0
      %v10100 = vadd.f32 0.0, %v10099
      %10101 = vmatmul.f32.gmra.mxu0 %v9438
      %v10102 = vpop.f32.mrf.mxu0
      %v10103 = vadd.f32 0.0, %v10102
      %10104 = vmatmul.f32.gmra.mxu0 %v9441
      %v10105 = vpop.f32.mrf.mxu0
      %v10106 = vadd.f32 0.0, %v10105
      %10107 = vmatmul.f32.gmra.mxu0 %v9444
      %v10108 = vpop.f32.mrf.mxu0
      %v10109 = vadd.f32 0.0, %v10108
      %10110 = vmatmul.f32.gmra.mxu0 %v9447
      %v10111 = vpop.f32.mrf.mxu0
      %v10112 = vadd.f32 0.0, %v10111
      %10113 = vmatmul.f32.gmra.mxu0 %v9450
      %v10114 = vpop.f32.mrf.mxu0
      %v10115 = vadd.f32 0.0, %v10114
      %10116 = vmatmul.f32.gmra.mxu0 %v9453
      %v10117 = vpop.f32.mrf.mxu0
      %v10118 = vadd.f32 0.0, %v10117
      %10119 = vmatmul.f32.gmra.mxu0 %v9456
      %v10120 = vpop.f32.mrf.mxu0
      %v10121 = vadd.f32 0.0, %v10120
      %10122 = vmatmul.f32.gmra.mxu0 %v9459
      %v10123 = vpop.f32.mrf.mxu0
      %v10124 = vadd.f32 0.0, %v10123
      %10125 = vmatmul.f32.gmra.mxu0 %v9462
      %v10126 = vpop.f32.mrf.mxu0
      %v10127 = vadd.f32 0.0, %v10126
      %10128 = vmatmul.f32.gmra.mxu0 %v9465
      %v10129 = vpop.f32.mrf.mxu0
      %v10130 = vadd.f32 0.0, %v10129
      %10131 = vmatmul.f32.gmra.mxu0 %v9468
      %v10132 = vpop.f32.mrf.mxu0
      %v10133 = vadd.f32 0.0, %v10132
      %10134 = vmatmul.f32.gmra.mxu0 %v9471
      %v10135 = vpop.f32.mrf.mxu0
      %v10136 = vadd.f32 0.0, %v10135
      %10137 = vmatmul.f32.gmra.mxu0 %v9474
      %v10138 = vpop.f32.mrf.mxu0
      %v10139 = vadd.f32 0.0, %v10138
      %10140 = vmatmul.f32.gmra.mxu0 %v9477
      %v10141 = vpop.f32.mrf.mxu0
      %v10142 = vadd.f32 0.0, %v10141
      %10143 = vmatmul.f32.gmra.mxu0 %v9480
      %v10144 = vpop.f32.mrf.mxu0
      %v10145 = vadd.f32 0.0, %v10144
      %10146 = vmatmul.f32.gmra.mxu0 %v9936
      %v10147 = vpop.f32.mrf.mxu0
      %v10148 = vadd.f32 0.0, %v10147
      %10149 = vmatmul.f32.gmra.mxu0 %v9939
      %v10150 = vpop.f32.mrf.mxu0
      %v10151 = vadd.f32 0.0, %v10150
      %10152 = vmatmul.f32.gmra.mxu0 %v9942
      %v10153 = vpop.f32.mrf.mxu0
      %v10154 = vadd.f32 0.0, %v10153
      %10155 = vmatmul.f32.gmra.mxu0 %v9945
      %v10156 = vpop.f32.mrf.mxu0
      %v10157 = vadd.f32 0.0, %v10156
      %10158 = vmatmul.f32.gmra.mxu0 %v9948
      %v10159 = vpop.f32.mrf.mxu0
      %v10160 = vadd.f32 0.0, %v10159
      %10161 = vmatmul.f32.gmra.mxu0 %v9951
      %v10162 = vpop.f32.mrf.mxu0
      %v10163 = vadd.f32 0.0, %v10162
      %10164 = vmatmul.f32.gmra.mxu0 %v9954
      %v10165 = vpop.f32.mrf.mxu0
      %v10166 = vadd.f32 0.0, %v10165
      %10167 = vmatmul.f32.gmra.mxu0 %v9957
      %v10168 = vpop.f32.mrf.mxu0
      %v10169 = vadd.f32 0.0, %v10168
      %10170 = vdwg.mxu0
      %v10171 = vadd.f32 %v9739, %v9980
      %v10172 = vadd.f32 %v9742, %v9983
      %v10173 = vadd.f32 %v9745, %v9986
      %v10174 = vadd.f32 %v9748, %v9989
      %v10175 = vadd.f32 %v9751, %v9992
      %v10176 = vadd.f32 %v9754, %v9995
      %v10177 = vadd.f32 %v9757, %v9998
      %v10178 = vadd.f32 %v9760, %v10001
      %v10179 = vadd.f32 %v9763, %v10004
      %v10180 = vadd.f32 %v9766, %v10007
      %v10181 = vadd.f32 %v9769, %v10010
      %v10182 = vadd.f32 %v9772, %v10013
      %v10183 = vadd.f32 %v9775, %v10016
      %v10184 = vadd.f32 %v9778, %v10019
      %v10185 = vadd.f32 %v9781, %v10022
      %v10186 = vadd.f32 %v9784, %v10025
      %v10187 = vadd.f32 %v9787, %v10028
      %v10188 = vadd.f32 %v9790, %v10031
      %v10189 = vadd.f32 %v9793, %v10034
      %v10190 = vadd.f32 %v9796, %v10037
      %v10191 = vadd.f32 %v9799, %v10040
      %v10192 = vadd.f32 %v9802, %v10043
      %v10193 = vadd.f32 %v9805, %v10046
      %v10194 = vadd.f32 %v9808, %v10049
      %v10195 = vadd.f32 %v9811, %v10052
      %v10196 = vadd.f32 %v9814, %v10055
      %v10197 = vadd.f32 %v9817, %v10058
      %v10198 = vadd.f32 %v9820, %v10061
      %v10199 = vadd.f32 %v9823, %v10064
      %v10200 = vadd.f32 %v9826, %v10067
      %v10201 = vadd.f32 %v9829, %v10070
      %v10202 = vadd.f32 %v9832, %v10073
      %v10203 = vadd.f32 %v9835, %v10076
      %v10204 = vadd.f32 %v9838, %v10079
      %v10205 = vadd.f32 %v9841, %v10082
      %v10206 = vadd.f32 %v9844, %v10085
      %v10207 = vadd.f32 %v9847, %v10088
      %v10208 = vadd.f32 %v9850, %v10091
      %v10209 = vadd.f32 %v9853, %v10094
      %v10210 = vadd.f32 %v9856, %v10097
      %v10211 = vadd.f32 %v9859, %v10100
      %v10212 = vadd.f32 %v9862, %v10103
      %v10213 = vadd.f32 %v9865, %v10106
      %v10214 = vadd.f32 %v9868, %v10109
      %v10215 = vadd.f32 %v9871, %v10112
      %v10216 = vadd.f32 %v9874, %v10115
      %v10217 = vadd.f32 %v9877, %v10118
      %v10218 = vadd.f32 %v9880, %v10121
      %v10219 = vadd.f32 %v9883, %v10124
      %v10220 = vadd.f32 %v9886, %v10127
      %v10221 = vadd.f32 %v9889, %v10130
      %v10222 = vadd.f32 %v9892, %v10133
      %v10223 = vadd.f32 %v9895, %v10136
      %v10224 = vadd.f32 %v9898, %v10139
      %v10225 = vadd.f32 %v9901, %v10142
      %v10226 = vadd.f32 %v9904, %v10145
      %v10227 = vadd.f32 %v9907, %v10148
      %v10228 = vadd.f32 %v9910, %v10151
      %v10229 = vadd.f32 %v9913, %v10154
      %v10230 = vadd.f32 %v9916, %v10157
      %v10231 = vadd.f32 %v9919, %v10160
      %v10232 = vadd.f32 %v9922, %v10163
      %v10233 = vadd.f32 %v9925, %v10166
      %v10234 = vadd.f32 %v9928, %v10169
      %v10235 = vmul.f32 %v10171, %v10171
      %v10236 = vmul.f32 %v10172, %v10172
      %v10237 = vmul.f32 %v10173, %v10173
      %v10238 = vmul.f32 %v10174, %v10174
      %v10239 = vmul.f32 %v10175, %v10175
      %v10240 = vmul.f32 %v10176, %v10176
      %v10241 = vmul.f32 %v10177, %v10177
      %v10242 = vmul.f32 %v10178, %v10178
      %v10243 = vmul.f32 %v10179, %v10179
      %v10244 = vmul.f32 %v10180, %v10180
      %v10245 = vmul.f32 %v10181, %v10181
      %v10246 = vmul.f32 %v10182, %v10182
      %v10247 = vmul.f32 %v10183, %v10183
      %v10248 = vmul.f32 %v10184, %v10184
      %v10249 = vmul.f32 %v10185, %v10185
      %v10250 = vmul.f32 %v10186, %v10186
      %v10251 = vmul.f32 %v10187, %v10187
      %v10252 = vmul.f32 %v10188, %v10188
      %v10253 = vmul.f32 %v10189, %v10189
      %v10254 = vmul.f32 %v10190, %v10190
      %v10255 = vmul.f32 %v10191, %v10191
      %v10256 = vmul.f32 %v10192, %v10192
      %v10257 = vmul.f32 %v10193, %v10193
      %v10258 = vmul.f32 %v10194, %v10194
      %v10259 = vmul.f32 %v10195, %v10195
      %v10260 = vmul.f32 %v10196, %v10196
      %v10261 = vmul.f32 %v10197, %v10197
      %v10262 = vmul.f32 %v10198, %v10198
      %v10263 = vmul.f32 %v10199, %v10199
      %v10264 = vmul.f32 %v10200, %v10200
      %v10265 = vmul.f32 %v10201, %v10201
      %v10266 = vmul.f32 %v10202, %v10202
      %v10267 = vmul.f32 %v10203, %v10203
      %v10268 = vmul.f32 %v10204, %v10204
      %v10269 = vmul.f32 %v10205, %v10205
      %v10270 = vmul.f32 %v10206, %v10206
      %v10271 = vmul.f32 %v10207, %v10207
      %v10272 = vmul.f32 %v10208, %v10208
      %v10273 = vmul.f32 %v10209, %v10209
      %v10274 = vmul.f32 %v10210, %v10210
      %v10275 = vmul.f32 %v10211, %v10211
      %v10276 = vmul.f32 %v10212, %v10212
      %v10277 = vmul.f32 %v10213, %v10213
      %v10278 = vmul.f32 %v10214, %v10214
      %v10279 = vmul.f32 %v10215, %v10215
      %v10280 = vmul.f32 %v10216, %v10216
      %v10281 = vmul.f32 %v10217, %v10217
      %v10282 = vmul.f32 %v10218, %v10218
      %v10283 = vmul.f32 %v10219, %v10219
      %v10284 = vmul.f32 %v10220, %v10220
      %v10285 = vmul.f32 %v10221, %v10221
      %v10286 = vmul.f32 %v10222, %v10222
      %v10287 = vmul.f32 %v10223, %v10223
      %v10288 = vmul.f32 %v10224, %v10224
      %v10289 = vmul.f32 %v10225, %v10225
      %v10290 = vmul.f32 %v10226, %v10226
      %v10291 = vmul.f32 %v10227, %v10227
      %v10292 = vmul.f32 %v10228, %v10228
      %v10293 = vmul.f32 %v10229, %v10229
      %v10294 = vmul.f32 %v10230, %v10230
      %v10295 = vmul.f32 %v10231, %v10231
      %v10296 = vmul.f32 %v10232, %v10232
      %v10297 = vmul.f32 %v10233, %v10233
      %v10298 = vmul.f32 %v10234, %v10234
      %10363 = vrot.lane.b32.xlu0 %v10235, 4
      %v10364 = vpop.permute.xlu0 %10363
      %10365 = vrot.lane.b32.xlu0 %v10236, 4
      %v10366 = vpop.permute.xlu0 %10365
      %10367 = vrot.lane.b32.xlu0 %v10237, 4
      %v10368 = vpop.permute.xlu0 %10367
      %10369 = vrot.lane.b32.xlu0 %v10238, 4
      %v10370 = vpop.permute.xlu0 %10369
      %10371 = vrot.lane.b32.xlu0 %v10239, 4
      %v10372 = vpop.permute.xlu0 %10371
      %10373 = vrot.lane.b32.xlu0 %v10240, 4
      %v10374 = vpop.permute.xlu0 %10373
      %10375 = vrot.lane.b32.xlu0 %v10241, 4
      %v10376 = vpop.permute.xlu0 %10375
      %10377 = vrot.lane.b32.xlu0 %v10242, 4
      %v10378 = vpop.permute.xlu0 %10377
      %10379 = vrot.lane.b32.xlu0 %v10243, 4
      %v10380 = vpop.permute.xlu0 %10379
      %10381 = vrot.lane.b32.xlu0 %v10244, 4
      %v10382 = vpop.permute.xlu0 %10381
      %10383 = vrot.lane.b32.xlu0 %v10245, 4
      %v10384 = vpop.permute.xlu0 %10383
      %10385 = vrot.lane.b32.xlu0 %v10246, 4
      %v10386 = vpop.permute.xlu0 %10385
      %10387 = vrot.lane.b32.xlu0 %v10247, 4
      %v10388 = vpop.permute.xlu0 %10387
      %10389 = vrot.lane.b32.xlu0 %v10248, 4
      %v10390 = vpop.permute.xlu0 %10389
      %10391 = vrot.lane.b32.xlu0 %v10249, 4
      %v10392 = vpop.permute.xlu0 %10391
      %10393 = vrot.lane.b32.xlu0 %v10250, 4
      %v10394 = vpop.permute.xlu0 %10393
      %10395 = vrot.lane.b32.xlu0 %v10251, 4
      %v10396 = vpop.permute.xlu0 %10395
      %10397 = vrot.lane.b32.xlu0 %v10252, 4
      %v10398 = vpop.permute.xlu0 %10397
      %10399 = vrot.lane.b32.xlu0 %v10253, 4
      %v10400 = vpop.permute.xlu0 %10399
      %10401 = vrot.lane.b32.xlu0 %v10254, 4
      %v10402 = vpop.permute.xlu0 %10401
      %10403 = vrot.lane.b32.xlu0 %v10255, 4
      %v10404 = vpop.permute.xlu0 %10403
      %10405 = vrot.lane.b32.xlu0 %v10256, 4
      %v10406 = vpop.permute.xlu0 %10405
      %10407 = vrot.lane.b32.xlu0 %v10257, 4
      %v10408 = vpop.permute.xlu0 %10407
      %10409 = vrot.lane.b32.xlu0 %v10258, 4
      %v10410 = vpop.permute.xlu0 %10409
      %10411 = vrot.lane.b32.xlu0 %v10259, 4
      %v10412 = vpop.permute.xlu0 %10411
      %10413 = vrot.lane.b32.xlu0 %v10260, 4
      %v10414 = vpop.permute.xlu0 %10413
      %10415 = vrot.lane.b32.xlu0 %v10261, 4
      %v10416 = vpop.permute.xlu0 %10415
      %10417 = vrot.lane.b32.xlu0 %v10262, 4
      %v10418 = vpop.permute.xlu0 %10417
      %10419 = vrot.lane.b32.xlu0 %v10263, 4
      %v10420 = vpop.permute.xlu0 %10419
      %10421 = vrot.lane.b32.xlu0 %v10264, 4
      %v10422 = vpop.permute.xlu0 %10421
      %10423 = vrot.lane.b32.xlu0 %v10265, 4
      %v10424 = vpop.permute.xlu0 %10423
      %10425 = vrot.lane.b32.xlu0 %v10266, 4
      %v10426 = vpop.permute.xlu0 %10425
      %10427 = vrot.lane.b32.xlu0 %v10267, 4
      %v10428 = vpop.permute.xlu0 %10427
      %10429 = vrot.lane.b32.xlu0 %v10268, 4
      %v10430 = vpop.permute.xlu0 %10429
      %10431 = vrot.lane.b32.xlu0 %v10269, 4
      %v10432 = vpop.permute.xlu0 %10431
      %10433 = vrot.lane.b32.xlu0 %v10270, 4
      %v10434 = vpop.permute.xlu0 %10433
      %10435 = vrot.lane.b32.xlu0 %v10271, 4
      %v10436 = vpop.permute.xlu0 %10435
      %10437 = vrot.lane.b32.xlu0 %v10272, 4
      %v10438 = vpop.permute.xlu0 %10437
      %10439 = vrot.lane.b32.xlu0 %v10273, 4
      %v10440 = vpop.permute.xlu0 %10439
      %10441 = vrot.lane.b32.xlu0 %v10274, 4
      %v10442 = vpop.permute.xlu0 %10441
      %10443 = vrot.lane.b32.xlu0 %v10275, 4
      %v10444 = vpop.permute.xlu0 %10443
      %10445 = vrot.lane.b32.xlu0 %v10276, 4
      %v10446 = vpop.permute.xlu0 %10445
      %10447 = vrot.lane.b32.xlu0 %v10277, 4
      %v10448 = vpop.permute.xlu0 %10447
      %10449 = vrot.lane.b32.xlu0 %v10278, 4
      %v10450 = vpop.permute.xlu0 %10449
      %10451 = vrot.lane.b32.xlu0 %v10279, 4
      %v10452 = vpop.permute.xlu0 %10451
      %10453 = vrot.lane.b32.xlu0 %v10280, 4
      %v10454 = vpop.permute.xlu0 %10453
      %10455 = vrot.lane.b32.xlu0 %v10281, 4
      %v10456 = vpop.permute.xlu0 %10455
      %10457 = vrot.lane.b32.xlu0 %v10282, 4
      %v10458 = vpop.permute.xlu0 %10457
      %10459 = vrot.lane.b32.xlu0 %v10283, 4
      %v10460 = vpop.permute.xlu0 %10459
      %10461 = vrot.lane.b32.xlu0 %v10284, 4
      %v10462 = vpop.permute.xlu0 %10461
      %10463 = vrot.lane.b32.xlu0 %v10285, 4
      %v10464 = vpop.permute.xlu0 %10463
      %10465 = vrot.lane.b32.xlu0 %v10286, 4
      %v10466 = vpop.permute.xlu0 %10465
      %10467 = vrot.lane.b32.xlu0 %v10287, 4
      %v10468 = vpop.permute.xlu0 %10467
      %10469 = vrot.lane.b32.xlu0 %v10288, 4
      %v10470 = vpop.permute.xlu0 %10469
      %10471 = vrot.lane.b32.xlu0 %v10289, 4
      %v10472 = vpop.permute.xlu0 %10471
      %10473 = vrot.lane.b32.xlu0 %v10290, 4
      %v10474 = vpop.permute.xlu0 %10473
      %10475 = vrot.lane.b32.xlu0 %v10291, 4
      %v10476 = vpop.permute.xlu0 %10475
      %10477 = vrot.lane.b32.xlu0 %v10292, 4
      %v10478 = vpop.permute.xlu0 %10477
      %10479 = vrot.lane.b32.xlu0 %v10293, 4
      %v10480 = vpop.permute.xlu0 %10479
      %10481 = vrot.lane.b32.xlu0 %v10294, 4
      %v10482 = vpop.permute.xlu0 %10481
      %10483 = vrot.lane.b32.xlu0 %v10295, 4
      %v10484 = vpop.permute.xlu0 %10483
      %10485 = vrot.lane.b32.xlu0 %v10296, 4
      %v10486 = vpop.permute.xlu0 %10485
      %10487 = vrot.lane.b32.xlu0 %v10297, 4
      %v10488 = vpop.permute.xlu0 %10487
      %10489 = vrot.lane.b32.xlu0 %v10298, 4
      %v10490 = vpop.permute.xlu0 %10489
      %v10555 = vsel %vm236, %v10171, %v10364
      %v10556 = vsel %vm236, %v10172, %v10366
      %v10557 = vsel %vm236, %v10173, %v10368
      %v10558 = vsel %vm236, %v10174, %v10370
      %v10559 = vsel %vm236, %v10175, %v10372
      %v10560 = vsel %vm236, %v10176, %v10374
      %v10561 = vsel %vm236, %v10177, %v10376
      %v10562 = vsel %vm236, %v10178, %v10378
      %v10563 = vsel %vm236, %v10179, %v10380
      %v10564 = vsel %vm236, %v10180, %v10382
      %v10565 = vsel %vm236, %v10181, %v10384
      %v10566 = vsel %vm236, %v10182, %v10386
      %v10567 = vsel %vm236, %v10183, %v10388
      %v10568 = vsel %vm236, %v10184, %v10390
      %v10569 = vsel %vm236, %v10185, %v10392
      %v10570 = vsel %vm236, %v10186, %v10394
      %v10571 = vsel %vm236, %v10187, %v10396
      %v10572 = vsel %vm236, %v10188, %v10398
      %v10573 = vsel %vm236, %v10189, %v10400
      %v10574 = vsel %vm236, %v10190, %v10402
      %v10575 = vsel %vm236, %v10191, %v10404
      %v10576 = vsel %vm236, %v10192, %v10406
      %v10577 = vsel %vm236, %v10193, %v10408
      %v10578 = vsel %vm236, %v10194, %v10410
      %v10579 = vsel %vm236, %v10195, %v10412
      %v10580 = vsel %vm236, %v10196, %v10414
      %v10581 = vsel %vm236, %v10197, %v10416
      %v10582 = vsel %vm236, %v10198, %v10418
      %v10583 = vsel %vm236, %v10199, %v10420
      %v10584 = vsel %vm236, %v10200, %v10422
      %v10585 = vsel %vm236, %v10201, %v10424
      %v10586 = vsel %vm236, %v10202, %v10426
      %v10587 = vsel %vm236, %v10203, %v10428
      %v10588 = vsel %vm236, %v10204, %v10430
      %v10589 = vsel %vm236, %v10205, %v10432
      %v10590 = vsel %vm236, %v10206, %v10434
      %v10591 = vsel %vm236, %v10207, %v10436
      %v10592 = vsel %vm236, %v10208, %v10438
      %v10593 = vsel %vm236, %v10209, %v10440
      %v10594 = vsel %vm236, %v10210, %v10442
      %v10595 = vsel %vm236, %v10211, %v10444
      %v10596 = vsel %vm236, %v10212, %v10446
      %v10597 = vsel %vm236, %v10213, %v10448
      %v10598 = vsel %vm236, %v10214, %v10450
      %v10599 = vsel %vm236, %v10215, %v10452
      %v10600 = vsel %vm236, %v10216, %v10454
      %v10601 = vsel %vm236, %v10217, %v10456
      %v10602 = vsel %vm236, %v10218, %v10458
      %v10603 = vsel %vm236, %v10219, %v10460
      %v10604 = vsel %vm236, %v10220, %v10462
      %v10605 = vsel %vm236, %v10221, %v10464
      %v10606 = vsel %vm236, %v10222, %v10466
      %v10607 = vsel %vm236, %v10223, %v10468
      %v10608 = vsel %vm236, %v10224, %v10470
      %v10609 = vsel %vm236, %v10225, %v10472
      %v10610 = vsel %vm236, %v10226, %v10474
      %v10611 = vsel %vm236, %v10227, %v10476
      %v10612 = vsel %vm236, %v10228, %v10478
      %v10613 = vsel %vm236, %v10229, %v10480
      %v10614 = vsel %vm236, %v10230, %v10482
      %v10615 = vsel %vm236, %v10231, %v10484
      %v10616 = vsel %vm236, %v10232, %v10486
      %v10617 = vsel %vm236, %v10233, %v10488
      %v10618 = vsel %vm236, %v10234, %v10490
      %v10619 = vsel %vm3354, %v10555, 0.0
      %v10620 = vsel %vm3354, %v10556, 0.0
      %v10621 = vadd.f32 %v10619, %v10620
      %v10622 = vsel %vm3354, %v10557, 0.0
      %v10623 = vadd.f32 %v10621, %v10622
      %v10624 = vsel %vm3354, %v10558, 0.0
      %v10625 = vadd.f32 %v10623, %v10624
      %v10626 = vsel %vm3354, %v10559, 0.0
      %v10627 = vadd.f32 %v10625, %v10626
      %v10628 = vsel %vm3354, %v10560, 0.0
      %v10629 = vadd.f32 %v10627, %v10628
      %v10630 = vsel %vm3354, %v10561, 0.0
      %v10631 = vadd.f32 %v10629, %v10630
      %v10632 = vsel %vm3354, %v10562, 0.0
      %v10633 = vadd.f32 %v10631, %v10632
      %v10634 = vsel %vm3354, %v10563, 0.0
      %v10635 = vadd.f32 %v10633, %v10634
      %v10636 = vsel %vm3354, %v10564, 0.0
      %v10637 = vadd.f32 %v10635, %v10636
      %v10638 = vsel %vm3354, %v10565, 0.0
      %v10639 = vadd.f32 %v10637, %v10638
      %v10640 = vsel %vm3354, %v10566, 0.0
      %v10641 = vadd.f32 %v10639, %v10640
      %v10642 = vsel %vm3354, %v10567, 0.0
      %v10643 = vadd.f32 %v10641, %v10642
      %v10644 = vsel %vm3354, %v10568, 0.0
      %v10645 = vadd.f32 %v10643, %v10644
      %v10646 = vsel %vm3354, %v10569, 0.0
      %v10647 = vadd.f32 %v10645, %v10646
      %v10648 = vsel %vm3354, %v10570, 0.0
      %v10649 = vadd.f32 %v10647, %v10648
      %v10650 = vsel %vm3354, %v10571, 0.0
      %v10651 = vadd.f32 %v10649, %v10650
      %v10652 = vsel %vm3354, %v10572, 0.0
      %v10653 = vadd.f32 %v10651, %v10652
      %v10654 = vsel %vm3354, %v10573, 0.0
      %v10655 = vadd.f32 %v10653, %v10654
      %v10656 = vsel %vm3354, %v10574, 0.0
      %v10657 = vadd.f32 %v10655, %v10656
      %v10658 = vsel %vm3354, %v10575, 0.0
      %v10659 = vadd.f32 %v10657, %v10658
      %v10660 = vsel %vm3354, %v10576, 0.0
      %v10661 = vadd.f32 %v10659, %v10660
      %v10662 = vsel %vm3354, %v10577, 0.0
      %v10663 = vadd.f32 %v10661, %v10662
      %v10664 = vsel %vm3354, %v10578, 0.0
      %v10665 = vadd.f32 %v10663, %v10664
      %v10666 = vsel %vm3354, %v10579, 0.0
      %v10667 = vadd.f32 %v10665, %v10666
      %v10668 = vsel %vm3354, %v10580, 0.0
      %v10669 = vadd.f32 %v10667, %v10668
      %v10670 = vsel %vm3354, %v10581, 0.0
      %v10671 = vadd.f32 %v10669, %v10670
      %v10672 = vsel %vm3354, %v10582, 0.0
      %v10673 = vadd.f32 %v10671, %v10672
      %v10674 = vsel %vm3354, %v10583, 0.0
      %v10675 = vadd.f32 %v10673, %v10674
      %v10676 = vsel %vm3354, %v10584, 0.0
      %v10677 = vadd.f32 %v10675, %v10676
      %v10678 = vsel %vm3354, %v10585, 0.0
      %v10679 = vadd.f32 %v10677, %v10678
      %v10680 = vsel %vm3354, %v10586, 0.0
      %v10681 = vadd.f32 %v10679, %v10680
      %v10682 = vsel %vm3354, %v10587, 0.0
      %v10683 = vadd.f32 %v10681, %v10682
      %v10684 = vsel %vm3354, %v10588, 0.0
      %v10685 = vadd.f32 %v10683, %v10684
      %v10686 = vsel %vm3354, %v10589, 0.0
      %v10687 = vadd.f32 %v10685, %v10686
      %v10688 = vsel %vm3354, %v10590, 0.0
      %v10689 = vadd.f32 %v10687, %v10688
      %v10690 = vsel %vm3354, %v10591, 0.0
      %v10691 = vadd.f32 %v10689, %v10690
      %v10692 = vsel %vm3354, %v10592, 0.0
      %v10693 = vadd.f32 %v10691, %v10692
      %v10694 = vsel %vm3354, %v10593, 0.0
      %v10695 = vadd.f32 %v10693, %v10694
      %v10696 = vsel %vm3354, %v10594, 0.0
      %v10697 = vadd.f32 %v10695, %v10696
      %v10698 = vsel %vm3354, %v10595, 0.0
      %v10699 = vadd.f32 %v10697, %v10698
      %v10700 = vsel %vm3354, %v10596, 0.0
      %v10701 = vadd.f32 %v10699, %v10700
      %v10702 = vsel %vm3354, %v10597, 0.0
      %v10703 = vadd.f32 %v10701, %v10702
      %v10704 = vsel %vm3354, %v10598, 0.0
      %v10705 = vadd.f32 %v10703, %v10704
      %v10706 = vsel %vm3354, %v10599, 0.0
      %v10707 = vadd.f32 %v10705, %v10706
      %v10708 = vsel %vm3354, %v10600, 0.0
      %v10709 = vadd.f32 %v10707, %v10708
      %v10710 = vsel %vm3354, %v10601, 0.0
      %v10711 = vadd.f32 %v10709, %v10710
      %v10712 = vsel %vm3354, %v10602, 0.0
      %v10713 = vadd.f32 %v10711, %v10712
      %v10714 = vsel %vm3354, %v10603, 0.0
      %v10715 = vadd.f32 %v10713, %v10714
      %v10716 = vsel %vm3354, %v10604, 0.0
      %v10717 = vadd.f32 %v10715, %v10716
      %v10718 = vsel %vm3354, %v10605, 0.0
      %v10719 = vadd.f32 %v10717, %v10718
      %v10720 = vsel %vm3354, %v10606, 0.0
      %v10721 = vadd.f32 %v10719, %v10720
      %v10722 = vsel %vm3354, %v10607, 0.0
      %v10723 = vadd.f32 %v10721, %v10722
      %v10724 = vsel %vm3354, %v10608, 0.0
      %v10725 = vadd.f32 %v10723, %v10724
      %v10726 = vsel %vm3354, %v10609, 0.0
      %v10727 = vadd.f32 %v10725, %v10726
      %v10728 = vsel %vm3354, %v10610, 0.0
      %v10729 = vadd.f32 %v10727, %v10728
      %v10730 = vsel %vm3354, %v10611, 0.0
      %v10731 = vadd.f32 %v10729, %v10730
      %v10732 = vsel %vm3354, %v10612, 0.0
      %v10733 = vadd.f32 %v10731, %v10732
      %v10734 = vsel %vm3354, %v10613, 0.0
      %v10735 = vadd.f32 %v10733, %v10734
      %v10736 = vsel %vm3354, %v10614, 0.0
      %v10737 = vadd.f32 %v10735, %v10736
      %v10738 = vsel %vm3354, %v10615, 0.0
      %v10739 = vadd.f32 %v10737, %v10738
      %v10740 = vsel %vm3354, %v10616, 0.0
      %v10741 = vadd.f32 %v10739, %v10740
      %v10742 = vsel %vm3354, %v10617, 0.0
      %v10743 = vadd.f32 %v10741, %v10742
      %v10744 = vsel %vm3354, %v10618, 0.0
      %v10745 = vadd.f32 %v10743, %v10744
      %v10746 = vrot.slane %v10745, 4
      %v10747 = vadd.f32 %v10745, %v10746
      %v10748 = vrot.slane %v10747, 2
      %v10749 = vadd.f32 %v10747, %v10748
      %v10750 = vrot.slane %v10749, 1
      %v10751 = vadd.f32 %v10749, %v10750
      %v10752 = vmul.f32 %v10751, 0.001953125
      %v10753 = vmul.f32 %v10752, %v10752
      %10755 = vrot.lane.b32.xlu0 %v10753, 4
      %v10756 = vpop.permute.xlu0 %10755
      %v10758 = vsub.f32 %v10752, %v10756
      %v10759 = vsub.f32 %v10171, %v10752
      %v10760 = vsub.f32 %v10172, %v10752
      %v10761 = vsub.f32 %v10173, %v10752
      %v10762 = vsub.f32 %v10174, %v10752
      %v10763 = vsub.f32 %v10175, %v10752
      %v10764 = vsub.f32 %v10176, %v10752
      %v10765 = vsub.f32 %v10177, %v10752
      %v10766 = vsub.f32 %v10178, %v10752
      %v10767 = vsub.f32 %v10179, %v10752
      %v10768 = vsub.f32 %v10180, %v10752
      %v10769 = vsub.f32 %v10181, %v10752
      %v10770 = vsub.f32 %v10182, %v10752
      %v10771 = vsub.f32 %v10183, %v10752
      %v10772 = vsub.f32 %v10184, %v10752
      %v10773 = vsub.f32 %v10185, %v10752
      %v10774 = vsub.f32 %v10186, %v10752
      %v10775 = vsub.f32 %v10187, %v10752
      %v10776 = vsub.f32 %v10188, %v10752
      %v10777 = vsub.f32 %v10189, %v10752
      %v10778 = vsub.f32 %v10190, %v10752
      %v10779 = vsub.f32 %v10191, %v10752
      %v10780 = vsub.f32 %v10192, %v10752
      %v10781 = vsub.f32 %v10193, %v10752
      %v10782 = vsub.f32 %v10194, %v10752
      %v10783 = vsub.f32 %v10195, %v10752
      %v10784 = vsub.f32 %v10196, %v10752
      %v10785 = vsub.f32 %v10197, %v10752
      %v10786 = vsub.f32 %v10198, %v10752
      %v10787 = vsub.f32 %v10199, %v10752
      %v10788 = vsub.f32 %v10200, %v10752
      %v10789 = vsub.f32 %v10201, %v10752
      %v10790 = vsub.f32 %v10202, %v10752
      %v10791 = vsub.f32 %v10203, %v10752
      %v10792 = vsub.f32 %v10204, %v10752
      %v10793 = vsub.f32 %v10205, %v10752
      %v10794 = vsub.f32 %v10206, %v10752
      %v10795 = vsub.f32 %v10207, %v10752
      %v10796 = vsub.f32 %v10208, %v10752
      %v10797 = vsub.f32 %v10209, %v10752
      %v10798 = vsub.f32 %v10210, %v10752
      %v10799 = vsub.f32 %v10211, %v10752
      %v10800 = vsub.f32 %v10212, %v10752
      %v10801 = vsub.f32 %v10213, %v10752
      %v10802 = vsub.f32 %v10214, %v10752
      %v10803 = vsub.f32 %v10215, %v10752
      %v10804 = vsub.f32 %v10216, %v10752
      %v10805 = vsub.f32 %v10217, %v10752
      %v10806 = vsub.f32 %v10218, %v10752
      %v10807 = vsub.f32 %v10219, %v10752
      %v10808 = vsub.f32 %v10220, %v10752
      %v10809 = vsub.f32 %v10221, %v10752
      %v10810 = vsub.f32 %v10222, %v10752
      %v10811 = vsub.f32 %v10223, %v10752
      %v10812 = vsub.f32 %v10224, %v10752
      %v10813 = vsub.f32 %v10225, %v10752
      %v10814 = vsub.f32 %v10226, %v10752
      %v10815 = vsub.f32 %v10227, %v10752
      %v10816 = vsub.f32 %v10228, %v10752
      %v10817 = vsub.f32 %v10229, %v10752
      %v10818 = vsub.f32 %v10230, %v10752
      %v10819 = vsub.f32 %v10231, %v10752
      %v10820 = vsub.f32 %v10232, %v10752
      %v10821 = vsub.f32 %v10233, %v10752
      %v10822 = vsub.f32 %v10234, %v10752
      %v10823 = vadd.f32 %v10758, 1e-05
      %v10824 = vrsqrt.pop %v10823
      %v10825 = vmul.f32 %v10824, %v10823
      %v10826 = vmul.f32 %v10825, %v10824
      %v10827 = vmul.f32 0.5, %v10826
      %v10828 = vsub.f32 1.5, %v10827
      %v10829 = vmul.f32 %v10824, %v10828
      %vm10830 = vweird.f32 %v10823
      %vm10831 = vweird.f32 %v10824
      %vm10832 = vmor %vm10830, %vm10831
      %v10833 = vsel %vm10832, %v10824, %v10829
      %v10834 = vperm.slane %v10833, 0
      %10836 = vrot.lane.b32.xlu0 %v10834, 124
      %v10837 = vpop.permute.xlu0 %10836
      %v10839 = vmul.f32 %v10759, %v10837
      %v10840 = vmul.f32 %v10760, %v10837
      %v10841 = vmul.f32 %v10761, %v10837
      %v10842 = vmul.f32 %v10762, %v10837
      %v10843 = vmul.f32 %v10763, %v10837
      %v10844 = vmul.f32 %v10764, %v10837
      %v10845 = vmul.f32 %v10765, %v10837
      %v10846 = vmul.f32 %v10766, %v10837
      %v10847 = vmul.f32 %v10767, %v10837
      %v10848 = vmul.f32 %v10768, %v10837
      %v10849 = vmul.f32 %v10769, %v10837
      %v10850 = vmul.f32 %v10770, %v10837
      %v10851 = vmul.f32 %v10771, %v10837
      %v10852 = vmul.f32 %v10772, %v10837
      %v10853 = vmul.f32 %v10773, %v10837
      %v10854 = vmul.f32 %v10774, %v10837
      %v10855 = vmul.f32 %v10775, %v10837
      %v10856 = vmul.f32 %v10776, %v10837
      %v10857 = vmul.f32 %v10777, %v10837
      %v10858 = vmul.f32 %v10778, %v10837
      %v10859 = vmul.f32 %v10779, %v10837
      %v10860 = vmul.f32 %v10780, %v10837
      %v10861 = vmul.f32 %v10781, %v10837
      %v10862 = vmul.f32 %v10782, %v10837
      %v10863 = vmul.f32 %v10783, %v10837
      %v10864 = vmul.f32 %v10784, %v10837
      %v10865 = vmul.f32 %v10785, %v10837
      %v10866 = vmul.f32 %v10786, %v10837
      %v10867 = vmul.f32 %v10787, %v10837
      %v10868 = vmul.f32 %v10788, %v10837
      %v10869 = vmul.f32 %v10789, %v10837
      %v10870 = vmul.f32 %v10790, %v10837
      %v10871 = vmul.f32 %v10791, %v10837
      %v10872 = vmul.f32 %v10792, %v10837
      %v10873 = vmul.f32 %v10793, %v10837
      %v10874 = vmul.f32 %v10794, %v10837
      %v10875 = vmul.f32 %v10795, %v10837
      %v10876 = vmul.f32 %v10796, %v10837
      %v10877 = vmul.f32 %v10797, %v10837
      %v10878 = vmul.f32 %v10798, %v10837
      %v10879 = vmul.f32 %v10799, %v10837
      %v10880 = vmul.f32 %v10800, %v10837
      %v10881 = vmul.f32 %v10801, %v10837
      %v10882 = vmul.f32 %v10802, %v10837
      %v10883 = vmul.f32 %v10803, %v10837
      %v10884 = vmul.f32 %v10804, %v10837
      %v10885 = vmul.f32 %v10805, %v10837
      %v10886 = vmul.f32 %v10806, %v10837
      %v10887 = vmul.f32 %v10807, %v10837
      %v10888 = vmul.f32 %v10808, %v10837
      %v10889 = vmul.f32 %v10809, %v10837
      %v10890 = vmul.f32 %v10810, %v10837
      %v10891 = vmul.f32 %v10811, %v10837
      %v10892 = vmul.f32 %v10812, %v10837
      %v10893 = vmul.f32 %v10813, %v10837
      %v10894 = vmul.f32 %v10814, %v10837
      %v10895 = vmul.f32 %v10815, %v10837
      %v10896 = vmul.f32 %v10816, %v10837
      %v10897 = vmul.f32 %v10817, %v10837
      %v10898 = vmul.f32 %v10818, %v10837
      %v10899 = vmul.f32 %v10819, %v10837
      %v10900 = vmul.f32 %v10820, %v10837
      %v10901 = vmul.f32 %v10821, %v10837
      %v10902 = vmul.f32 %v10822, %v10837
      %v10903 = vld [vmem:[%s165] sm:$0xff]
      %v10904 = vld [vmem:[%s165 + $0x8] sm:$0xff]
      %v10905 = vld [vmem:[%s165 + $0x10] sm:$0xff]
      %v10906 = vld [vmem:[%s165 + $0x18] sm:$0xff]
      %v10907 = vld [vmem:[%s165 + $0x20] sm:$0xff]
      %v10908 = vld [vmem:[%s165 + $0x28] sm:$0xff]
      %v10909 = vld [vmem:[%s165 + $0x30] sm:$0xff]
      %v10910 = vld [vmem:[%s165 + $0x38] sm:$0xff]
      %v10911 = vld [vmem:[%s165 + $0x40] sm:$0xff]
      %v10912 = vld [vmem:[%s165 + $0x48] sm:$0xff]
      %v10913 = vld [vmem:[%s165 + $0x50] sm:$0xff]
      %v10914 = vld [vmem:[%s165 + $0x58] sm:$0xff]
      %v10915 = vld [vmem:[%s165 + $0x60] sm:$0xff]
      %v10916 = vld [vmem:[%s165 + $0x68] sm:$0xff]
      %v10917 = vld [vmem:[%s165 + $0x70] sm:$0xff]
      %v10918 = vld [vmem:[%s165 + $0x78] sm:$0xff]
      %v10919 = vld [vmem:[%s165 + $0x80] sm:$0xff]
      %v10920 = vld [vmem:[%s165 + $0x88] sm:$0xff]
      %v10921 = vld [vmem:[%s165 + $0x90] sm:$0xff]
      %v10922 = vld [vmem:[%s165 + $0x98] sm:$0xff]
      %v10923 = vld [vmem:[%s165 + $0xa0] sm:$0xff]
      %v10924 = vld [vmem:[%s165 + $0xa8] sm:$0xff]
      %v10925 = vld [vmem:[%s165 + $0xb0] sm:$0xff]
      %v10926 = vld [vmem:[%s165 + $0xb8] sm:$0xff]
      %v10927 = vld [vmem:[%s165 + $0xc0] sm:$0xff]
      %v10928 = vld [vmem:[%s165 + $0xc8] sm:$0xff]
      %v10929 = vld [vmem:[%s165 + $0xd0] sm:$0xff]
      %v10930 = vld [vmem:[%s165 + $0xd8] sm:$0xff]
      %v10931 = vld [vmem:[%s165 + $0xe0] sm:$0xff]
      %v10932 = vld [vmem:[%s165 + $0xe8] sm:$0xff]
      %v10933 = vld [vmem:[%s165 + $0xf0] sm:$0xff]
      %v10934 = vld [vmem:[%s165 + $0xf8] sm:$0xff]
      %v10935 = vld [vmem:[%s165 + $0x100] sm:$0xff]
      %v10936 = vld [vmem:[%s165 + $0x108] sm:$0xff]
      %v10937 = vld [vmem:[%s165 + $0x110] sm:$0xff]
      %v10938 = vld [vmem:[%s165 + $0x118] sm:$0xff]
      %v10939 = vld [vmem:[%s165 + $0x120] sm:$0xff]
      %v10940 = vld [vmem:[%s165 + $0x128] sm:$0xff]
      %v10941 = vld [vmem:[%s165 + $0x130] sm:$0xff]
      %v10942 = vld [vmem:[%s165 + $0x138] sm:$0xff]
      %v10943 = vld [vmem:[%s165 + $0x140] sm:$0xff]
      %v10944 = vld [vmem:[%s165 + $0x148] sm:$0xff]
      %v10945 = vld [vmem:[%s165 + $0x150] sm:$0xff]
      %v10946 = vld [vmem:[%s165 + $0x158] sm:$0xff]
      %v10947 = vld [vmem:[%s165 + $0x160] sm:$0xff]
      %v10948 = vld [vmem:[%s165 + $0x168] sm:$0xff]
      %v10949 = vld [vmem:[%s165 + $0x170] sm:$0xff]
      %v10950 = vld [vmem:[%s165 + $0x178] sm:$0xff]
      %v10951 = vld [vmem:[%s165 + $0x180] sm:$0xff]
      %v10952 = vld [vmem:[%s165 + $0x188] sm:$0xff]
      %v10953 = vld [vmem:[%s165 + $0x190] sm:$0xff]
      %v10954 = vld [vmem:[%s165 + $0x198] sm:$0xff]
      %v10955 = vld [vmem:[%s165 + $0x1a0] sm:$0xff]
      %v10956 = vld [vmem:[%s165 + $0x1a8] sm:$0xff]
      %v10957 = vld [vmem:[%s165 + $0x1b0] sm:$0xff]
      %v10958 = vld [vmem:[%s165 + $0x1b8] sm:$0xff]
      %v10959 = vld [vmem:[%s165 + $0x1c0] sm:$0xff]
      %v10960 = vld [vmem:[%s165 + $0x1c8] sm:$0xff]
      %v10961 = vld [vmem:[%s165 + $0x1d0] sm:$0xff]
      %v10962 = vld [vmem:[%s165 + $0x1d8] sm:$0xff]
      %v10963 = vld [vmem:[%s165 + $0x1e0] sm:$0xff]
      %v10964 = vld [vmem:[%s165 + $0x1e8] sm:$0xff]
      %v10965 = vld [vmem:[%s165 + $0x1f0] sm:$0xff]
      %v10966 = vld [vmem:[%s165 + $0x1f8] sm:$0xff]
      %v10967 = vadd.f32 %v10903, %v10839
      %v10968 = vadd.f32 %v10904, %v10840
      %v10969 = vadd.f32 %v10905, %v10841
      %v10970 = vadd.f32 %v10906, %v10842
      %v10971 = vadd.f32 %v10907, %v10843
      %v10972 = vadd.f32 %v10908, %v10844
      %v10973 = vadd.f32 %v10909, %v10845
      %v10974 = vadd.f32 %v10910, %v10846
      %v10975 = vadd.f32 %v10911, %v10847
      %v10976 = vadd.f32 %v10912, %v10848
      %v10977 = vadd.f32 %v10913, %v10849
      %v10978 = vadd.f32 %v10914, %v10850
      %v10979 = vadd.f32 %v10915, %v10851
      %v10980 = vadd.f32 %v10916, %v10852
      %v10981 = vadd.f32 %v10917, %v10853
      %v10982 = vadd.f32 %v10918, %v10854
      %v10983 = vadd.f32 %v10919, %v10855
      %v10984 = vadd.f32 %v10920, %v10856
      %v10985 = vadd.f32 %v10921, %v10857
      %v10986 = vadd.f32 %v10922, %v10858
      %v10987 = vadd.f32 %v10923, %v10859
      %v10988 = vadd.f32 %v10924, %v10860
      %v10989 = vadd.f32 %v10925, %v10861
      %v10990 = vadd.f32 %v10926, %v10862
      %v10991 = vadd.f32 %v10927, %v10863
      %v10992 = vadd.f32 %v10928, %v10864
      %v10993 = vadd.f32 %v10929, %v10865
      %v10994 = vadd.f32 %v10930, %v10866
      %v10995 = vadd.f32 %v10931, %v10867
      %v10996 = vadd.f32 %v10932, %v10868
      %v10997 = vadd.f32 %v10933, %v10869
      %v10998 = vadd.f32 %v10934, %v10870
      %v10999 = vadd.f32 %v10935, %v10871
      %v11000 = vadd.f32 %v10936, %v10872
      %v11001 = vadd.f32 %v10937, %v10873
      %v11002 = vadd.f32 %v10938, %v10874
      %v11003 = vadd.f32 %v10939, %v10875
      %v11004 = vadd.f32 %v10940, %v10876
      %v11005 = vadd.f32 %v10941, %v10877
      %v11006 = vadd.f32 %v10942, %v10878
      %v11007 = vadd.f32 %v10943, %v10879
      %v11008 = vadd.f32 %v10944, %v10880
      %v11009 = vadd.f32 %v10945, %v10881
      %v11010 = vadd.f32 %v10946, %v10882
      %v11011 = vadd.f32 %v10947, %v10883
      %v11012 = vadd.f32 %v10948, %v10884
      %v11013 = vadd.f32 %v10949, %v10885
      %v11014 = vadd.f32 %v10950, %v10886
      %v11015 = vadd.f32 %v10951, %v10887
      %v11016 = vadd.f32 %v10952, %v10888
      %v11017 = vadd.f32 %v10953, %v10889
      %v11018 = vadd.f32 %v10954, %v10890
      %v11019 = vadd.f32 %v10955, %v10891
      %v11020 = vadd.f32 %v10956, %v10892
      %v11021 = vadd.f32 %v10957, %v10893
      %v11022 = vadd.f32 %v10958, %v10894
      %v11023 = vadd.f32 %v10959, %v10895
      %v11024 = vadd.f32 %v10960, %v10896
      %v11025 = vadd.f32 %v10961, %v10897
      %v11026 = vadd.f32 %v10962, %v10898
      %v11027 = vadd.f32 %v10963, %v10899
      %v11028 = vadd.f32 %v10964, %v10900
      %v11029 = vadd.f32 %v10965, %v10901
      %v11030 = vadd.f32 %v10966, %v10902
      %11031 = vst.msk [vmem:[%s170] sm:$0xff] %vm236, %v10967
      %11032 = vst.msk [vmem:[%s170 + $0x8] sm:$0xff] %vm236, %v10968
      %11033 = vst.msk [vmem:[%s170 + $0x10] sm:$0xff] %vm236, %v10969
      %11034 = vst.msk [vmem:[%s170 + $0x18] sm:$0xff] %vm236, %v10970
      %11035 = vst.msk [vmem:[%s170 + $0x20] sm:$0xff] %vm236, %v10971
      %11036 = vst.msk [vmem:[%s170 + $0x28] sm:$0xff] %vm236, %v10972
      %11037 = vst.msk [vmem:[%s170 + $0x30] sm:$0xff] %vm236, %v10973
      %11038 = vst.msk [vmem:[%s170 + $0x38] sm:$0xff] %vm236, %v10974
      %11039 = vst.msk [vmem:[%s170 + $0x40] sm:$0xff] %vm236, %v10975
      %11040 = vst.msk [vmem:[%s170 + $0x48] sm:$0xff] %vm236, %v10976
      %11041 = vst.msk [vmem:[%s170 + $0x50] sm:$0xff] %vm236, %v10977
      %11042 = vst.msk [vmem:[%s170 + $0x58] sm:$0xff] %vm236, %v10978
      %11043 = vst.msk [vmem:[%s170 + $0x60] sm:$0xff] %vm236, %v10979
      %11044 = vst.msk [vmem:[%s170 + $0x68] sm:$0xff] %vm236, %v10980
      %11045 = vst.msk [vmem:[%s170 + $0x70] sm:$0xff] %vm236, %v10981
      %11046 = vst.msk [vmem:[%s170 + $0x78] sm:$0xff] %vm236, %v10982
      %11047 = vst.msk [vmem:[%s170 + $0x80] sm:$0xff] %vm236, %v10983
      %11048 = vst.msk [vmem:[%s170 + $0x88] sm:$0xff] %vm236, %v10984
      %11049 = vst.msk [vmem:[%s170 + $0x90] sm:$0xff] %vm236, %v10985
      %11050 = vst.msk [vmem:[%s170 + $0x98] sm:$0xff] %vm236, %v10986
      %11051 = vst.msk [vmem:[%s170 + $0xa0] sm:$0xff] %vm236, %v10987
      %11052 = vst.msk [vmem:[%s170 + $0xa8] sm:$0xff] %vm236, %v10988
      %11053 = vst.msk [vmem:[%s170 + $0xb0] sm:$0xff] %vm236, %v10989
      %11054 = vst.msk [vmem:[%s170 + $0xb8] sm:$0xff] %vm236, %v10990
      %11055 = vst.msk [vmem:[%s170 + $0xc0] sm:$0xff] %vm236, %v10991
      %11056 = vst.msk [vmem:[%s170 + $0xc8] sm:$0xff] %vm236, %v10992
      %11057 = vst.msk [vmem:[%s170 + $0xd0] sm:$0xff] %vm236, %v10993
      %11058 = vst.msk [vmem:[%s170 + $0xd8] sm:$0xff] %vm236, %v10994
      %11059 = vst.msk [vmem:[%s170 + $0xe0] sm:$0xff] %vm236, %v10995
      %11060 = vst.msk [vmem:[%s170 + $0xe8] sm:$0xff] %vm236, %v10996
      %11061 = vst.msk [vmem:[%s170 + $0xf0] sm:$0xff] %vm236, %v10997
      %11062 = vst.msk [vmem:[%s170 + $0xf8] sm:$0xff] %vm236, %v10998
      %11063 = vst.msk [vmem:[%s170 + $0x100] sm:$0xff] %vm236, %v10999
      %11064 = vst.msk [vmem:[%s170 + $0x108] sm:$0xff] %vm236, %v11000
      %11065 = vst.msk [vmem:[%s170 + $0x110] sm:$0xff] %vm236, %v11001
      %11066 = vst.msk [vmem:[%s170 + $0x118] sm:$0xff] %vm236, %v11002
      %11067 = vst.msk [vmem:[%s170 + $0x120] sm:$0xff] %vm236, %v11003
      %11068 = vst.msk [vmem:[%s170 + $0x128] sm:$0xff] %vm236, %v11004
      %11069 = vst.msk [vmem:[%s170 + $0x130] sm:$0xff] %vm236, %v11005
      %11070 = vst.msk [vmem:[%s170 + $0x138] sm:$0xff] %vm236, %v11006
      %11071 = vst.msk [vmem:[%s170 + $0x140] sm:$0xff] %vm236, %v11007
      %11072 = vst.msk [vmem:[%s170 + $0x148] sm:$0xff] %vm236, %v11008
      %11073 = vst.msk [vmem:[%s170 + $0x150] sm:$0xff] %vm236, %v11009
      %11074 = vst.msk [vmem:[%s170 + $0x158] sm:$0xff] %vm236, %v11010
      %11075 = vst.msk [vmem:[%s170 + $0x160] sm:$0xff] %vm236, %v11011
      %11076 = vst.msk [vmem:[%s170 + $0x168] sm:$0xff] %vm236, %v11012
      %11077 = vst.msk [vmem:[%s170 + $0x170] sm:$0xff] %vm236, %v11013
      %11078 = vst.msk [vmem:[%s170 + $0x178] sm:$0xff] %vm236, %v11014
      %11079 = vst.msk [vmem:[%s170 + $0x180] sm:$0xff] %vm236, %v11015
      %11080 = vst.msk [vmem:[%s170 + $0x188] sm:$0xff] %vm236, %v11016
      %11081 = vst.msk [vmem:[%s170 + $0x190] sm:$0xff] %vm236, %v11017
      %11082 = vst.msk [vmem:[%s170 + $0x198] sm:$0xff] %vm236, %v11018
      %11083 = vst.msk [vmem:[%s170 + $0x1a0] sm:$0xff] %vm236, %v11019
      %11084 = vst.msk [vmem:[%s170 + $0x1a8] sm:$0xff] %vm236, %v11020
      %11085 = vst.msk [vmem:[%s170 + $0x1b0] sm:$0xff] %vm236, %v11021
      %11086 = vst.msk [vmem:[%s170 + $0x1b8] sm:$0xff] %vm236, %v11022
      %11087 = vst.msk [vmem:[%s170 + $0x1c0] sm:$0xff] %vm236, %v11023
      %11088 = vst.msk [vmem:[%s170 + $0x1c8] sm:$0xff] %vm236, %v11024
      %11089 = vst.msk [vmem:[%s170 + $0x1d0] sm:$0xff] %vm236, %v11025
      %11090 = vst.msk [vmem:[%s170 + $0x1d8] sm:$0xff] %vm236, %v11026
      %11091 = vst.msk [vmem:[%s170 + $0x1e0] sm:$0xff] %vm236, %v11027
      %11092 = vst.msk [vmem:[%s170 + $0x1e8] sm:$0xff] %vm236, %v11028
      %11093 = vst.msk [vmem:[%s170 + $0x1f0] sm:$0xff] %vm236, %v11029
      %11094 = vst.msk [vmem:[%s170 + $0x1f8] sm:$0xff] %vm236, %v11030
      %p11095 = scmp.lt.s32.totalorder %s14, 1
      %s11096 = scalar_select %p11095, %s14, 1
      %s11097 = smul.addr %s11096, 64
      %s11098 = smul.addr %s11097, 8
      %s11099 = scalar_lea.vmem %s3, %s11098
      // Predicated region
      $region33: #{residual_block_forward.1} parent=31 // pred_check
        %p11100 = pneg %p100
      $region34: #{residual_block_forward.1} parent=31 // pred_check_branch
        %11102 = sbr.rel (%p11100) target = $region36
      $region35: #{residual_block_forward.1} parent=31 // pred_region
        _
      $region36: #{residual_block_forward.1} parent=31 // pred_fallthru
        _
    $region32: #{residual_block_forward.1} parent=5 // pred_fallthru
      _
    %p11103 = scmp.le.s32.totalorder 2, %s9
    // Predicated region
    $region37: #{residual_block_forward.1} parent=5 // pred_check
      %p11104 = pneg %p11103
    $region38: #{residual_block_forward.1} parent=5 // pred_check_branch
      %11106 = sbr.rel (%p11104) target = $region40
    $region39: #{residual_block_forward.1} parent=5 // pred_region
      %s11107 = ssub.s32 %s9, 2
      // Predicated region
      $region41: #{residual_block_forward.1} parent=39 // pred_check
        %p11108 = pneg %p106
      $region42: #{residual_block_forward.1} parent=39 // pred_check_branch
        %11110 = sbr.rel (%p11108) target = $region44
      $region43: #{residual_block_forward.1} parent=39 // pred_region
        %p11111 = scmp.lt.s32.totalorder %s15, 1
        %s11112 = scalar_select %p11111, %s15, 1
        %s11113 = smul.addr %s11112, 64
        %s11114 = smul.addr %s11113, 8
        %s11115 = scalar_lea.vmem %s3, %s11114
      $region44: #{residual_block_forward.1} parent=39 // pred_fallthru
        _
    $region40: #{residual_block_forward.1} parent=5 // pred_fallthru
      _
  $region6: #{residual_block_forward.1} parent=0 // loop_footer
    %s13 = sadd.s32 1, %s9
  $region7: #{residual_block_forward.1} parent=0 // loop_footer_branch
    %8 = sbr.rel target = $region3
  $region8: #{residual_block_forward.1} parent=0 // loop_exit
    _

</llo_original>
